<compile_context>
chip_gen: v7x
topology: tpu7x:2x2x1
jax: 0.10.0
libtpu: 0.0.40
codegen_flags: <defaults>
</compile_context>

<pallas_src>
import functools
import math

import jax
import jax.numpy as jnp
from jax.experimental import pallas as pl
from jax.experimental.pallas import tpu as pltpu

# ----------------------------- configuration (small, consistent with the module) ---------------
B = 2
N_POINTS = 128            # input points per cloud
IN_FEAT = 3               # extra per-point features (dp(3) + feat(3) = 6 == in_channels)
GROUP_SIZE = 8            # K (group_size in embed_args, scaled down)
NUM_GROUPS = 8            # L = N * sample_ratio (0.0625 * 128)
EMBED_DIM = 48            # encoder embed dim (scaled down from 384)
DEPTH = 2                 # encoder depth (scaled down from 12)
NUM_HEADS = 6
MLP_RATIO = 4.0
DEC_DIM = 32              # decoder embed dim (scaled down from 192)
DEC_DEPTH = 2
DEC_HEADS = 4
MASK_RATIO = 0.75
LN_EPS = 1e-6

_MM = jnp.bfloat16        # matmul-operand dtype (weights stored bf16, f32 MXU accumulation)
_VMEM = pl.BlockSpec(memory_space=pltpu.MemorySpace.VMEM)

_BLOCK_KEYS = ("ln1_g", "ln1_b", "wqkv", "pw", "pb",
               "ln2_g", "ln2_b", "fc1_w", "fc1_b", "fc2_w", "fc2_b")


# ----------------------------- BlockSpec helpers -------------------------------------------------
def _layer_spec(shape):
    """Per-layer weight: leading axis is the transformer-layer index (grid axis 1)."""
    ndim = len(shape)

    def imap(b, l):
        return (l,) + (0,) * (ndim - 1)

    return pl.BlockSpec((1,) + tuple(shape[1:]), imap)


def _const_spec(shape):
    """Whole array, same block for every grid step (resident in VMEM)."""
    ndim = len(shape)

    def imap(b, l):
        return (0,) * ndim

    return pl.BlockSpec(tuple(shape), imap)


def _batch_spec(shape):
    """[B, seq, dim] activation: one per-batch block, revisited across the depth axis."""

    def imap(b, l):
        return (b, 0, 0)

    return pl.BlockSpec((1,) + tuple(shape[1:]), imap)


# ----------------------------- in-kernel building blocks -----------------------------------------
def _ln(x, g, b, eps=LN_EPS):
    mu = jnp.mean(x, axis=-1, keepdims=True)
    var = jnp.mean((x - mu) ** 2, axis=-1, keepdims=True)
    return (x - mu) * jax.lax.rsqrt(var + eps) * g + b


def _gelu(x):
    # tanh-approx GELU (per v5e perf feedback; deviation from torch's erf GELU is tiny).
    return jax.nn.gelu(x, approximate=True)


def _vit_block(xin, w, *, heads, hd):
    """One timm-style Block on a single cloud's [seq, dim] slab (batch lives on the grid).

    * one lane-dense fused QKV matmul per layer
    * per-head softmax(QK^T)V with the output projection folded as sum_h o_h @ Wp[h-rows]
    * attention scale already folded into Wq at init; matmul operands in bf16, f32 accumulate
    """
    (ln1_g, ln1_b, wqkv, pw, pb, ln2_g, ln2_b, fc1_w, fc1_b, fc2_w, fc2_b) = w
    dim = xin.shape[-1]

    # ---- multi-head self attention ----
    h = _ln(xin, ln1_g, ln1_b)
    qkv = jnp.dot(h.astype(_MM), wqkv, preferred_element_type=jnp.float32)      # [seq, 3*dim]
    attn = jnp.zeros((xin.shape[0], dim), jnp.float32)
    for hi in range(heads):
        q = qkv[:, hi * hd:(hi + 1) * hd].astype(_MM)
        k = qkv[:, dim + hi * hd:dim + (hi + 1) * hd].astype(_MM)
        v = qkv[:, 2 * dim + hi * hd:2 * dim + (hi + 1) * hd].astype(_MM)
        s = jax.lax.dot_general(q, k, (((1,), (1,)), ((), ())),
                                preferred_element_type=jnp.float32)             # [seq, seq]
        s = s - jnp.max(s, axis=-1, keepdims=True)
        p = jnp.exp(s)
        p = p * pl.reciprocal(jnp.sum(p, axis=-1, keepdims=True), approx=True)
        o = jnp.dot(p.astype(_MM), v, preferred_element_type=jnp.float32)       # [seq, hd]
        # proj(concat_h o_h) == sum_h o_h @ Wp[h*hd:(h+1)*hd, :]
        attn = attn + jnp.dot(o.astype(_MM), pw[hi * hd:(hi + 1) * hd, :],
                              preferred_element_type=jnp.float32)
    x = xin + attn + pb

    # ---- MLP ----
    h2 = _ln(x, ln2_g, ln2_b)
    h2 = jnp.dot(h2.astype(_MM), fc1_w, preferred_element_type=jnp.float32) + fc1_b
    h2 = _gelu(h2)
    h2 = jnp.dot(h2.astype(_MM), fc2_w, preferred_element_type=jnp.float32) + fc2_b
    return x + h2


# ----------------------------- kernel 1: patch-feature MLP+maxpool & positional MLPs -------------
def _embed_kernel(gin_ref, ctr_ref,
                  pw1, pb1, pw2, pb2,
                  ew1, eb1, ew2, eb2,
                  dw1, db1, dw2, db2,
                  feat_ref, epos_ref, dpos_ref, *, groups, k):
    gin = gin_ref[...].astype(_MM)
    h = _gelu(jnp.dot(gin, pw1[...], preferred_element_type=jnp.float32) + pb1[...])
    y = jnp.dot(h.astype(_MM), pw2[...], preferred_element_type=jnp.float32) + pb2[...]
    feat_ref[...] = jnp.max(y.reshape(groups, k, y.shape[-1]), axis=1)          # group max-pool

    ctr = ctr_ref[...].astype(_MM)
    h = _gelu(jnp.dot(ctr, ew1[...], preferred_element_type=jnp.float32) + eb1[...])
    epos_ref[...] = jnp.dot(h.astype(_MM), ew2[...], preferred_element_type=jnp.float32) + eb2[...]
    h = _gelu(jnp.dot(ctr, dw1[...], preferred_element_type=jnp.float32) + db1[...])
    dpos_ref[...] = jnp.dot(h.astype(_MM), dw2[...], preferred_element_type=jnp.float32) + db2[...]


def embed_forward(grouped_in, centers, params):
    groups = centers.shape[0]
    pp, ep, dp = params["patch"], params["enc_pos"], params["dec_pos"]
    e_feat = pp["w2"].shape[1]
    e_pos = ep["w2"].shape[1]
    c_pos = dp["w2"].shape[1]
    return pl.pallas_call(
        functools.partial(_embed_kernel, groups=groups, k=GROUP_SIZE),
        out_shape=(jax.ShapeDtypeStruct((groups, e_feat), jnp.float32),
                   jax.ShapeDtypeStruct((groups, e_pos), jnp.float32),
                   jax.ShapeDtypeStruct((groups, c_pos), jnp.float32)),
        in_specs=[_VMEM] * 14,
        out_specs=(_VMEM, _VMEM, _VMEM),
    )(grouped_in, centers,
      pp["w1"], pp["b1"], pp["w2"], pp["b2"],
      ep["w1"], ep["b1"], ep["w2"], ep["b2"],
      dp["w1"], dp["b1"], dp["w2"], dp["b2"])


# ----------------------------- kernels 2/3: fused transformer stacks -----------------------------
def _encoder_stack_kernel(x0_ref, pos_ref,
                          ln1_g, ln1_b, wqkv, pw, pb, ln2_g, ln2_b,
                          fc1_w, fc1_b, fc2_w, fc2_b,
                          norm_g, norm_b, de_w, de_b,
                          out_ref, x_carry, *, heads, hd):
    layer = pl.program_id(1)

    @pl.when(layer == 0)
    def _init():
        x_carry[...] = x0_ref[0]

    xin = x_carry[...] + pos_ref[0]                          # add_pos_each_block=True
    w = (ln1_g[0], ln1_b[0], wqkv[0], pw[0], pb[0], ln2_g[0], ln2_b[0],
         fc1_w[0], fc1_b[0], fc2_w[0], fc2_b[0])
    x_new = _vit_block(xin, w, heads=heads, hd=hd)
    x_carry[...] = x_new

    @pl.when(layer == pl.num_programs(1) - 1)
    def _tail():
        latent = _ln(x_new, norm_g[...], norm_b[...])        # encoder.norm
        out_ref[0, :, :] = (jnp.dot(latent.astype(_MM), de_w[...],
                                    preferred_element_type=jnp.float32)
                            + de_b[...])                     # decoder_embed fused in


def _decoder_stack_kernel(f0_ref, pos_ref,
                          ln1_g, ln1_b, wqkv, pw, pb, ln2_g, ln2_b,
                          fc1_w, fc1_b, fc2_w, fc2_b,
                          norm_g, norm_b, pr_w, pr_b,
                          pred_ref, x_carry, *, heads, hd):
    layer = pl.program_id(1)

    @pl.when(layer == 0)
    def _init():
        x_carry[...] = f0_ref[0]

    xin = x_carry[...] + pos_ref[0]                          # add_pos_each_block=True
    w = (ln1_g[0], ln1_b[0], wqkv[0], pw[0], pb[0], ln2_g[0], ln2_b[0],
         fc1_w[0], fc1_b[0], fc2_w[0], fc2_b[0])
    x_new = _vit_block(xin, w, heads=heads, hd=hd)
    x_carry[...] = x_new

    @pl.when(layer == pl.num_programs(1) - 1)
    def _tail():
        fn = _ln(x_new, norm_g[...], norm_b[...])            # decoder_norm
        # Full [seq, K*3] pred slab; the cls-token row drop happens in XLA outside the kernel.
        pred_ref[0, :, :] = (jnp.dot(fn.astype(_MM), pr_w[...],
                                     preferred_element_type=jnp.float32) + pr_b[...])


def _stack_forward(kernel, x0, pos, blocks, tail, out_dim, heads):
    b, seq, dim = x0.shape
    depth = blocks["wqkv"].shape[0]
    hd = dim // heads
    stacked = [blocks[key] for key in _BLOCK_KEYS]
    in_specs = ([_batch_spec(x0.shape), _batch_spec(pos.shape)]
                + [_layer_spec(a.shape) for a in stacked]
                + [_const_spec(a.shape) for a in tail])
    return pl.pallas_call(
        functools.partial(kernel, heads=heads, hd=hd),
        grid=(b, depth),
        out_shape=jax.ShapeDtypeStruct((b, seq, out_dim), jnp.float32),
        in_specs=in_specs,
        out_specs=_batch_spec((b, seq, out_dim)),
        scratch_shapes=[pltpu.VMEM((seq, dim), jnp.float32)],
        compiler_params=pltpu.CompilerParams(
            dimension_semantics=("parallel", "arbitrary")),  # batch-parallel -> 2nd TC on v7x
    )(x0, pos, *stacked, *tail)


def encoder_forward(x0, pos, params):
    tail = [params["enc_norm_g"], params["enc_norm_b"],
            params["dec_embed_w"], params["dec_embed_b"]]
    return _stack_forward(_encoder_stack_kernel, x0, pos, params["enc_blocks"],
                          tail, DEC_DIM, NUM_HEADS)


def decoder_forward(f0, pos, params):
    tail = [params["dec_norm_g"], params["dec_norm_b"],
            params["dec_pred_w"], params["dec_pred_b"]]
    return _stack_forward(_decoder_stack_kernel, f0, pos, params["dec_blocks"],
                          tail, GROUP_SIZE * 3, DEC_HEADS)


# ----------------------------- plain-JAX glue (sampling / grouping / masking / loss) -------------
# TODO(synk): fps + kNN + argsort masking + un-shuffle gathers stay in XLA inside the jit
#             (data-dependent gathers have no clean static BlockSpec).
def fps(xyz, npoint):
    """Deterministic farthest-point sampling (starts at point 0). xyz: [B, N, 3] -> idx [B, L]."""
    bn, n, _ = xyz.shape
    idxs = jnp.zeros((bn, npoint), dtype=jnp.int32)
    dist = jnp.full((bn, n), 1e10, dtype=jnp.float32)
    farthest = jnp.zeros((bn,), dtype=jnp.int32)

    def body(i, carry):
        idxs, dist, farthest = carry
        idxs = idxs.at[:, i].set(farthest)
        idx3 = jnp.broadcast_to(farthest[:, None, None], (bn, 1, 3))
        centroid = jnp.take_along_axis(xyz, idx3, axis=1)                      # [B,1,3]
        d = jnp.sum((xyz - centroid) ** 2, axis=-1)
        dist = jnp.minimum(dist, d)
        farthest = jnp.argmax(dist, axis=-1).astype(jnp.int32)
        return idxs, dist, farthest

    idxs, _, _ = jax.lax.fori_loop(0, npoint, body, (idxs, dist, farthest))
    return idxs


def chamfer_l1(pred_pts, gt_pts):
    """pred_pts, gt_pts: [M, K, 3] -> scalar Chamfer-L1 (0.5*(mean d_pg + mean d_gp))."""
    pn = jnp.sum(pred_pts ** 2, axis=-1)                                       # [M, K]
    gn = jnp.sum(gt_pts ** 2, axis=-1)                                         # [M, K]
    cross = jnp.einsum('mic,mjc->mij', pred_pts, gt_pts)                       # [M, K, K]
    d2 = jnp.maximum(pn[:, :, None] + gn[:, None, :] - 2.0 * cross, 0.0)
    d_pg = jnp.sqrt(jnp.min(d2, axis=2))                                       # pred -> nearest gt
    d_gp = jnp.sqrt(jnp.min(d2, axis=1))                                       # gt   -> nearest pred
    return 0.5 * (jnp.mean(d_pg) + jnp.mean(d_gp))


# ----------------------------- parameters --------------------------------------------------------
def _linear_init(key, din, dout, dtype=jnp.float32):
    w = jax.random.normal(key, (din, dout), jnp.float32) * (1.0 / math.sqrt(din))
    return w.astype(dtype), jnp.zeros((1, dout), jnp.float32)


def _stacked_blocks(key, depth, dim, heads, mlp_ratio):
    hd = dim // heads
    hidden = int(dim * mlp_ratio)
    s = 1.0 / math.sqrt(dim)

    def one(k):
        kq, kk, kv, kp, k1, k2 = jax.random.split(k, 6)
        # lane-dense fused QKV [dim, 3*dim]; 1/sqrt(head_dim) folded into the Q columns
        wq = jax.random.normal(kq, (dim, dim), jnp.float32) * s * (hd ** -0.5)
        wk = jax.random.normal(kk, (dim, dim), jnp.float32) * s
        wv = jax.random.normal(kv, (dim, dim), jnp.float32) * s
        return dict(
            ln1_g=jnp.ones((1, dim), jnp.float32), ln1_b=jnp.zeros((1, dim), jnp.float32),
            wqkv=jnp.concatenate([wq, wk, wv], axis=1).astype(_MM),            # [dim, 3*dim]
            pw=(jax.random.normal(kp, (dim, dim), jnp.float32) * s).astype(_MM),
            pb=jnp.zeros((1, dim), jnp.float32),
            ln2_g=jnp.ones((1, dim), jnp.float32), ln2_b=jnp.zeros((1, dim), jnp.float32),
            fc1_w=(jax.random.normal(k1, (dim, hidden), jnp.float32) * s).astype(_MM),
            fc1_b=jnp.zeros((1, hidden), jnp.float32),
            fc2_w=(jax.random.normal(k2, (hidden, dim), jnp.float32)
                   * (1.0 / math.sqrt(hidden))).astype(_MM),
            fc2_b=jnp.zeros((1, dim), jnp.float32),
        )

    layers = [one(k) for k in jax.random.split(key, depth)]
    return {name: jnp.stack([lyr[name] for lyr in layers], axis=0) for name in layers[0]}


def init_params(key):
    keys = jax.random.split(key, 14)
    pe_w1, pe_b1 = _linear_init(keys[0], 3 + IN_FEAT, EMBED_DIM // 2, _MM)
    pe_w2, pe_b2 = _linear_init(keys[1], EMBED_DIM // 2, EMBED_DIM, _MM)
    ep_w1, ep_b1 = _linear_init(keys[2], 3, 128, _MM)
    ep_w2, ep_b2 = _linear_init(keys[3], 128, EMBED_DIM, _MM)
    dp_w1, db1 = _linear_init(keys[4], 3, 128, _MM)
    dp_w2, db2 = _linear_init(keys[5], 128, DEC_DIM, _MM)
    de_w, de_b = _linear_init(keys[6], EMBED_DIM, DEC_DIM, _MM)
    pr_w, pr_b = _linear_init(keys[7], DEC_DIM, GROUP_SIZE * 3, _MM)

    return dict(
        patch=dict(w1=pe_w1, b1=pe_b1, w2=pe_w2, b2=pe_b2),
        enc_pos=dict(w1=ep_w1, b1=ep_b1, w2=ep_w2, b2=ep_b2),
        dec_pos=dict(w1=dp_w1, b1=db1, w2=dp_w2, b2=db2),
        cls_token=0.02 * jax.random.normal(keys[8], (1, 1, EMBED_DIM), jnp.float32),
        cls_pos=0.02 * jax.random.normal(keys[9], (1, 1, EMBED_DIM), jnp.float32),
        dec_cls_pos=0.02 * jax.random.normal(keys[10], (1, 1, DEC_DIM), jnp.float32),
        mask_token=0.02 * jax.random.normal(keys[11], (1, 1, DEC_DIM), jnp.float32),
        enc_blocks=_stacked_blocks(keys[12], DEPTH, EMBED_DIM, NUM_HEADS, MLP_RATIO),
        dec_blocks=_stacked_blocks(keys[13], DEC_DEPTH, DEC_DIM, DEC_HEADS, MLP_RATIO),
        enc_norm_g=jnp.ones((1, EMBED_DIM), jnp.float32),
        enc_norm_b=jnp.zeros((1, EMBED_DIM), jnp.float32),
        dec_norm_g=jnp.ones((1, DEC_DIM), jnp.float32),
        dec_norm_b=jnp.zeros((1, DEC_DIM), jnp.float32),
        dec_embed_w=de_w, dec_embed_b=de_b,
        dec_pred_w=pr_w, dec_pred_b=pr_b,
    )


# ----------------------------- full forward ------------------------------------------------------
@jax.jit
def masked_point_vit_forward(xyz, feats, params, mask_key):
    # ---- patch grouping: fps centers, knn groups, 'dp'+feat features ----
    # TODO(synk): exact openpoints PointPatchEmbed conv stack is external to the given module;
    #             approximated as per-point MLP + group max-pool (Pallas kernel 1).
    center_idx = fps(xyz, NUM_GROUPS)                                          # [B, L]
    center = jnp.take_along_axis(
        xyz, jnp.broadcast_to(center_idx[:, :, None], (B, NUM_GROUPS, 3)), axis=1)   # [B, L, 3]
    d = jnp.sum((center[:, :, None, :] - xyz[:, None, :, :]) ** 2, axis=-1)    # [B, L, N]
    _, knn_idx = jax.lax.top_k(-d, GROUP_SIZE)                                 # [B, L, K]
    gather_pts = jax.vmap(lambda pts, idx: pts[idx])                           # [N,C],[L,K]->[L,K,C]
    gxyz = gather_pts(xyz, knn_idx)                                            # [B, L, K, 3]
    gfeat = gather_pts(feats, knn_idx)                                         # [B, L, K, IN_FEAT]
    dp = gxyz - center[:, :, None, :]
    grouped_in = jnp.concatenate([dp, gfeat], axis=-1).reshape(-1, 3 + IN_FEAT)   # [B*L*K, 6]

    # ---- Pallas kernel 1: patch-feature embed + both positional MLPs (fused) ----
    features, enc_pos, dec_pos = embed_forward(grouped_in, center.reshape(-1, 3), params)
    features = features.reshape(B, NUM_GROUPS, EMBED_DIM)
    enc_pos = enc_pos.reshape(B, NUM_GROUPS, EMBED_DIM)
    dec_pos = dec_pos.reshape(B, NUM_GROUPS, DEC_DIM)

    # ---- random masking (reference forward_loss never uses `mask`, so it is not materialized) ---
    L = NUM_GROUPS
    len_keep = int(L * (1 - MASK_RATIO))
    noise = jax.random.uniform(mask_key, (B, L))
    ids_shuffle = jnp.argsort(noise, axis=1)
    ids_restore = jnp.argsort(ids_shuffle, axis=1)
    ids_keep = ids_shuffle[:, :len_keep]
    x_masked = jnp.take_along_axis(
        features, jnp.broadcast_to(ids_keep[:, :, None], (B, len_keep, EMBED_DIM)), axis=1)
    pos_masked = jnp.take_along_axis(
        enc_pos, jnp.broadcast_to(ids_keep[:, :, None], (B, len_keep, EMBED_DIM)), axis=1)

    x0 = jnp.concatenate(
        [jnp.broadcast_to(params["cls_token"], (B, 1, EMBED_DIM)), x_masked], axis=1)
    pos_full = jnp.concatenate(
        [jnp.broadcast_to(params["cls_pos"], (B, 1, EMBED_DIM)), pos_masked], axis=1)

    # ---- Pallas kernel 2: encoder stack (+norm +decoder_embed), grid = (batch, depth) ----
    f_enc = encoder_forward(x0, pos_full, params)                              # [B, 1+keep, C]

    # ---- decoder token assembly (un-shuffle with mask tokens; gathers stay in XLA) --------------
    mask_tokens = jnp.broadcast_to(params["mask_token"], (B, L - len_keep, DEC_DIM))
    x_ = jnp.concatenate([f_enc[:, 1:, :], mask_tokens], axis=1)               # [B, L, C]
    x_ = jnp.take_along_axis(
        x_, jnp.broadcast_to(ids_restore[:, :, None], (B, L, DEC_DIM)), axis=1)
    f0 = jnp.concatenate([f_enc[:, :1, :], x_], axis=1)                        # [B, 1+L, C]
    dpos_full = jnp.concatenate(
        [jnp.broadcast_to(params["dec_cls_pos"], (B, 1, DEC_DIM)), dec_pos], axis=1)

    # ---- Pallas kernel 3: decoder stack (+norm +decoder_pred), grid = (batch, depth) ----
    pred_full = decoder_forward(f0, dpos_full, params)                         # [B, 1+L, K*3]
    pred = pred_full[:, 1:, :]                                                 # cls-row drop (XLA)

    # ---- Chamfer-L1 on tiny [B*L, K, K] slabs in XLA (moved out of the kernel tail) -------------
    loss = chamfer_l1(pred.reshape(B * L, GROUP_SIZE, 3),
                      gxyz.reshape(B * L, GROUP_SIZE, 3))
    return loss, pred


# ----------------------------- main ---------------------------------------------------------------
if __name__ == "__main__":
    root = jax.random.PRNGKey(0)
    k_xyz, k_feat, k_params, k_mask = jax.random.split(root, 4)

    xyz = jax.random.normal(k_xyz, (B, N_POINTS, 3), jnp.float32)              # point coordinates
    feats = jax.random.normal(k_feat, (B, N_POINTS, IN_FEAT), jnp.float32)     # per-point features
    params = init_params(k_params)

    loss, pred = masked_point_vit_forward(xyz, feats, params, k_mask)
    loss = jax.block_until_ready(loss)
    pred = jax.block_until_ready(pred)

    assert pred.shape == (B, NUM_GROUPS, GROUP_SIZE * 3)
    assert bool(jnp.isfinite(loss)) and bool(jnp.all(jnp.isfinite(pred)))
    print("KERNEL_OK")
</pallas_src>

<mosaic_0001>
module attributes {stable_mosaic.version = 11 : i64} {
  func.func @_embed_kernel(%arg0: memref<128x6xf32, #tpu.memory_space<vmem>>, %arg1: memref<16x3xf32, #tpu.memory_space<vmem>>, %arg2: memref<6x24xbf16, #tpu.memory_space<vmem>>, %arg3: memref<1x24xf32, #tpu.memory_space<vmem>>, %arg4: memref<24x48xbf16, #tpu.memory_space<vmem>>, %arg5: memref<1x48xf32, #tpu.memory_space<vmem>>, %arg6: memref<3x128xbf16, #tpu.memory_space<vmem>>, %arg7: memref<1x128xf32, #tpu.memory_space<vmem>>, %arg8: memref<128x48xbf16, #tpu.memory_space<vmem>>, %arg9: memref<1x48xf32, #tpu.memory_space<vmem>>, %arg10: memref<3x128xbf16, #tpu.memory_space<vmem>>, %arg11: memref<1x128xf32, #tpu.memory_space<vmem>>, %arg12: memref<128x32xbf16, #tpu.memory_space<vmem>>, %arg13: memref<1x32xf32, #tpu.memory_space<vmem>>, %arg14: memref<16x48xf32, #tpu.memory_space<vmem>>, %arg15: memref<16x48xf32, #tpu.memory_space<vmem>>, %arg16: memref<16x32xf32, #tpu.memory_space<vmem>>) attributes {dimension_semantics = [], scalar_prefetch = 0 : i64, scratch_operands = 0 : i64, tpu.core_type = #tpu.core_type<tc>} {
    %c0 = arith.constant 0 : index
    %c0_0 = arith.constant 0 : index
    %0 = vector.load %arg0[%c0, %c0_0] : memref<128x6xf32, #tpu.memory_space<vmem>>, vector<128x6xf32>
    %1 = arith.truncf %0 : vector<128x6xf32> to vector<128x6xbf16>
    %c0_1 = arith.constant 0 : index
    %c0_2 = arith.constant 0 : index
    %2 = vector.load %arg2[%c0_1, %c0_2] : memref<6x24xbf16, #tpu.memory_space<vmem>>, vector<6x24xbf16>
    %cst = arith.constant dense<0.000000e+00> : vector<128x24xf32>
    %3 = tpu.matmul %1, %2, %cst {dimension_numbers = #tpu.dot_dimension_numbers<[1], [0], [0], [1], [0, 0, 1, 1], [], []>} : vector<128x6xbf16>, vector<6x24xbf16>, vector<128x24xf32> -> vector<128x24xf32>
    %c0_3 = arith.constant 0 : index
    %c0_4 = arith.constant 0 : index
    %4 = vector.load %arg3[%c0_3, %c0_4] : memref<1x24xf32, #tpu.memory_space<vmem>>, vector<1x24xf32>
    %5 = vector.broadcast %4 : vector<1x24xf32> to vector<128x24xf32>
    %6 = arith.addf %3, %5 : vector<128x24xf32>
    %7 = arith.mulf %6, %6 : vector<128x24xf32>
    %8 = arith.mulf %6, %7 : vector<128x24xf32>
    %cst_5 = arith.constant 4.471500e-02 : f32
    %9 = vector.broadcast %cst_5 : f32 to vector<128x24xf32>
    %10 = arith.mulf %9, %8 : vector<128x24xf32>
    %11 = arith.addf %6, %10 : vector<128x24xf32>
    %cst_6 = arith.constant 0.797884583 : f32
    %12 = vector.broadcast %cst_6 : f32 to vector<128x24xf32>
    %13 = arith.mulf %12, %11 : vector<128x24xf32>
    %14 = math.tanh %13 : vector<128x24xf32>
    %cst_7 = arith.constant 1.000000e+00 : f32
    %15 = vector.broadcast %cst_7 : f32 to vector<128x24xf32>
    %16 = arith.addf %15, %14 : vector<128x24xf32>
    %cst_8 = arith.constant 5.000000e-01 : f32
    %17 = vector.broadcast %cst_8 : f32 to vector<128x24xf32>
    %18 = arith.mulf %17, %16 : vector<128x24xf32>
    %19 = arith.mulf %6, %18 : vector<128x24xf32>
    %20 = arith.truncf %19 : vector<128x24xf32> to vector<128x24xbf16>
    %c0_9 = arith.constant 0 : index
    %c0_10 = arith.constant 0 : index
    %21 = vector.load %arg4[%c0_9, %c0_10] : memref<24x48xbf16, #tpu.memory_space<vmem>>, vector<24x48xbf16>
    %cst_11 = arith.constant dense<0.000000e+00> : vector<128x48xf32>
    %22 = tpu.matmul %20, %21, %cst_11 {dimension_numbers = #tpu.dot_dimension_numbers<[1], [0], [0], [1], [0, 0, 1, 1], [], []>} : vector<128x24xbf16>, vector<24x48xbf16>, vector<128x48xf32> -> vector<128x48xf32>
    %c0_12 = arith.constant 0 : index
    %c0_13 = arith.constant 0 : index
    %23 = vector.load %arg5[%c0_12, %c0_13] : memref<1x48xf32, #tpu.memory_space<vmem>>, vector<1x48xf32>
    %24 = vector.broadcast %23 : vector<1x48xf32> to vector<128x48xf32>
    %25 = arith.addf %22, %24 : vector<128x48xf32>
    %26 = vector.shape_cast %25 : vector<128x48xf32> to vector<16x8x48xf32>
    %cst_14 = arith.constant dense<0xFF800000> : vector<16x48xf32>
    %27 = vector.multi_reduction <maximumf>, %26, %cst_14 [1] : vector<16x8x48xf32> to vector<16x48xf32>
    %c0_15 = arith.constant 0 : index
    %c0_16 = arith.constant 0 : index
    %28 = vector.load %arg14[%c0_15, %c0_16] : memref<16x48xf32, #tpu.memory_space<vmem>>, vector<16x48xf32>
    tpu.vector_store %arg14[%c0_15, %c0_16], %27 {strides = array<i32>} : memref<16x48xf32, #tpu.memory_space<vmem>>, vector<16x48xf32>,
    %c0_17 = arith.constant 0 : index
    %c0_18 = arith.constant 0 : index
    %29 = vector.load %arg1[%c0_17, %c0_18] : memref<16x3xf32, #tpu.memory_space<vmem>>, vector<16x3xf32>
    %30 = arith.truncf %29 : vector<16x3xf32> to vector<16x3xbf16>
    %c0_19 = arith.constant 0 : index
    %c0_20 = arith.constant 0 : index
    %31 = vector.load %arg6[%c0_19, %c0_20] : memref<3x128xbf16, #tpu.memory_space<vmem>>, vector<3x128xbf16>
    %cst_21 = arith.constant dense<0.000000e+00> : vector<16x128xf32>
    %32 = tpu.matmul %30, %31, %cst_21 {dimension_numbers = #tpu.dot_dimension_numbers<[1], [0], [0], [1], [0, 0, 1, 1], [], []>} : vector<16x3xbf16>, vector<3x128xbf16>, vector<16x128xf32> -> vector<16x128xf32>
    %c0_22 = arith.constant 0 : index
    %c0_23 = arith.constant 0 : index
    %33 = vector.load %arg7[%c0_22, %c0_23] : memref<1x128xf32, #tpu.memory_space<vmem>>, vector<1x128xf32>
    %34 = vector.broadcast %33 : vector<1x128xf32> to vector<16x128xf32>
    %35 = arith.addf %32, %34 : vector<16x128xf32>
    %36 = arith.mulf %35, %35 : vector<16x128xf32>
    %37 = arith.mulf %35, %36 : vector<16x128xf32>
    %cst_24 = arith.constant 4.471500e-02 : f32
    %38 = vector.broadcast %cst_24 : f32 to vector<16x128xf32>
    %39 = arith.mulf %38, %37 : vector<16x128xf32>
    %40 = arith.addf %35, %39 : vector<16x128xf32>
    %cst_25 = arith.constant 0.797884583 : f32
    %41 = vector.broadcast %cst_25 : f32 to vector<16x128xf32>
    %42 = arith.mulf %41, %40 : vector<16x128xf32>
    %43 = math.tanh %42 : vector<16x128xf32>
    %cst_26 = arith.constant 1.000000e+00 : f32
    %44 = vector.broadcast %cst_26 : f32 to vector<16x128xf32>
    %45 = arith.addf %44, %43 : vector<16x128xf32>
    %cst_27 = arith.constant 5.000000e-01 : f32
    %46 = vector.broadcast %cst_27 : f32 to vector<16x128xf32>
    %47 = arith.mulf %46, %45 : vector<16x128xf32>
    %48 = arith.mulf %35, %47 : vector<16x128xf32>
    %49 = arith.truncf %48 : vector<16x128xf32> to vector<16x128xbf16>
    %c0_28 = arith.constant 0 : index
    %c0_29 = arith.constant 0 : index
    %50 = vector.load %arg8[%c0_28, %c0_29] : memref<128x48xbf16, #tpu.memory_space<vmem>>, vector<128x48xbf16>
    %cst_30 = arith.constant dense<0.000000e+00> : vector<16x48xf32>
    %51 = tpu.matmul %49, %50, %cst_30 {dimension_numbers = #tpu.dot_dimension_numbers<[1], [0], [0], [1], [0, 0, 1, 1], [], []>} : vector<16x128xbf16>, vector<128x48xbf16>, vector<16x48xf32> -> vector<16x48xf32>
    %c0_31 = arith.constant 0 : index
    %c0_32 = arith.constant 0 : index
    %52 = vector.load %arg9[%c0_31, %c0_32] : memref<1x48xf32, #tpu.memory_space<vmem>>, vector<1x48xf32>
    %53 = vector.broadcast %52 : vector<1x48xf32> to vector<16x48xf32>
    %54 = arith.addf %51, %53 : vector<16x48xf32>
    %c0_33 = arith.constant 0 : index
    %c0_34 = arith.constant 0 : index
    %55 = vector.load %arg15[%c0_33, %c0_34] : memref<16x48xf32, #tpu.memory_space<vmem>>, vector<16x48xf32>
    tpu.vector_store %arg15[%c0_33, %c0_34], %54 {strides = array<i32>} : memref<16x48xf32, #tpu.memory_space<vmem>>, vector<16x48xf32>,
    %c0_35 = arith.constant 0 : index
    %c0_36 = arith.constant 0 : index
    %56 = vector.load %arg10[%c0_35, %c0_36] : memref<3x128xbf16, #tpu.memory_space<vmem>>, vector<3x128xbf16>
    %cst_37 = arith.constant dense<0.000000e+00> : vector<16x128xf32>
    %57 = tpu.matmul %30, %56, %cst_37 {dimension_numbers = #tpu.dot_dimension_numbers<[1], [0], [0], [1], [0, 0, 1, 1], [], []>} : vector<16x3xbf16>, vector<3x128xbf16>, vector<16x128xf32> -> vector<16x128xf32>
    %c0_38 = arith.constant 0 : index
    %c0_39 = arith.constant 0 : index
    %58 = vector.load %arg11[%c0_38, %c0_39] : memref<1x128xf32, #tpu.memory_space<vmem>>, vector<1x128xf32>
    %59 = vector.broadcast %58 : vector<1x128xf32> to vector<16x128xf32>
    %60 = arith.addf %57, %59 : vector<16x128xf32>
    %61 = arith.mulf %60, %60 : vector<16x128xf32>
    %62 = arith.mulf %60, %61 : vector<16x128xf32>
    %cst_40 = arith.constant 4.471500e-02 : f32
    %63 = vector.broadcast %cst_40 : f32 to vector<16x128xf32>
    %64 = arith.mulf %63, %62 : vector<16x128xf32>
    %65 = arith.addf %60, %64 : vector<16x128xf32>
    %cst_41 = arith.constant 0.797884583 : f32
    %66 = vector.broadcast %cst_41 : f32 to vector<16x128xf32>
    %67 = arith.mulf %66, %65 : vector<16x128xf32>
    %68 = math.tanh %67 : vector<16x128xf32>
    %cst_42 = arith.constant 1.000000e+00 : f32
    %69 = vector.broadcast %cst_42 : f32 to vector<16x128xf32>
    %70 = arith.addf %69, %68 : vector<16x128xf32>
    %cst_43 = arith.constant 5.000000e-01 : f32
    %71 = vector.broadcast %cst_43 : f32 to vector<16x128xf32>
    %72 = arith.mulf %71, %70 : vector<16x128xf32>
    %73 = arith.mulf %60, %72 : vector<16x128xf32>
    %74 = arith.truncf %73 : vector<16x128xf32> to vector<16x128xbf16>
    %c0_44 = arith.constant 0 : index
    %c0_45 = arith.constant 0 : index
    %75 = vector.load %arg12[%c0_44, %c0_45] : memref<128x32xbf16, #tpu.memory_space<vmem>>, vector<128x32xbf16>
    %cst_46 = arith.constant dense<0.000000e+00> : vector<16x32xf32>
    %76 = tpu.matmul %74, %75, %cst_46 {dimension_numbers = #tpu.dot_dimension_numbers<[1], [0], [0], [1], [0, 0, 1, 1], [], []>} : vector<16x128xbf16>, vector<128x32xbf16>, vector<16x32xf32> -> vector<16x32xf32>
    %c0_47 = arith.constant 0 : index
    %c0_48 = arith.constant 0 : index
    %77 = vector.load %arg13[%c0_47, %c0_48] : memref<1x32xf32, #tpu.memory_space<vmem>>, vector<1x32xf32>
    %78 = vector.broadcast %77 : vector<1x32xf32> to vector<16x32xf32>
    %79 = arith.addf %76, %78 : vector<16x32xf32>
    %c0_49 = arith.constant 0 : index
    %c0_50 = arith.constant 0 : index
    %80 = vector.load %arg16[%c0_49, %c0_50] : memref<16x32xf32, #tpu.memory_space<vmem>>, vector<16x32xf32>
    tpu.vector_store %arg16[%c0_49, %c0_50], %79 {strides = array<i32>} : memref<16x32xf32, #tpu.memory_space<vmem>>, vector<16x32xf32>,
    return
  }
}

module attributes {stable_mosaic.version = 11 : i64} {
  func.func @_encoder_stack_kernel(%arg0: i32, %arg1: i32, %arg2: memref<1x3x48xf32, #tpu.memory_space<vmem>>, %arg3: memref<1x3x48xf32, #tpu.memory_space<vmem>>, %arg4: memref<1x1x48xf32, #tpu.memory_space<vmem>>, %arg5: memref<1x1x48xf32, #tpu.memory_space<vmem>>, %arg6: memref<1x48x144xbf16, #tpu.memory_space<vmem>>, %arg7: memref<1x48x48xbf16, #tpu.memory_space<vmem>>, %arg8: memref<1x1x48xf32, #tpu.memory_space<vmem>>, %arg9: memref<1x1x48xf32, #tpu.memory_space<vmem>>, %arg10: memref<1x1x48xf32, #tpu.memory_space<vmem>>, %arg11: memref<1x48x192xbf16, #tpu.memory_space<vmem>>, %arg12: memref<1x1x192xf32, #tpu.memory_space<vmem>>, %arg13: memref<1x192x48xbf16, #tpu.memory_space<vmem>>, %arg14: memref<1x1x48xf32, #tpu.memory_space<vmem>>, %arg15: memref<1x48xf32, #tpu.memory_space<vmem>>, %arg16: memref<1x48xf32, #tpu.memory_space<vmem>>, %arg17: memref<48x32xbf16, #tpu.memory_space<vmem>>, %arg18: memref<1x32xf32, #tpu.memory_space<vmem>>, %arg19: memref<1x3x32xf32, #tpu.memory_space<vmem>>, %arg20: memref<3x48xf32, #tpu.memory_space<vmem>>) attributes {dimension_semantics = [#tpu.dimension_semantics<parallel>, #tpu.dimension_semantics<arbitrary>], iteration_bounds = array<i64: 2, 2>, scalar_prefetch = 0 : i64, scratch_operands = 1 : i64, tpu.core_type = #tpu.core_type<tc>, window_params = [{transform_indices = @transform_0, window_bounds = array<i64: 1, 3, 48>}, {transform_indices = @transform_1, window_bounds = array<i64: 1, 3, 48>}, {transform_indices = @transform_2, window_bounds = array<i64: 1, 1, 48>}, {transform_indices = @transform_3, window_bounds = array<i64: 1, 1, 48>}, {transform_indices = @transform_4, window_bounds = array<i64: 1, 48, 144>}, {transform_indices = @transform_5, window_bounds = array<i64: 1, 48, 48>}, {transform_indices = @transform_6, window_bounds = array<i64: 1, 1, 48>}, {transform_indices = @transform_7, window_bounds = array<i64: 1, 1, 48>}, {transform_indices = @transform_8, window_bounds = array<i64: 1, 1, 48>}, {transform_indices = @transform_9, window_bounds = array<i64: 1, 48, 192>}, {transform_indices = @transform_10, window_bounds = array<i64: 1, 1, 192>}, {transform_indices = @transform_11, window_bounds = array<i64: 1, 192, 48>}, {transform_indices = @transform_12, window_bounds = array<i64: 1, 1, 48>}, {pipeline_mode = #tpu.pipeline_mode<synchronous>, transform_indices = @transform_13, window_bounds = array<i64: 1, 48>}, {pipeline_mode = #tpu.pipeline_mode<synchronous>, transform_indices = @transform_14, window_bounds = array<i64: 1, 48>}, {pipeline_mode = #tpu.pipeline_mode<synchronous>, transform_indices = @transform_15, window_bounds = array<i64: 48, 32>}, {pipeline_mode = #tpu.pipeline_mode<synchronous>, transform_indices = @transform_16, window_bounds = array<i64: 1, 32>}, {transform_indices = @transform_17, window_bounds = array<i64: 1, 3, 32>}]} {
    %c0_i32 = arith.constant 0 : i32
    %0 = arith.cmpi eq, %arg1, %c0_i32 : i32
    %1 = arith.extui %0 : i1 to i32
    %c0_i32_0 = arith.constant 0 : i32
    %2 = arith.cmpi ne, %1, %c0_i32_0 : i32
    scf.if %2 {
      %c0_88 = arith.constant 0 : index
      %c0_89 = arith.constant 0 : index
      %c0_90 = arith.constant 0 : index
      %243 = vector.load %arg2[%c0_88, %c0_89, %c0_90] : memref<1x3x48xf32, #tpu.memory_space<vmem>>, vector<1x3x48xf32>
      %244 = vector.shape_cast %243 : vector<1x3x48xf32> to vector<3x48xf32>
      %c0_91 = arith.constant 0 : index
      %c0_92 = arith.constant 0 : index
      %245 = vector.load %arg20[%c0_91, %c0_92] : memref<3x48xf32, #tpu.memory_space<vmem>>, vector<3x48xf32>
      tpu.vector_store %arg20[%c0_91, %c0_92], %244 {strides = array<i32>} : memref<3x48xf32, #tpu.memory_space<vmem>>, vector<3x48xf32>,
    } else {
    }
    %c0 = arith.constant 0 : index
    %c0_1 = arith.constant 0 : index
    %3 = vector.load %arg20[%c0, %c0_1] : memref<3x48xf32, #tpu.memory_space<vmem>>, vector<3x48xf32>
    %c0_2 = arith.constant 0 : index
    %c0_3 = arith.constant 0 : index
    %c0_4 = arith.constant 0 : index
    %4 = vector.load %arg3[%c0_2, %c0_3, %c0_4] : memref<1x3x48xf32, #tpu.memory_space<vmem>>, vector<1x3x48xf32>
    %5 = vector.shape_cast %4 : vector<1x3x48xf32> to vector<3x48xf32>
    %6 = arith.addf %3, %5 : vector<3x48xf32>
    %c0_5 = arith.constant 0 : index
    %c0_6 = arith.constant 0 : index
    %c0_7 = arith.constant 0 : index
    %7 = vector.load %arg4[%c0_5, %c0_6, %c0_7] : memref<1x1x48xf32, #tpu.memory_space<vmem>>, vector<1x1x48xf32>
    %8 = vector.shape_cast %7 : vector<1x1x48xf32> to vector<1x48xf32>
    %c0_8 = arith.constant 0 : index
    %c0_9 = arith.constant 0 : index
    %c0_10 = arith.constant 0 : index
    %9 = vector.load %arg5[%c0_8, %c0_9, %c0_10] : memref<1x1x48xf32, #tpu.memory_space<vmem>>, vector<1x1x48xf32>
    %10 = vector.shape_cast %9 : vector<1x1x48xf32> to vector<1x48xf32>
    %c0_11 = arith.constant 0 : index
    %c0_12 = arith.constant 0 : index
    %c0_13 = arith.constant 0 : index
    %11 = vector.load %arg6[%c0_11, %c0_12, %c0_13] : memref<1x48x144xbf16, #tpu.memory_space<vmem>>, vector<1x48x144xbf16>
    %12 = vector.shape_cast %11 : vector<1x48x144xbf16> to vector<48x144xbf16>
    %c0_14 = arith.constant 0 : index
    %c0_15 = arith.constant 0 : index
    %c0_16 = arith.constant 0 : index
    %13 = vector.load %arg7[%c0_14, %c0_15, %c0_16] : memref<1x48x48xbf16, #tpu.memory_space<vmem>>, vector<1x48x48xbf16>
    %14 = vector.shape_cast %13 : vector<1x48x48xbf16> to vector<48x48xbf16>
    %c0_17 = arith.constant 0 : index
    %c0_18 = arith.constant 0 : index
    %c0_19 = arith.constant 0 : index
    %15 = vector.load %arg8[%c0_17, %c0_18, %c0_19] : memref<1x1x48xf32, #tpu.memory_space<vmem>>, vector<1x1x48xf32>
    %16 = vector.shape_cast %15 : vector<1x1x48xf32> to vector<1x48xf32>
    %c0_20 = arith.constant 0 : index
    %c0_21 = arith.constant 0 : index
    %c0_22 = arith.constant 0 : index
    %17 = vector.load %arg9[%c0_20, %c0_21, %c0_22] : memref<1x1x48xf32, #tpu.memory_space<vmem>>, vector<1x1x48xf32>
    %18 = vector.shape_cast %17 : vector<1x1x48xf32> to vector<1x48xf32>
    %c0_23 = arith.constant 0 : index
    %c0_24 = arith.constant 0 : index
    %c0_25 = arith.constant 0 : index
    %19 = vector.load %arg10[%c0_23, %c0_24, %c0_25] : memref<1x1x48xf32, #tpu.memory_space<vmem>>, vector<1x1x48xf32>
    %20 = vector.shape_cast %19 : vector<1x1x48xf32> to vector<1x48xf32>
    %c0_26 = arith.constant 0 : index
    %c0_27 = arith.constant 0 : index
    %c0_28 = arith.constant 0 : index
    %21 = vector.load %arg11[%c0_26, %c0_27, %c0_28] : memref<1x48x192xbf16, #tpu.memory_space<vmem>>, vector<1x48x192xbf16>
    %22 = vector.shape_cast %21 : vector<1x48x192xbf16> to vector<48x192xbf16>
    %c0_29 = arith.constant 0 : index
    %c0_30 = arith.constant 0 : index
    %c0_31 = arith.constant 0 : index
    %23 = vector.load %arg12[%c0_29, %c0_30, %c0_31] : memref<1x1x192xf32, #tpu.memory_space<vmem>>, vector<1x1x192xf32>
    %24 = vector.shape_cast %23 : vector<1x1x192xf32> to vector<1x192xf32>
    %c0_32 = arith.constant 0 : index
    %c0_33 = arith.constant 0 : index
    %c0_34 = arith.constant 0 : index
    %25 = vector.load %arg13[%c0_32, %c0_33, %c0_34] : memref<1x192x48xbf16, #tpu.memory_space<vmem>>, vector<1x192x48xbf16>
    %26 = vector.shape_cast %25 : vector<1x192x48xbf16> to vector<192x48xbf16>
    %c0_35 = arith.constant 0 : index
    %c0_36 = arith.constant 0 : index
    %c0_37 = arith.constant 0 : index
    %27 = vector.load %arg14[%c0_35, %c0_36, %c0_37] : memref<1x1x48xf32, #tpu.memory_space<vmem>>, vector<1x1x48xf32>
    %28 = vector.shape_cast %27 : vector<1x1x48xf32> to vector<1x48xf32>
    %cst = arith.constant dense<0.000000e+00> : vector<3xf32>
    %29 = vector.multi_reduction <add>, %6, %cst [1] : vector<3x48xf32> to vector<3xf32>
    %30 = vector.shape_cast %29 : vector<3xf32> to vector<3x1xf32>
    %cst_38 = arith.constant 4.800000e+01 : f32
    %31 = vector.broadcast %cst_38 : f32 to vector<3x1xf32>
    %32 = arith.divf %30, %31 : vector<3x1xf32>
    %33 = vector.broadcast %32 : vector<3x1xf32> to vector<3x48xf32>
    %34 = arith.subf %6, %33 : vector<3x48xf32>
    %35 = arith.mulf %34, %34 : vector<3x48xf32>
    %cst_39 = arith.constant dense<0.000000e+00> : vector<3xf32>
    %36 = vector.multi_reduction <add>, %35, %cst_39 [1] : vector<3x48xf32> to vector<3xf32>
    %37 = vector.shape_cast %36 : vector<3xf32> to vector<3x1xf32>
    %cst_40 = arith.constant 4.800000e+01 : f32
    %38 = vector.broadcast %cst_40 : f32 to vector<3x1xf32>
    %39 = arith.divf %37, %38 : vector<3x1xf32>
    %40 = vector.broadcast %32 : vector<3x1xf32> to vector<3x48xf32>
    %41 = arith.subf %6, %40 : vector<3x48xf32>
    %cst_41 = arith.constant 9.99999997E-7 : f32
    %42 = vector.broadcast %cst_41 : f32 to vector<3x1xf32>
    %43 = arith.addf %39, %42 : vector<3x1xf32>
    %44 = math.rsqrt %43 : vector<3x1xf32>
    %45 = vector.broadcast %44 : vector<3x1xf32> to vector<3x48xf32>
    %46 = arith.mulf %41, %45 : vector<3x48xf32>
    %47 = vector.broadcast %8 : vector<1x48xf32> to vector<3x48xf32>
    %48 = arith.mulf %46, %47 : vector<3x48xf32>
    %49 = vector.broadcast %10 : vector<1x48xf32> to vector<3x48xf32>
    %50 = arith.addf %48, %49 : vector<3x48xf32>
    %51 = arith.truncf %50 : vector<3x48xf32> to vector<3x48xbf16>
    %cst_42 = arith.constant dense<0.000000e+00> : vector<3x144xf32>
    %52 = tpu.matmul %51, %12, %cst_42 {dimension_numbers = #tpu.dot_dimension_numbers<[1], [0], [0], [1], [0, 0, 1, 1], [], []>} : vector<3x48xbf16>, vector<48x144xbf16>, vector<3x144xf32> -> vector<3x144xf32>
    %cst_43 = arith.constant 0.000000e+00 : f32
    %53 = vector.broadcast %cst_43 : f32 to vector<3x48xf32>
    %54 = vector.extract_strided_slice %52 {offsets = [0, 0], sizes = [3, 8], strides = [1, 1]} : vector<3x144xf32> to vector<3x8xf32>
    %55 = arith.truncf %54 : vector<3x8xf32> to vector<3x8xbf16>
    %56 = vector.extract_strided_slice %52 {offsets = [0, 48], sizes = [3, 8], strides = [1, 1]} : vector<3x144xf32> to vector<3x8xf32>
    %57 = arith.truncf %56 : vector<3x8xf32> to vector<3x8xbf16>
    %58 = vector.extract_strided_slice %52 {offsets = [0, 96], sizes = [3, 8], strides = [1, 1]} : vector<3x144xf32> to vector<3x8xf32>
    %59 = arith.truncf %58 : vector<3x8xf32> to vector<3x8xbf16>
    %cst_44 = arith.constant dense<0.000000e+00> : vector<3x3xf32>
    %60 = tpu.matmul %55, %57, %cst_44 {dimension_numbers = #tpu.dot_dimension_numbers<[1], [1], [0], [0], [0, 0, 1, 0], [], []>} : vector<3x8xbf16>, vector<3x8xbf16>, vector<3x3xf32> -> vector<3x3xf32>
    %cst_45 = arith.constant dense<0xFF800000> : vector<3xf32>
    %61 = vector.multi_reduction <maximumf>, %60, %cst_45 [1] : vector<3x3xf32> to vector<3xf32>
    %62 = vector.shape_cast %61 : vector<3xf32> to vector<3x1xf32>
    %63 = vector.broadcast %62 : vector<3x1xf32> to vector<3x3xf32>
    %64 = arith.subf %60, %63 : vector<3x3xf32>
    %65 = math.exp %64 : vector<3x3xf32>
    %cst_46 = arith.constant dense<0.000000e+00> : vector<3xf32>
    %66 = vector.multi_reduction <add>, %65, %cst_46 [1] : vector<3x3xf32> to vector<3xf32>
    %67 = vector.shape_cast %66 : vector<3xf32> to vector<3x1xf32>
    %68 = tpu.reciprocal %67 {approx = true} : vector<3x1xf32> -> vector<3x1xf32>
    %69 = vector.broadcast %68 : vector<3x1xf32> to vector<3x3xf32>
    %70 = arith.mulf %65, %69 : vector<3x3xf32>
    %71 = arith.truncf %70 : vector<3x3xf32> to vector<3x3xbf16>
    %cst_47 = arith.constant dense<0.000000e+00> : vector<3x8xf32>
    %72 = tpu.matmul %71, %59, %cst_47 {dimension_numbers = #tpu.dot_dimension_numbers<[1], [0], [0], [1], [0, 0, 1, 1], [], []>} : vector<3x3xbf16>, vector<3x8xbf16>, vector<3x8xf32> -> vector<3x8xf32>
    %73 = arith.truncf %72 : vector<3x8xf32> to vector<3x8xbf16>
    %74 = vector.extract_strided_slice %14 {offsets = [0, 0], sizes = [8, 48], strides = [1, 1]} : vector<48x48xbf16> to vector<8x48xbf16>
    %cst_48 = arith.constant dense<0.000000e+00> : vector<3x48xf32>
    %75 = tpu.matmul %73, %74, %cst_48 {dimension_numbers = #tpu.dot_dimension_numbers<[1], [0], [0], [1], [0, 0, 1, 1], [], []>} : vector<3x8xbf16>, vector<8x48xbf16>, vector<3x48xf32> -> vector<3x48xf32>
    %76 = arith.addf %53, %75 : vector<3x48xf32>
    %77 = vector.extract_strided_slice %52 {offsets = [0, 8], sizes = [3, 8], strides = [1, 1]} : vector<3x144xf32> to vector<3x8xf32>
    %78 = arith.truncf %77 : vector<3x8xf32> to vector<3x8xbf16>
    %79 = vector.extract_strided_slice %52 {offsets = [0, 56], sizes = [3, 8], strides = [1, 1]} : vector<3x144xf32> to vector<3x8xf32>
    %80 = arith.truncf %79 : vector<3x8xf32> to vector<3x8xbf16>
    %81 = vector.extract_strided_slice %52 {offsets = [0, 104], sizes = [3, 8], strides = [1, 1]} : vector<3x144xf32> to vector<3x8xf32>
    %82 = arith.truncf %81 : vector<3x8xf32> to vector<3x8xbf16>
    %cst_49 = arith.constant dense<0.000000e+00> : vector<3x3xf32>
    %83 = tpu.matmul %78, %80, %cst_49 {dimension_numbers = #tpu.dot_dimension_numbers<[1], [1], [0], [0], [0, 0, 1, 0], [], []>} : vector<3x8xbf16>, vector<3x8xbf16>, vector<3x3xf32> -> vector<3x3xf32>
    %cst_50 = arith.constant dense<0xFF800000> : vector<3xf32>
    %84 = vector.multi_reduction <maximumf>, %83, %cst_50 [1] : vector<3x3xf32> to vector<3xf32>
    %85 = vector.shape_cast %84 : vector<3xf32> to vector<3x1xf32>
    %86 = vector.broadcast %85 : vector<3x1xf32> to vector<3x3xf32>
    %87 = arith.subf %83, %86 : vector<3x3xf32>
    %88 = math.exp %87 : vector<3x3xf32>
    %cst_51 = arith.constant dense<0.000000e+00> : vector<3xf32>
    %89 = vector.multi_reduction <add>, %88, %cst_51 [1] : vector<3x3xf32> to vector<3xf32>
    %90 = vector.shape_cast %89 : vector<3xf32> to vector<3x1xf32>
    %91 = tpu.reciprocal %90 {approx = true} : vector<3x1xf32> -> vector<3x1xf32>
    %92 = vector.broadcast %91 : vector<3x1xf32> to vector<3x3xf32>
    %93 = arith.mulf %88, %92 : vector<3x3xf32>
    %94 = arith.truncf %93 : vector<3x3xf32> to vector<3x3xbf16>
    %cst_52 = arith.constant dense<0.000000e+00> : vector<3x8xf32>
    %95 = tpu.matmul %94, %82, %cst_52 {dimension_numbers = #tpu.dot_dimension_numbers<[1], [0], [0], [1], [0, 0, 1, 1], [], []>} : vector<3x3xbf16>, vector<3x8xbf16>, vector<3x8xf32> -> vector<3x8xf32>
    %96 = arith.truncf %95 : vector<3x8xf32> to vector<3x8xbf16>
    %97 = vector.extract_strided_slice %14 {offsets = [8, 0], sizes = [8, 48], strides = [1, 1]} : vector<48x48xbf16> to vector<8x48xbf16>
    %cst_53 = arith.constant dense<0.000000e+00> : vector<3x48xf32>
    %98 = tpu.matmul %96, %97, %cst_53 {dimension_numbers = #tpu.dot_dimension_numbers<[1], [0], [0], [1], [0, 0, 1, 1], [], []>} : vector<3x8xbf16>, vector<8x48xbf16>, vector<3x48xf32> -> vector<3x48xf32>
    %99 = arith.addf %76, %98 : vector<3x48xf32>
    %100 = vector.extract_strided_slice %52 {offsets = [0, 16], sizes = [3, 8], strides = [1, 1]} : vector<3x144xf32> to vector<3x8xf32>
    %101 = arith.truncf %100 : vector<3x8xf32> to vector<3x8xbf16>
    %102 = vector.extract_strided_slice %52 {offsets = [0, 64], sizes = [3, 8], strides = [1, 1]} : vector<3x144xf32> to vector<3x8xf32>
    %103 = arith.truncf %102 : vector<3x8xf32> to vector<3x8xbf16>
    %104 = vector.extract_strided_slice %52 {offsets = [0, 112], sizes = [3, 8], strides = [1, 1]} : vector<3x144xf32> to vector<3x8xf32>
    %105 = arith.truncf %104 : vector<3x8xf32> to vector<3x8xbf16>
    %cst_54 = arith.constant dense<0.000000e+00> : vector<3x3xf32>
    %106 = tpu.matmul %101, %103, %cst_54 {dimension_numbers = #tpu.dot_dimension_numbers<[1], [1], [0], [0], [0, 0, 1, 0], [], []>} : vector<3x8xbf16>, vector<3x8xbf16>, vector<3x3xf32> -> vector<3x3xf32>
    %cst_55 = arith.constant dense<0xFF800000> : vector<3xf32>
    %107 = vector.multi_reduction <maximumf>, %106, %cst_55 [1] : vector<3x3xf32> to vector<3xf32>
    %108 = vector.shape_cast %107 : vector<3xf32> to vector<3x1xf32>
    %109 = vector.broadcast %108 : vector<3x1xf32> to vector<3x3xf32>
    %110 = arith.subf %106, %109 : vector<3x3xf32>
    %111 = math.exp %110 : vector<3x3xf32>
    %cst_56 = arith.constant dense<0.000000e+00> : vector<3xf32>
    %112 = vector.multi_reduction <add>, %111, %cst_56 [1] : vector<3x3xf32> to vector<3xf32>
    %113 = vector.shape_cast %112 : vector<3xf32> to vector<3x1xf32>
    %114 = tpu.reciprocal %113 {approx = true} : vector<3x1xf32> -> vector<3x1xf32>
    %115 = vector.broadcast %114 : vector<3x1xf32> to vector<3x3xf32>
    %116 = arith.mulf %111, %115 : vector<3x3xf32>
    %117 = arith.truncf %116 : vector<3x3xf32> to vector<3x3xbf16>
    %cst_57 = arith.constant dense<0.000000e+00> : vector<3x8xf32>
    %118 = tpu.matmul %117, %105, %cst_57 {dimension_numbers = #tpu.dot_dimension_numbers<[1], [0], [0], [1], [0, 0, 1, 1], [], []>} : vector<3x3xbf16>, vector<3x8xbf16>, vector<3x8xf32> -> vector<3x8xf32>
    %119 = arith.truncf %118 : vector<3x8xf32> to vector<3x8xbf16>
    %120 = vector.extract_strided_slice %14 {offsets = [16, 0], sizes = [8, 48], strides = [1, 1]} : vector<48x48xbf16> to vector<8x48xbf16>
    %cst_58 = arith.constant dense<0.000000e+00> : vector<3x48xf32>
    %121 = tpu.matmul %119, %120, %cst_58 {dimension_numbers = #tpu.dot_dimension_numbers<[1], [0], [0], [1], [0, 0, 1, 1], [], []>} : vector<3x8xbf16>, vector<8x48xbf16>, vector<3x48xf32> -> vector<3x48xf32>
    %122 = arith.addf %99, %121 : vector<3x48xf32>
    %123 = vector.extract_strided_slice %52 {offsets = [0, 24], sizes = [3, 8], strides = [1, 1]} : vector<3x144xf32> to vector<3x8xf32>
    %124 = arith.truncf %123 : vector<3x8xf32> to vector<3x8xbf16>
    %125 = vector.extract_strided_slice %52 {offsets = [0, 72], sizes = [3, 8], strides = [1, 1]} : vector<3x144xf32> to vector<3x8xf32>
    %126 = arith.truncf %125 : vector<3x8xf32> to vector<3x8xbf16>
    %127 = vector.extract_strided_slice %52 {offsets = [0, 120], sizes = [3, 8], strides = [1, 1]} : vector<3x144xf32> to vector<3x8xf32>
    %128 = arith.truncf %127 : vector<3x8xf32> to vector<3x8xbf16>
    %cst_59 = arith.constant dense<0.000000e+00> : vector<3x3xf32>
    %129 = tpu.matmul %124, %126, %cst_59 {dimension_numbers = #tpu.dot_dimension_numbers<[1], [1], [0], [0], [0, 0, 1, 0], [], []>} : vector<3x8xbf16>, vector<3x8xbf16>, vector<3x3xf32> -> vector<3x3xf32>
    %cst_60 = arith.constant dense<0xFF800000> : vector<3xf32>
    %130 = vector.multi_reduction <maximumf>, %129, %cst_60 [1] : vector<3x3xf32> to vector<3xf32>
    %131 = vector.shape_cast %130 : vector<3xf32> to vector<3x1xf32>
    %132 = vector.broadcast %131 : vector<3x1xf32> to vector<3x3xf32>
    %133 = arith.subf %129, %132 : vector<3x3xf32>
    %134 = math.exp %133 : vector<3x3xf32>
    %cst_61 = arith.constant dense<0.000000e+00> : vector<3xf32>
    %135 = vector.multi_reduction <add>, %134, %cst_61 [1] : vector<3x3xf32> to vector<3xf32>
    %136 = vector.shape_cast %135 : vector<3xf32> to vector<3x1xf32>
    %137 = tpu.reciprocal %136 {approx = true} : vector<3x1xf32> -> vector<3x1xf32>
    %138 = vector.broadcast %137 : vector<3x1xf32> to vector<3x3xf32>
    %139 = arith.mulf %134, %138 : vector<3x3xf32>
    %140 = arith.truncf %139 : vector<3x3xf32> to vector<3x3xbf16>
    %cst_62 = arith.constant dense<0.000000e+00> : vector<3x8xf32>
    %141 = tpu.matmul %140, %128, %cst_62 {dimension_numbers = #tpu.dot_dimension_numbers<[1], [0], [0], [1], [0, 0, 1, 1], [], []>} : vector<3x3xbf16>, vector<3x8xbf16>, vector<3x8xf32> -> vector<3x8xf32>
    %142 = arith.truncf %141 : vector<3x8xf32> to vector<3x8xbf16>
    %143 = vector.extract_strided_slice %14 {offsets = [24, 0], sizes = [8, 48], strides = [1, 1]} : vector<48x48xbf16> to vector<8x48xbf16>
    %cst_63 = arith.constant dense<0.000000e+00> : vector<3x48xf32>
    %144 = tpu.matmul %142, %143, %cst_63 {dimension_numbers = #tpu.dot_dimension_numbers<[1], [0], [0], [1], [0, 0, 1, 1], [], []>} : vector<3x8xbf16>, vector<8x48xbf16>, vector<3x48xf32> -> vector<3x48xf32>
    %145 = arith.addf %122, %144 : vector<3x48xf32>
    %146 = vector.extract_strided_slice %52 {offsets = [0, 32], sizes = [3, 8], strides = [1, 1]} : vector<3x144xf32> to vector<3x8xf32>
    %147 = arith.truncf %146 : vector<3x8xf32> to vector<3x8xbf16>
    %148 = vector.extract_strided_slice %52 {offsets = [0, 80], sizes = [3, 8], strides = [1, 1]} : vector<3x144xf32> to vector<3x8xf32>
    %149 = arith.truncf %148 : vector<3x8xf32> to vector<3x8xbf16>
    %150 = vector.extract_strided_slice %52 {offsets = [0, 128], sizes = [3, 8], strides = [1, 1]} : vector<3x144xf32> to vector<3x8xf32>
    %151 = arith.truncf %150 : vector<3x8xf32> to vector<3x8xbf16>
    %cst_64 = arith.constant dense<0.000000e+00> : vector<3x3xf32>
    %152 = tpu.matmul %147, %149, %cst_64 {dimension_numbers = #tpu.dot_dimension_numbers<[1], [1], [0], [0], [0, 0, 1, 0], [], []>} : vector<3x8xbf16>, vector<3x8xbf16>, vector<3x3xf32> -> vector<3x3xf32>
    %cst_65 = arith.constant dense<0xFF800000> : vector<3xf32>
    %153 = vector.multi_reduction <maximumf>, %152, %cst_65 [1] : vector<3x3xf32> to vector<3xf32>
    %154 = vector.shape_cast %153 : vector<3xf32> to vector<3x1xf32>
    %155 = vector.broadcast %154 : vector<3x1xf32> to vector<3x3xf32>
    %156 = arith.subf %152, %155 : vector<3x3xf32>
    %157 = math.exp %156 : vector<3x3xf32>
    %cst_66 = arith.constant dense<0.000000e+00> : vector<3xf32>
    %158 = vector.multi_reduction <add>, %157, %cst_66 [1] : vector<3x3xf32> to vector<3xf32>
    %159 = vector.shape_cast %158 : vector<3xf32> to vector<3x1xf32>
    %160 = tpu.reciprocal %159 {approx = true} : vector<3x1xf32> -> vector<3x1xf32>
    %161 = vector.broadcast %160 : vector<3x1xf32> to vector<3x3xf32>
    %162 = arith.mulf %157, %161 : vector<3x3xf32>
    %163 = arith.truncf %162 : vector<3x3xf32> to vector<3x3xbf16>
    %cst_67 = arith.constant dense<0.000000e+00> : vector<3x8xf32>
    %164 = tpu.matmul %163, %151, %cst_67 {dimension_numbers = #tpu.dot_dimension_numbers<[1], [0], [0], [1], [0, 0, 1, 1], [], []>} : vector<3x3xbf16>, vector<3x8xbf16>, vector<3x8xf32> -> vector<3x8xf32>
    %165 = arith.truncf %164 : vector<3x8xf32> to vector<3x8xbf16>
    %166 = vector.extract_strided_slice %14 {offsets = [32, 0], sizes = [8, 48], strides = [1, 1]} : vector<48x48xbf16> to vector<8x48xbf16>
    %cst_68 = arith.constant dense<0.000000e+00> : vector<3x48xf32>
    %167 = tpu.matmul %165, %166, %cst_68 {dimension_numbers = #tpu.dot_dimension_numbers<[1], [0], [0], [1], [0, 0, 1, 1], [], []>} : vector<3x8xbf16>, vector<8x48xbf16>, vector<3x48xf32> -> vector<3x48xf32>
    %168 = arith.addf %145, %167 : vector<3x48xf32>
    %169 = vector.extract_strided_slice %52 {offsets = [0, 40], sizes = [3, 8], strides = [1, 1]} : vector<3x144xf32> to vector<3x8xf32>
    %170 = arith.truncf %169 : vector<3x8xf32> to vector<3x8xbf16>
    %171 = vector.extract_strided_slice %52 {offsets = [0, 88], sizes = [3, 8], strides = [1, 1]} : vector<3x144xf32> to vector<3x8xf32>
    %172 = arith.truncf %171 : vector<3x8xf32> to vector<3x8xbf16>
    %173 = vector.extract_strided_slice %52 {offsets = [0, 136], sizes = [3, 8], strides = [1, 1]} : vector<3x144xf32> to vector<3x8xf32>
    %174 = arith.truncf %173 : vector<3x8xf32> to vector<3x8xbf16>
    %cst_69 = arith.constant dense<0.000000e+00> : vector<3x3xf32>
    %175 = tpu.matmul %170, %172, %cst_69 {dimension_numbers = #tpu.dot_dimension_numbers<[1], [1], [0], [0], [0, 0, 1, 0], [], []>} : vector<3x8xbf16>, vector<3x8xbf16>, vector<3x3xf32> -> vector<3x3xf32>
    %cst_70 = arith.constant dense<0xFF800000> : vector<3xf32>
    %176 = vector.multi_reduction <maximumf>, %175, %cst_70 [1] : vector<3x3xf32> to vector<3xf32>
    %177 = vector.shape_cast %176 : vector<3xf32> to vector<3x1xf32>
    %178 = vector.broadcast %177 : vector<3x1xf32> to vector<3x3xf32>
    %179 = arith.subf %175, %178 : vector<3x3xf32>
    %180 = math.exp %179 : vector<3x3xf32>
    %cst_71 = arith.constant dense<0.000000e+00> : vector<3xf32>
    %181 = vector.multi_reduction <add>, %180, %cst_71 [1] : vector<3x3xf32> to vector<3xf32>
    %182 = vector.shape_cast %181 : vector<3xf32> to vector<3x1xf32>
    %183 = tpu.reciprocal %182 {approx = true} : vector<3x1xf32> -> vector<3x1xf32>
    %184 = vector.broadcast %183 : vector<3x1xf32> to vector<3x3xf32>
    %185 = arith.mulf %180, %184 : vector<3x3xf32>
    %186 = arith.truncf %185 : vector<3x3xf32> to vector<3x3xbf16>
    %cst_72 = arith.constant dense<0.000000e+00> : vector<3x8xf32>
    %187 = tpu.matmul %186, %174, %cst_72 {dimension_numbers = #tpu.dot_dimension_numbers<[1], [0], [0], [1], [0, 0, 1, 1], [], []>} : vector<3x3xbf16>, vector<3x8xbf16>, vector<3x8xf32> -> vector<3x8xf32>
    %188 = arith.truncf %187 : vector<3x8xf32> to vector<3x8xbf16>
    %189 = vector.extract_strided_slice %14 {offsets = [40, 0], sizes = [8, 48], strides = [1, 1]} : vector<48x48xbf16> to vector<8x48xbf16>
    %cst_73 = arith.constant dense<0.000000e+00> : vector<3x48xf32>
    %190 = tpu.matmul %188, %189, %cst_73 {dimension_numbers = #tpu.dot_dimension_numbers<[1], [0], [0], [1], [0, 0, 1, 1], [], []>} : vector<3x8xbf16>, vector<8x48xbf16>, vector<3x48xf32> -> vector<3x48xf32>
    %191 = arith.addf %168, %190 : vector<3x48xf32>
    %192 = arith.addf %6, %191 : vector<3x48xf32>
    %193 = vector.broadcast %16 : vector<1x48xf32> to vector<3x48xf32>
    %194 = arith.addf %192, %193 : vector<3x48xf32>
    %cst_74 = arith.constant dense<0.000000e+00> : vector<3xf32>
    %195 = vector.multi_reduction <add>, %194, %cst_74 [1] : vector<3x48xf32> to vector<3xf32>
    %196 = vector.shape_cast %195 : vector<3xf32> to vector<3x1xf32>
    %cst_75 = arith.constant 4.800000e+01 : f32
    %197 = vector.broadcast %cst_75 : f32 to vector<3x1xf32>
    %198 = arith.divf %196, %197 : vector<3x1xf32>
    %199 = vector.broadcast %198 : vector<3x1xf32> to vector<3x48xf32>
    %200 = arith.subf %194, %199 : vector<3x48xf32>
    %201 = arith.mulf %200, %200 : vector<3x48xf32>
    %cst_76 = arith.constant dense<0.000000e+00> : vector<3xf32>
    %202 = vector.multi_reduction <add>, %201, %cst_76 [1] : vector<3x48xf32> to vector<3xf32>
    %203 = vector.shape_cast %202 : vector<3xf32> to vector<3x1xf32>
    %cst_77 = arith.constant 4.800000e+01 : f32
    %204 = vector.broadcast %cst_77 : f32 to vector<3x1xf32>
    %205 = arith.divf %203, %204 : vector<3x1xf32>
    %206 = vector.broadcast %198 : vector<3x1xf32> to vector<3x48xf32>
    %207 = arith.subf %194, %206 : vector<3x48xf32>
    %cst_78 = arith.constant 9.99999997E-7 : f32
    %208 = vector.broadcast %cst_78 : f32 to vector<3x1xf32>
    %209 = arith.addf %205, %208 : vector<3x1xf32>
    %210 = math.rsqrt %209 : vector<3x1xf32>
    %211 = vector.broadcast %210 : vector<3x1xf32> to vector<3x48xf32>
    %212 = arith.mulf %207, %211 : vector<3x48xf32>
    %213 = vector.broadcast %18 : vector<1x48xf32> to vector<3x48xf32>
    %214 = arith.mulf %212, %213 : vector<3x48xf32>
    %215 = vector.broadcast %20 : vector<1x48xf32> to vector<3x48xf32>
    %216 = arith.addf %214, %215 : vector<3x48xf32>
    %217 = arith.truncf %216 : vector<3x48xf32> to vector<3x48xbf16>
    %cst_79 = arith.constant dense<0.000000e+00> : vector<3x192xf32>
    %218 = tpu.matmul %217, %22, %cst_79 {dimension_numbers = #tpu.dot_dimension_numbers<[1], [0], [0], [1], [0, 0, 1, 1], [], []>} : vector<3x48xbf16>, vector<48x192xbf16>, vector<3x192xf32> -> vector<3x192xf32>
    %219 = vector.broadcast %24 : vector<1x192xf32> to vector<3x192xf32>
    %220 = arith.addf %218, %219 : vector<3x192xf32>
    %221 = arith.mulf %220, %220 : vector<3x192xf32>
    %222 = arith.mulf %220, %221 : vector<3x192xf32>
    %cst_80 = arith.constant 4.471500e-02 : f32
    %223 = vector.broadcast %cst_80 : f32 to vector<3x192xf32>
    %224 = arith.mulf %223, %222 : vector<3x192xf32>
    %225 = arith.addf %220, %224 : vector<3x192xf32>
    %cst_81 = arith.constant 0.797884583 : f32
    %226 = vector.broadcast %cst_81 : f32 to vector<3x192xf32>
    %227 = arith.mulf %226, %225 : vector<3x192xf32>
    %228 = math.tanh %227 : vector<3x192xf32>
    %cst_82 = arith.constant 1.000000e+00 : f32
    %229 = vector.broadcast %cst_82 : f32 to vector<3x192xf32>
    %230 = arith.addf %229, %228 : vector<3x192xf32>
    %cst_83 = arith.constant 5.000000e-01 : f32
    %231 = vector.broadcast %cst_83 : f32 to vector<3x192xf32>
    %232 = arith.mulf %231, %230 : vector<3x192xf32>
    %233 = arith.mulf %220, %232 : vector<3x192xf32>
    %234 = arith.truncf %233 : vector<3x192xf32> to vector<3x192xbf16>
    %cst_84 = arith.constant dense<0.000000e+00> : vector<3x48xf32>
    %235 = tpu.matmul %234, %26, %cst_84 {dimension_numbers = #tpu.dot_dimension_numbers<[1], [0], [0], [1], [0, 0, 1, 1], [], []>} : vector<3x192xbf16>, vector<192x48xbf16>, vector<3x48xf32> -> vector<3x48xf32>
    %236 = vector.broadcast %28 : vector<1x48xf32> to vector<3x48xf32>
    %237 = arith.addf %235, %236 : vector<3x48xf32>
    %238 = arith.addf %194, %237 : vector<3x48xf32>
    %c0_85 = arith.constant 0 : index
    %c0_86 = arith.constant 0 : index
    %239 = vector.load %arg20[%c0_85, %c0_86] : memref<3x48xf32, #tpu.memory_space<vmem>>, vector<3x48xf32>
    tpu.vector_store %arg20[%c0_85, %c0_86], %238 {strides = array<i32>} : memref<3x48xf32, #tpu.memory_space<vmem>>, vector<3x48xf32>,
    %c1_i32 = arith.constant 1 : i32
    %240 = arith.cmpi eq, %arg1, %c1_i32 : i32
    %241 = arith.extui %240 : i1 to i32
    %c0_i32_87 = arith.constant 0 : i32
    %242 = arith.cmpi ne, %241, %c0_i32_87 : i32
    scf.if %242 {
      %c0_88 = arith.constant 0 : index
      %c0_89 = arith.constant 0 : index
      %243 = vector.load %arg15[%c0_88, %c0_89] : memref<1x48xf32, #tpu.memory_space<vmem>>, vector<1x48xf32>
      %c0_90 = arith.constant 0 : index
      %c0_91 = arith.constant 0 : index
      %244 = vector.load %arg16[%c0_90, %c0_91] : memref<1x48xf32, #tpu.memory_space<vmem>>, vector<1x48xf32>
      %cst_92 = arith.constant dense<0.000000e+00> : vector<3xf32>
      %245 = vector.multi_reduction <add>, %238, %cst_92 [1] : vector<3x48xf32> to vector<3xf32>
      %246 = vector.shape_cast %245 : vector<3xf32> to vector<3x1xf32>
      %cst_93 = arith.constant 4.800000e+01 : f32
      %247 = vector.broadcast %cst_93 : f32 to vector<3x1xf32>
      %248 = arith.divf %246, %247 : vector<3x1xf32>
      %249 = vector.broadcast %248 : vector<3x1xf32> to vector<3x48xf32>
      %250 = arith.subf %238, %249 : vector<3x48xf32>
      %251 = arith.mulf %250, %250 : vector<3x48xf32>
      %cst_94 = arith.constant dense<0.000000e+00> : vector<3xf32>
      %252 = vector.multi_reduction <add>, %251, %cst_94 [1] : vector<3x48xf32> to vector<3xf32>
      %253 = vector.shape_cast %252 : vector<3xf32> to vector<3x1xf32>
      %cst_95 = arith.constant 4.800000e+01 : f32
      %254 = vector.broadcast %cst_95 : f32 to vector<3x1xf32>
      %255 = arith.divf %253, %254 : vector<3x1xf32>
      %256 = vector.broadcast %248 : vector<3x1xf32> to vector<3x48xf32>
      %257 = arith.subf %238, %256 : vector<3x48xf32>
      %cst_96 = arith.constant 9.99999997E-7 : f32
      %258 = vector.broadcast %cst_96 : f32 to vector<3x1xf32>
      %259 = arith.addf %255, %258 : vector<3x1xf32>
      %260 = math.rsqrt %259 : vector<3x1xf32>
      %261 = vector.broadcast %260 : vector<3x1xf32> to vector<3x48xf32>
      %262 = arith.mulf %257, %261 : vector<3x48xf32>
      %263 = vector.broadcast %243 : vector<1x48xf32> to vector<3x48xf32>
      %264 = arith.mulf %262, %263 : vector<3x48xf32>
      %265 = vector.broadcast %244 : vector<1x48xf32> to vector<3x48xf32>
      %266 = arith.addf %264, %265 : vector<3x48xf32>
      %267 = arith.truncf %266 : vector<3x48xf32> to vector<3x48xbf16>
      %c0_97 = arith.constant 0 : index
      %c0_98 = arith.constant 0 : index
      %268 = vector.load %arg17[%c0_97, %c0_98] : memref<48x32xbf16, #tpu.memory_space<vmem>>, vector<48x32xbf16>
      %cst_99 = arith.constant dense<0.000000e+00> : vector<3x32xf32>
      %269 = tpu.matmul %267, %268, %cst_99 {dimension_numbers = #tpu.dot_dimension_numbers<[1], [0], [0], [1], [0, 0, 1, 1], [], []>} : vector<3x48xbf16>, vector<48x32xbf16>, vector<3x32xf32> -> vector<3x32xf32>
      %c0_100 = arith.constant 0 : index
      %c0_101 = arith.constant 0 : index
      %270 = vector.load %arg18[%c0_100, %c0_101] : memref<1x32xf32, #tpu.memory_space<vmem>>, vector<1x32xf32>
      %271 = vector.broadcast %270 : vector<1x32xf32> to vector<3x32xf32>
      %272 = arith.addf %269, %271 : vector<3x32xf32>
      %c0_102 = arith.constant 0 : index
      %c0_103 = arith.constant 0 : index
      %c0_104 = arith.constant 0 : index
      %273 = vector.load %arg19[%c0_102, %c0_103, %c0_104] : memref<1x3x32xf32, #tpu.memory_space<vmem>>, vector<1x3x32xf32>
      %274 = vector.shape_cast %273 : vector<1x3x32xf32> to vector<3x32xf32>
      %275 = vector.shape_cast %272 : vector<3x32xf32> to vector<1x3x32xf32>
      tpu.vector_store %arg19[%c0_102, %c0_103, %c0_104], %275 {strides = array<i32>} : memref<1x3x32xf32, #tpu.memory_space<vmem>>, vector<1x3x32xf32>,
    } else {
    }
    return
  }
  func.func @transform_0(%arg0: i32, %arg1: i32) -> (i32, i32, i32) {
    %c0_i32 = arith.constant 0 : i32
    %c0_i32_0 = arith.constant 0 : i32
    %c0_i32_1 = arith.constant 0 : i32
    return %arg0, %c0_i32, %c0_i32_0 : i32, i32, i32
  }
  func.func @transform_1(%arg0: i32, %arg1: i32) -> (i32, i32, i32) {
    %c0_i32 = arith.constant 0 : i32
    %c0_i32_0 = arith.constant 0 : i32
    %c0_i32_1 = arith.constant 0 : i32
    return %arg0, %c0_i32, %c0_i32_0 : i32, i32, i32
  }
  func.func @transform_2(%arg0: i32, %arg1: i32) -> (i32, i32, i32) {
    %c0_i32 = arith.constant 0 : i32
    %c0_i32_0 = arith.constant 0 : i32
    %c0_i32_1 = arith.constant 0 : i32
    return %arg1, %c0_i32, %c0_i32_0 : i32, i32, i32
  }
  func.func @transform_3(%arg0: i32, %arg1: i32) -> (i32, i32, i32) {
    %c0_i32 = arith.constant 0 : i32
    %c0_i32_0 = arith.constant 0 : i32
    %c0_i32_1 = arith.constant 0 : i32
    return %arg1, %c0_i32, %c0_i32_0 : i32, i32, i32
  }
  func.func @transform_4(%arg0: i32, %arg1: i32) -> (i32, i32, i32) {
    %c0_i32 = arith.constant 0 : i32
    %c0_i32_0 = arith.constant 0 : i32
    %c0_i32_1 = arith.constant 0 : i32
    return %arg1, %c0_i32, %c0_i32_0 : i32, i32, i32
  }
  func.func @transform_5(%arg0: i32, %arg1: i32) -> (i32, i32, i32) {
    %c0_i32 = arith.constant 0 : i32
    %c0_i32_0 = arith.constant 0 : i32
    %c0_i32_1 = arith.constant 0 : i32
    return %arg1, %c0_i32, %c0_i32_0 : i32, i32, i32
  }
  func.func @transform_6(%arg0: i32, %arg1: i32) -> (i32, i32, i32) {
    %c0_i32 = arith.constant 0 : i32
    %c0_i32_0 = arith.constant 0 : i32
    %c0_i32_1 = arith.constant 0 : i32
    return %arg1, %c0_i32, %c0_i32_0 : i32, i32, i32
  }
  func.func @transform_7(%arg0: i32, %arg1: i32) -> (i32, i32, i32) {
    %c0_i32 = arith.constant 0 : i32
    %c0_i32_0 = arith.constant 0 : i32
    %c0_i32_1 = arith.constant 0 : i32
    return %arg1, %c0_i32, %c0_i32_0 : i32, i32, i32
  }
  func.func @transform_8(%arg0: i32, %arg1: i32) -> (i32, i32, i32) {
    %c0_i32 = arith.constant 0 : i32
    %c0_i32_0 = arith.constant 0 : i32
    %c0_i32_1 = arith.constant 0 : i32
    return %arg1, %c0_i32, %c0_i32_0 : i32, i32, i32
  }
  func.func @transform_9(%arg0: i32, %arg1: i32) -> (i32, i32, i32) {
    %c0_i32 = arith.constant 0 : i32
    %c0_i32_0 = arith.constant 0 : i32
    %c0_i32_1 = arith.constant 0 : i32
    return %arg1, %c0_i32, %c0_i32_0 : i32, i32, i32
  }
  func.func @transform_10(%arg0: i32, %arg1: i32) -> (i32, i32, i32) {
    %c0_i32 = arith.constant 0 : i32
    %c0_i32_0 = arith.constant 0 : i32
    %c0_i32_1 = arith.constant 0 : i32
    return %arg1, %c0_i32, %c0_i32_0 : i32, i32, i32
  }
  func.func @transform_11(%arg0: i32, %arg1: i32) -> (i32, i32, i32) {
    %c0_i32 = arith.constant 0 : i32
    %c0_i32_0 = arith.constant 0 : i32
    %c0_i32_1 = arith.constant 0 : i32
    return %arg1, %c0_i32, %c0_i32_0 : i32, i32, i32
  }
  func.func @transform_12(%arg0: i32, %arg1: i32) -> (i32, i32, i32) {
    %c0_i32 = arith.constant 0 : i32
    %c0_i32_0 = arith.constant 0 : i32
    %c0_i32_1 = arith.constant 0 : i32
    return %arg1, %c0_i32, %c0_i32_0 : i32, i32, i32
  }
  func.func @transform_13(%arg0: i32, %arg1: i32) -> (i32, i32) {
    %c0_i32 = arith.constant 0 : i32
    %c0_i32_0 = arith.constant 0 : i32
    %c0_i32_1 = arith.constant 0 : i32
    return %c0_i32, %c0_i32_0 : i32, i32
  }
  func.func @transform_14(%arg0: i32, %arg1: i32) -> (i32, i32) {
    %c0_i32 = arith.constant 0 : i32
    %c0_i32_0 = arith.constant 0 : i32
    %c0_i32_1 = arith.constant 0 : i32
    return %c0_i32, %c0_i32_0 : i32, i32
  }
  func.func @transform_15(%arg0: i32, %arg1: i32) -> (i32, i32) {
    %c0_i32 = arith.constant 0 : i32
    %c0_i32_0 = arith.constant 0 : i32
    %c0_i32_1 = arith.constant 0 : i32
    return %c0_i32, %c0_i32_0 : i32, i32
  }
  func.func @transform_16(%arg0: i32, %arg1: i32) -> (i32, i32) {
    %c0_i32 = arith.constant 0 : i32
    %c0_i32_0 = arith.constant 0 : i32
    %c0_i32_1 = arith.constant 0 : i32
    return %c0_i32, %c0_i32_0 : i32, i32
  }
  func.func @transform_17(%arg0: i32, %arg1: i32) -> (i32, i32, i32) {
    %c0_i32 = arith.constant 0 : i32
    %c0_i32_0 = arith.constant 0 : i32
    %c0_i32_1 = arith.constant 0 : i32
    return %arg0, %c0_i32, %c0_i32_0 : i32, i32, i32
  }
}

module attributes {stable_mosaic.version = 11 : i64} {
  func.func @_decoder_stack_kernel(%arg0: i32, %arg1: i32, %arg2: memref<1x9x32xf32, #tpu.memory_space<vmem>>, %arg3: memref<1x9x32xf32, #tpu.memory_space<vmem>>, %arg4: memref<1x1x32xf32, #tpu.memory_space<vmem>>, %arg5: memref<1x1x32xf32, #tpu.memory_space<vmem>>, %arg6: memref<1x32x96xbf16, #tpu.memory_space<vmem>>, %arg7: memref<1x32x32xbf16, #tpu.memory_space<vmem>>, %arg8: memref<1x1x32xf32, #tpu.memory_space<vmem>>, %arg9: memref<1x1x32xf32, #tpu.memory_space<vmem>>, %arg10: memref<1x1x32xf32, #tpu.memory_space<vmem>>, %arg11: memref<1x32x128xbf16, #tpu.memory_space<vmem>>, %arg12: memref<1x1x128xf32, #tpu.memory_space<vmem>>, %arg13: memref<1x128x32xbf16, #tpu.memory_space<vmem>>, %arg14: memref<1x1x32xf32, #tpu.memory_space<vmem>>, %arg15: memref<1x32xf32, #tpu.memory_space<vmem>>, %arg16: memref<1x32xf32, #tpu.memory_space<vmem>>, %arg17: memref<32x24xbf16, #tpu.memory_space<vmem>>, %arg18: memref<1x24xf32, #tpu.memory_space<vmem>>, %arg19: memref<1x9x24xf32, #tpu.memory_space<vmem>>, %arg20: memref<9x32xf32, #tpu.memory_space<vmem>>) attributes {dimension_semantics = [#tpu.dimension_semantics<parallel>, #tpu.dimension_semantics<arbitrary>], iteration_bounds = array<i64: 2, 2>, scalar_prefetch = 0 : i64, scratch_operands = 1 : i64, tpu.core_type = #tpu.core_type<tc>, window_params = [{transform_indices = @transform_0, window_bounds = array<i64: 1, 9, 32>}, {transform_indices = @transform_1, window_bounds = array<i64: 1, 9, 32>}, {transform_indices = @transform_2, window_bounds = array<i64: 1, 1, 32>}, {transform_indices = @transform_3, window_bounds = array<i64: 1, 1, 32>}, {transform_indices = @transform_4, window_bounds = array<i64: 1, 32, 96>}, {transform_indices = @transform_5, window_bounds = array<i64: 1, 32, 32>}, {transform_indices = @transform_6, window_bounds = array<i64: 1, 1, 32>}, {transform_indices = @transform_7, window_bounds = array<i64: 1, 1, 32>}, {transform_indices = @transform_8, window_bounds = array<i64: 1, 1, 32>}, {transform_indices = @transform_9, window_bounds = array<i64: 1, 32, 128>}, {transform_indices = @transform_10, window_bounds = array<i64: 1, 1, 128>}, {transform_indices = @transform_11, window_bounds = array<i64: 1, 128, 32>}, {transform_indices = @transform_12, window_bounds = array<i64: 1, 1, 32>}, {pipeline_mode = #tpu.pipeline_mode<synchronous>, transform_indices = @transform_13, window_bounds = array<i64: 1, 32>}, {pipeline_mode = #tpu.pipeline_mode<synchronous>, transform_indices = @transform_14, window_bounds = array<i64: 1, 32>}, {pipeline_mode = #tpu.pipeline_mode<synchronous>, transform_indices = @transform_15, window_bounds = array<i64: 32, 24>}, {pipeline_mode = #tpu.pipeline_mode<synchronous>, transform_indices = @transform_16, window_bounds = array<i64: 1, 24>}, {transform_indices = @transform_17, window_bounds = array<i64: 1, 9, 24>}]} {
    %c0_i32 = arith.constant 0 : i32
    %0 = arith.cmpi eq, %arg1, %c0_i32 : i32
    %1 = arith.extui %0 : i1 to i32
    %c0_i32_0 = arith.constant 0 : i32
    %2 = arith.cmpi ne, %1, %c0_i32_0 : i32
    scf.if %2 {
      %c0_78 = arith.constant 0 : index
      %c0_79 = arith.constant 0 : index
      %c0_80 = arith.constant 0 : index
      %197 = vector.load %arg2[%c0_78, %c0_79, %c0_80] : memref<1x9x32xf32, #tpu.memory_space<vmem>>, vector<1x9x32xf32>
      %198 = vector.shape_cast %197 : vector<1x9x32xf32> to vector<9x32xf32>
      %c0_81 = arith.constant 0 : index
      %c0_82 = arith.constant 0 : index
      %199 = vector.load %arg20[%c0_81, %c0_82] : memref<9x32xf32, #tpu.memory_space<vmem>>, vector<9x32xf32>
      tpu.vector_store %arg20[%c0_81, %c0_82], %198 {strides = array<i32>} : memref<9x32xf32, #tpu.memory_space<vmem>>, vector<9x32xf32>,
    } else {
    }
    %c0 = arith.constant 0 : index
    %c0_1 = arith.constant 0 : index
    %3 = vector.load %arg20[%c0, %c0_1] : memref<9x32xf32, #tpu.memory_space<vmem>>, vector<9x32xf32>
    %c0_2 = arith.constant 0 : index
    %c0_3 = arith.constant 0 : index
    %c0_4 = arith.constant 0 : index
    %4 = vector.load %arg3[%c0_2, %c0_3, %c0_4] : memref<1x9x32xf32, #tpu.memory_space<vmem>>, vector<1x9x32xf32>
    %5 = vector.shape_cast %4 : vector<1x9x32xf32> to vector<9x32xf32>
    %6 = arith.addf %3, %5 : vector<9x32xf32>
    %c0_5 = arith.constant 0 : index
    %c0_6 = arith.constant 0 : index
    %c0_7 = arith.constant 0 : index
    %7 = vector.load %arg4[%c0_5, %c0_6, %c0_7] : memref<1x1x32xf32, #tpu.memory_space<vmem>>, vector<1x1x32xf32>
    %8 = vector.shape_cast %7 : vector<1x1x32xf32> to vector<1x32xf32>
    %c0_8 = arith.constant 0 : index
    %c0_9 = arith.constant 0 : index
    %c0_10 = arith.constant 0 : index
    %9 = vector.load %arg5[%c0_8, %c0_9, %c0_10] : memref<1x1x32xf32, #tpu.memory_space<vmem>>, vector<1x1x32xf32>
    %10 = vector.shape_cast %9 : vector<1x1x32xf32> to vector<1x32xf32>
    %c0_11 = arith.constant 0 : index
    %c0_12 = arith.constant 0 : index
    %c0_13 = arith.constant 0 : index
    %11 = vector.load %arg6[%c0_11, %c0_12, %c0_13] : memref<1x32x96xbf16, #tpu.memory_space<vmem>>, vector<1x32x96xbf16>
    %12 = vector.shape_cast %11 : vector<1x32x96xbf16> to vector<32x96xbf16>
    %c0_14 = arith.constant 0 : index
    %c0_15 = arith.constant 0 : index
    %c0_16 = arith.constant 0 : index
    %13 = vector.load %arg7[%c0_14, %c0_15, %c0_16] : memref<1x32x32xbf16, #tpu.memory_space<vmem>>, vector<1x32x32xbf16>
    %14 = vector.shape_cast %13 : vector<1x32x32xbf16> to vector<32x32xbf16>
    %c0_17 = arith.constant 0 : index
    %c0_18 = arith.constant 0 : index
    %c0_19 = arith.constant 0 : index
    %15 = vector.load %arg8[%c0_17, %c0_18, %c0_19] : memref<1x1x32xf32, #tpu.memory_space<vmem>>, vector<1x1x32xf32>
    %16 = vector.shape_cast %15 : vector<1x1x32xf32> to vector<1x32xf32>
    %c0_20 = arith.constant 0 : index
    %c0_21 = arith.constant 0 : index
    %c0_22 = arith.constant 0 : index
    %17 = vector.load %arg9[%c0_20, %c0_21, %c0_22] : memref<1x1x32xf32, #tpu.memory_space<vmem>>, vector<1x1x32xf32>
    %18 = vector.shape_cast %17 : vector<1x1x32xf32> to vector<1x32xf32>
    %c0_23 = arith.constant 0 : index
    %c0_24 = arith.constant 0 : index
    %c0_25 = arith.constant 0 : index
    %19 = vector.load %arg10[%c0_23, %c0_24, %c0_25] : memref<1x1x32xf32, #tpu.memory_space<vmem>>, vector<1x1x32xf32>
    %20 = vector.shape_cast %19 : vector<1x1x32xf32> to vector<1x32xf32>
    %c0_26 = arith.constant 0 : index
    %c0_27 = arith.constant 0 : index
    %c0_28 = arith.constant 0 : index
    %21 = vector.load %arg11[%c0_26, %c0_27, %c0_28] : memref<1x32x128xbf16, #tpu.memory_space<vmem>>, vector<1x32x128xbf16>
    %22 = vector.shape_cast %21 : vector<1x32x128xbf16> to vector<32x128xbf16>
    %c0_29 = arith.constant 0 : index
    %c0_30 = arith.constant 0 : index
    %c0_31 = arith.constant 0 : index
    %23 = vector.load %arg12[%c0_29, %c0_30, %c0_31] : memref<1x1x128xf32, #tpu.memory_space<vmem>>, vector<1x1x128xf32>
    %24 = vector.shape_cast %23 : vector<1x1x128xf32> to vector<1x128xf32>
    %c0_32 = arith.constant 0 : index
    %c0_33 = arith.constant 0 : index
    %c0_34 = arith.constant 0 : index
    %25 = vector.load %arg13[%c0_32, %c0_33, %c0_34] : memref<1x128x32xbf16, #tpu.memory_space<vmem>>, vector<1x128x32xbf16>
    %26 = vector.shape_cast %25 : vector<1x128x32xbf16> to vector<128x32xbf16>
    %c0_35 = arith.constant 0 : index
    %c0_36 = arith.constant 0 : index
    %c0_37 = arith.constant 0 : index
    %27 = vector.load %arg14[%c0_35, %c0_36, %c0_37] : memref<1x1x32xf32, #tpu.memory_space<vmem>>, vector<1x1x32xf32>
    %28 = vector.shape_cast %27 : vector<1x1x32xf32> to vector<1x32xf32>
    %cst = arith.constant dense<0.000000e+00> : vector<9xf32>
    %29 = vector.multi_reduction <add>, %6, %cst [1] : vector<9x32xf32> to vector<9xf32>
    %30 = vector.shape_cast %29 : vector<9xf32> to vector<9x1xf32>
    %cst_38 = arith.constant 3.200000e+01 : f32
    %31 = vector.broadcast %cst_38 : f32 to vector<9x1xf32>
    %32 = arith.divf %30, %31 : vector<9x1xf32>
    %33 = vector.broadcast %32 : vector<9x1xf32> to vector<9x32xf32>
    %34 = arith.subf %6, %33 : vector<9x32xf32>
    %35 = arith.mulf %34, %34 : vector<9x32xf32>
    %cst_39 = arith.constant dense<0.000000e+00> : vector<9xf32>
    %36 = vector.multi_reduction <add>, %35, %cst_39 [1] : vector<9x32xf32> to vector<9xf32>
    %37 = vector.shape_cast %36 : vector<9xf32> to vector<9x1xf32>
    %cst_40 = arith.constant 3.200000e+01 : f32
    %38 = vector.broadcast %cst_40 : f32 to vector<9x1xf32>
    %39 = arith.divf %37, %38 : vector<9x1xf32>
    %40 = vector.broadcast %32 : vector<9x1xf32> to vector<9x32xf32>
    %41 = arith.subf %6, %40 : vector<9x32xf32>
    %cst_41 = arith.constant 9.99999997E-7 : f32
    %42 = vector.broadcast %cst_41 : f32 to vector<9x1xf32>
    %43 = arith.addf %39, %42 : vector<9x1xf32>
    %44 = math.rsqrt %43 : vector<9x1xf32>
    %45 = vector.broadcast %44 : vector<9x1xf32> to vector<9x32xf32>
    %46 = arith.mulf %41, %45 : vector<9x32xf32>
    %47 = vector.broadcast %8 : vector<1x32xf32> to vector<9x32xf32>
    %48 = arith.mulf %46, %47 : vector<9x32xf32>
    %49 = vector.broadcast %10 : vector<1x32xf32> to vector<9x32xf32>
    %50 = arith.addf %48, %49 : vector<9x32xf32>
    %51 = arith.truncf %50 : vector<9x32xf32> to vector<9x32xbf16>
    %cst_42 = arith.constant dense<0.000000e+00> : vector<9x96xf32>
    %52 = tpu.matmul %51, %12, %cst_42 {dimension_numbers = #tpu.dot_dimension_numbers<[1], [0], [0], [1], [0, 0, 1, 1], [], []>} : vector<9x32xbf16>, vector<32x96xbf16>, vector<9x96xf32> -> vector<9x96xf32>
    %cst_43 = arith.constant 0.000000e+00 : f32
    %53 = vector.broadcast %cst_43 : f32 to vector<9x32xf32>
    %54 = vector.extract_strided_slice %52 {offsets = [0, 0], sizes = [9, 8], strides = [1, 1]} : vector<9x96xf32> to vector<9x8xf32>
    %55 = arith.truncf %54 : vector<9x8xf32> to vector<9x8xbf16>
    %56 = vector.extract_strided_slice %52 {offsets = [0, 32], sizes = [9, 8], strides = [1, 1]} : vector<9x96xf32> to vector<9x8xf32>
    %57 = arith.truncf %56 : vector<9x8xf32> to vector<9x8xbf16>
    %58 = vector.extract_strided_slice %52 {offsets = [0, 64], sizes = [9, 8], strides = [1, 1]} : vector<9x96xf32> to vector<9x8xf32>
    %59 = arith.truncf %58 : vector<9x8xf32> to vector<9x8xbf16>
    %cst_44 = arith.constant dense<0.000000e+00> : vector<9x9xf32>
    %60 = tpu.matmul %55, %57, %cst_44 {dimension_numbers = #tpu.dot_dimension_numbers<[1], [1], [0], [0], [0, 0, 1, 0], [], []>} : vector<9x8xbf16>, vector<9x8xbf16>, vector<9x9xf32> -> vector<9x9xf32>
    %cst_45 = arith.constant dense<0xFF800000> : vector<9xf32>
    %61 = vector.multi_reduction <maximumf>, %60, %cst_45 [1] : vector<9x9xf32> to vector<9xf32>
    %62 = vector.shape_cast %61 : vector<9xf32> to vector<9x1xf32>
    %63 = vector.broadcast %62 : vector<9x1xf32> to vector<9x9xf32>
    %64 = arith.subf %60, %63 : vector<9x9xf32>
    %65 = math.exp %64 : vector<9x9xf32>
    %cst_46 = arith.constant dense<0.000000e+00> : vector<9xf32>
    %66 = vector.multi_reduction <add>, %65, %cst_46 [1] : vector<9x9xf32> to vector<9xf32>
    %67 = vector.shape_cast %66 : vector<9xf32> to vector<9x1xf32>
    %68 = tpu.reciprocal %67 {approx = true} : vector<9x1xf32> -> vector<9x1xf32>
    %69 = vector.broadcast %68 : vector<9x1xf32> to vector<9x9xf32>
    %70 = arith.mulf %65, %69 : vector<9x9xf32>
    %71 = arith.truncf %70 : vector<9x9xf32> to vector<9x9xbf16>
    %cst_47 = arith.constant dense<0.000000e+00> : vector<9x8xf32>
    %72 = tpu.matmul %71, %59, %cst_47 {dimension_numbers = #tpu.dot_dimension_numbers<[1], [0], [0], [1], [0, 0, 1, 1], [], []>} : vector<9x9xbf16>, vector<9x8xbf16>, vector<9x8xf32> -> vector<9x8xf32>
    %73 = arith.truncf %72 : vector<9x8xf32> to vector<9x8xbf16>
    %74 = vector.extract_strided_slice %14 {offsets = [0, 0], sizes = [8, 32], strides = [1, 1]} : vector<32x32xbf16> to vector<8x32xbf16>
    %cst_48 = arith.constant dense<0.000000e+00> : vector<9x32xf32>
    %75 = tpu.matmul %73, %74, %cst_48 {dimension_numbers = #tpu.dot_dimension_numbers<[1], [0], [0], [1], [0, 0, 1, 1], [], []>} : vector<9x8xbf16>, vector<8x32xbf16>, vector<9x32xf32> -> vector<9x32xf32>
    %76 = arith.addf %53, %75 : vector<9x32xf32>
    %77 = vector.extract_strided_slice %52 {offsets = [0, 8], sizes = [9, 8], strides = [1, 1]} : vector<9x96xf32> to vector<9x8xf32>
    %78 = arith.truncf %77 : vector<9x8xf32> to vector<9x8xbf16>
    %79 = vector.extract_strided_slice %52 {offsets = [0, 40], sizes = [9, 8], strides = [1, 1]} : vector<9x96xf32> to vector<9x8xf32>
    %80 = arith.truncf %79 : vector<9x8xf32> to vector<9x8xbf16>
    %81 = vector.extract_strided_slice %52 {offsets = [0, 72], sizes = [9, 8], strides = [1, 1]} : vector<9x96xf32> to vector<9x8xf32>
    %82 = arith.truncf %81 : vector<9x8xf32> to vector<9x8xbf16>
    %cst_49 = arith.constant dense<0.000000e+00> : vector<9x9xf32>
    %83 = tpu.matmul %78, %80, %cst_49 {dimension_numbers = #tpu.dot_dimension_numbers<[1], [1], [0], [0], [0, 0, 1, 0], [], []>} : vector<9x8xbf16>, vector<9x8xbf16>, vector<9x9xf32> -> vector<9x9xf32>
    %cst_50 = arith.constant dense<0xFF800000> : vector<9xf32>
    %84 = vector.multi_reduction <maximumf>, %83, %cst_50 [1] : vector<9x9xf32> to vector<9xf32>
    %85 = vector.shape_cast %84 : vector<9xf32> to vector<9x1xf32>
    %86 = vector.broadcast %85 : vector<9x1xf32> to vector<9x9xf32>
    %87 = arith.subf %83, %86 : vector<9x9xf32>
    %88 = math.exp %87 : vector<9x9xf32>
    %cst_51 = arith.constant dense<0.000000e+00> : vector<9xf32>
    %89 = vector.multi_reduction <add>, %88, %cst_51 [1] : vector<9x9xf32> to vector<9xf32>
    %90 = vector.shape_cast %89 : vector<9xf32> to vector<9x1xf32>
    %91 = tpu.reciprocal %90 {approx = true} : vector<9x1xf32> -> vector<9x1xf32>
    %92 = vector.broadcast %91 : vector<9x1xf32> to vector<9x9xf32>
    %93 = arith.mulf %88, %92 : vector<9x9xf32>
    %94 = arith.truncf %93 : vector<9x9xf32> to vector<9x9xbf16>
    %cst_52 = arith.constant dense<0.000000e+00> : vector<9x8xf32>
    %95 = tpu.matmul %94, %82, %cst_52 {dimension_numbers = #tpu.dot_dimension_numbers<[1], [0], [0], [1], [0, 0, 1, 1], [], []>} : vector<9x9xbf16>, vector<9x8xbf16>, vector<9x8xf32> -> vector<9x8xf32>
    %96 = arith.truncf %95 : vector<9x8xf32> to vector<9x8xbf16>
    %97 = vector.extract_strided_slice %14 {offsets = [8, 0], sizes = [8, 32], strides = [1, 1]} : vector<32x32xbf16> to vector<8x32xbf16>
    %cst_53 = arith.constant dense<0.000000e+00> : vector<9x32xf32>
    %98 = tpu.matmul %96, %97, %cst_53 {dimension_numbers = #tpu.dot_dimension_numbers<[1], [0], [0], [1], [0, 0, 1, 1], [], []>} : vector<9x8xbf16>, vector<8x32xbf16>, vector<9x32xf32> -> vector<9x32xf32>
    %99 = arith.addf %76, %98 : vector<9x32xf32>
    %100 = vector.extract_strided_slice %52 {offsets = [0, 16], sizes = [9, 8], strides = [1, 1]} : vector<9x96xf32> to vector<9x8xf32>
    %101 = arith.truncf %100 : vector<9x8xf32> to vector<9x8xbf16>
    %102 = vector.extract_strided_slice %52 {offsets = [0, 48], sizes = [9, 8], strides = [1, 1]} : vector<9x96xf32> to vector<9x8xf32>
    %103 = arith.truncf %102 : vector<9x8xf32> to vector<9x8xbf16>
    %104 = vector.extract_strided_slice %52 {offsets = [0, 80], sizes = [9, 8], strides = [1, 1]} : vector<9x96xf32> to vector<9x8xf32>
    %105 = arith.truncf %104 : vector<9x8xf32> to vector<9x8xbf16>
    %cst_54 = arith.constant dense<0.000000e+00> : vector<9x9xf32>
    %106 = tpu.matmul %101, %103, %cst_54 {dimension_numbers = #tpu.dot_dimension_numbers<[1], [1], [0], [0], [0, 0, 1, 0], [], []>} : vector<9x8xbf16>, vector<9x8xbf16>, vector<9x9xf32> -> vector<9x9xf32>
    %cst_55 = arith.constant dense<0xFF800000> : vector<9xf32>
    %107 = vector.multi_reduction <maximumf>, %106, %cst_55 [1] : vector<9x9xf32> to vector<9xf32>
    %108 = vector.shape_cast %107 : vector<9xf32> to vector<9x1xf32>
    %109 = vector.broadcast %108 : vector<9x1xf32> to vector<9x9xf32>
    %110 = arith.subf %106, %109 : vector<9x9xf32>
    %111 = math.exp %110 : vector<9x9xf32>
    %cst_56 = arith.constant dense<0.000000e+00> : vector<9xf32>
    %112 = vector.multi_reduction <add>, %111, %cst_56 [1] : vector<9x9xf32> to vector<9xf32>
    %113 = vector.shape_cast %112 : vector<9xf32> to vector<9x1xf32>
    %114 = tpu.reciprocal %113 {approx = true} : vector<9x1xf32> -> vector<9x1xf32>
    %115 = vector.broadcast %114 : vector<9x1xf32> to vector<9x9xf32>
    %116 = arith.mulf %111, %115 : vector<9x9xf32>
    %117 = arith.truncf %116 : vector<9x9xf32> to vector<9x9xbf16>
    %cst_57 = arith.constant dense<0.000000e+00> : vector<9x8xf32>
    %118 = tpu.matmul %117, %105, %cst_57 {dimension_numbers = #tpu.dot_dimension_numbers<[1], [0], [0], [1], [0, 0, 1, 1], [], []>} : vector<9x9xbf16>, vector<9x8xbf16>, vector<9x8xf32> -> vector<9x8xf32>
    %119 = arith.truncf %118 : vector<9x8xf32> to vector<9x8xbf16>
    %120 = vector.extract_strided_slice %14 {offsets = [16, 0], sizes = [8, 32], strides = [1, 1]} : vector<32x32xbf16> to vector<8x32xbf16>
    %cst_58 = arith.constant dense<0.000000e+00> : vector<9x32xf32>
    %121 = tpu.matmul %119, %120, %cst_58 {dimension_numbers = #tpu.dot_dimension_numbers<[1], [0], [0], [1], [0, 0, 1, 1], [], []>} : vector<9x8xbf16>, vector<8x32xbf16>, vector<9x32xf32> -> vector<9x32xf32>
    %122 = arith.addf %99, %121 : vector<9x32xf32>
    %123 = vector.extract_strided_slice %52 {offsets = [0, 24], sizes = [9, 8], strides = [1, 1]} : vector<9x96xf32> to vector<9x8xf32>
    %124 = arith.truncf %123 : vector<9x8xf32> to vector<9x8xbf16>
    %125 = vector.extract_strided_slice %52 {offsets = [0, 56], sizes = [9, 8], strides = [1, 1]} : vector<9x96xf32> to vector<9x8xf32>
    %126 = arith.truncf %125 : vector<9x8xf32> to vector<9x8xbf16>
    %127 = vector.extract_strided_slice %52 {offsets = [0, 88], sizes = [9, 8], strides = [1, 1]} : vector<9x96xf32> to vector<9x8xf32>
    %128 = arith.truncf %127 : vector<9x8xf32> to vector<9x8xbf16>
    %cst_59 = arith.constant dense<0.000000e+00> : vector<9x9xf32>
    %129 = tpu.matmul %124, %126, %cst_59 {dimension_numbers = #tpu.dot_dimension_numbers<[1], [1], [0], [0], [0, 0, 1, 0], [], []>} : vector<9x8xbf16>, vector<9x8xbf16>, vector<9x9xf32> -> vector<9x9xf32>
    %cst_60 = arith.constant dense<0xFF800000> : vector<9xf32>
    %130 = vector.multi_reduction <maximumf>, %129, %cst_60 [1] : vector<9x9xf32> to vector<9xf32>
    %131 = vector.shape_cast %130 : vector<9xf32> to vector<9x1xf32>
    %132 = vector.broadcast %131 : vector<9x1xf32> to vector<9x9xf32>
    %133 = arith.subf %129, %132 : vector<9x9xf32>
    %134 = math.exp %133 : vector<9x9xf32>
    %cst_61 = arith.constant dense<0.000000e+00> : vector<9xf32>
    %135 = vector.multi_reduction <add>, %134, %cst_61 [1] : vector<9x9xf32> to vector<9xf32>
    %136 = vector.shape_cast %135 : vector<9xf32> to vector<9x1xf32>
    %137 = tpu.reciprocal %136 {approx = true} : vector<9x1xf32> -> vector<9x1xf32>
    %138 = vector.broadcast %137 : vector<9x1xf32> to vector<9x9xf32>
    %139 = arith.mulf %134, %138 : vector<9x9xf32>
    %140 = arith.truncf %139 : vector<9x9xf32> to vector<9x9xbf16>
    %cst_62 = arith.constant dense<0.000000e+00> : vector<9x8xf32>
    %141 = tpu.matmul %140, %128, %cst_62 {dimension_numbers = #tpu.dot_dimension_numbers<[1], [0], [0], [1], [0, 0, 1, 1], [], []>} : vector<9x9xbf16>, vector<9x8xbf16>, vector<9x8xf32> -> vector<9x8xf32>
    %142 = arith.truncf %141 : vector<9x8xf32> to vector<9x8xbf16>
    %143 = vector.extract_strided_slice %14 {offsets = [24, 0], sizes = [8, 32], strides = [1, 1]} : vector<32x32xbf16> to vector<8x32xbf16>
    %cst_63 = arith.constant dense<0.000000e+00> : vector<9x32xf32>
    %144 = tpu.matmul %142, %143, %cst_63 {dimension_numbers = #tpu.dot_dimension_numbers<[1], [0], [0], [1], [0, 0, 1, 1], [], []>} : vector<9x8xbf16>, vector<8x32xbf16>, vector<9x32xf32> -> vector<9x32xf32>
    %145 = arith.addf %122, %144 : vector<9x32xf32>
    %146 = arith.addf %6, %145 : vector<9x32xf32>
    %147 = vector.broadcast %16 : vector<1x32xf32> to vector<9x32xf32>
    %148 = arith.addf %146, %147 : vector<9x32xf32>
    %cst_64 = arith.constant dense<0.000000e+00> : vector<9xf32>
    %149 = vector.multi_reduction <add>, %148, %cst_64 [1] : vector<9x32xf32> to vector<9xf32>
    %150 = vector.shape_cast %149 : vector<9xf32> to vector<9x1xf32>
    %cst_65 = arith.constant 3.200000e+01 : f32
    %151 = vector.broadcast %cst_65 : f32 to vector<9x1xf32>
    %152 = arith.divf %150, %151 : vector<9x1xf32>
    %153 = vector.broadcast %152 : vector<9x1xf32> to vector<9x32xf32>
    %154 = arith.subf %148, %153 : vector<9x32xf32>
    %155 = arith.mulf %154, %154 : vector<9x32xf32>
    %cst_66 = arith.constant dense<0.000000e+00> : vector<9xf32>
    %156 = vector.multi_reduction <add>, %155, %cst_66 [1] : vector<9x32xf32> to vector<9xf32>
    %157 = vector.shape_cast %156 : vector<9xf32> to vector<9x1xf32>
    %cst_67 = arith.constant 3.200000e+01 : f32
    %158 = vector.broadcast %cst_67 : f32 to vector<9x1xf32>
    %159 = arith.divf %157, %158 : vector<9x1xf32>
    %160 = vector.broadcast %152 : vector<9x1xf32> to vector<9x32xf32>
    %161 = arith.subf %148, %160 : vector<9x32xf32>
    %cst_68 = arith.constant 9.99999997E-7 : f32
    %162 = vector.broadcast %cst_68 : f32 to vector<9x1xf32>
    %163 = arith.addf %159, %162 : vector<9x1xf32>
    %164 = math.rsqrt %163 : vector<9x1xf32>
    %165 = vector.broadcast %164 : vector<9x1xf32> to vector<9x32xf32>
    %166 = arith.mulf %161, %165 : vector<9x32xf32>
    %167 = vector.broadcast %18 : vector<1x32xf32> to vector<9x32xf32>
    %168 = arith.mulf %166, %167 : vector<9x32xf32>
    %169 = vector.broadcast %20 : vector<1x32xf32> to vector<9x32xf32>
    %170 = arith.addf %168, %169 : vector<9x32xf32>
    %171 = arith.truncf %170 : vector<9x32xf32> to vector<9x32xbf16>
    %cst_69 = arith.constant dense<0.000000e+00> : vector<9x128xf32>
    %172 = tpu.matmul %171, %22, %cst_69 {dimension_numbers = #tpu.dot_dimension_numbers<[1], [0], [0], [1], [0, 0, 1, 1], [], []>} : vector<9x32xbf16>, vector<32x128xbf16>, vector<9x128xf32> -> vector<9x128xf32>
    %173 = vector.broadcast %24 : vector<1x128xf32> to vector<9x128xf32>
    %174 = arith.addf %172, %173 : vector<9x128xf32>
    %175 = arith.mulf %174, %174 : vector<9x128xf32>
    %176 = arith.mulf %174, %175 : vector<9x128xf32>
    %cst_70 = arith.constant 4.471500e-02 : f32
    %177 = vector.broadcast %cst_70 : f32 to vector<9x128xf32>
    %178 = arith.mulf %177, %176 : vector<9x128xf32>
    %179 = arith.addf %174, %178 : vector<9x128xf32>
    %cst_71 = arith.constant 0.797884583 : f32
    %180 = vector.broadcast %cst_71 : f32 to vector<9x128xf32>
    %181 = arith.mulf %180, %179 : vector<9x128xf32>
    %182 = math.tanh %181 : vector<9x128xf32>
    %cst_72 = arith.constant 1.000000e+00 : f32
    %183 = vector.broadcast %cst_72 : f32 to vector<9x128xf32>
    %184 = arith.addf %183, %182 : vector<9x128xf32>
    %cst_73 = arith.constant 5.000000e-01 : f32
    %185 = vector.broadcast %cst_73 : f32 to vector<9x128xf32>
    %186 = arith.mulf %185, %184 : vector<9x128xf32>
    %187 = arith.mulf %174, %186 : vector<9x128xf32>
    %188 = arith.truncf %187 : vector<9x128xf32> to vector<9x128xbf16>
    %cst_74 = arith.constant dense<0.000000e+00> : vector<9x32xf32>
    %189 = tpu.matmul %188, %26, %cst_74 {dimension_numbers = #tpu.dot_dimension_numbers<[1], [0], [0], [1], [0, 0, 1, 1], [], []>} : vector<9x128xbf16>, vector<128x32xbf16>, vector<9x32xf32> -> vector<9x32xf32>
    %190 = vector.broadcast %28 : vector<1x32xf32> to vector<9x32xf32>
    %191 = arith.addf %189, %190 : vector<9x32xf32>
    %192 = arith.addf %148, %191 : vector<9x32xf32>
    %c0_75 = arith.constant 0 : index
    %c0_76 = arith.constant 0 : index
    %193 = vector.load %arg20[%c0_75, %c0_76] : memref<9x32xf32, #tpu.memory_space<vmem>>, vector<9x32xf32>
    tpu.vector_store %arg20[%c0_75, %c0_76], %192 {strides = array<i32>} : memref<9x32xf32, #tpu.memory_space<vmem>>, vector<9x32xf32>,
    %c1_i32 = arith.constant 1 : i32
    %194 = arith.cmpi eq, %arg1, %c1_i32 : i32
    %195 = arith.extui %194 : i1 to i32
    %c0_i32_77 = arith.constant 0 : i32
    %196 = arith.cmpi ne, %195, %c0_i32_77 : i32
    scf.if %196 {
      %c0_78 = arith.constant 0 : index
      %c0_79 = arith.constant 0 : index
      %197 = vector.load %arg15[%c0_78, %c0_79] : memref<1x32xf32, #tpu.memory_space<vmem>>, vector<1x32xf32>
      %c0_80 = arith.constant 0 : index
      %c0_81 = arith.constant 0 : index
      %198 = vector.load %arg16[%c0_80, %c0_81] : memref<1x32xf32, #tpu.memory_space<vmem>>, vector<1x32xf32>
      %cst_82 = arith.constant dense<0.000000e+00> : vector<9xf32>
      %199 = vector.multi_reduction <add>, %192, %cst_82 [1] : vector<9x32xf32> to vector<9xf32>
      %200 = vector.shape_cast %199 : vector<9xf32> to vector<9x1xf32>
      %cst_83 = arith.constant 3.200000e+01 : f32
      %201 = vector.broadcast %cst_83 : f32 to vector<9x1xf32>
      %202 = arith.divf %200, %201 : vector<9x1xf32>
      %203 = vector.broadcast %202 : vector<9x1xf32> to vector<9x32xf32>
      %204 = arith.subf %192, %203 : vector<9x32xf32>
      %205 = arith.mulf %204, %204 : vector<9x32xf32>
      %cst_84 = arith.constant dense<0.000000e+00> : vector<9xf32>
      %206 = vector.multi_reduction <add>, %205, %cst_84 [1] : vector<9x32xf32> to vector<9xf32>
      %207 = vector.shape_cast %206 : vector<9xf32> to vector<9x1xf32>
      %cst_85 = arith.constant 3.200000e+01 : f32
      %208 = vector.broadcast %cst_85 : f32 to vector<9x1xf32>
      %209 = arith.divf %207, %208 : vector<9x1xf32>
      %210 = vector.broadcast %202 : vector<9x1xf32> to vector<9x32xf32>
      %211 = arith.subf %192, %210 : vector<9x32xf32>
      %cst_86 = arith.constant 9.99999997E-7 : f32
      %212 = vector.broadcast %cst_86 : f32 to vector<9x1xf32>
      %213 = arith.addf %209, %212 : vector<9x1xf32>
      %214 = math.rsqrt %213 : vector<9x1xf32>
      %215 = vector.broadcast %214 : vector<9x1xf32> to vector<9x32xf32>
      %216 = arith.mulf %211, %215 : vector<9x32xf32>
      %217 = vector.broadcast %197 : vector<1x32xf32> to vector<9x32xf32>
      %218 = arith.mulf %216, %217 : vector<9x32xf32>
      %219 = vector.broadcast %198 : vector<1x32xf32> to vector<9x32xf32>
      %220 = arith.addf %218, %219 : vector<9x32xf32>
      %221 = arith.truncf %220 : vector<9x32xf32> to vector<9x32xbf16>
      %c0_87 = arith.constant 0 : index
      %c0_88 = arith.constant 0 : index
      %222 = vector.load %arg17[%c0_87, %c0_88] : memref<32x24xbf16, #tpu.memory_space<vmem>>, vector<32x24xbf16>
      %cst_89 = arith.constant dense<0.000000e+00> : vector<9x24xf32>
      %223 = tpu.matmul %221, %222, %cst_89 {dimension_numbers = #tpu.dot_dimension_numbers<[1], [0], [0], [1], [0, 0, 1, 1], [], []>} : vector<9x32xbf16>, vector<32x24xbf16>, vector<9x24xf32> -> vector<9x24xf32>
      %c0_90 = arith.constant 0 : index
      %c0_91 = arith.constant 0 : index
      %224 = vector.load %arg18[%c0_90, %c0_91] : memref<1x24xf32, #tpu.memory_space<vmem>>, vector<1x24xf32>
      %225 = vector.broadcast %224 : vector<1x24xf32> to vector<9x24xf32>
      %226 = arith.addf %223, %225 : vector<9x24xf32>
      %c0_92 = arith.constant 0 : index
      %c0_93 = arith.constant 0 : index
      %c0_94 = arith.constant 0 : index
      %227 = vector.load %arg19[%c0_92, %c0_93, %c0_94] : memref<1x9x24xf32, #tpu.memory_space<vmem>>, vector<1x9x24xf32>
      %228 = vector.shape_cast %227 : vector<1x9x24xf32> to vector<9x24xf32>
      %229 = vector.shape_cast %226 : vector<9x24xf32> to vector<1x9x24xf32>
      tpu.vector_store %arg19[%c0_92, %c0_93, %c0_94], %229 {strides = array<i32>} : memref<1x9x24xf32, #tpu.memory_space<vmem>>, vector<1x9x24xf32>,
    } else {
    }
    return
  }
  func.func @transform_0(%arg0: i32, %arg1: i32) -> (i32, i32, i32) {
    %c0_i32 = arith.constant 0 : i32
    %c0_i32_0 = arith.constant 0 : i32
    %c0_i32_1 = arith.constant 0 : i32
    return %arg0, %c0_i32, %c0_i32_0 : i32, i32, i32
  }
  func.func @transform_1(%arg0: i32, %arg1: i32) -> (i32, i32, i32) {
    %c0_i32 = arith.constant 0 : i32
    %c0_i32_0 = arith.constant 0 : i32
    %c0_i32_1 = arith.constant 0 : i32
    return %arg0, %c0_i32, %c0_i32_0 : i32, i32, i32
  }
  func.func @transform_2(%arg0: i32, %arg1: i32) -> (i32, i32, i32) {
    %c0_i32 = arith.constant 0 : i32
    %c0_i32_0 = arith.constant 0 : i32
    %c0_i32_1 = arith.constant 0 : i32
    return %arg1, %c0_i32, %c0_i32_0 : i32, i32, i32
  }
  func.func @transform_3(%arg0: i32, %arg1: i32) -> (i32, i32, i32) {
    %c0_i32 = arith.constant 0 : i32
    %c0_i32_0 = arith.constant 0 : i32
    %c0_i32_1 = arith.constant 0 : i32
    return %arg1, %c0_i32, %c0_i32_0 : i32, i32, i32
  }
  func.func @transform_4(%arg0: i32, %arg1: i32) -> (i32, i32, i32) {
    %c0_i32 = arith.constant 0 : i32
    %c0_i32_0 = arith.constant 0 : i32
    %c0_i32_1 = arith.constant 0 : i32
    return %arg1, %c0_i32, %c0_i32_0 : i32, i32, i32
  }
  func.func @transform_5(%arg0: i32, %arg1: i32) -> (i32, i32, i32) {
    %c0_i32 = arith.constant 0 : i32
    %c0_i32_0 = arith.constant 0 : i32
    %c0_i32_1 = arith.constant 0 : i32
    return %arg1, %c0_i32, %c0_i32_0 : i32, i32, i32
  }
  func.func @transform_6(%arg0: i32, %arg1: i32) -> (i32, i32, i32) {
    %c0_i32 = arith.constant 0 : i32
    %c0_i32_0 = arith.constant 0 : i32
    %c0_i32_1 = arith.constant 0 : i32
    return %arg1, %c0_i32, %c0_i32_0 : i32, i32, i32
  }
  func.func @transform_7(%arg0: i32, %arg1: i32) -> (i32, i32, i32) {
    %c0_i32 = arith.constant 0 : i32
    %c0_i32_0 = arith.constant 0 : i32
    %c0_i32_1 = arith.constant 0 : i32
    return %arg1, %c0_i32, %c0_i32_0 : i32, i32, i32
  }
  func.func @transform_8(%arg0: i32, %arg1: i32) -> (i32, i32, i32) {
    %c0_i32 = arith.constant 0 : i32
    %c0_i32_0 = arith.constant 0 : i32
    %c0_i32_1 = arith.constant 0 : i32
    return %arg1, %c0_i32, %c0_i32_0 : i32, i32, i32
  }
  func.func @transform_9(%arg0: i32, %arg1: i32) -> (i32, i32, i32) {
    %c0_i32 = arith.constant 0 : i32
    %c0_i32_0 = arith.constant 0 : i32
    %c0_i32_1 = arith.constant 0 : i32
    return %arg1, %c0_i32, %c0_i32_0 : i32, i32, i32
  }
  func.func @transform_10(%arg0: i32, %arg1: i32) -> (i32, i32, i32) {
    %c0_i32 = arith.constant 0 : i32
    %c0_i32_0 = arith.constant 0 : i32
    %c0_i32_1 = arith.constant 0 : i32
    return %arg1, %c0_i32, %c0_i32_0 : i32, i32, i32
  }
  func.func @transform_11(%arg0: i32, %arg1: i32) -> (i32, i32, i32) {
    %c0_i32 = arith.constant 0 : i32
    %c0_i32_0 = arith.constant 0 : i32
    %c0_i32_1 = arith.constant 0 : i32
    return %arg1, %c0_i32, %c0_i32_0 : i32, i32, i32
  }
  func.func @transform_12(%arg0: i32, %arg1: i32) -> (i32, i32, i32) {
    %c0_i32 = arith.constant 0 : i32
    %c0_i32_0 = arith.constant 0 : i32
    %c0_i32_1 = arith.constant 0 : i32
    return %arg1, %c0_i32, %c0_i32_0 : i32, i32, i32
  }
  func.func @transform_13(%arg0: i32, %arg1: i32) -> (i32, i32) {
    %c0_i32 = arith.constant 0 : i32
    %c0_i32_0 = arith.constant 0 : i32
    %c0_i32_1 = arith.constant 0 : i32
    return %c0_i32, %c0_i32_0 : i32, i32
  }
  func.func @transform_14(%arg0: i32, %arg1: i32) -> (i32, i32) {
    %c0_i32 = arith.constant 0 : i32
    %c0_i32_0 = arith.constant 0 : i32
    %c0_i32_1 = arith.constant 0 : i32
    return %c0_i32, %c0_i32_0 : i32, i32
  }
  func.func @transform_15(%arg0: i32, %arg1: i32) -> (i32, i32) {
    %c0_i32 = arith.constant 0 : i32
    %c0_i32_0 = arith.constant 0 : i32
    %c0_i32_1 = arith.constant 0 : i32
    return %c0_i32, %c0_i32_0 : i32, i32
  }
  func.func @transform_16(%arg0: i32, %arg1: i32) -> (i32, i32) {
    %c0_i32 = arith.constant 0 : i32
    %c0_i32_0 = arith.constant 0 : i32
    %c0_i32_1 = arith.constant 0 : i32
    return %c0_i32, %c0_i32_0 : i32, i32
  }
  func.func @transform_17(%arg0: i32, %arg1: i32) -> (i32, i32, i32) {
    %c0_i32 = arith.constant 0 : i32
    %c0_i32_0 = arith.constant 0 : i32
    %c0_i32_1 = arith.constant 0 : i32
    return %arg0, %c0_i32, %c0_i32_0 : i32, i32, i32
  }
}

</mosaic_0001>

<llo_original>
// kernel: custom-call.14
$region0: #{custom-call.14}
  %s0 = inlined_call_operand.vmem [shape: f32[2,128], index: 0, kind: output, shape index: {}]

// kernel: neg.1
$region0: #{neg.1}
  #allocation0 [shape = 's32[1]{0}', space=sflag, size = 0x4, scoped, tag = 'scoped memory for neg.1']
  %s0 = inlined_call_operand.vmem [shape: f32[2,8,128], index: 0, kind: input, shape index: {}]
  %s1 = inlined_call_operand.vmem [shape: f32[2,8,128], index: 1, kind: output, shape index: {}]
  %v2 = vld [vmem:[%s0] sm:$0xff]
  %3 = xla_tuple %v2
  %4 = xla_tuple %3
  %v5 = vxor.u32 %v2, 2147483648
  %6 = xla_tuple %v5
  %7 = vst [vmem:[%s1] sm:$0xff] %v5
  %s8 = scalar_lea.vmem %s0, 8
  %v9 = vld [vmem:[%s8] sm:$0xff]
  %10 = xla_tuple %v9
  %11 = xla_tuple %10
  %v12 = vxor.u32 %v9, 2147483648
  %13 = xla_tuple %v12
  %s14 = scalar_lea.vmem %s1, 8
  %15 = vst [vmem:[%s14] sm:$0xff] %v12

// kernel: masked_point_vit_forward.3
$region0: #{masked_point_vit_forward.3}
  #allocation0 [shape = 'u32[]', space=smem, size = 0x4, offset = 0x4, fixed_abs, tag = 'smem constant byte address 0x4 - core index']
  #allocation1 [shape = 'u32[144,128]{1,0:T(1,128)}', space=vmem, size = 0x12000, scoped, tag = 'internal scratch']
  %s0 = inlined_call_operand.vmem [shape: f32[128,6], index: 0, kind: input, shape index: {}]
  %s1 = inlined_call_operand.vmem [shape: f32[16,3], index: 1, kind: input, shape index: {}]
  %s2 = inlined_call_operand.vmem [shape: bf16[6,24], index: 2, kind: input, shape index: {}]
  %s3 = inlined_call_operand.vmem [shape: f32[1,24], index: 3, kind: input, shape index: {}]
  %s4 = inlined_call_operand.vmem [shape: bf16[24,48], index: 4, kind: input, shape index: {}]
  %s5 = inlined_call_operand.vmem [shape: f32[1,48], index: 5, kind: input, shape index: {}]
  %s6 = inlined_call_operand.vmem [shape: bf16[3,128], index: 6, kind: input, shape index: {}]
  %s7 = inlined_call_operand.vmem [shape: f32[1,128], index: 7, kind: input, shape index: {}]
  %s8 = inlined_call_operand.vmem [shape: bf16[128,48], index: 8, kind: input, shape index: {}]
  %s9 = inlined_call_operand.vmem [shape: f32[1,48], index: 9, kind: input, shape index: {}]
  %s10 = inlined_call_operand.vmem [shape: bf16[3,128], index: 10, kind: input, shape index: {}]
  %s11 = inlined_call_operand.vmem [shape: f32[1,128], index: 11, kind: input, shape index: {}]
  %s12 = inlined_call_operand.vmem [shape: bf16[128,32], index: 12, kind: input, shape index: {}]
  %s13 = inlined_call_operand.vmem [shape: f32[1,32], index: 13, kind: input, shape index: {}]
  %s14 = inlined_call_operand.vmem [shape: f32[16,48], index: 14, kind: output, shape index: {0}]
  %s15 = inlined_call_operand.vmem [shape: f32[16,48], index: 15, kind: output, shape index: {1}]
  %s16 = inlined_call_operand.vmem [shape: f32[16,32], index: 16, kind: output, shape index: {2}]
  %17 = xla_tuple %s14, %s15, %s16
  %s18 = sld [smem:[#allocation0]]
  $region82: #{masked_point_vit_forward.3} parent=0
    _
  %s20 = ssub.s32 1, %s18
  %s21 = scalar_select 0, %s20, %s18
  // Predicated region
  $region2: #{masked_point_vit_forward.3} parent=0 // pred_check
    _
  $region3: #{masked_point_vit_forward.3} parent=0 // pred_check_branch
    %23 = sbr.rel (0) target = $region5
  $region4: #{masked_point_vit_forward.3} parent=0 // pred_region
    _
  $region5: #{masked_point_vit_forward.3} parent=0 // pred_fallthru
    _
  // Predicated region
  $region6: #{masked_point_vit_forward.3} parent=0 // pred_check
    _
  $region7: #{masked_point_vit_forward.3} parent=0 // pred_check_branch
    %25 = sbr.rel (0) target = $region9
  $region8: #{masked_point_vit_forward.3} parent=0 // pred_region
    _
  $region9: #{masked_point_vit_forward.3} parent=0 // pred_fallthru
    _
  // Predicated region
  $region10: #{masked_point_vit_forward.3} parent=0 // pred_check
    _
  $region11: #{masked_point_vit_forward.3} parent=0 // pred_check_branch
    %27 = sbr.rel (0) target = $region13
  $region12: #{masked_point_vit_forward.3} parent=0 // pred_region
    _
  $region13: #{masked_point_vit_forward.3} parent=0 // pred_fallthru
    _
  // Predicated region
  $region14: #{masked_point_vit_forward.3} parent=0 // pred_check
    _
  $region15: #{masked_point_vit_forward.3} parent=0 // pred_check_branch
    %29 = sbr.rel (0) target = $region17
  $region16: #{masked_point_vit_forward.3} parent=0 // pred_region
    _
  $region17: #{masked_point_vit_forward.3} parent=0 // pred_fallthru
    _
  // Predicated region
  $region18: #{masked_point_vit_forward.3} parent=0 // pred_check
    _
  $region19: #{masked_point_vit_forward.3} parent=0 // pred_check_branch
    %31 = sbr.rel (0) target = $region21
  $region20: #{masked_point_vit_forward.3} parent=0 // pred_region
    _
  $region21: #{masked_point_vit_forward.3} parent=0 // pred_fallthru
    _
  // Predicated region
  $region22: #{masked_point_vit_forward.3} parent=0 // pred_check
    _
  $region23: #{masked_point_vit_forward.3} parent=0 // pred_check_branch
    %33 = sbr.rel (0) target = $region25
  $region24: #{masked_point_vit_forward.3} parent=0 // pred_region
    _
  $region25: #{masked_point_vit_forward.3} parent=0 // pred_fallthru
    _
  // Predicated region
  $region26: #{masked_point_vit_forward.3} parent=0 // pred_check
    _
  $region27: #{masked_point_vit_forward.3} parent=0 // pred_check_branch
    %35 = sbr.rel (0) target = $region29
  $region28: #{masked_point_vit_forward.3} parent=0 // pred_region
    _
  $region29: #{masked_point_vit_forward.3} parent=0 // pred_fallthru
    _
  // Predicated region
  $region30: #{masked_point_vit_forward.3} parent=0 // pred_check
    _
  $region31: #{masked_point_vit_forward.3} parent=0 // pred_check_branch
    %37 = sbr.rel (0) target = $region33
  $region32: #{masked_point_vit_forward.3} parent=0 // pred_region
    _
  $region33: #{masked_point_vit_forward.3} parent=0 // pred_fallthru
    _
  // Predicated region
  $region34: #{masked_point_vit_forward.3} parent=0 // pred_check
    _
  $region35: #{masked_point_vit_forward.3} parent=0 // pred_check_branch
    %39 = sbr.rel (0) target = $region37
  $region36: #{masked_point_vit_forward.3} parent=0 // pred_region
    _
  $region37: #{masked_point_vit_forward.3} parent=0 // pred_fallthru
    _
  // Predicated region
  $region38: #{masked_point_vit_forward.3} parent=0 // pred_check
    _
  $region39: #{masked_point_vit_forward.3} parent=0 // pred_check_branch
    %41 = sbr.rel (0) target = $region41
  $region40: #{masked_point_vit_forward.3} parent=0 // pred_region
    _
  $region41: #{masked_point_vit_forward.3} parent=0 // pred_fallthru
    _
  // Predicated region
  $region42: #{masked_point_vit_forward.3} parent=0 // pred_check
    _
  $region43: #{masked_point_vit_forward.3} parent=0 // pred_check_branch
    %43 = sbr.rel (0) target = $region45
  $region44: #{masked_point_vit_forward.3} parent=0 // pred_region
    _
  $region45: #{masked_point_vit_forward.3} parent=0 // pred_fallthru
    _
  // Predicated region
  $region46: #{masked_point_vit_forward.3} parent=0 // pred_check
    _
  $region47: #{masked_point_vit_forward.3} parent=0 // pred_check_branch
    %45 = sbr.rel (0) target = $region49
  $region48: #{masked_point_vit_forward.3} parent=0 // pred_region
    _
  $region49: #{masked_point_vit_forward.3} parent=0 // pred_fallthru
    _
  // Predicated region
  $region50: #{masked_point_vit_forward.3} parent=0 // pred_check
    _
  $region51: #{masked_point_vit_forward.3} parent=0 // pred_check_branch
    %47 = sbr.rel (0) target = $region53
  $region52: #{masked_point_vit_forward.3} parent=0 // pred_region
    _
  $region53: #{masked_point_vit_forward.3} parent=0 // pred_fallthru
    _
  // Predicated region
  $region54: #{masked_point_vit_forward.3} parent=0 // pred_check
    _
  $region55: #{masked_point_vit_forward.3} parent=0 // pred_check_branch
    %49 = sbr.rel (0) target = $region57
  $region56: #{masked_point_vit_forward.3} parent=0 // pred_region
    _
  $region57: #{masked_point_vit_forward.3} parent=0 // pred_fallthru
    _
  %v51 = vld [vmem:[%s0] sm:$0xff]
  %v52 = vld [vmem:[%s0 + $0x8] sm:$0xff]
  %v53 = vld [vmem:[%s0 + $0x10] sm:$0xff]
  %v54 = vld [vmem:[%s0 + $0x18] sm:$0xff]
  %v55 = vld [vmem:[%s0 + $0x20] sm:$0xff]
  %v56 = vld [vmem:[%s0 + $0x28] sm:$0xff]
  %v57 = vld [vmem:[%s0 + $0x30] sm:$0xff]
  %v58 = vld [vmem:[%s0 + $0x38] sm:$0xff]
  %v59 = vld [vmem:[%s0 + $0x40] sm:$0xff]
  %v60 = vld [vmem:[%s0 + $0x48] sm:$0xff]
  %v61 = vld [vmem:[%s0 + $0x50] sm:$0xff]
  %v62 = vld [vmem:[%s0 + $0x58] sm:$0xff]
  %v63 = vld [vmem:[%s0 + $0x60] sm:$0xff]
  %v64 = vld [vmem:[%s0 + $0x68] sm:$0xff]
  %v65 = vld [vmem:[%s0 + $0x70] sm:$0xff]
  %v66 = vld [vmem:[%s0 + $0x78] sm:$0xff]
  %v67 = vpack.c.bf16 %v52, %v51
  %v68 = vpack.c.bf16 %v54, %v53
  %v69 = vpack.c.bf16 %v56, %v55
  %v70 = vpack.c.bf16 %v58, %v57
  %v71 = vpack.c.bf16 %v60, %v59
  %v72 = vpack.c.bf16 %v62, %v61
  %v73 = vpack.c.bf16 %v64, %v63
  %v74 = vpack.c.bf16 %v66, %v65
  %v75 = vld [vmem:[%s2] sm:$0x7]
  %v76 = vld [vmem:[%s3] sm:$0x1]
  %v78 = vlaneseq
  %v79 = vshrl.u32 %v78, 7
  %v80 = vsub.s32 0, %v79
  %v81 = vrot.slane %v76, %v80
  %vm83 = vcmask 48128
  %v85 = vsel %vm83, %v67, 0
  %v88 = vsel %vm83, %v68, 0
  %v91 = vsel %vm83, %v69, 0
  %v94 = vsel %vm83, %v70, 0
  %v97 = vsel %vm83, %v71, 0
  %v100 = vsel %vm83, %v72, 0
  %v103 = vsel %vm83, %v73, 0
  %v106 = vsel %vm83, %v74, 0
  %vm108 = vcmask 1042432
  %v110 = vsel %vm108, %v75, 0
  %112 = vmatprep.subr.bf16.mxu0 0
  %113 = vmatpush1.bf16.msra.mxu0 %v110
  %114 = vmatprep.subr.bf16.mxu0 0
  %115 = vmatpush1.bf16.msra.mxu0 0
  %116 = vmatprep.subr.bf16.mxu0 0
  %117 = vmatpush1.bf16.msra.mxu0 0
  %118 = vmatprep.subr.bf16.mxu0 0
  %119 = vmatpush1.bf16.msra.mxu0 0
  %120 = vmatprep.subr.bf16.mxu0 0
  %121 = vmatpush1.bf16.msra.mxu0 0
  %122 = vmatprep.subr.bf16.mxu0 0
  %123 = vmatpush1.bf16.msra.mxu0 0
  %124 = vmatprep.subr.bf16.mxu0 0
  %125 = vmatpush1.bf16.msra.mxu0 0
  %126 = vmatprep.subr.bf16.mxu0 0
  %127 = vmatpush1.bf16.msra.mxu0 0
  %128 = vmatprep.subr.bf16.mxu0 0
  %129 = vmatpush1.bf16.msra.mxu0 0
  %130 = vmatprep.subr.bf16.mxu0 0
  %131 = vmatpush1.bf16.msra.mxu0 0
  %132 = vmatprep.subr.bf16.mxu0 0
  %133 = vmatpush1.bf16.msra.mxu0 0
  %134 = vmatprep.subr.bf16.mxu0 0
  %135 = vmatpush1.bf16.msra.mxu0 0
  %136 = vmatprep.subr.bf16.mxu0 0
  %137 = vmatpush1.bf16.msra.mxu0 0
  %138 = vmatprep.subr.bf16.mxu0 0
  %139 = vmatpush1.bf16.msra.mxu0 0
  %140 = vmatprep.subr.bf16.mxu0 0
  %141 = vmatpush1.bf16.msra.mxu0 0
  %142 = vmatprep.subr.bf16.mxu0 0
  %143 = vmatpush1.bf16.msra.mxu0 0
  %144 = vmatprep.mubr.bf16.mxu0 0
  %145 = vmatmul.mubr.bf16.gmra.mrb[0].mxu0 %v85
  %v146 = vpop.f32.mrb[0].mxu0
  %v147 = vadd.f32 %v81, %v146
  %v148 = vpop.f32.mrb[0].mxu0
  %v149 = vpop.f32.mrb[0].mxu0
  %v150 = vadd.f32 %v81, %v149
  %v151 = vpop.f32.mrb[0].mxu0
  %152 = vmatprep.mubr.bf16.mxu0 0
  %153 = vmatmul.mubr.bf16.gmra.mrb[0].mxu0 %v88
  %v154 = vpop.f32.mrb[0].mxu0
  %v155 = vadd.f32 %v81, %v154
  %v156 = vpop.f32.mrb[0].mxu0
  %v157 = vpop.f32.mrb[0].mxu0
  %v158 = vadd.f32 %v81, %v157
  %v159 = vpop.f32.mrb[0].mxu0
  %160 = vmatprep.mubr.bf16.mxu0 0
  %161 = vmatmul.mubr.bf16.gmra.mrb[0].mxu0 %v91
  %v162 = vpop.f32.mrb[0].mxu0
  %v163 = vadd.f32 %v81, %v162
  %v164 = vpop.f32.mrb[0].mxu0
  %v165 = vpop.f32.mrb[0].mxu0
  %v166 = vadd.f32 %v81, %v165
  %v167 = vpop.f32.mrb[0].mxu0
  %168 = vmatprep.mubr.bf16.mxu0 0
  %169 = vmatmul.mubr.bf16.gmra.mrb[0].mxu0 %v94
  %v170 = vpop.f32.mrb[0].mxu0
  %v171 = vadd.f32 %v81, %v170
  %v172 = vpop.f32.mrb[0].mxu0
  %v173 = vpop.f32.mrb[0].mxu0
  %v174 = vadd.f32 %v81, %v173
  %v175 = vpop.f32.mrb[0].mxu0
  %176 = vmatprep.mubr.bf16.mxu0 0
  %177 = vmatmul.mubr.bf16.gmra.mrb[0].mxu0 %v97
  %v178 = vpop.f32.mrb[0].mxu0
  %v179 = vadd.f32 %v81, %v178
  %v180 = vpop.f32.mrb[0].mxu0
  %v181 = vpop.f32.mrb[0].mxu0
  %v182 = vadd.f32 %v81, %v181
  %v183 = vpop.f32.mrb[0].mxu0
  %184 = vmatprep.mubr.bf16.mxu0 0
  %185 = vmatmul.mubr.bf16.gmra.mrb[0].mxu0 %v100
  %v186 = vpop.f32.mrb[0].mxu0
  %v187 = vadd.f32 %v81, %v186
  %v188 = vpop.f32.mrb[0].mxu0
  %v189 = vpop.f32.mrb[0].mxu0
  %v190 = vadd.f32 %v81, %v189
  %v191 = vpop.f32.mrb[0].mxu0
  %192 = vmatprep.mubr.bf16.mxu0 0
  %193 = vmatmul.mubr.bf16.gmra.mrb[0].mxu0 %v103
  %v194 = vpop.f32.mrb[0].mxu0
  %v195 = vadd.f32 %v81, %v194
  %v196 = vpop.f32.mrb[0].mxu0
  %v197 = vpop.f32.mrb[0].mxu0
  %v198 = vadd.f32 %v81, %v197
  %v199 = vpop.f32.mrb[0].mxu0
  %200 = vmatprep.mubr.bf16.mxu0 0
  %201 = vmatmul.mubr.bf16.gmra.mrb[0].mxu0 %v106
  %v202 = vpop.f32.mrb[0].mxu0
  %v203 = vadd.f32 %v81, %v202
  %v204 = vpop.f32.mrb[0].mxu0
  %v205 = vpop.f32.mrb[0].mxu0
  %v206 = vadd.f32 %v81, %v205
  %v207 = vpop.f32.mrb[0].mxu0
  %208 = vdwg.mxu0
  %v209 = vmul.f32 %v147, %v147
  %v210 = vmul.f32 %v150, %v150
  %v211 = vmul.f32 %v155, %v155
  %v212 = vmul.f32 %v158, %v158
  %v213 = vmul.f32 %v163, %v163
  %v214 = vmul.f32 %v166, %v166
  %v215 = vmul.f32 %v171, %v171
  %v216 = vmul.f32 %v174, %v174
  %v217 = vmul.f32 %v179, %v179
  %v218 = vmul.f32 %v182, %v182
  %v219 = vmul.f32 %v187, %v187
  %v220 = vmul.f32 %v190, %v190
  %v221 = vmul.f32 %v195, %v195
  %v222 = vmul.f32 %v198, %v198
  %v223 = vmul.f32 %v203, %v203
  %v224 = vmul.f32 %v206, %v206
  %v225 = vmul.f32 %v147, %v209
  %v226 = vmul.f32 %v150, %v210
  %v227 = vmul.f32 %v155, %v211
  %v228 = vmul.f32 %v158, %v212
  %v229 = vmul.f32 %v163, %v213
  %v230 = vmul.f32 %v166, %v214
  %v231 = vmul.f32 %v171, %v215
  %v232 = vmul.f32 %v174, %v216
  %v233 = vmul.f32 %v179, %v217
  %v234 = vmul.f32 %v182, %v218
  %v235 = vmul.f32 %v187, %v219
  %v236 = vmul.f32 %v190, %v220
  %v237 = vmul.f32 %v195, %v221
  %v238 = vmul.f32 %v198, %v222
  %v239 = vmul.f32 %v203, %v223
  %v240 = vmul.f32 %v206, %v224
  %v241 = vmul.f32 %v225, 0.044715
  %v242 = vmul.f32 %v226, 0.044715
  %v243 = vmul.f32 %v227, 0.044715
  %v244 = vmul.f32 %v228, 0.044715
  %v245 = vmul.f32 %v229, 0.044715
  %v246 = vmul.f32 %v230, 0.044715
  %v247 = vmul.f32 %v231, 0.044715
  %v248 = vmul.f32 %v232, 0.044715
  %v249 = vmul.f32 %v233, 0.044715
  %v250 = vmul.f32 %v234, 0.044715
  %v251 = vmul.f32 %v235, 0.044715
  %v252 = vmul.f32 %v236, 0.044715
  %v253 = vmul.f32 %v237, 0.044715
  %v254 = vmul.f32 %v238, 0.044715
  %v255 = vmul.f32 %v239, 0.044715
  %v256 = vmul.f32 %v240, 0.044715
  %v257 = vadd.f32 %v147, %v241
  %v258 = vadd.f32 %v150, %v242
  %v259 = vadd.f32 %v155, %v243
  %v260 = vadd.f32 %v158, %v244
  %v261 = vadd.f32 %v163, %v245
  %v262 = vadd.f32 %v166, %v246
  %v263 = vadd.f32 %v171, %v247
  %v264 = vadd.f32 %v174, %v248
  %v265 = vadd.f32 %v179, %v249
  %v266 = vadd.f32 %v182, %v250
  %v267 = vadd.f32 %v187, %v251
  %v268 = vadd.f32 %v190, %v252
  %v269 = vadd.f32 %v195, %v253
  %v270 = vadd.f32 %v198, %v254
  %v271 = vadd.f32 %v203, %v255
  %v272 = vadd.f32 %v206, %v256
  %v273 = vmul.f32 %v257, 0.7978846
  %v274 = vmul.f32 %v258, 0.7978846
  %v275 = vmul.f32 %v259, 0.7978846
  %v276 = vmul.f32 %v260, 0.7978846
  %v277 = vmul.f32 %v261, 0.7978846
  %v278 = vmul.f32 %v262, 0.7978846
  %v279 = vmul.f32 %v263, 0.7978846
  %v280 = vmul.f32 %v264, 0.7978846
  %v281 = vmul.f32 %v265, 0.7978846
  %v282 = vmul.f32 %v266, 0.7978846
  %v283 = vmul.f32 %v267, 0.7978846
  %v284 = vmul.f32 %v268, 0.7978846
  %v285 = vmul.f32 %v269, 0.7978846
  %v286 = vmul.f32 %v270, 0.7978846
  %v287 = vmul.f32 %v271, 0.7978846
  %v288 = vmul.f32 %v272, 0.7978846
  %v289 = vtanh.pop %v273
  %v290 = vtanh.pop %v274
  %v291 = vtanh.pop %v275
  %v292 = vtanh.pop %v276
  %v293 = vtanh.pop %v277
  %v294 = vtanh.pop %v278
  %v295 = vtanh.pop %v279
  %v296 = vtanh.pop %v280
  %v297 = vtanh.pop %v281
  %v298 = vtanh.pop %v282
  %v299 = vtanh.pop %v283
  %v300 = vtanh.pop %v284
  %v301 = vtanh.pop %v285
  %v302 = vtanh.pop %v286
  %v303 = vtanh.pop %v287
  %v304 = vtanh.pop %v288
  %v305 = vadd.f32 %v289, 1.0
  %v306 = vadd.f32 %v290, 1.0
  %v307 = vadd.f32 %v291, 1.0
  %v308 = vadd.f32 %v292, 1.0
  %v309 = vadd.f32 %v293, 1.0
  %v310 = vadd.f32 %v294, 1.0
  %v311 = vadd.f32 %v295, 1.0
  %v312 = vadd.f32 %v296, 1.0
  %v313 = vadd.f32 %v297, 1.0
  %v314 = vadd.f32 %v298, 1.0
  %v315 = vadd.f32 %v299, 1.0
  %v316 = vadd.f32 %v300, 1.0
  %v317 = vadd.f32 %v301, 1.0
  %v318 = vadd.f32 %v302, 1.0
  %v319 = vadd.f32 %v303, 1.0
  %v320 = vadd.f32 %v304, 1.0
  %v321 = vmul.f32 %v305, 0.5
  %v322 = vmul.f32 %v306, 0.5
  %v323 = vmul.f32 %v307, 0.5
  %v324 = vmul.f32 %v308, 0.5
  %v325 = vmul.f32 %v309, 0.5
  %v326 = vmul.f32 %v310, 0.5
  %v327 = vmul.f32 %v311, 0.5
  %v328 = vmul.f32 %v312, 0.5
  %v329 = vmul.f32 %v313, 0.5
  %v330 = vmul.f32 %v314, 0.5
  %v331 = vmul.f32 %v315, 0.5
  %v332 = vmul.f32 %v316, 0.5
  %v333 = vmul.f32 %v317, 0.5
  %v334 = vmul.f32 %v318, 0.5
  %v335 = vmul.f32 %v319, 0.5
  %v336 = vmul.f32 %v320, 0.5
  %v337 = vmul.f32 %v147, %v321
  %v338 = vmul.f32 %v150, %v322
  %v339 = vmul.f32 %v155, %v323
  %v340 = vmul.f32 %v158, %v324
  %v341 = vmul.f32 %v163, %v325
  %v342 = vmul.f32 %v166, %v326
  %v343 = vmul.f32 %v171, %v327
  %v344 = vmul.f32 %v174, %v328
  %v345 = vmul.f32 %v179, %v329
  %v346 = vmul.f32 %v182, %v330
  %v347 = vmul.f32 %v187, %v331
  %v348 = vmul.f32 %v190, %v332
  %v349 = vmul.f32 %v195, %v333
  %v350 = vmul.f32 %v198, %v334
  %v351 = vmul.f32 %v203, %v335
  %v352 = vmul.f32 %v206, %v336
  %v353 = vpack.c.bf16 %v338, %v337
  %v354 = vpack.c.bf16 %v340, %v339
  %v355 = vpack.c.bf16 %v342, %v341
  %v356 = vpack.c.bf16 %v344, %v343
  %v357 = vpack.c.bf16 %v346, %v345
  %v358 = vpack.c.bf16 %v348, %v347
  %v359 = vpack.c.bf16 %v350, %v349
  %v360 = vpack.c.bf16 %v352, %v351
  %v361 = vld [vmem:[%s4] sm:$0xf]
  %v362 = vld [vmem:[%s4 + $0x4] sm:$0xf]
  %v363 = vld [vmem:[%s4 + $0x8] sm:$0xf]
  %v364 = vld [vmem:[%s5] sm:$0x1]
  %v366 = vlaneseq
  %v367 = vshrl.u32 %v366, 7
  %v368 = vsub.s32 0, %v367
  %v369 = vrot.slane %v364, %v368
  %v374 = vunpack.c.l.b16 %v361
  %v375 = vunpack.c.l.b16 %v362
  %v376 = vunpack.c.l.b16 %v363
  %v377 = vpack.c.b16 %v375, %v374
  %v378 = vpack.c.b16 %v376, %v376
  %vm380 = vcmask 195584
  %v382 = vsel %vm380, %v353, 0
  %v385 = vsel %vm380, %v354, 0
  %v388 = vsel %vm380, %v355, 0
  %v391 = vsel %vm380, %v356, 0
  %v394 = vsel %vm380, %v357, 0
  %v397 = vsel %vm380, %v358, 0
  %v400 = vsel %vm380, %v359, 0
  %v403 = vsel %vm380, %v360, 0
  %vm405 = vcmask 1043456
  %v407 = vsel %vm405, %v378, 0
  %409 = vmatprep.subr.bf16.mxu0 0
  %410 = vmatpush1.bf16.msra.mxu0 %v377
  %411 = vmatprep.subr.bf16.mxu0 0
  %412 = vmatpush1.bf16.msra.mxu0 %v407
  %413 = vmatprep.subr.bf16.mxu0 0
  %414 = vmatpush1.bf16.msra.mxu0 0
  %415 = vmatprep.subr.bf16.mxu0 0
  %416 = vmatpush1.bf16.msra.mxu0 0
  %417 = vmatprep.subr.bf16.mxu0 0
  %418 = vmatpush1.bf16.msra.mxu0 0
  %419 = vmatprep.subr.bf16.mxu0 0
  %420 = vmatpush1.bf16.msra.mxu0 0
  %421 = vmatprep.subr.bf16.mxu0 0
  %422 = vmatpush1.bf16.msra.mxu0 0
  %423 = vmatprep.subr.bf16.mxu0 0
  %424 = vmatpush1.bf16.msra.mxu0 0
  %425 = vmatprep.subr.bf16.mxu0 0
  %426 = vmatpush1.bf16.msra.mxu0 0
  %427 = vmatprep.subr.bf16.mxu0 0
  %428 = vmatpush1.bf16.msra.mxu0 0
  %429 = vmatprep.subr.bf16.mxu0 0
  %430 = vmatpush1.bf16.msra.mxu0 0
  %431 = vmatprep.subr.bf16.mxu0 0
  %432 = vmatpush1.bf16.msra.mxu0 0
  %433 = vmatprep.subr.bf16.mxu0 0
  %434 = vmatpush1.bf16.msra.mxu0 0
  %435 = vmatprep.subr.bf16.mxu0 0
  %436 = vmatpush1.bf16.msra.mxu0 0
  %437 = vmatprep.subr.bf16.mxu0 0
  %438 = vmatpush1.bf16.msra.mxu0 0
  %439 = vmatprep.subr.bf16.mxu0 0
  %440 = vmatpush1.bf16.msra.mxu0 0
  %441 = vmatprep.mubr.bf16.mxu0 0
  %442 = vmatmul.mubr.bf16.gmra.mrb[0].mxu0 %v382
  %v443 = vpop.f32.mrb[0].mxu0
  %v444 = vadd.f32 %v369, %v443
  %v445 = vpop.f32.mrb[0].mxu0
  %v446 = vpop.f32.mrb[0].mxu0
  %v447 = vadd.f32 %v369, %v446
  %v448 = vpop.f32.mrb[0].mxu0
  %449 = vmatprep.mubr.bf16.mxu0 0
  %450 = vmatmul.mubr.bf16.gmra.mrb[0].mxu0 %v385
  %v451 = vpop.f32.mrb[0].mxu0
  %v452 = vadd.f32 %v369, %v451
  %v453 = vpop.f32.mrb[0].mxu0
  %v454 = vpop.f32.mrb[0].mxu0
  %v455 = vadd.f32 %v369, %v454
  %v456 = vpop.f32.mrb[0].mxu0
  %457 = vmatprep.mubr.bf16.mxu0 0
  %458 = vmatmul.mubr.bf16.gmra.mrb[0].mxu0 %v388
  %v459 = vpop.f32.mrb[0].mxu0
  %v460 = vadd.f32 %v369, %v459
  %v461 = vpop.f32.mrb[0].mxu0
  %v462 = vpop.f32.mrb[0].mxu0
  %v463 = vadd.f32 %v369, %v462
  %v464 = vpop.f32.mrb[0].mxu0
  %465 = vmatprep.mubr.bf16.mxu0 0
  %466 = vmatmul.mubr.bf16.gmra.mrb[0].mxu0 %v391
  %v467 = vpop.f32.mrb[0].mxu0
  %v468 = vadd.f32 %v369, %v467
  %v469 = vpop.f32.mrb[0].mxu0
  %v470 = vpop.f32.mrb[0].mxu0
  %v471 = vadd.f32 %v369, %v470
  %v472 = vpop.f32.mrb[0].mxu0
  %473 = vmatprep.mubr.bf16.mxu0 0
  %474 = vmatmul.mubr.bf16.gmra.mrb[0].mxu0 %v394
  %v475 = vpop.f32.mrb[0].mxu0
  %v476 = vadd.f32 %v369, %v475
  %v477 = vpop.f32.mrb[0].mxu0
  %v478 = vpop.f32.mrb[0].mxu0
  %v479 = vadd.f32 %v369, %v478
  %v480 = vpop.f32.mrb[0].mxu0
  %481 = vmatprep.mubr.bf16.mxu0 0
  %482 = vmatmul.mubr.bf16.gmra.mrb[0].mxu0 %v397
  %v483 = vpop.f32.mrb[0].mxu0
  %v484 = vadd.f32 %v369, %v483
  %v485 = vpop.f32.mrb[0].mxu0
  %v486 = vpop.f32.mrb[0].mxu0
  %v487 = vadd.f32 %v369, %v486
  %v488 = vpop.f32.mrb[0].mxu0
  %489 = vmatprep.mubr.bf16.mxu0 0
  %490 = vmatmul.mubr.bf16.gmra.mrb[0].mxu0 %v400
  %v491 = vpop.f32.mrb[0].mxu0
  %v492 = vadd.f32 %v369, %v491
  %v493 = vpop.f32.mrb[0].mxu0
  %v494 = vpop.f32.mrb[0].mxu0
  %v495 = vadd.f32 %v369, %v494
  %v496 = vpop.f32.mrb[0].mxu0
  %497 = vmatprep.mubr.bf16.mxu0 0
  %498 = vmatmul.mubr.bf16.gmra.mrb[0].mxu0 %v403
  %v499 = vpop.f32.mrb[0].mxu0
  %v500 = vadd.f32 %v369, %v499
  %v501 = vpop.f32.mrb[0].mxu0
  %v502 = vpop.f32.mrb[0].mxu0
  %v503 = vadd.f32 %v369, %v502
  %v504 = vpop.f32.mrb[0].mxu0
  %505 = vdwg.mxu0
  %vm506 = vcmask 392192
  %v507 = vsel %vm506, %v444, -inf
  %v508 = vrot.slane %v507, 4
  %v509 = vmax.f32 %v507, %v508
  %v510 = vrot.slane %v509, 2
  %v511 = vmax.f32 %v509, %v510
  %v512 = vrot.slane %v511, 1
  %v513 = vmax.f32 %v511, %v512
  %v514 = vsel %vm506, %v447, -inf
  %v515 = vrot.slane %v514, 4
  %v516 = vmax.f32 %v514, %v515
  %v517 = vrot.slane %v516, 2
  %v518 = vmax.f32 %v516, %v517
  %v519 = vrot.slane %v518, 1
  %v520 = vmax.f32 %v518, %v519
  %v521 = vsel %vm506, %v452, -inf
  %v522 = vrot.slane %v521, 4
  %v523 = vmax.f32 %v521, %v522
  %v524 = vrot.slane %v523, 2
  %v525 = vmax.f32 %v523, %v524
  %v526 = vrot.slane %v525, 1
  %v527 = vmax.f32 %v525, %v526
  %v528 = vsel %vm506, %v455, -inf
  %v529 = vrot.slane %v528, 4
  %v530 = vmax.f32 %v528, %v529
  %v531 = vrot.slane %v530, 2
  %v532 = vmax.f32 %v530, %v531
  %v533 = vrot.slane %v532, 1
  %v534 = vmax.f32 %v532, %v533
  %v535 = vsel %vm506, %v460, -inf
  %v536 = vrot.slane %v535, 4
  %v537 = vmax.f32 %v535, %v536
  %v538 = vrot.slane %v537, 2
  %v539 = vmax.f32 %v537, %v538
  %v540 = vrot.slane %v539, 1
  %v541 = vmax.f32 %v539, %v540
  %v542 = vsel %vm506, %v463, -inf
  %v543 = vrot.slane %v542, 4
  %v544 = vmax.f32 %v542, %v543
  %v545 = vrot.slane %v544, 2
  %v546 = vmax.f32 %v544, %v545
  %v547 = vrot.slane %v546, 1
  %v548 = vmax.f32 %v546, %v547
  %v549 = vsel %vm506, %v468, -inf
  %v550 = vrot.slane %v549, 4
  %v551 = vmax.f32 %v549, %v550
  %v552 = vrot.slane %v551, 2
  %v553 = vmax.f32 %v551, %v552
  %v554 = vrot.slane %v553, 1
  %v555 = vmax.f32 %v553, %v554
  %v556 = vsel %vm506, %v471, -inf
  %v557 = vrot.slane %v556, 4
  %v558 = vmax.f32 %v556, %v557
  %v559 = vrot.slane %v558, 2
  %v560 = vmax.f32 %v558, %v559
  %v561 = vrot.slane %v560, 1
  %v562 = vmax.f32 %v560, %v561
  %v563 = vsel %vm506, %v476, -inf
  %v564 = vrot.slane %v563, 4
  %v565 = vmax.f32 %v563, %v564
  %v566 = vrot.slane %v565, 2
  %v567 = vmax.f32 %v565, %v566
  %v568 = vrot.slane %v567, 1
  %v569 = vmax.f32 %v567, %v568
  %v570 = vsel %vm506, %v479, -inf
  %v571 = vrot.slane %v570, 4
  %v572 = vmax.f32 %v570, %v571
  %v573 = vrot.slane %v572, 2
  %v574 = vmax.f32 %v572, %v573
  %v575 = vrot.slane %v574, 1
  %v576 = vmax.f32 %v574, %v575
  %v577 = vsel %vm506, %v484, -inf
  %v578 = vrot.slane %v577, 4
  %v579 = vmax.f32 %v577, %v578
  %v580 = vrot.slane %v579, 2
  %v581 = vmax.f32 %v579, %v580
  %v582 = vrot.slane %v581, 1
  %v583 = vmax.f32 %v581, %v582
  %v584 = vsel %vm506, %v487, -inf
  %v585 = vrot.slane %v584, 4
  %v586 = vmax.f32 %v584, %v585
  %v587 = vrot.slane %v586, 2
  %v588 = vmax.f32 %v586, %v587
  %v589 = vrot.slane %v588, 1
  %v590 = vmax.f32 %v588, %v589
  %v591 = vsel %vm506, %v492, -inf
  %v592 = vrot.slane %v591, 4
  %v593 = vmax.f32 %v591, %v592
  %v594 = vrot.slane %v593, 2
  %v595 = vmax.f32 %v593, %v594
  %v596 = vrot.slane %v595, 1
  %v597 = vmax.f32 %v595, %v596
  %v598 = vsel %vm506, %v495, -inf
  %v599 = vrot.slane %v598, 4
  %v600 = vmax.f32 %v598, %v599
  %v601 = vrot.slane %v600, 2
  %v602 = vmax.f32 %v600, %v601
  %v603 = vrot.slane %v602, 1
  %v604 = vmax.f32 %v602, %v603
  %v605 = vsel %vm506, %v500, -inf
  %v606 = vrot.slane %v605, 4
  %v607 = vmax.f32 %v605, %v606
  %v608 = vrot.slane %v607, 2
  %v609 = vmax.f32 %v607, %v608
  %v610 = vrot.slane %v609, 1
  %v611 = vmax.f32 %v609, %v610
  %v612 = vsel %vm506, %v503, -inf
  %v613 = vrot.slane %v612, 4
  %v614 = vmax.f32 %v612, %v613
  %v615 = vrot.slane %v614, 2
  %v616 = vmax.f32 %v614, %v615
  %v617 = vrot.slane %v616, 1
  %v618 = vmax.f32 %v616, %v617
  %vm635 = vcmask 1041409
  %v636 = vsel %vm635, %v520, %v513
  %vm637 = vcmask 1042434
  %v638 = vsel %vm637, %v527, %v636
  %vm639 = vcmask 1043459
  %v640 = vsel %vm639, %v534, %v638
  %vm641 = vcmask 1044484
  %v642 = vsel %vm641, %v541, %v640
  %vm643 = vcmask 1045509
  %v644 = vsel %vm643, %v548, %v642
  %vm645 = vcmask 1046534
  %v646 = vsel %vm645, %v555, %v644
  %vm647 = vcmask 1047559
  %v648 = vsel %vm647, %v562, %v646
  %v649 = vsel %vm635, %v576, %v569
  %v650 = vsel %vm637, %v583, %v649
  %v651 = vsel %vm639, %v590, %v650
  %v652 = vsel %vm641, %v597, %v651
  %v653 = vsel %vm643, %v604, %v652
  %v654 = vsel %vm645, %v611, %v653
  %v655 = vsel %vm647, %v618, %v654
  %658 = vst.msk [vmem:[%s14] sm:$0xff] %vm506, %v648
  %659 = vst.msk [vmem:[%s14 + $0x8] sm:$0xff] %vm506, %v655
  %v660 = vld [vmem:[%s1] sm:$0xff]
  %v661 = vld [vmem:[%s1 + $0x8] sm:$0xff]
  %v662 = vpack.c.bf16 %v661, %v660
  %v663 = vld [vmem:[%s6] sm:$0x3]
  %v664 = vld [vmem:[%s7] sm:$0x1]
  %v666 = vlaneseq
  %v667 = vshrl.u32 %v666, 7
  %v668 = vsub.s32 0, %v667
  %v669 = vrot.slane %v664, %v668
  %vm671 = vcmask 23552
  %v673 = vsel %vm671, %v662, 0
  %vm675 = vcmask 1040384
  %vm676 = vcmask 1041408
  %v677 = vsel %vm675, 4294967295, 65535
  %v678 = vsel %vm676, %v677, 0
  %v680 = vand.u32 %v663, %v678
  %682 = vmatprep.subr.bf16.mxu0 0
  %683 = vmatpush1.bf16.msra.mxu0 %v680
  %684 = vmatprep.subr.bf16.mxu0 0
  %685 = vmatpush1.bf16.msra.mxu0 0
  %686 = vmatprep.subr.bf16.mxu0 0
  %687 = vmatpush1.bf16.msra.mxu0 0
  %688 = vmatprep.subr.bf16.mxu0 0
  %689 = vmatpush1.bf16.msra.mxu0 0
  %690 = vmatprep.subr.bf16.mxu0 0
  %691 = vmatpush1.bf16.msra.mxu0 0
  %692 = vmatprep.subr.bf16.mxu0 0
  %693 = vmatpush1.bf16.msra.mxu0 0
  %694 = vmatprep.subr.bf16.mxu0 0
  %695 = vmatpush1.bf16.msra.mxu0 0
  %696 = vmatprep.subr.bf16.mxu0 0
  %697 = vmatpush1.bf16.msra.mxu0 0
  %698 = vmatprep.subr.bf16.mxu0 0
  %699 = vmatpush1.bf16.msra.mxu0 0
  %700 = vmatprep.subr.bf16.mxu0 0
  %701 = vmatpush1.bf16.msra.mxu0 0
  %702 = vmatprep.subr.bf16.mxu0 0
  %703 = vmatpush1.bf16.msra.mxu0 0
  %704 = vmatprep.subr.bf16.mxu0 0
  %705 = vmatpush1.bf16.msra.mxu0 0
  %706 = vmatprep.subr.bf16.mxu0 0
  %707 = vmatpush1.bf16.msra.mxu0 0
  %708 = vmatprep.subr.bf16.mxu0 0
  %709 = vmatpush1.bf16.msra.mxu0 0
  %710 = vmatprep.subr.bf16.mxu0 0
  %711 = vmatpush1.bf16.msra.mxu0 0
  %712 = vmatprep.subr.bf16.mxu0 0
  %713 = vmatpush1.bf16.msra.mxu0 0
  %714 = vmatprep.mubr.bf16.mxu0 0
  %715 = vmatmul.mubr.bf16.gmra.mrb[0].mxu0 %v673
  %v716 = vpop.f32.mrb[0].mxu0
  %v717 = vadd.f32 %v669, %v716
  %v718 = vpop.f32.mrb[0].mxu0
  %v719 = vpop.f32.mrb[0].mxu0
  %v720 = vadd.f32 %v669, %v719
  %v721 = vpop.f32.mrb[0].mxu0
  %722 = vdwg.mxu0
  %v723 = vmul.f32 %v717, %v717
  %v724 = vmul.f32 %v720, %v720
  %v725 = vmul.f32 %v717, %v723
  %v726 = vmul.f32 %v720, %v724
  %v727 = vmul.f32 %v725, 0.044715
  %v728 = vmul.f32 %v726, 0.044715
  %v729 = vadd.f32 %v717, %v727
  %v730 = vadd.f32 %v720, %v728
  %v731 = vmul.f32 %v729, 0.7978846
  %v732 = vmul.f32 %v730, 0.7978846
  %v733 = vtanh.pop %v731
  %v734 = vtanh.pop %v732
  %v735 = vadd.f32 %v733, 1.0
  %v736 = vadd.f32 %v734, 1.0
  %v737 = vmul.f32 %v735, 0.5
  %v738 = vmul.f32 %v736, 0.5
  %v739 = vmul.f32 %v717, %v737
  %v740 = vmul.f32 %v720, %v738
  %v741 = vpack.c.bf16 %v740, %v739
  %v742 = vld [vmem:[%s8] sm:$0xf]
  %v743 = vld [vmem:[%s8 + $0x4] sm:$0xf]
  %v744 = vld [vmem:[%s8 + $0x8] sm:$0xf]
  %v745 = vld [vmem:[%s8 + $0xc] sm:$0xf]
  %v746 = vld [vmem:[%s8 + $0x10] sm:$0xf]
  %v747 = vld [vmem:[%s8 + $0x14] sm:$0xf]
  %v748 = vld [vmem:[%s8 + $0x18] sm:$0xf]
  %v749 = vld [vmem:[%s8 + $0x1c] sm:$0xf]
  %v750 = vld [vmem:[%s8 + $0x20] sm:$0xf]
  %v751 = vld [vmem:[%s8 + $0x24] sm:$0xf]
  %v752 = vld [vmem:[%s8 + $0x28] sm:$0xf]
  %v753 = vld [vmem:[%s8 + $0x2c] sm:$0xf]
  %v754 = vld [vmem:[%s8 + $0x30] sm:$0xf]
  %v755 = vld [vmem:[%s8 + $0x34] sm:$0xf]
  %v756 = vld [vmem:[%s8 + $0x38] sm:$0xf]
  %v757 = vld [vmem:[%s8 + $0x3c] sm:$0xf]
  %v758 = vld [vmem:[%s9] sm:$0x1]
  %v760 = vlaneseq
  %v761 = vshrl.u32 %v760, 7
  %v762 = vsub.s32 0, %v761
  %v763 = vrot.slane %v758, %v762
  %v781 = vunpack.c.l.b16 %v742
  %v782 = vunpack.c.l.b16 %v743
  %v783 = vunpack.c.l.b16 %v744
  %v784 = vunpack.c.l.b16 %v745
  %v785 = vunpack.c.l.b16 %v746
  %v786 = vunpack.c.l.b16 %v747
  %v787 = vunpack.c.l.b16 %v748
  %v788 = vunpack.c.l.b16 %v749
  %v789 = vunpack.c.l.b16 %v750
  %v790 = vunpack.c.l.b16 %v751
  %v791 = vunpack.c.l.b16 %v752
  %v792 = vunpack.c.l.b16 %v753
  %v793 = vunpack.c.l.b16 %v754
  %v794 = vunpack.c.l.b16 %v755
  %v795 = vunpack.c.l.b16 %v756
  %v796 = vunpack.c.l.b16 %v757
  %v797 = vpack.c.b16 %v782, %v781
  %v798 = vpack.c.b16 %v784, %v783
  %v799 = vpack.c.b16 %v786, %v785
  %v800 = vpack.c.b16 %v788, %v787
  %v801 = vpack.c.b16 %v790, %v789
  %v802 = vpack.c.b16 %v792, %v791
  %v803 = vpack.c.b16 %v794, %v793
  %v804 = vpack.c.b16 %v796, %v795
  %813 = vmatprep.subr.bf16.mxu0 0
  %814 = vmatpush1.bf16.msra.mxu0 %v797
  %815 = vmatprep.subr.bf16.mxu0 0
  %816 = vmatpush1.bf16.msra.mxu0 %v798
  %817 = vmatprep.subr.bf16.mxu0 0
  %818 = vmatpush1.bf16.msra.mxu0 %v799
  %819 = vmatprep.subr.bf16.mxu0 0
  %820 = vmatpush1.bf16.msra.mxu0 %v800
  %821 = vmatprep.subr.bf16.mxu0 0
  %822 = vmatpush1.bf16.msra.mxu0 %v801
  %823 = vmatprep.subr.bf16.mxu0 0
  %824 = vmatpush1.bf16.msra.mxu0 %v802
  %825 = vmatprep.subr.bf16.mxu0 0
  %826 = vmatpush1.bf16.msra.mxu0 %v803
  %827 = vmatprep.subr.bf16.mxu0 0
  %828 = vmatpush1.bf16.msra.mxu0 %v804
  %829 = vmatprep.subr.bf16.mxu0 0
  %830 = vmatpush1.bf16.msra.mxu0 0
  %831 = vmatprep.subr.bf16.mxu0 0
  %832 = vmatpush1.bf16.msra.mxu0 0
  %833 = vmatprep.subr.bf16.mxu0 0
  %834 = vmatpush1.bf16.msra.mxu0 0
  %835 = vmatprep.subr.bf16.mxu0 0
  %836 = vmatpush1.bf16.msra.mxu0 0
  %837 = vmatprep.subr.bf16.mxu0 0
  %838 = vmatpush1.bf16.msra.mxu0 0
  %839 = vmatprep.subr.bf16.mxu0 0
  %840 = vmatpush1.bf16.msra.mxu0 0
  %841 = vmatprep.subr.bf16.mxu0 0
  %842 = vmatpush1.bf16.msra.mxu0 0
  %843 = vmatprep.subr.bf16.mxu0 0
  %844 = vmatpush1.bf16.msra.mxu0 0
  %845 = vmatprep.mubr.bf16.mxu0 0
  %846 = vmatmul.mubr.bf16.gmra.mrb[0].mxu0 %v741
  %v847 = vpop.f32.mrb[0].mxu0
  %v848 = vadd.f32 %v763, %v847
  %v849 = vpop.f32.mrb[0].mxu0
  %v850 = vpop.f32.mrb[0].mxu0
  %v851 = vadd.f32 %v763, %v850
  %v852 = vpop.f32.mrb[0].mxu0
  %853 = vdwg.mxu0
  %854 = vst.msk [vmem:[%s15] sm:$0xff] %vm506, %v848
  %855 = vst.msk [vmem:[%s15 + $0x8] sm:$0xff] %vm506, %v851
  %v856 = vld [vmem:[%s10] sm:$0x3]
  %v857 = vld [vmem:[%s11] sm:$0x1]
  %v859 = vlaneseq
  %v860 = vshrl.u32 %v859, 7
  %v861 = vsub.s32 0, %v860
  %v862 = vrot.slane %v857, %v861
  %v865 = vand.u32 %v856, %v678
  %867 = vmatprep.subr.bf16.mxu0 0
  %868 = vmatpush1.bf16.msra.mxu0 %v865
  %869 = vmatprep.subr.bf16.mxu0 0
  %870 = vmatpush1.bf16.msra.mxu0 0
  %871 = vmatprep.subr.bf16.mxu0 0
  %872 = vmatpush1.bf16.msra.mxu0 0
  %873 = vmatprep.subr.bf16.mxu0 0
  %874 = vmatpush1.bf16.msra.mxu0 0
  %875 = vmatprep.subr.bf16.mxu0 0
  %876 = vmatpush1.bf16.msra.mxu0 0
  %877 = vmatprep.subr.bf16.mxu0 0
  %878 = vmatpush1.bf16.msra.mxu0 0
  %879 = vmatprep.subr.bf16.mxu0 0
  %880 = vmatpush1.bf16.msra.mxu0 0
  %881 = vmatprep.subr.bf16.mxu0 0
  %882 = vmatpush1.bf16.msra.mxu0 0
  %883 = vmatprep.subr.bf16.mxu0 0
  %884 = vmatpush1.bf16.msra.mxu0 0
  %885 = vmatprep.subr.bf16.mxu0 0
  %886 = vmatpush1.bf16.msra.mxu0 0
  %887 = vmatprep.subr.bf16.mxu0 0
  %888 = vmatpush1.bf16.msra.mxu0 0
  %889 = vmatprep.subr.bf16.mxu0 0
  %890 = vmatpush1.bf16.msra.mxu0 0
  %891 = vmatprep.subr.bf16.mxu0 0
  %892 = vmatpush1.bf16.msra.mxu0 0
  %893 = vmatprep.subr.bf16.mxu0 0
  %894 = vmatpush1.bf16.msra.mxu0 0
  %895 = vmatprep.subr.bf16.mxu0 0
  %896 = vmatpush1.bf16.msra.mxu0 0
  %897 = vmatprep.subr.bf16.mxu0 0
  %898 = vmatpush1.bf16.msra.mxu0 0
  %899 = vmatprep.mubr.bf16.mxu0 0
  %900 = vmatmul.mubr.bf16.gmra.mrb[0].mxu0 %v673
  %v901 = vpop.f32.mrb[0].mxu0
  %v902 = vadd.f32 %v862, %v901
  %v903 = vpop.f32.mrb[0].mxu0
  %v904 = vpop.f32.mrb[0].mxu0
  %v905 = vadd.f32 %v862, %v904
  %v906 = vpop.f32.mrb[0].mxu0
  %907 = vdwg.mxu0
  %v908 = vmul.f32 %v902, %v902
  %v909 = vmul.f32 %v905, %v905
  %v910 = vmul.f32 %v902, %v908
  %v911 = vmul.f32 %v905, %v909
  %v912 = vmul.f32 %v910, 0.044715
  %v913 = vmul.f32 %v911, 0.044715
  %v914 = vadd.f32 %v902, %v912
  %v915 = vadd.f32 %v905, %v913
  %v916 = vmul.f32 %v914, 0.7978846
  %v917 = vmul.f32 %v915, 0.7978846
  %v918 = vtanh.pop %v916
  %v919 = vtanh.pop %v917
  %v920 = vadd.f32 %v918, 1.0
  %v921 = vadd.f32 %v919, 1.0
  %v922 = vmul.f32 %v920, 0.5
  %v923 = vmul.f32 %v921, 0.5
  %v924 = vmul.f32 %v902, %v922
  %v925 = vmul.f32 %v905, %v923
  %v926 = vpack.c.bf16 %v925, %v924
  %v927 = vld [vmem:[%s12] sm:$0xf]
  %v928 = vld [vmem:[%s12 + $0x4] sm:$0xf]
  %v929 = vld [vmem:[%s12 + $0x8] sm:$0xf]
  %v930 = vld [vmem:[%s12 + $0xc] sm:$0xf]
  %v931 = vld [vmem:[%s12 + $0x10] sm:$0xf]
  %v932 = vld [vmem:[%s12 + $0x14] sm:$0xf]
  %v933 = vld [vmem:[%s12 + $0x18] sm:$0xf]
  %v934 = vld [vmem:[%s12 + $0x1c] sm:$0xf]
  %v935 = vld [vmem:[%s12 + $0x20] sm:$0xf]
  %v936 = vld [vmem:[%s12 + $0x24] sm:$0xf]
  %v937 = vld [vmem:[%s12 + $0x28] sm:$0xf]
  %v938 = vld [vmem:[%s12 + $0x2c] sm:$0xf]
  %v939 = vld [vmem:[%s12 + $0x30] sm:$0xf]
  %v940 = vld [vmem:[%s12 + $0x34] sm:$0xf]
  %v941 = vld [vmem:[%s12 + $0x38] sm:$0xf]
  %v942 = vld [vmem:[%s12 + $0x3c] sm:$0xf]
  %v943 = vld [vmem:[%s13] sm:$0x1]
  %v945 = vlaneseq
  %v946 = vshrl.u32 %v945, 7
  %v947 = vsub.s32 0, %v946
  %v948 = vrot.slane %v943, %v947
  %v966 = vunpack.c.l.b16 %v927
  %v967 = vunpack.c.l.b16 %v928
  %v968 = vunpack.c.l.b16 %v929
  %v969 = vunpack.c.l.b16 %v930
  %v970 = vunpack.c.l.b16 %v931
  %v971 = vunpack.c.l.b16 %v932
  %v972 = vunpack.c.l.b16 %v933
  %v973 = vunpack.c.l.b16 %v934
  %v974 = vunpack.c.l.b16 %v935
  %v975 = vunpack.c.l.b16 %v936
  %v976 = vunpack.c.l.b16 %v937
  %v977 = vunpack.c.l.b16 %v938
  %v978 = vunpack.c.l.b16 %v939
  %v979 = vunpack.c.l.b16 %v940
  %v980 = vunpack.c.l.b16 %v941
  %v981 = vunpack.c.l.b16 %v942
  %v982 = vpack.c.b16 %v967, %v966
  %v983 = vpack.c.b16 %v969, %v968
  %v984 = vpack.c.b16 %v971, %v970
  %v985 = vpack.c.b16 %v973, %v972
  %v986 = vpack.c.b16 %v975, %v974
  %v987 = vpack.c.b16 %v977, %v976
  %v988 = vpack.c.b16 %v979, %v978
  %v989 = vpack.c.b16 %v981, %v980
  %998 = vmatprep.subr.bf16.mxu0 0
  %999 = vmatpush1.bf16.msra.mxu0 %v982
  %1000 = vmatprep.subr.bf16.mxu0 0
  %1001 = vmatpush1.bf16.msra.mxu0 %v983
  %1002 = vmatprep.subr.bf16.mxu0 0
  %1003 = vmatpush1.bf16.msra.mxu0 %v984
  %1004 = vmatprep.subr.bf16.mxu0 0
  %1005 = vmatpush1.bf16.msra.mxu0 %v985
  %1006 = vmatprep.subr.bf16.mxu0 0
  %1007 = vmatpush1.bf16.msra.mxu0 %v986
  %1008 = vmatprep.subr.bf16.mxu0 0
  %1009 = vmatpush1.bf16.msra.mxu0 %v987
  %1010 = vmatprep.subr.bf16.mxu0 0
  %1011 = vmatpush1.bf16.msra.mxu0 %v988
  %1012 = vmatprep.subr.bf16.mxu0 0
  %1013 = vmatpush1.bf16.msra.mxu0 %v989
  %1014 = vmatprep.subr.bf16.mxu0 0
  %1015 = vmatpush1.bf16.msra.mxu0 0
  %1016 = vmatprep.subr.bf16.mxu0 0
  %1017 = vmatpush1.bf16.msra.mxu0 0
  %1018 = vmatprep.subr.bf16.mxu0 0
  %1019 = vmatpush1.bf16.msra.mxu0 0
  %1020 = vmatprep.subr.bf16.mxu0 0
  %1021 = vmatpush1.bf16.msra.mxu0 0
  %1022 = vmatprep.subr.bf16.mxu0 0
  %1023 = vmatpush1.bf16.msra.mxu0 0
  %1024 = vmatprep.subr.bf16.mxu0 0
  %1025 = vmatpush1.bf16.msra.mxu0 0
  %1026 = vmatprep.subr.bf16.mxu0 0
  %1027 = vmatpush1.bf16.msra.mxu0 0
  %1028 = vmatprep.subr.bf16.mxu0 0
  %1029 = vmatpush1.bf16.msra.mxu0 0
  %1030 = vmatprep.mubr.bf16.mxu0 0
  %1031 = vmatmul.mubr.bf16.gmra.mrb[0].mxu0 %v926
  %v1032 = vpop.f32.mrb[0].mxu0
  %v1033 = vadd.f32 %v948, %v1032
  %v1034 = vpop.f32.mrb[0].mxu0
  %v1035 = vpop.f32.mrb[0].mxu0
  %v1036 = vadd.f32 %v948, %v1035
  %v1037 = vpop.f32.mrb[0].mxu0
  %1038 = vdwg.mxu0
  %vm1039 = vcmask 261120
  %1040 = vst.msk [vmem:[%s16] sm:$0xff] %vm1039, %v1033
  %1041 = vst.msk [vmem:[%s16 + $0x8] sm:$0xff] %vm1039, %v1036
  // Predicated region
  $region58: #{masked_point_vit_forward.3} parent=0 // pred_check
    _
  $region59: #{masked_point_vit_forward.3} parent=0 // pred_check_branch
    %1043 = sbr.rel (0) target = $region61
  $region60: #{masked_point_vit_forward.3} parent=0 // pred_region
    _
  $region61: #{masked_point_vit_forward.3} parent=0 // pred_fallthru
    _
  // Predicated region
  $region62: #{masked_point_vit_forward.3} parent=0 // pred_check
    _
  $region63: #{masked_point_vit_forward.3} parent=0 // pred_check_branch
    %1045 = sbr.rel (0) target = $region65
  $region64: #{masked_point_vit_forward.3} parent=0 // pred_region
    _
  $region65: #{masked_point_vit_forward.3} parent=0 // pred_fallthru
    _
  // Predicated region
  $region66: #{masked_point_vit_forward.3} parent=0 // pred_check
    _
  $region67: #{masked_point_vit_forward.3} parent=0 // pred_check_branch
    %1047 = sbr.rel (0) target = $region69
  $region68: #{masked_point_vit_forward.3} parent=0 // pred_region
    _
  $region69: #{masked_point_vit_forward.3} parent=0 // pred_fallthru
    _
  // Predicated region
  $region70: #{masked_point_vit_forward.3} parent=0 // pred_check
    _
  $region71: #{masked_point_vit_forward.3} parent=0 // pred_check_branch
    %1049 = sbr.rel (0) target = $region73
  $region72: #{masked_point_vit_forward.3} parent=0 // pred_region
    _
  $region73: #{masked_point_vit_forward.3} parent=0 // pred_fallthru
    _
  // Predicated region
  $region74: #{masked_point_vit_forward.3} parent=0 // pred_check
    _
  $region75: #{masked_point_vit_forward.3} parent=0 // pred_check_branch
    %1051 = sbr.rel (0) target = $region77
  $region76: #{masked_point_vit_forward.3} parent=0 // pred_region
    _
  $region77: #{masked_point_vit_forward.3} parent=0 // pred_fallthru
    _
  // Predicated region
  $region78: #{masked_point_vit_forward.3} parent=0 // pred_check
    _
  $region79: #{masked_point_vit_forward.3} parent=0 // pred_check_branch
    %1053 = sbr.rel (0) target = $region81
  $region80: #{masked_point_vit_forward.3} parent=0 // pred_region
    _
  $region81: #{masked_point_vit_forward.3} parent=0 // pred_fallthru
    _

// kernel: masked_point_vit_forward.4
$region0: #{masked_point_vit_forward.4}
  #allocation0 [shape = 'u32[]', space=smem, size = 0x4, offset = 0x4, fixed_abs, tag = 'smem constant byte address 0x4 - core index']
  #allocation1 [shape = 'u32[144,128]{1,0:T(1,128)}', space=vmem, size = 0x12000, scoped, tag = 'internal scratch']
  #allocation2 [shape = 'f32[3,48]{1,0:T(4,128)}', space=vmem, size = 0x800, scoped, tag = 'scratch operand']
  %s0 = inlined_call_operand.vmem [shape: f32[2,3,48], index: 0, kind: input, shape index: {}]
  %s1 = inlined_call_operand.vmem [shape: f32[2,3,48], index: 1, kind: input, shape index: {}]
  %s2 = inlined_call_operand.vmem [shape: f32[2,1,48], index: 2, kind: input, shape index: {}]
  %s3 = inlined_call_operand.vmem [shape: f32[2,1,48], index: 3, kind: input, shape index: {}]
  %s4 = inlined_call_operand.vmem [shape: bf16[2,48,144], index: 4, kind: input, shape index: {}]
  %s5 = inlined_call_operand.vmem [shape: bf16[2,48,48], index: 5, kind: input, shape index: {}]
  %s6 = inlined_call_operand.vmem [shape: f32[2,1,48], index: 6, kind: input, shape index: {}]
  %s7 = inlined_call_operand.vmem [shape: f32[2,1,48], index: 7, kind: input, shape index: {}]
  %s8 = inlined_call_operand.vmem [shape: f32[2,1,48], index: 8, kind: input, shape index: {}]
  %s9 = inlined_call_operand.vmem [shape: bf16[2,48,192], index: 9, kind: input, shape index: {}]
  %s10 = inlined_call_operand.vmem [shape: f32[2,1,192], index: 10, kind: input, shape index: {}]
  %s11 = inlined_call_operand.vmem [shape: bf16[2,192,48], index: 11, kind: input, shape index: {}]
  %s12 = inlined_call_operand.vmem [shape: f32[2,1,48], index: 12, kind: input, shape index: {}]
  %s13 = inlined_call_operand.vmem [shape: f32[1,48], index: 13, kind: input, shape index: {}]
  %s14 = inlined_call_operand.vmem [shape: f32[1,48], index: 14, kind: input, shape index: {}]
  %s15 = inlined_call_operand.vmem [shape: bf16[48,32], index: 15, kind: input, shape index: {}]
  %s16 = inlined_call_operand.vmem [shape: f32[1,32], index: 16, kind: input, shape index: {}]
  %s17 = inlined_call_operand.vmem [shape: f32[2,3,32], index: 17, kind: output, shape index: {}]
  %s18 = sld [smem:[#allocation0]]
  $region109: #{masked_point_vit_forward.4} parent=0
    _
  %s20 = ssub.s32 1, %s18
  %s21 = scalar_select 0, %s20, %s18
  loop: start=0, step=1, limit=6
  $region2: #{masked_point_vit_forward.4} parent=0 // loop_pre_header
    _
  $region3: #{masked_point_vit_forward.4} parent=0 // loop_header
    %s23 = sphi 0, %s27
    %p24 = scmp.ge.s32.totalorder %s23, 6
    %s30 = sphi 0, %s42
    %s31 = sphi 0, %s38
    %s32 = sphi 0, %s30
    %s33 = sphi 0, %s31
    %s34 = sphi 0, %s32
    %s35 = sphi 0, %s33
    %s45 = sphi 0, %s47
    %s48 = sphi 0, %s45
    %s49 = sphi 0, %s48
    %s65 = sphi 0, %s49
    %s71 = sphi 0, %s73
    %s74 = sphi 0, %s71
    %s75 = sphi 0, %s74
    %s91 = sphi 0, %s75
    %s97 = sphi 0, %s99
    %s100 = sphi 0, %s97
    %s101 = sphi 0, %s100
    %s117 = sphi 0, %s101
    %s123 = sphi 0, %s125
    %s126 = sphi 0, %s123
    %s127 = sphi 0, %s126
    %s143 = sphi 0, %s127
    %s149 = sphi 0, %s151
    %s152 = sphi 0, %s149
    %s153 = sphi 0, %s152
    %s169 = sphi 0, %s153
    %s175 = sphi 0, %s177
    %s178 = sphi 0, %s175
    %s179 = sphi 0, %s178
    %s195 = sphi 0, %s179
    %s201 = sphi 0, %s203
    %s204 = sphi 0, %s201
    %s205 = sphi 0, %s204
    %s221 = sphi 0, %s205
    %s227 = sphi 0, %s229
    %s230 = sphi 0, %s227
    %s231 = sphi 0, %s230
    %s247 = sphi 0, %s231
    %s253 = sphi 0, %s255
    %s256 = sphi 0, %s253
    %s257 = sphi 0, %s256
    %s273 = sphi 0, %s257
    %s279 = sphi 0, %s281
    %s282 = sphi 0, %s279
    %s283 = sphi 0, %s282
    %s299 = sphi 0, %s283
    %s305 = sphi 0, %s307
    %s308 = sphi 0, %s305
    %s309 = sphi 0, %s308
    %s325 = sphi 0, %s309
    %s331 = sphi 0, %s333
    %s334 = sphi 0, %s331
    %s335 = sphi 0, %s334
    %s351 = sphi 0, %s335
    %s357 = sphi 0, %s359
    %s360 = sphi 0, %s357
    %s361 = sphi 0, %s360
    %s377 = sphi 0, %s361
    %s381 = sphi 0, %s381
    %s383 = sphi 0, %s381
    %s384 = sphi 0, %s383
    %s398 = sphi 0, %s384
    %s402 = sphi 0, %s402
    %s404 = sphi 0, %s402
    %s405 = sphi 0, %s404
    %s419 = sphi 0, %s405
    %s423 = sphi 0, %s423
    %s425 = sphi 0, %s423
    %s426 = sphi 0, %s425
    %s440 = sphi 0, %s426
    %s444 = sphi 0, %s444
    %s446 = sphi 0, %s444
    %s447 = sphi 0, %s446
    %s461 = sphi 0, %s447
    %s467 = sphi 0, %s469
    %s470 = sphi 0, %s467
    %s471 = sphi 0, %s470
    %s487 = sphi 0, %s471
  $region4: #{masked_point_vit_forward.4} parent=0 // loop_header_branch
    %26 = sbr.rel (%p24) target = $region8
  $region5: #{masked_point_vit_forward.4} parent=0 // loop_body
    %s28 = ssub.s32 %s23, 1
    %s29 = ssub.s32 %s23, 2
    %s36 = sadd.s32 1, %s31
    %p37 = scmp.ge.s32.totalorder %s36, 2
    %s38 = scalar_select %p37, 0, %s36
    %s39 = sadd.s32 1, %s30
    %s40 = scalar_select %p37, %s39, %s30
    %p41 = scmp.ge.s32.totalorder %s40, 2
    %s42 = scalar_select %p41, 0, %s40
    %s43 = ssub.s32 %s30, %s42
    %p44 = scmp.eq.s32.totalorder %s43, 0
    %s46 = sadd.s32 %s45, 1
    %s47 = scalar_select %p44, %s45, %s46
    %p50 = pneg %p44
    %p51 = scmp.eq.s32.totalorder %s23, 3
    %p52 = por %p50, %p51
    %p53 = scmp.ne.s32.totalorder %s45, %s48
    %p54 = scmp.eq.s32.totalorder %s23, 0
    %p55 = por %p53, %p54
    %p56 = scmp.ne.s32.totalorder %s45, %s48
    %p57 = scmp.eq.s32.totalorder %s28, 3
    %p58 = por %p56, %p57
    %p59 = scmp.ne.s32.totalorder %s48, %s49
    %p60 = scmp.eq.s32.totalorder %s28, 0
    %p61 = por %p59, %p60
    %p62 = scmp.ne.s32.totalorder %s48, %s49
    %p63 = scmp.eq.s32.totalorder %s29, 3
    %p64 = por %p62, %p63
    %p66 = scmp.ne.s32.totalorder %s49, %s65
    %p67 = scmp.eq.s32.totalorder %s29, 0
    %p68 = por %p66, %p67
    %s69 = ssub.s32 %s30, %s42
    %p70 = scmp.eq.s32.totalorder %s69, 0
    %s72 = sadd.s32 %s71, 1
    %s73 = scalar_select %p70, %s71, %s72
    %p76 = pneg %p70
    %p77 = scmp.eq.s32.totalorder %s23, 3
    %p78 = por %p76, %p77
    %p79 = scmp.ne.s32.totalorder %s71, %s74
    %p80 = scmp.eq.s32.totalorder %s23, 0
    %p81 = por %p79, %p80
    %p82 = scmp.ne.s32.totalorder %s71, %s74
    %p83 = scmp.eq.s32.totalorder %s28, 3
    %p84 = por %p82, %p83
    %p85 = scmp.ne.s32.totalorder %s74, %s75
    %p86 = scmp.eq.s32.totalorder %s28, 0
    %p87 = por %p85, %p86
    %p88 = scmp.ne.s32.totalorder %s74, %s75
    %p89 = scmp.eq.s32.totalorder %s29, 3
    %p90 = por %p88, %p89
    %p92 = scmp.ne.s32.totalorder %s75, %s91
    %p93 = scmp.eq.s32.totalorder %s29, 0
    %p94 = por %p92, %p93
    %s95 = ssub.s32 %s31, %s38
    %p96 = scmp.eq.s32.totalorder %s95, 0
    %s98 = sadd.s32 %s97, 1
    %s99 = scalar_select %p96, %s97, %s98
    %p102 = pneg %p96
    %p103 = scmp.eq.s32.totalorder %s23, 3
    %p104 = por %p102, %p103
    %p105 = scmp.ne.s32.totalorder %s97, %s100
    %p106 = scmp.eq.s32.totalorder %s23, 0
    %p107 = por %p105, %p106
    %p108 = scmp.ne.s32.totalorder %s97, %s100
    %p109 = scmp.eq.s32.totalorder %s28, 3
    %p110 = por %p108, %p109
    %p111 = scmp.ne.s32.totalorder %s100, %s101
    %p112 = scmp.eq.s32.totalorder %s28, 0
    %p113 = por %p111, %p112
    %p114 = scmp.ne.s32.totalorder %s100, %s101
    %p115 = scmp.eq.s32.totalorder %s29, 3
    %p116 = por %p114, %p115
    %p118 = scmp.ne.s32.totalorder %s101, %s117
    %p119 = scmp.eq.s32.totalorder %s29, 0
    %p120 = por %p118, %p119
    %s121 = ssub.s32 %s31, %s38
    %p122 = scmp.eq.s32.totalorder %s121, 0
    %s124 = sadd.s32 %s123, 1
    %s125 = scalar_select %p122, %s123, %s124
    %p128 = pneg %p122
    %p129 = scmp.eq.s32.totalorder %s23, 3
    %p130 = por %p128, %p129
    %p131 = scmp.ne.s32.totalorder %s123, %s126
    %p132 = scmp.eq.s32.totalorder %s23, 0
    %p133 = por %p131, %p132
    %p134 = scmp.ne.s32.totalorder %s123, %s126
    %p135 = scmp.eq.s32.totalorder %s28, 3
    %p136 = por %p134, %p135
    %p137 = scmp.ne.s32.totalorder %s126, %s127
    %p138 = scmp.eq.s32.totalorder %s28, 0
    %p139 = por %p137, %p138
    %p140 = scmp.ne.s32.totalorder %s126, %s127
    %p141 = scmp.eq.s32.totalorder %s29, 3
    %p142 = por %p140, %p141
    %p144 = scmp.ne.s32.totalorder %s127, %s143
    %p145 = scmp.eq.s32.totalorder %s29, 0
    %p146 = por %p144, %p145
    %s147 = ssub.s32 %s31, %s38
    %p148 = scmp.eq.s32.totalorder %s147, 0
    %s150 = sadd.s32 %s149, 1
    %s151 = scalar_select %p148, %s149, %s150
    %p154 = pneg %p148
    %p155 = scmp.eq.s32.totalorder %s23, 3
    %p156 = por %p154, %p155
    %p157 = scmp.ne.s32.totalorder %s149, %s152
    %p158 = scmp.eq.s32.totalorder %s23, 0
    %p159 = por %p157, %p158
    %p160 = scmp.ne.s32.totalorder %s149, %s152
    %p161 = scmp.eq.s32.totalorder %s28, 3
    %p162 = por %p160, %p161
    %p163 = scmp.ne.s32.totalorder %s152, %s153
    %p164 = scmp.eq.s32.totalorder %s28, 0
    %p165 = por %p163, %p164
    %p166 = scmp.ne.s32.totalorder %s152, %s153
    %p167 = scmp.eq.s32.totalorder %s29, 3
    %p168 = por %p166, %p167
    %p170 = scmp.ne.s32.totalorder %s153, %s169
    %p171 = scmp.eq.s32.totalorder %s29, 0
    %p172 = por %p170, %p171
    %s173 = ssub.s32 %s31, %s38
    %p174 = scmp.eq.s32.totalorder %s173, 0
    %s176 = sadd.s32 %s175, 1
    %s177 = scalar_select %p174, %s175, %s176
    %p180 = pneg %p174
    %p181 = scmp.eq.s32.totalorder %s23, 3
    %p182 = por %p180, %p181
    %p183 = scmp.ne.s32.totalorder %s175, %s178
    %p184 = scmp.eq.s32.totalorder %s23, 0
    %p185 = por %p183, %p184
    %p186 = scmp.ne.s32.totalorder %s175, %s178
    %p187 = scmp.eq.s32.totalorder %s28, 3
    %p188 = por %p186, %p187
    %p189 = scmp.ne.s32.totalorder %s178, %s179
    %p190 = scmp.eq.s32.totalorder %s28, 0
    %p191 = por %p189, %p190
    %p192 = scmp.ne.s32.totalorder %s178, %s179
    %p193 = scmp.eq.s32.totalorder %s29, 3
    %p194 = por %p192, %p193
    %p196 = scmp.ne.s32.totalorder %s179, %s195
    %p197 = scmp.eq.s32.totalorder %s29, 0
    %p198 = por %p196, %p197
    %s199 = ssub.s32 %s31, %s38
    %p200 = scmp.eq.s32.totalorder %s199, 0
    %s202 = sadd.s32 %s201, 1
    %s203 = scalar_select %p200, %s201, %s202
    %p206 = pneg %p200
    %p207 = scmp.eq.s32.totalorder %s23, 3
    %p208 = por %p206, %p207
    %p209 = scmp.ne.s32.totalorder %s201, %s204
    %p210 = scmp.eq.s32.totalorder %s23, 0
    %p211 = por %p209, %p210
    %p212 = scmp.ne.s32.totalorder %s201, %s204
    %p213 = scmp.eq.s32.totalorder %s28, 3
    %p214 = por %p212, %p213
    %p215 = scmp.ne.s32.totalorder %s204, %s205
    %p216 = scmp.eq.s32.totalorder %s28, 0
    %p217 = por %p215, %p216
    %p218 = scmp.ne.s32.totalorder %s204, %s205
    %p219 = scmp.eq.s32.totalorder %s29, 3
    %p220 = por %p218, %p219
    %p222 = scmp.ne.s32.totalorder %s205, %s221
    %p223 = scmp.eq.s32.totalorder %s29, 0
    %p224 = por %p222, %p223
    %s225 = ssub.s32 %s31, %s38
    %p226 = scmp.eq.s32.totalorder %s225, 0
    %s228 = sadd.s32 %s227, 1
    %s229 = scalar_select %p226, %s227, %s228
    %p232 = pneg %p226
    %p233 = scmp.eq.s32.totalorder %s23, 3
    %p234 = por %p232, %p233
    %p235 = scmp.ne.s32.totalorder %s227, %s230
    %p236 = scmp.eq.s32.totalorder %s23, 0
    %p237 = por %p235, %p236
    %p238 = scmp.ne.s32.totalorder %s227, %s230
    %p239 = scmp.eq.s32.totalorder %s28, 3
    %p240 = por %p238, %p239
    %p241 = scmp.ne.s32.totalorder %s230, %s231
    %p242 = scmp.eq.s32.totalorder %s28, 0
    %p243 = por %p241, %p242
    %p244 = scmp.ne.s32.totalorder %s230, %s231
    %p245 = scmp.eq.s32.totalorder %s29, 3
    %p246 = por %p244, %p245
    %p248 = scmp.ne.s32.totalorder %s231, %s247
    %p249 = scmp.eq.s32.totalorder %s29, 0
    %p250 = por %p248, %p249
    %s251 = ssub.s32 %s31, %s38
    %p252 = scmp.eq.s32.totalorder %s251, 0
    %s254 = sadd.s32 %s253, 1
    %s255 = scalar_select %p252, %s253, %s254
    %p258 = pneg %p252
    %p259 = scmp.eq.s32.totalorder %s23, 3
    %p260 = por %p258, %p259
    %p261 = scmp.ne.s32.totalorder %s253, %s256
    %p262 = scmp.eq.s32.totalorder %s23, 0
    %p263 = por %p261, %p262
    %p264 = scmp.ne.s32.totalorder %s253, %s256
    %p265 = scmp.eq.s32.totalorder %s28, 3
    %p266 = por %p264, %p265
    %p267 = scmp.ne.s32.totalorder %s256, %s257
    %p268 = scmp.eq.s32.totalorder %s28, 0
    %p269 = por %p267, %p268
    %p270 = scmp.ne.s32.totalorder %s256, %s257
    %p271 = scmp.eq.s32.totalorder %s29, 3
    %p272 = por %p270, %p271
    %p274 = scmp.ne.s32.totalorder %s257, %s273
    %p275 = scmp.eq.s32.totalorder %s29, 0
    %p276 = por %p274, %p275
    %s277 = ssub.s32 %s31, %s38
    %p278 = scmp.eq.s32.totalorder %s277, 0
    %s280 = sadd.s32 %s279, 1
    %s281 = scalar_select %p278, %s279, %s280
    %p284 = pneg %p278
    %p285 = scmp.eq.s32.totalorder %s23, 3
    %p286 = por %p284, %p285
    %p287 = scmp.ne.s32.totalorder %s279, %s282
    %p288 = scmp.eq.s32.totalorder %s23, 0
    %p289 = por %p287, %p288
    %p290 = scmp.ne.s32.totalorder %s279, %s282
    %p291 = scmp.eq.s32.totalorder %s28, 3
    %p292 = por %p290, %p291
    %p293 = scmp.ne.s32.totalorder %s282, %s283
    %p294 = scmp.eq.s32.totalorder %s28, 0
    %p295 = por %p293, %p294
    %p296 = scmp.ne.s32.totalorder %s282, %s283
    %p297 = scmp.eq.s32.totalorder %s29, 3
    %p298 = por %p296, %p297
    %p300 = scmp.ne.s32.totalorder %s283, %s299
    %p301 = scmp.eq.s32.totalorder %s29, 0
    %p302 = por %p300, %p301
    %s303 = ssub.s32 %s31, %s38
    %p304 = scmp.eq.s32.totalorder %s303, 0
    %s306 = sadd.s32 %s305, 1
    %s307 = scalar_select %p304, %s305, %s306
    %p310 = pneg %p304
    %p311 = scmp.eq.s32.totalorder %s23, 3
    %p312 = por %p310, %p311
    %p313 = scmp.ne.s32.totalorder %s305, %s308
    %p314 = scmp.eq.s32.totalorder %s23, 0
    %p315 = por %p313, %p314
    %p316 = scmp.ne.s32.totalorder %s305, %s308
    %p317 = scmp.eq.s32.totalorder %s28, 3
    %p318 = por %p316, %p317
    %p319 = scmp.ne.s32.totalorder %s308, %s309
    %p320 = scmp.eq.s32.totalorder %s28, 0
    %p321 = por %p319, %p320
    %p322 = scmp.ne.s32.totalorder %s308, %s309
    %p323 = scmp.eq.s32.totalorder %s29, 3
    %p324 = por %p322, %p323
    %p326 = scmp.ne.s32.totalorder %s309, %s325
    %p327 = scmp.eq.s32.totalorder %s29, 0
    %p328 = por %p326, %p327
    %s329 = ssub.s32 %s31, %s38
    %p330 = scmp.eq.s32.totalorder %s329, 0
    %s332 = sadd.s32 %s331, 1
    %s333 = scalar_select %p330, %s331, %s332
    %p336 = pneg %p330
    %p337 = scmp.eq.s32.totalorder %s23, 3
    %p338 = por %p336, %p337
    %p339 = scmp.ne.s32.totalorder %s331, %s334
    %p340 = scmp.eq.s32.totalorder %s23, 0
    %p341 = por %p339, %p340
    %p342 = scmp.ne.s32.totalorder %s331, %s334
    %p343 = scmp.eq.s32.totalorder %s28, 3
    %p344 = por %p342, %p343
    %p345 = scmp.ne.s32.totalorder %s334, %s335
    %p346 = scmp.eq.s32.totalorder %s28, 0
    %p347 = por %p345, %p346
    %p348 = scmp.ne.s32.totalorder %s334, %s335
    %p349 = scmp.eq.s32.totalorder %s29, 3
    %p350 = por %p348, %p349
    %p352 = scmp.ne.s32.totalorder %s335, %s351
    %p353 = scmp.eq.s32.totalorder %s29, 0
    %p354 = por %p352, %p353
    %s355 = ssub.s32 %s31, %s38
    %p356 = scmp.eq.s32.totalorder %s355, 0
    %s358 = sadd.s32 %s357, 1
    %s359 = scalar_select %p356, %s357, %s358
    %p362 = pneg %p356
    %p363 = scmp.eq.s32.totalorder %s23, 3
    %p364 = por %p362, %p363
    %p365 = scmp.ne.s32.totalorder %s357, %s360
    %p366 = scmp.eq.s32.totalorder %s23, 0
    %p367 = por %p365, %p366
    %p368 = scmp.ne.s32.totalorder %s357, %s360
    %p369 = scmp.eq.s32.totalorder %s28, 3
    %p370 = por %p368, %p369
    %p371 = scmp.ne.s32.totalorder %s360, %s361
    %p372 = scmp.eq.s32.totalorder %s28, 0
    %p373 = por %p371, %p372
    %p374 = scmp.ne.s32.totalorder %s360, %s361
    %p375 = scmp.eq.s32.totalorder %s29, 3
    %p376 = por %p374, %p375
    %p378 = scmp.ne.s32.totalorder %s361, %s377
    %p379 = scmp.eq.s32.totalorder %s29, 0
    %p380 = por %p378, %p379
    %s382 = sadd.s32 %s381, 1
    %p385 = scmp.eq.s32.totalorder %s23, 3
    %p386 = scmp.ne.s32.totalorder %s381, %s383
    %p387 = scmp.eq.s32.totalorder %s23, 0
    %p388 = por %p386, %p387
    %p389 = scmp.ne.s32.totalorder %s381, %s383
    %p390 = scmp.eq.s32.totalorder %s28, 3
    %p391 = por %p389, %p390
    %p392 = scmp.ne.s32.totalorder %s383, %s384
    %p393 = scmp.eq.s32.totalorder %s28, 0
    %p394 = por %p392, %p393
    %p395 = scmp.ne.s32.totalorder %s383, %s384
    %p396 = scmp.eq.s32.totalorder %s29, 3
    %p397 = por %p395, %p396
    %p399 = scmp.ne.s32.totalorder %s384, %s398
    %p400 = scmp.eq.s32.totalorder %s29, 0
    %p401 = por %p399, %p400
    %s403 = sadd.s32 %s402, 1
    %p406 = scmp.eq.s32.totalorder %s23, 3
    %p407 = scmp.ne.s32.totalorder %s402, %s404
    %p408 = scmp.eq.s32.totalorder %s23, 0
    %p409 = por %p407, %p408
    %p410 = scmp.ne.s32.totalorder %s402, %s404
    %p411 = scmp.eq.s32.totalorder %s28, 3
    %p412 = por %p410, %p411
    %p413 = scmp.ne.s32.totalorder %s404, %s405
    %p414 = scmp.eq.s32.totalorder %s28, 0
    %p415 = por %p413, %p414
    %p416 = scmp.ne.s32.totalorder %s404, %s405
    %p417 = scmp.eq.s32.totalorder %s29, 3
    %p418 = por %p416, %p417
    %p420 = scmp.ne.s32.totalorder %s405, %s419
    %p421 = scmp.eq.s32.totalorder %s29, 0
    %p422 = por %p420, %p421
    %s424 = sadd.s32 %s423, 1
    %p427 = scmp.eq.s32.totalorder %s23, 3
    %p428 = scmp.ne.s32.totalorder %s423, %s425
    %p429 = scmp.eq.s32.totalorder %s23, 0
    %p430 = por %p428, %p429
    %p431 = scmp.ne.s32.totalorder %s423, %s425
    %p432 = scmp.eq.s32.totalorder %s28, 3
    %p433 = por %p431, %p432
    %p434 = scmp.ne.s32.totalorder %s425, %s426
    %p435 = scmp.eq.s32.totalorder %s28, 0
    %p436 = por %p434, %p435
    %p437 = scmp.ne.s32.totalorder %s425, %s426
    %p438 = scmp.eq.s32.totalorder %s29, 3
    %p439 = por %p437, %p438
    %p441 = scmp.ne.s32.totalorder %s426, %s440
    %p442 = scmp.eq.s32.totalorder %s29, 0
    %p443 = por %p441, %p442
    %s445 = sadd.s32 %s444, 1
    %p448 = scmp.eq.s32.totalorder %s23, 3
    %p449 = scmp.ne.s32.totalorder %s444, %s446
    %p450 = scmp.eq.s32.totalorder %s23, 0
    %p451 = por %p449, %p450
    %p452 = scmp.ne.s32.totalorder %s444, %s446
    %p453 = scmp.eq.s32.totalorder %s28, 3
    %p454 = por %p452, %p453
    %p455 = scmp.ne.s32.totalorder %s446, %s447
    %p456 = scmp.eq.s32.totalorder %s28, 0
    %p457 = por %p455, %p456
    %p458 = scmp.ne.s32.totalorder %s446, %s447
    %p459 = scmp.eq.s32.totalorder %s29, 3
    %p460 = por %p458, %p459
    %p462 = scmp.ne.s32.totalorder %s447, %s461
    %p463 = scmp.eq.s32.totalorder %s29, 0
    %p464 = por %p462, %p463
    %s465 = ssub.s32 %s30, %s42
    %p466 = scmp.eq.s32.totalorder %s465, 0
    %s468 = sadd.s32 %s467, 1
    %s469 = scalar_select %p466, %s467, %s468
    %p472 = pneg %p466
    %p473 = scmp.eq.s32.totalorder %s23, 3
    %p474 = por %p472, %p473
    %p475 = scmp.ne.s32.totalorder %s467, %s470
    %p476 = scmp.eq.s32.totalorder %s23, 0
    %p477 = por %p475, %p476
    %p478 = scmp.ne.s32.totalorder %s467, %s470
    %p479 = scmp.eq.s32.totalorder %s28, 3
    %p480 = por %p478, %p479
    %p481 = scmp.ne.s32.totalorder %s470, %s471
    %p482 = scmp.eq.s32.totalorder %s28, 0
    %p483 = por %p481, %p482
    %p484 = scmp.ne.s32.totalorder %s470, %s471
    %p485 = scmp.eq.s32.totalorder %s29, 3
    %p486 = por %p484, %p485
    %p488 = scmp.ne.s32.totalorder %s471, %s487
    %p489 = scmp.eq.s32.totalorder %s29, 0
    %p490 = por %p488, %p489
    %p491 = scmp.le.s32.totalorder 1, %s23
    %p492 = scmp.lt.s32.totalorder %s23, 5
    %p493 = pnand %p491, %p492
    %p494 = pneg %p493
    // Predicated region
    $region9: #{masked_point_vit_forward.4} parent=5 // pred_check
      _
    $region10: #{masked_point_vit_forward.4} parent=5 // pred_check_branch
      %496 = sbr.rel (%p493) target = $region12
    $region11: #{masked_point_vit_forward.4} parent=5 // pred_region
      %s497 = ssub.s32 %s23, 1
      // Predicated region
      $region13: #{masked_point_vit_forward.4} parent=11 // pred_check
        %p498 = pneg %p394
      $region14: #{masked_point_vit_forward.4} parent=11 // pred_check_branch
        %500 = sbr.rel (%p498) target = $region16
      $region15: #{masked_point_vit_forward.4} parent=11 // pred_region
        _
      $region16: #{masked_point_vit_forward.4} parent=11 // pred_fallthru
        _
      // Predicated region
      $region17: #{masked_point_vit_forward.4} parent=11 // pred_check
        %p501 = pneg %p415
      $region18: #{masked_point_vit_forward.4} parent=11 // pred_check_branch
        %503 = sbr.rel (%p501) target = $region20
      $region19: #{masked_point_vit_forward.4} parent=11 // pred_region
        _
      $region20: #{masked_point_vit_forward.4} parent=11 // pred_fallthru
        _
      // Predicated region
      $region21: #{masked_point_vit_forward.4} parent=11 // pred_check
        %p504 = pneg %p436
      $region22: #{masked_point_vit_forward.4} parent=11 // pred_check_branch
        %506 = sbr.rel (%p504) target = $region24
      $region23: #{masked_point_vit_forward.4} parent=11 // pred_region
        _
      $region24: #{masked_point_vit_forward.4} parent=11 // pred_fallthru
        _
      // Predicated region
      $region25: #{masked_point_vit_forward.4} parent=11 // pred_check
        %p507 = pneg %p457
      $region26: #{masked_point_vit_forward.4} parent=11 // pred_check_branch
        %509 = sbr.rel (%p507) target = $region28
      $region27: #{masked_point_vit_forward.4} parent=11 // pred_region
        _
      $region28: #{masked_point_vit_forward.4} parent=11 // pred_fallthru
        _
    $region12: #{masked_point_vit_forward.4} parent=5 // pred_fallthru
      _
    %p510 = scmp.lt.s32.totalorder %s23, 4
    // Predicated region
    $region29: #{masked_point_vit_forward.4} parent=5 // pred_check
      %p511 = pneg %p510
    $region30: #{masked_point_vit_forward.4} parent=5 // pred_check_branch
      %513 = sbr.rel (%p511) target = $region32
    $region31: #{masked_point_vit_forward.4} parent=5 // pred_region
      // Predicated region
      $region33: #{masked_point_vit_forward.4} parent=31 // pred_check
        %p514 = pneg %p55
      $region34: #{masked_point_vit_forward.4} parent=31 // pred_check_branch
        %516 = sbr.rel (%p514) target = $region36
      $region35: #{masked_point_vit_forward.4} parent=31 // pred_region
        %p517 = scmp.lt.s32.totalorder %s30, 1
        %s518 = scalar_select %p517, %s30, 1
        %s519 = smul.addr %s518, 4
        %s520 = scalar_lea.vmem %s0, %s519
      $region36: #{masked_point_vit_forward.4} parent=31 // pred_fallthru
        _
      // Predicated region
      $region37: #{masked_point_vit_forward.4} parent=31 // pred_check
        %p521 = pneg %p81
      $region38: #{masked_point_vit_forward.4} parent=31 // pred_check_branch
        %523 = sbr.rel (%p521) target = $region40
      $region39: #{masked_point_vit_forward.4} parent=31 // pred_region
        %p524 = scmp.lt.s32.totalorder %s30, 1
        %s525 = scalar_select %p524, %s30, 1
        %s526 = smul.addr %s525, 4
        %s527 = scalar_lea.vmem %s1, %s526
      $region40: #{masked_point_vit_forward.4} parent=31 // pred_fallthru
        _
      // Predicated region
      $region41: #{masked_point_vit_forward.4} parent=31 // pred_check
        %p528 = pneg %p107
      $region42: #{masked_point_vit_forward.4} parent=31 // pred_check_branch
        %530 = sbr.rel (%p528) target = $region44
      $region43: #{masked_point_vit_forward.4} parent=31 // pred_region
        %p531 = scmp.lt.s32.totalorder %s31, 1
        %s532 = scalar_select %p531, %s31, 1
        %s533 = scalar_lea.vmem %s2, %s532
      $region44: #{masked_point_vit_forward.4} parent=31 // pred_fallthru
        _
      // Predicated region
      $region45: #{masked_point_vit_forward.4} parent=31 // pred_check
        %p534 = pneg %p133
      $region46: #{masked_point_vit_forward.4} parent=31 // pred_check_branch
        %536 = sbr.rel (%p534) target = $region48
      $region47: #{masked_point_vit_forward.4} parent=31 // pred_region
        %p537 = scmp.lt.s32.totalorder %s31, 1
        %s538 = scalar_select %p537, %s31, 1
        %s539 = scalar_lea.vmem %s3, %s538
      $region48: #{masked_point_vit_forward.4} parent=31 // pred_fallthru
        _
      // Predicated region
      $region49: #{masked_point_vit_forward.4} parent=31 // pred_check
        %p540 = pneg %p159
      $region50: #{masked_point_vit_forward.4} parent=31 // pred_check_branch
        %542 = sbr.rel (%p540) target = $region52
      $region51: #{masked_point_vit_forward.4} parent=31 // pred_region
        %p543 = scmp.lt.s32.totalorder %s31, 1
        %s544 = scalar_select %p543, %s31, 1
        %s545 = smul.addr %s544, 12
        %s546 = smul.addr %s545, 4
        %s547 = scalar_lea.vmem %s4, %s546
      $region52: #{masked_point_vit_forward.4} parent=31 // pred_fallthru
        _
      // Predicated region
      $region53: #{masked_point_vit_forward.4} parent=31 // pred_check
        %p548 = pneg %p185
      $region54: #{masked_point_vit_forward.4} parent=31 // pred_check_branch
        %550 = sbr.rel (%p548) target = $region56
      $region55: #{masked_point_vit_forward.4} parent=31 // pred_region
        %p551 = scmp.lt.s32.totalorder %s31, 1
        %s552 = scalar_select %p551, %s31, 1
        %s553 = smul.addr %s552, 6
        %s554 = smul.addr %s553, 4
        %s555 = scalar_lea.vmem %s5, %s554
      $region56: #{masked_point_vit_forward.4} parent=31 // pred_fallthru
        _
      // Predicated region
      $region57: #{masked_point_vit_forward.4} parent=31 // pred_check
        %p556 = pneg %p211
      $region58: #{masked_point_vit_forward.4} parent=31 // pred_check_branch
        %558 = sbr.rel (%p556) target = $region60
      $region59: #{masked_point_vit_forward.4} parent=31 // pred_region
        %p559 = scmp.lt.s32.totalorder %s31, 1
        %s560 = scalar_select %p559, %s31, 1
        %s561 = scalar_lea.vmem %s6, %s560
      $region60: #{masked_point_vit_forward.4} parent=31 // pred_fallthru
        _
      // Predicated region
      $region61: #{masked_point_vit_forward.4} parent=31 // pred_check
        %p562 = pneg %p237
      $region62: #{masked_point_vit_forward.4} parent=31 // pred_check_branch
        %564 = sbr.rel (%p562) target = $region64
      $region63: #{masked_point_vit_forward.4} parent=31 // pred_region
        %p565 = scmp.lt.s32.totalorder %s31, 1
        %s566 = scalar_select %p565, %s31, 1
        %s567 = scalar_lea.vmem %s7, %s566
      $region64: #{masked_point_vit_forward.4} parent=31 // pred_fallthru
        _
      // Predicated region
      $region65: #{masked_point_vit_forward.4} parent=31 // pred_check
        %p568 = pneg %p263
      $region66: #{masked_point_vit_forward.4} parent=31 // pred_check_branch
        %570 = sbr.rel (%p568) target = $region68
      $region67: #{masked_point_vit_forward.4} parent=31 // pred_region
        %p571 = scmp.lt.s32.totalorder %s31, 1
        %s572 = scalar_select %p571, %s31, 1
        %s573 = scalar_lea.vmem %s8, %s572
      $region68: #{masked_point_vit_forward.4} parent=31 // pred_fallthru
        _
      // Predicated region
      $region69: #{masked_point_vit_forward.4} parent=31 // pred_check
        %p574 = pneg %p289
      $region70: #{masked_point_vit_forward.4} parent=31 // pred_check_branch
        %576 = sbr.rel (%p574) target = $region72
      $region71: #{masked_point_vit_forward.4} parent=31 // pred_region
        %p577 = scmp.lt.s32.totalorder %s31, 1
        %s578 = scalar_select %p577, %s31, 1
        %s579 = smul.addr %s578, 12
        %s580 = smul.addr %s579, 4
        %s581 = scalar_lea.vmem %s9, %s580
      $region72: #{masked_point_vit_forward.4} parent=31 // pred_fallthru
        _
      // Predicated region
      $region73: #{masked_point_vit_forward.4} parent=31 // pred_check
        %p582 = pneg %p315
      $region74: #{masked_point_vit_forward.4} parent=31 // pred_check_branch
        %584 = sbr.rel (%p582) target = $region76
      $region75: #{masked_point_vit_forward.4} parent=31 // pred_region
        %p585 = scmp.lt.s32.totalorder %s31, 1
        %s586 = scalar_select %p585, %s31, 1
        %s587 = smul.addr %s586, 2
        %s588 = scalar_lea.vmem %s10, %s587
      $region76: #{masked_point_vit_forward.4} parent=31 // pred_fallthru
        _
      // Predicated region
      $region77: #{masked_point_vit_forward.4} parent=31 // pred_check
        %p589 = pneg %p341
      $region78: #{masked_point_vit_forward.4} parent=31 // pred_check_branch
        %591 = sbr.rel (%p589) target = $region80
      $region79: #{masked_point_vit_forward.4} parent=31 // pred_region
        %p592 = scmp.lt.s32.totalorder %s31, 1
        %s593 = scalar_select %p592, %s31, 1
        %s594 = smul.addr %s593, 24
        %s595 = smul.addr %s594, 4
        %s596 = scalar_lea.vmem %s11, %s595
      $region80: #{masked_point_vit_forward.4} parent=31 // pred_fallthru
        _
      // Predicated region
      $region81: #{masked_point_vit_forward.4} parent=31 // pred_check
        %p597 = pneg %p367
      $region82: #{masked_point_vit_forward.4} parent=31 // pred_check_branch
        %599 = sbr.rel (%p597) target = $region84
      $region83: #{masked_point_vit_forward.4} parent=31 // pred_region
        %p600 = scmp.lt.s32.totalorder %s31, 1
        %s601 = scalar_select %p600, %s31, 1
        %s602 = scalar_lea.vmem %s12, %s601
      $region84: #{masked_point_vit_forward.4} parent=31 // pred_fallthru
        _
    $region32: #{masked_point_vit_forward.4} parent=5 // pred_fallthru
      _
    %p603 = scmp.le.s32.totalorder 1, %s23
    %p604 = scmp.lt.s32.totalorder %s23, 5
    %p605 = pnand %p603, %p604
    %p606 = pneg %p605
    // Predicated region
    $region85: #{masked_point_vit_forward.4} parent=5 // pred_check
      _
    $region86: #{masked_point_vit_forward.4} parent=5 // pred_check_branch
      %608 = sbr.rel (%p605) target = $region88
    $region87: #{masked_point_vit_forward.4} parent=5 // pred_region
      %s609 = ssub.s32 %s23, 1
      %p610 = scmp.lt.s32.totalorder %s32, 1
      %s611 = scalar_select %p610, %s32, 1
      %s612 = smul.addr %s611, 4
      %s613 = scalar_lea.vmem %s0, %s612
      %p614 = pneg %p61
      %p615 = pneg %p58
      %p616 = scmp.lt.s32.totalorder %s32, 1
      %s617 = scalar_select %p616, %s32, 1
      %s618 = smul.addr %s617, 4
      %s619 = scalar_lea.vmem %s1, %s618
      %p620 = pneg %p87
      %p621 = pneg %p84
      %p622 = scmp.lt.s32.totalorder %s33, 1
      %s623 = scalar_select %p622, %s33, 1
      %s624 = scalar_lea.vmem %s2, %s623
      %p625 = pneg %p113
      %p626 = pneg %p110
      %p627 = scmp.lt.s32.totalorder %s33, 1
      %s628 = scalar_select %p627, %s33, 1
      %s629 = scalar_lea.vmem %s3, %s628
      %p630 = pneg %p139
      %p631 = pneg %p136
      %p632 = scmp.lt.s32.totalorder %s33, 1
      %s633 = scalar_select %p632, %s33, 1
      %s634 = smul.addr %s633, 12
      %s635 = smul.addr %s634, 4
      %s636 = scalar_lea.vmem %s4, %s635
      %p637 = pneg %p165
      %p638 = pneg %p162
      %p639 = scmp.lt.s32.totalorder %s33, 1
      %s640 = scalar_select %p639, %s33, 1
      %s641 = smul.addr %s640, 6
      %s642 = smul.addr %s641, 4
      %s643 = scalar_lea.vmem %s5, %s642
      %p644 = pneg %p191
      %p645 = pneg %p188
      %p646 = scmp.lt.s32.totalorder %s33, 1
      %s647 = scalar_select %p646, %s33, 1
      %s648 = scalar_lea.vmem %s6, %s647
      %p649 = pneg %p217
      %p650 = pneg %p214
      %p651 = scmp.lt.s32.totalorder %s33, 1
      %s652 = scalar_select %p651, %s33, 1
      %s653 = scalar_lea.vmem %s7, %s652
      %p654 = pneg %p243
      %p655 = pneg %p240
      %p656 = scmp.lt.s32.totalorder %s33, 1
      %s657 = scalar_select %p656, %s33, 1
      %s658 = scalar_lea.vmem %s8, %s657
      %p659 = pneg %p269
      %p660 = pneg %p266
      %p661 = scmp.lt.s32.totalorder %s33, 1
      %s662 = scalar_select %p661, %s33, 1
      %s663 = smul.addr %s662, 12
      %s664 = smul.addr %s663, 4
      %s665 = scalar_lea.vmem %s9, %s664
      %p666 = pneg %p295
      %p667 = pneg %p292
      %p668 = scmp.lt.s32.totalorder %s33, 1
      %s669 = scalar_select %p668, %s33, 1
      %s670 = smul.addr %s669, 2
      %s671 = scalar_lea.vmem %s10, %s670
      %p672 = pneg %p321
      %p673 = pneg %p318
      %p674 = scmp.lt.s32.totalorder %s33, 1
      %s675 = scalar_select %p674, %s33, 1
      %s676 = smul.addr %s675, 24
      %s677 = smul.addr %s676, 4
      %s678 = scalar_lea.vmem %s11, %s677
      %p679 = pneg %p347
      %p680 = pneg %p344
      %p681 = scmp.lt.s32.totalorder %s33, 1
      %s682 = scalar_select %p681, %s33, 1
      %s683 = scalar_lea.vmem %s12, %s682
      %p684 = pneg %p373
      %p685 = pneg %p370
      %p686 = pneg %p394
      %p687 = pneg %p391
      %p688 = pneg %p415
      %p689 = pneg %p412
      %p690 = pneg %p436
      %p691 = pneg %p433
      %p692 = pneg %p457
      %p693 = pneg %p454
      %p694 = pneg %p483
      %p695 = pneg %p480
      %p696 = scmp.lt.s32.totalorder %s32, 1
      %s697 = scalar_select %p696, %s32, 1
      %s698 = smul.addr %s697, 4
      %s699 = scalar_lea.vmem %s17, %s698
      %p700 = scmp.lt.s32.totalorder %s32, 1
      %s701 = scalar_select %p700, %s32, 1
      %s702 = smul.addr %s701, 4
      %s703 = scalar_lea.vmem %s0, %s702
      %p704 = scmp.lt.s32.totalorder %s32, 1
      %s705 = scalar_select %p704, %s32, 1
      %s706 = smul.addr %s705, 4
      %s707 = scalar_lea.vmem %s1, %s706
      %p708 = scmp.lt.s32.totalorder %s33, 1
      %s709 = scalar_select %p708, %s33, 1
      %s710 = scalar_lea.vmem %s2, %s709
      %p711 = scmp.lt.s32.totalorder %s33, 1
      %s712 = scalar_select %p711, %s33, 1
      %s713 = scalar_lea.vmem %s3, %s712
      %p714 = scmp.lt.s32.totalorder %s33, 1
      %s715 = scalar_select %p714, %s33, 1
      %s716 = smul.addr %s715, 12
      %s717 = smul.addr %s716, 4
      %s718 = scalar_lea.vmem %s4, %s717
      %p719 = scmp.lt.s32.totalorder %s33, 1
      %s720 = scalar_select %p719, %s33, 1
      %s721 = smul.addr %s720, 6
      %s722 = smul.addr %s721, 4
      %s723 = scalar_lea.vmem %s5, %s722
      %p724 = scmp.lt.s32.totalorder %s33, 1
      %s725 = scalar_select %p724, %s33, 1
      %s726 = scalar_lea.vmem %s6, %s725
      %p727 = scmp.lt.s32.totalorder %s33, 1
      %s728 = scalar_select %p727, %s33, 1
      %s729 = scalar_lea.vmem %s7, %s728
      %p730 = scmp.lt.s32.totalorder %s33, 1
      %s731 = scalar_select %p730, %s33, 1
      %s732 = scalar_lea.vmem %s8, %s731
      %p733 = scmp.lt.s32.totalorder %s33, 1
      %s734 = scalar_select %p733, %s33, 1
      %s735 = smul.addr %s734, 12
      %s736 = smul.addr %s735, 4
      %s737 = scalar_lea.vmem %s9, %s736
      %p738 = scmp.lt.s32.totalorder %s33, 1
      %s739 = scalar_select %p738, %s33, 1
      %s740 = smul.addr %s739, 2
      %s741 = scalar_lea.vmem %s10, %s740
      %p742 = scmp.lt.s32.totalorder %s33, 1
      %s743 = scalar_select %p742, %s33, 1
      %s744 = smul.addr %s743, 24
      %s745 = smul.addr %s744, 4
      %s746 = scalar_lea.vmem %s11, %s745
      %p747 = scmp.lt.s32.totalorder %s33, 1
      %s748 = scalar_select %p747, %s33, 1
      %s749 = scalar_lea.vmem %s12, %s748
      %p750 = scmp.lt.s32.totalorder %s32, 1
      %s751 = scalar_select %p750, %s32, 1
      %s752 = smul.addr %s751, 4
      %s753 = scalar_lea.vmem %s17, %s752
      %p755 = scmp.eq.s32.totalorder %s33, 0
      // Predicated region
      $region89: #{masked_point_vit_forward.4} parent=87 // pred_check
        %p756 = pneg %p755
      $region90: #{masked_point_vit_forward.4} parent=87 // pred_check_branch
        %758 = sbr.rel (%p756) target = $region92
      $region91: #{masked_point_vit_forward.4} parent=87 // pred_region
        %v759 = vld [vmem:[%s703] sm:$0x7]
        %vm760 = vcmask 387072
        %761 = vst.msk [vmem:[#allocation2] sm:$0x7] %vm760, %v759
      $region92: #{masked_point_vit_forward.4} parent=87 // pred_fallthru
        _
      %v762 = vld [vmem:[#allocation2] sm:$0x7]
      %v763 = vld [vmem:[%s707] sm:$0x7]
      %v764 = vadd.f32 %v762, %v763
      %v765 = vld [vmem:[%s710] sm:$0x1]
      %v766 = vld [vmem:[%s713] sm:$0x1]
      %v767 = vld [vmem:[%s718] sm:$0xff]
      %v768 = vld [vmem:[%s718 + $0x8] sm:$0xff]
      %v769 = vld [vmem:[%s718 + $0x10] sm:$0xff]
      %v770 = vld [vmem:[%s718 + $0x18] sm:$0xff]
      %v771 = vld [vmem:[%s718 + $0x20] sm:$0xff]
      %v772 = vld [vmem:[%s718 + $0x28] sm:$0xff]
      %v773 = vld [vmem:[%s723] sm:$0xf]
      %v774 = vld [vmem:[%s723 + $0x4] sm:$0xf]
      %v775 = vld [vmem:[%s723 + $0x8] sm:$0xf]
      %v776 = vld [vmem:[%s723 + $0xc] sm:$0xf]
      %v777 = vld [vmem:[%s723 + $0x10] sm:$0xf]
      %v778 = vld [vmem:[%s723 + $0x14] sm:$0xf]
      %v779 = vld [vmem:[%s726] sm:$0x1]
      %v780 = vld [vmem:[%s729] sm:$0x1]
      %v781 = vld [vmem:[%s732] sm:$0x1]
      %v782 = vld [vmem:[%s737] sm:$0xff]
      %v783 = vld [vmem:[%s737 + $0x8] sm:$0xff]
      %v784 = vld [vmem:[%s737 + $0x10] sm:$0xff]
      %v785 = vld [vmem:[%s737 + $0x18] sm:$0xff]
      %v786 = vld [vmem:[%s737 + $0x20] sm:$0xff]
      %v787 = vld [vmem:[%s737 + $0x28] sm:$0xff]
      %v788 = vld [vmem:[%s741] sm:$0x3]
      %v789 = vld [vmem:[%s746] sm:$0xf]
      %v790 = vld [vmem:[%s746 + $0x4] sm:$0xf]
      %v791 = vld [vmem:[%s746 + $0x8] sm:$0xf]
      %v792 = vld [vmem:[%s746 + $0xc] sm:$0xf]
      %v793 = vld [vmem:[%s746 + $0x10] sm:$0xf]
      %v794 = vld [vmem:[%s746 + $0x14] sm:$0xf]
      %v795 = vld [vmem:[%s746 + $0x18] sm:$0xf]
      %v796 = vld [vmem:[%s746 + $0x1c] sm:$0xf]
      %v797 = vld [vmem:[%s746 + $0x20] sm:$0xf]
      %v798 = vld [vmem:[%s746 + $0x24] sm:$0xf]
      %v799 = vld [vmem:[%s746 + $0x28] sm:$0xf]
      %v800 = vld [vmem:[%s746 + $0x2c] sm:$0xf]
      %v801 = vld [vmem:[%s746 + $0x30] sm:$0xf]
      %v802 = vld [vmem:[%s746 + $0x34] sm:$0xf]
      %v803 = vld [vmem:[%s746 + $0x38] sm:$0xf]
      %v804 = vld [vmem:[%s746 + $0x3c] sm:$0xf]
      %v805 = vld [vmem:[%s746 + $0x40] sm:$0xf]
      %v806 = vld [vmem:[%s746 + $0x44] sm:$0xf]
      %v807 = vld [vmem:[%s746 + $0x48] sm:$0xf]
      %v808 = vld [vmem:[%s746 + $0x4c] sm:$0xf]
      %v809 = vld [vmem:[%s746 + $0x50] sm:$0xf]
      %v810 = vld [vmem:[%s746 + $0x54] sm:$0xf]
      %v811 = vld [vmem:[%s746 + $0x58] sm:$0xf]
      %v812 = vld [vmem:[%s746 + $0x5c] sm:$0xf]
      %v813 = vld [vmem:[%s749] sm:$0x1]
      %vm814 = vcmask 387072
      %v815 = vsel %vm814, %v764, 0.0
      %816 = vadd.xlane.f32.xlu0 %v815
      %v817 = vpop.xlane.xlu0 %816
      %v818 = vrcp.pop 48.0
      %v819 = vmul.f32 %v817, %v818
      %v820 = vsub.f32 %v764, %v819
      %v821 = vmul.f32 %v820, %v820
      %v822 = vsel %vm814, %v821, 0.0
      %823 = vadd.xlane.f32.xlu0 %v822
      %v824 = vpop.xlane.xlu0 %823
      %v825 = vmul.f32 %v824, %v818
      %v826 = vadd.f32 %v825, 1e-06
      %v827 = vrsqrt.pop %v826
      %v828 = vmul.f32 %v820, %v827
      %v830 = vlaneseq
      %v831 = vshrl.u32 %v830, 7
      %v832 = vsub.s32 0, %v831
      %v833 = vrot.slane %v765, %v832
      %v835 = vmul.f32 %v828, %v833
      %v837 = vlaneseq
      %v838 = vshrl.u32 %v837, 7
      %v839 = vsub.s32 0, %v838
      %v840 = vrot.slane %v766, %v839
      %v842 = vadd.f32 %v835, %v840
      %v843 = vpack.c.bf16 %v842, %v842
      %v850 = vunpack.c.l.b16 %v767
      %v851 = vunpack.c.h.b16 %v767
      %v852 = vunpack.c.l.b16 %v768
      %v853 = vunpack.c.h.b16 %v768
      %v854 = vunpack.c.l.b16 %v769
      %v855 = vunpack.c.h.b16 %v769
      %v856 = vunpack.c.l.b16 %v770
      %v857 = vunpack.c.h.b16 %v770
      %v858 = vunpack.c.l.b16 %v771
      %v859 = vunpack.c.h.b16 %v771
      %v860 = vunpack.c.l.b16 %v772
      %v861 = vunpack.c.h.b16 %v772
      %v862 = vpack.c.b16 %v852, %v850
      %v863 = vpack.c.b16 %v853, %v851
      %v864 = vpack.c.b16 %v856, %v854
      %v865 = vpack.c.b16 %v857, %v855
      %v866 = vpack.c.b16 %v860, %v858
      %v867 = vpack.c.b16 %v861, %v859
      %vm874 = vcmask 392192
      %v876 = vsel %vm874, %v843, 0
      %878 = vmatprep.subr.bf16.mxu0 %v863
      %879 = vmatpush1.bf16.msra.mxu0 %v862
      %880 = vmatprep.subr.bf16.mxu0 %v865
      %881 = vmatpush1.bf16.msra.mxu0 %v864
      %882 = vmatprep.subr.bf16.mxu0 %v867
      %883 = vmatpush1.bf16.msra.mxu0 %v866
      %884 = vmatprep.subr.bf16.mxu0 0
      %885 = vmatpush1.bf16.msra.mxu0 0
      %886 = vmatprep.subr.bf16.mxu0 0
      %887 = vmatpush1.bf16.msra.mxu0 0
      %888 = vmatprep.subr.bf16.mxu0 0
      %889 = vmatpush1.bf16.msra.mxu0 0
      %890 = vmatprep.subr.bf16.mxu0 0
      %891 = vmatpush1.bf16.msra.mxu0 0
      %892 = vmatprep.subr.bf16.mxu0 0
      %893 = vmatpush1.bf16.msra.mxu0 0
      %894 = vmatprep.subr.bf16.mxu0 0
      %895 = vmatpush1.bf16.msra.mxu0 0
      %896 = vmatprep.subr.bf16.mxu0 0
      %897 = vmatpush1.bf16.msra.mxu0 0
      %898 = vmatprep.subr.bf16.mxu0 0
      %899 = vmatpush1.bf16.msra.mxu0 0
      %900 = vmatprep.subr.bf16.mxu0 0
      %901 = vmatpush1.bf16.msra.mxu0 0
      %902 = vmatprep.subr.bf16.mxu0 0
      %903 = vmatpush1.bf16.msra.mxu0 0
      %904 = vmatprep.subr.bf16.mxu0 0
      %905 = vmatpush1.bf16.msra.mxu0 0
      %906 = vmatprep.subr.bf16.mxu0 0
      %907 = vmatpush1.bf16.msra.mxu0 0
      %908 = vmatprep.subr.bf16.mxu0 0
      %909 = vmatpush1.bf16.msra.mxu0 0
      %910 = vmatprep.mubr.bf16.mxu0 0
      %911 = vmatmul.mubr.bf16.gmra.mrb[0].mxu0 %v876
      %v912 = vpop.f32.mrb[0].mxu0
      %v913 = vadd.f32 0.0, %v912
      %v914 = vpop.f32.mrb[0].mxu0
      %v915 = vadd.f32 0.0, %v914
      %v916 = vpop.f32.mrb[0].mxu0
      %v917 = vpop.f32.mrb[0].mxu0
      %918 = vdwg.mxu0
      %v919 = vpack.c.bf16 %v913, %v913
      %921 = vrot.lane.b32.xlu0 %v919, 80
      %v922 = vpop.permute.xlu0 %921
      %vm923 = vcmask 64512
      %v925 = vsel %vm923, %v919, 0
      %v928 = vsel %vm923, %v922, 0
      %930 = vmatprep.subr.bf16.mxu0 0
      %931 = vmatpush1.bf16.xpose.msra.mxu0 %v928
      %932 = vmatprep.subr.bf16.mxu0 0
      %933 = vmatpush1.bf16.xpose.msra.mxu0 0
      %934 = vmatprep.subr.bf16.mxu0 0
      %935 = vmatpush1.bf16.xpose.msra.mxu0 0
      %936 = vmatprep.subr.bf16.mxu0 0
      %937 = vmatpush1.bf16.xpose.msra.mxu0 0
      %938 = vmatprep.subr.bf16.mxu0 0
      %939 = vmatpush1.bf16.xpose.msra.mxu0 0
      %940 = vmatprep.subr.bf16.mxu0 0
      %941 = vmatpush1.bf16.xpose.msra.mxu0 0
      %942 = vmatprep.subr.bf16.mxu0 0
      %943 = vmatpush1.bf16.xpose.msra.mxu0 0
      %944 = vmatprep.subr.bf16.mxu0 0
      %945 = vmatpush1.bf16.xpose.msra.mxu0 0
      %946 = vmatprep.subr.bf16.mxu0 0
      %947 = vmatpush1.bf16.xpose.msra.mxu0 0
      %948 = vmatprep.subr.bf16.mxu0 0
      %949 = vmatpush1.bf16.xpose.msra.mxu0 0
      %950 = vmatprep.subr.bf16.mxu0 0
      %951 = vmatpush1.bf16.xpose.msra.mxu0 0
      %952 = vmatprep.subr.bf16.mxu0 0
      %953 = vmatpush1.bf16.xpose.msra.mxu0 0
      %954 = vmatprep.subr.bf16.mxu0 0
      %955 = vmatpush1.bf16.xpose.msra.mxu0 0
      %956 = vmatprep.subr.bf16.mxu0 0
      %957 = vmatpush1.bf16.xpose.msra.mxu0 0
      %958 = vmatprep.subr.bf16.mxu0 0
      %959 = vmatpush1.bf16.xpose.msra.mxu0 0
      %960 = vmatprep.subr.bf16.mxu0 0
      %961 = vmatpush1.bf16.xpose.msra.mxu0 0
      %962 = vmatprep.mubr.bf16.mxu0 0
      %963 = vmatmul.mubr.bf16.gmra.mrb[0].mxu0 %v925
      %v964 = vpop.f32.mrb[0].mxu0
      %v965 = vadd.f32 0.0, %v964
      %v966 = vpop.f32.mrb[0].mxu0
      %v967 = vpop.f32.mrb[0].mxu0
      %v968 = vpop.f32.mrb[0].mxu0
      %969 = vdwg.mxu0
      %vm970 = vcmask 18432
      %v971 = vsel %vm970, %v965, -inf
      %972 = vmax.xlane.f32.xlu0 %v971
      %v973 = vpop.xlane.xlu0 %972
      %v974 = vsub.f32 %v965, %v973
      %v975 = vmul.f32 %v974, 1.442695
      %v976 = vpow.pop %v975
      %v977 = vsel %vm970, %v976, 0.0
      %978 = vadd.xlane.f32.xlu0 %v977
      %v979 = vpop.xlane.xlu0 %978
      %v980 = vrcp.pop %v979
      %v981 = vmul.f32 %v976, %v980
      %v982 = vpack.c.bf16 %v981, %v981
      %983 = vrot.lane.b32.xlu0 %v919, 32
      %v984 = vpop.permute.xlu0 %983
      %vm985 = vcmask 23552
      %v987 = vsel %vm985, %v982, 0
      %vm989 = vcmask 1040384
      %vm990 = vcmask 1041408
      %v991 = vsel %vm989, 4294967295, 65535
      %v992 = vsel %vm990, %v991, 0
      %v994 = vand.u32 %v984, %v992
      %996 = vmatprep.subr.bf16.mxu0 0
      %997 = vmatpush1.bf16.msra.mxu0 %v994
      %998 = vmatprep.subr.bf16.mxu0 0
      %999 = vmatpush1.bf16.msra.mxu0 0
      %1000 = vmatprep.subr.bf16.mxu0 0
      %1001 = vmatpush1.bf16.msra.mxu0 0
      %1002 = vmatprep.subr.bf16.mxu0 0
      %1003 = vmatpush1.bf16.msra.mxu0 0
      %1004 = vmatprep.subr.bf16.mxu0 0
      %1005 = vmatpush1.bf16.msra.mxu0 0
      %1006 = vmatprep.subr.bf16.mxu0 0
      %1007 = vmatpush1.bf16.msra.mxu0 0
      %1008 = vmatprep.subr.bf16.mxu0 0
      %1009 = vmatpush1.bf16.msra.mxu0 0
      %1010 = vmatprep.subr.bf16.mxu0 0
      %1011 = vmatpush1.bf16.msra.mxu0 0
      %1012 = vmatprep.subr.bf16.mxu0 0
      %1013 = vmatpush1.bf16.msra.mxu0 0
      %1014 = vmatprep.subr.bf16.mxu0 0
      %1015 = vmatpush1.bf16.msra.mxu0 0
      %1016 = vmatprep.subr.bf16.mxu0 0
      %1017 = vmatpush1.bf16.msra.mxu0 0
      %1018 = vmatprep.subr.bf16.mxu0 0
      %1019 = vmatpush1.bf16.msra.mxu0 0
      %1020 = vmatprep.subr.bf16.mxu0 0
      %1021 = vmatpush1.bf16.msra.mxu0 0
      %1022 = vmatprep.subr.bf16.mxu0 0
      %1023 = vmatpush1.bf16.msra.mxu0 0
      %1024 = vmatprep.subr.bf16.mxu0 0
      %1025 = vmatpush1.bf16.msra.mxu0 0
      %1026 = vmatprep.subr.bf16.mxu0 0
      %1027 = vmatpush1.bf16.msra.mxu0 0
      %1028 = vmatprep.mubr.bf16.mxu0 0
      %1029 = vmatmul.mubr.bf16.gmra.mrb[0].mxu0 %v987
      %v1030 = vpop.f32.mrb[0].mxu0
      %v1031 = vadd.f32 0.0, %v1030
      %v1032 = vpop.f32.mrb[0].mxu0
      %v1033 = vpop.f32.mrb[0].mxu0
      %v1034 = vpop.f32.mrb[0].mxu0
      %1035 = vdwg.mxu0
      %v1036 = vpack.c.bf16 %v1031, %v1031
      %1037 = vrot.lane.b32.xlu0 %v919, 120
      %v1038 = vpop.permute.xlu0 %1037
      %1039 = vrot.lane.b32.xlu0 %v919, 72
      %v1040 = vpop.permute.xlu0 %1039
      %v1042 = vsel %vm923, %v1038, 0
      %v1045 = vsel %vm923, %v1040, 0
      %1047 = vmatprep.subr.bf16.mxu0 0
      %1048 = vmatpush1.bf16.xpose.msra.mxu0 %v1045
      %1049 = vmatprep.subr.bf16.mxu0 0
      %1050 = vmatpush1.bf16.xpose.msra.mxu0 0
      %1051 = vmatprep.subr.bf16.mxu0 0
      %1052 = vmatpush1.bf16.xpose.msra.mxu0 0
      %1053 = vmatprep.subr.bf16.mxu0 0
      %1054 = vmatpush1.bf16.xpose.msra.mxu0 0
      %1055 = vmatprep.subr.bf16.mxu0 0
      %1056 = vmatpush1.bf16.xpose.msra.mxu0 0
      %1057 = vmatprep.subr.bf16.mxu0 0
      %1058 = vmatpush1.bf16.xpose.msra.mxu0 0
      %1059 = vmatprep.subr.bf16.mxu0 0
      %1060 = vmatpush1.bf16.xpose.msra.mxu0 0
      %1061 = vmatprep.subr.bf16.mxu0 0
      %1062 = vmatpush1.bf16.xpose.msra.mxu0 0
      %1063 = vmatprep.subr.bf16.mxu0 0
      %1064 = vmatpush1.bf16.xpose.msra.mxu0 0
      %1065 = vmatprep.subr.bf16.mxu0 0
      %1066 = vmatpush1.bf16.xpose.msra.mxu0 0
      %1067 = vmatprep.subr.bf16.mxu0 0
      %1068 = vmatpush1.bf16.xpose.msra.mxu0 0
      %1069 = vmatprep.subr.bf16.mxu0 0
      %1070 = vmatpush1.bf16.xpose.msra.mxu0 0
      %1071 = vmatprep.subr.bf16.mxu0 0
      %1072 = vmatpush1.bf16.xpose.msra.mxu0 0
      %1073 = vmatprep.subr.bf16.mxu0 0
      %1074 = vmatpush1.bf16.xpose.msra.mxu0 0
      %1075 = vmatprep.subr.bf16.mxu0 0
      %1076 = vmatpush1.bf16.xpose.msra.mxu0 0
      %1077 = vmatprep.subr.bf16.mxu0 0
      %1078 = vmatpush1.bf16.xpose.msra.mxu0 0
      %1079 = vmatprep.mubr.bf16.mxu0 0
      %1080 = vmatmul.mubr.bf16.gmra.mrb[0].mxu0 %v1042
      %v1081 = vpop.f32.mrb[0].mxu0
      %v1082 = vadd.f32 0.0, %v1081
      %v1083 = vpop.f32.mrb[0].mxu0
      %v1084 = vpop.f32.mrb[0].mxu0
      %v1085 = vpop.f32.mrb[0].mxu0
      %1086 = vdwg.mxu0
      %v1087 = vsel %vm970, %v1082, -inf
      %1088 = vmax.xlane.f32.xlu0 %v1087
      %v1089 = vpop.xlane.xlu0 %1088
      %v1090 = vsub.f32 %v1082, %v1089
      %v1091 = vmul.f32 %v1090, 1.442695
      %v1092 = vpow.pop %v1091
      %v1093 = vsel %vm970, %v1092, 0.0
      %1094 = vadd.xlane.f32.xlu0 %v1093
      %v1095 = vpop.xlane.xlu0 %1094
      %v1096 = vrcp.pop %v1095
      %v1097 = vmul.f32 %v1092, %v1096
      %v1098 = vpack.c.bf16 %v1097, %v1097
      %1099 = vrot.lane.b32.xlu0 %v919, 24
      %v1100 = vpop.permute.xlu0 %1099
      %v1102 = vsel %vm985, %v1098, 0
      %v1105 = vand.u32 %v1100, %v992
      %1107 = vmatprep.subr.bf16.mxu0 0
      %1108 = vmatpush1.bf16.msra.mxu0 %v1105
      %1109 = vmatprep.subr.bf16.mxu0 0
      %1110 = vmatpush1.bf16.msra.mxu0 0
      %1111 = vmatprep.subr.bf16.mxu0 0
      %1112 = vmatpush1.bf16.msra.mxu0 0
      %1113 = vmatprep.subr.bf16.mxu0 0
      %1114 = vmatpush1.bf16.msra.mxu0 0
      %1115 = vmatprep.subr.bf16.mxu0 0
      %1116 = vmatpush1.bf16.msra.mxu0 0
      %1117 = vmatprep.subr.bf16.mxu0 0
      %1118 = vmatpush1.bf16.msra.mxu0 0
      %1119 = vmatprep.subr.bf16.mxu0 0
      %1120 = vmatpush1.bf16.msra.mxu0 0
      %1121 = vmatprep.subr.bf16.mxu0 0
      %1122 = vmatpush1.bf16.msra.mxu0 0
      %1123 = vmatprep.subr.bf16.mxu0 0
      %1124 = vmatpush1.bf16.msra.mxu0 0
      %1125 = vmatprep.subr.bf16.mxu0 0
      %1126 = vmatpush1.bf16.msra.mxu0 0
      %1127 = vmatprep.subr.bf16.mxu0 0
      %1128 = vmatpush1.bf16.msra.mxu0 0
      %1129 = vmatprep.subr.bf16.mxu0 0
      %1130 = vmatpush1.bf16.msra.mxu0 0
      %1131 = vmatprep.subr.bf16.mxu0 0
      %1132 = vmatpush1.bf16.msra.mxu0 0
      %1133 = vmatprep.subr.bf16.mxu0 0
      %1134 = vmatpush1.bf16.msra.mxu0 0
      %1135 = vmatprep.subr.bf16.mxu0 0
      %1136 = vmatpush1.bf16.msra.mxu0 0
      %1137 = vmatprep.subr.bf16.mxu0 0
      %1138 = vmatpush1.bf16.msra.mxu0 0
      %1139 = vmatprep.mubr.bf16.mxu0 0
      %1140 = vmatmul.mubr.bf16.gmra.mrb[0].mxu0 %v1102
      %v1141 = vpop.f32.mrb[0].mxu0
      %v1142 = vadd.f32 0.0, %v1141
      %v1143 = vpop.f32.mrb[0].mxu0
      %v1144 = vpop.f32.mrb[0].mxu0
      %v1145 = vpop.f32.mrb[0].mxu0
      %1146 = vdwg.mxu0
      %v1147 = vpack.c.bf16 %v1142, %v1142
      %v1149 = vsel %vm923, %v1147, 0
      %vm1151 = vcmask 1043456
      %v1153 = vsel %vm1151, %v774, 0
      %1155 = vmatprep.subr.bf16.mxu0 0
      %1156 = vmatpush1.bf16.msra.mxu0 %v1153
      %1157 = vmatprep.subr.bf16.mxu0 0
      %1158 = vmatpush1.bf16.msra.mxu0 0
      %1159 = vmatprep.subr.bf16.mxu0 0
      %1160 = vmatpush1.bf16.msra.mxu0 0
      %1161 = vmatprep.subr.bf16.mxu0 0
      %1162 = vmatpush1.bf16.msra.mxu0 0
      %1163 = vmatprep.subr.bf16.mxu0 0
      %1164 = vmatpush1.bf16.msra.mxu0 0
      %1165 = vmatprep.subr.bf16.mxu0 0
      %1166 = vmatpush1.bf16.msra.mxu0 0
      %1167 = vmatprep.subr.bf16.mxu0 0
      %1168 = vmatpush1.bf16.msra.mxu0 0
      %1169 = vmatprep.subr.bf16.mxu0 0
      %1170 = vmatpush1.bf16.msra.mxu0 0
      %1171 = vmatprep.subr.bf16.mxu0 0
      %1172 = vmatpush1.bf16.msra.mxu0 0
      %1173 = vmatprep.subr.bf16.mxu0 0
      %1174 = vmatpush1.bf16.msra.mxu0 0
      %1175 = vmatprep.subr.bf16.mxu0 0
      %1176 = vmatpush1.bf16.msra.mxu0 0
      %1177 = vmatprep.subr.bf16.mxu0 0
      %1178 = vmatpush1.bf16.msra.mxu0 0
      %1179 = vmatprep.subr.bf16.mxu0 0
      %1180 = vmatpush1.bf16.msra.mxu0 0
      %1181 = vmatprep.subr.bf16.mxu0 0
      %1182 = vmatpush1.bf16.msra.mxu0 0
      %1183 = vmatprep.subr.bf16.mxu0 0
      %1184 = vmatpush1.bf16.msra.mxu0 0
      %1185 = vmatprep.subr.bf16.mxu0 0
      %1186 = vmatpush1.bf16.msra.mxu0 0
      %1187 = vmatprep.mubr.bf16.mxu0 0
      %1188 = vmatmul.mubr.bf16.gmra.mrb[0].mxu0 %v1149
      %v1189 = vpop.f32.mrb[0].mxu0
      %v1190 = vadd.f32 0.0, %v1189
      %v1191 = vpop.f32.mrb[0].mxu0
      %v1192 = vpop.f32.mrb[0].mxu0
      %v1193 = vpop.f32.mrb[0].mxu0
      %1194 = vdwg.mxu0
      %v1196 = vsel %vm923, %v1036, 0
      %v1199 = vsel %vm1151, %v773, 0
      %1201 = vmatprep.subr.bf16.mxu0 0
      %1202 = vmatpush1.bf16.msra.mxu0 %v1199
      %1203 = vmatprep.subr.bf16.mxu0 0
      %1204 = vmatpush1.bf16.msra.mxu0 0
      %1205 = vmatprep.subr.bf16.mxu0 0
      %1206 = vmatpush1.bf16.msra.mxu0 0
      %1207 = vmatprep.subr.bf16.mxu0 0
      %1208 = vmatpush1.bf16.msra.mxu0 0
      %1209 = vmatprep.subr.bf16.mxu0 0
      %1210 = vmatpush1.bf16.msra.mxu0 0
      %1211 = vmatprep.subr.bf16.mxu0 0
      %1212 = vmatpush1.bf16.msra.mxu0 0
      %1213 = vmatprep.subr.bf16.mxu0 0
      %1214 = vmatpush1.bf16.msra.mxu0 0
      %1215 = vmatprep.subr.bf16.mxu0 0
      %1216 = vmatpush1.bf16.msra.mxu0 0
      %1217 = vmatprep.subr.bf16.mxu0 0
      %1218 = vmatpush1.bf16.msra.mxu0 0
      %1219 = vmatprep.subr.bf16.mxu0 0
      %1220 = vmatpush1.bf16.msra.mxu0 0
      %1221 = vmatprep.subr.bf16.mxu0 0
      %1222 = vmatpush1.bf16.msra.mxu0 0
      %1223 = vmatprep.subr.bf16.mxu0 0
      %1224 = vmatpush1.bf16.msra.mxu0 0
      %1225 = vmatprep.subr.bf16.mxu0 0
      %1226 = vmatpush1.bf16.msra.mxu0 0
      %1227 = vmatprep.subr.bf16.mxu0 0
      %1228 = vmatpush1.bf16.msra.mxu0 0
      %1229 = vmatprep.subr.bf16.mxu0 0
      %1230 = vmatpush1.bf16.msra.mxu0 0
      %1231 = vmatprep.subr.bf16.mxu0 0
      %1232 = vmatpush1.bf16.msra.mxu0 0
      %1233 = vmatprep.mubr.bf16.mxu0 0
      %1234 = vmatmul.mubr.bf16.gmra.mrb[0].mxu0 %v1196
      %v1235 = vpop.f32.mrb[0].mxu0
      %v1236 = vadd.f32 %v1190, %v1235
      %v1237 = vpop.f32.mrb[0].mxu0
      %v1238 = vpop.f32.mrb[0].mxu0
      %v1239 = vpop.f32.mrb[0].mxu0
      %1240 = vdwg.mxu0
      %1241 = vrot.lane.b32.xlu0 %v919, 112
      %v1242 = vpop.permute.xlu0 %1241
      %1243 = vrot.lane.b32.xlu0 %v919, 64
      %v1244 = vpop.permute.xlu0 %1243
      %v1246 = vsel %vm923, %v1242, 0
      %v1249 = vsel %vm923, %v1244, 0
      %1251 = vmatprep.subr.bf16.mxu0 0
      %1252 = vmatpush1.bf16.xpose.msra.mxu0 %v1249
      %1253 = vmatprep.subr.bf16.mxu0 0
      %1254 = vmatpush1.bf16.xpose.msra.mxu0 0
      %1255 = vmatprep.subr.bf16.mxu0 0
      %1256 = vmatpush1.bf16.xpose.msra.mxu0 0
      %1257 = vmatprep.subr.bf16.mxu0 0
      %1258 = vmatpush1.bf16.xpose.msra.mxu0 0
      %1259 = vmatprep.subr.bf16.mxu0 0
      %1260 = vmatpush1.bf16.xpose.msra.mxu0 0
      %1261 = vmatprep.subr.bf16.mxu0 0
      %1262 = vmatpush1.bf16.xpose.msra.mxu0 0
      %1263 = vmatprep.subr.bf16.mxu0 0
      %1264 = vmatpush1.bf16.xpose.msra.mxu0 0
      %1265 = vmatprep.subr.bf16.mxu0 0
      %1266 = vmatpush1.bf16.xpose.msra.mxu0 0
      %1267 = vmatprep.subr.bf16.mxu0 0
      %1268 = vmatpush1.bf16.xpose.msra.mxu0 0
      %1269 = vmatprep.subr.bf16.mxu0 0
      %1270 = vmatpush1.bf16.xpose.msra.mxu0 0
      %1271 = vmatprep.subr.bf16.mxu0 0
      %1272 = vmatpush1.bf16.xpose.msra.mxu0 0
      %1273 = vmatprep.subr.bf16.mxu0 0
      %1274 = vmatpush1.bf16.xpose.msra.mxu0 0
      %1275 = vmatprep.subr.bf16.mxu0 0
      %1276 = vmatpush1.bf16.xpose.msra.mxu0 0
      %1277 = vmatprep.subr.bf16.mxu0 0
      %1278 = vmatpush1.bf16.xpose.msra.mxu0 0
      %1279 = vmatprep.subr.bf16.mxu0 0
      %1280 = vmatpush1.bf16.xpose.msra.mxu0 0
      %1281 = vmatprep.subr.bf16.mxu0 0
      %1282 = vmatpush1.bf16.xpose.msra.mxu0 0
      %1283 = vmatprep.mubr.bf16.mxu0 0
      %1284 = vmatmul.mubr.bf16.gmra.mrb[0].mxu0 %v1246
      %v1285 = vpop.f32.mrb[0].mxu0
      %v1286 = vadd.f32 0.0, %v1285
      %v1287 = vpop.f32.mrb[0].mxu0
      %v1288 = vpop.f32.mrb[0].mxu0
      %v1289 = vpop.f32.mrb[0].mxu0
      %1290 = vdwg.mxu0
      %v1291 = vsel %vm970, %v1286, -inf
      %1292 = vmax.xlane.f32.xlu0 %v1291
      %v1293 = vpop.xlane.xlu0 %1292
      %v1294 = vsub.f32 %v1286, %v1293
      %v1295 = vmul.f32 %v1294, 1.442695
      %v1296 = vpow.pop %v1295
      %v1297 = vsel %vm970, %v1296, 0.0
      %1298 = vadd.xlane.f32.xlu0 %v1297
      %v1299 = vpop.xlane.xlu0 %1298
      %v1300 = vrcp.pop %v1299
      %v1301 = vmul.f32 %v1296, %v1300
      %v1302 = vpack.c.bf16 %v1301, %v1301
      %1303 = vrot.lane.b32.xlu0 %v919, 16
      %v1304 = vpop.permute.xlu0 %1303
      %v1306 = vsel %vm985, %v1302, 0
      %v1309 = vand.u32 %v1304, %v992
      %1311 = vmatprep.subr.bf16.mxu0 0
      %1312 = vmatpush1.bf16.msra.mxu0 %v1309
      %1313 = vmatprep.subr.bf16.mxu0 0
      %1314 = vmatpush1.bf16.msra.mxu0 0
      %1315 = vmatprep.subr.bf16.mxu0 0
      %1316 = vmatpush1.bf16.msra.mxu0 0
      %1317 = vmatprep.subr.bf16.mxu0 0
      %1318 = vmatpush1.bf16.msra.mxu0 0
      %1319 = vmatprep.subr.bf16.mxu0 0
      %1320 = vmatpush1.bf16.msra.mxu0 0
      %1321 = vmatprep.subr.bf16.mxu0 0
      %1322 = vmatpush1.bf16.msra.mxu0 0
      %1323 = vmatprep.subr.bf16.mxu0 0
      %1324 = vmatpush1.bf16.msra.mxu0 0
      %1325 = vmatprep.subr.bf16.mxu0 0
      %1326 = vmatpush1.bf16.msra.mxu0 0
      %1327 = vmatprep.subr.bf16.mxu0 0
      %1328 = vmatpush1.bf16.msra.mxu0 0
      %1329 = vmatprep.subr.bf16.mxu0 0
      %1330 = vmatpush1.bf16.msra.mxu0 0
      %1331 = vmatprep.subr.bf16.mxu0 0
      %1332 = vmatpush1.bf16.msra.mxu0 0
      %1333 = vmatprep.subr.bf16.mxu0 0
      %1334 = vmatpush1.bf16.msra.mxu0 0
      %1335 = vmatprep.subr.bf16.mxu0 0
      %1336 = vmatpush1.bf16.msra.mxu0 0
      %1337 = vmatprep.subr.bf16.mxu0 0
      %1338 = vmatpush1.bf16.msra.mxu0 0
      %1339 = vmatprep.subr.bf16.mxu0 0
      %1340 = vmatpush1.bf16.msra.mxu0 0
      %1341 = vmatprep.subr.bf16.mxu0 0
      %1342 = vmatpush1.bf16.msra.mxu0 0
      %1343 = vmatprep.mubr.bf16.mxu0 0
      %1344 = vmatmul.mubr.bf16.gmra.mrb[0].mxu0 %v1306
      %v1345 = vpop.f32.mrb[0].mxu0
      %v1346 = vadd.f32 0.0, %v1345
      %v1347 = vpop.f32.mrb[0].mxu0
      %v1348 = vpop.f32.mrb[0].mxu0
      %v1349 = vpop.f32.mrb[0].mxu0
      %1350 = vdwg.mxu0
      %v1351 = vpack.c.bf16 %v1346, %v1346
      %v1353 = vsel %vm923, %v1351, 0
      %v1356 = vsel %vm1151, %v775, 0
      %1358 = vmatprep.subr.bf16.mxu0 0
      %1359 = vmatpush1.bf16.msra.mxu0 %v1356
      %1360 = vmatprep.subr.bf16.mxu0 0
      %1361 = vmatpush1.bf16.msra.mxu0 0
      %1362 = vmatprep.subr.bf16.mxu0 0
      %1363 = vmatpush1.bf16.msra.mxu0 0
      %1364 = vmatprep.subr.bf16.mxu0 0
      %1365 = vmatpush1.bf16.msra.mxu0 0
      %1366 = vmatprep.subr.bf16.mxu0 0
      %1367 = vmatpush1.bf16.msra.mxu0 0
      %1368 = vmatprep.subr.bf16.mxu0 0
      %1369 = vmatpush1.bf16.msra.mxu0 0
      %1370 = vmatprep.subr.bf16.mxu0 0
      %1371 = vmatpush1.bf16.msra.mxu0 0
      %1372 = vmatprep.subr.bf16.mxu0 0
      %1373 = vmatpush1.bf16.msra.mxu0 0
      %1374 = vmatprep.subr.bf16.mxu0 0
      %1375 = vmatpush1.bf16.msra.mxu0 0
      %1376 = vmatprep.subr.bf16.mxu0 0
      %1377 = vmatpush1.bf16.msra.mxu0 0
      %1378 = vmatprep.subr.bf16.mxu0 0
      %1379 = vmatpush1.bf16.msra.mxu0 0
      %1380 = vmatprep.subr.bf16.mxu0 0
      %1381 = vmatpush1.bf16.msra.mxu0 0
      %1382 = vmatprep.subr.bf16.mxu0 0
      %1383 = vmatpush1.bf16.msra.mxu0 0
      %1384 = vmatprep.subr.bf16.mxu0 0
      %1385 = vmatpush1.bf16.msra.mxu0 0
      %1386 = vmatprep.subr.bf16.mxu0 0
      %1387 = vmatpush1.bf16.msra.mxu0 0
      %1388 = vmatprep.subr.bf16.mxu0 0
      %1389 = vmatpush1.bf16.msra.mxu0 0
      %1390 = vmatprep.mubr.bf16.mxu0 0
      %1391 = vmatmul.mubr.bf16.gmra.mrb[0].mxu0 %v1353
      %v1392 = vpop.f32.mrb[0].mxu0
      %v1393 = vadd.f32 0.0, %v1392
      %v1394 = vpop.f32.mrb[0].mxu0
      %v1395 = vpop.f32.mrb[0].mxu0
      %v1396 = vpop.f32.mrb[0].mxu0
      %1397 = vdwg.mxu0
      %v1398 = vadd.f32 %v1236, %v1393
      %1399 = vrot.lane.b32.xlu0 %v919, 104
      %v1400 = vpop.permute.xlu0 %1399
      %1401 = vrot.lane.b32.xlu0 %v919, 56
      %v1402 = vpop.permute.xlu0 %1401
      %v1404 = vsel %vm923, %v1400, 0
      %v1407 = vsel %vm923, %v1402, 0
      %1409 = vmatprep.subr.bf16.mxu0 0
      %1410 = vmatpush1.bf16.xpose.msra.mxu0 %v1407
      %1411 = vmatprep.subr.bf16.mxu0 0
      %1412 = vmatpush1.bf16.xpose.msra.mxu0 0
      %1413 = vmatprep.subr.bf16.mxu0 0
      %1414 = vmatpush1.bf16.xpose.msra.mxu0 0
      %1415 = vmatprep.subr.bf16.mxu0 0
      %1416 = vmatpush1.bf16.xpose.msra.mxu0 0
      %1417 = vmatprep.subr.bf16.mxu0 0
      %1418 = vmatpush1.bf16.xpose.msra.mxu0 0
      %1419 = vmatprep.subr.bf16.mxu0 0
      %1420 = vmatpush1.bf16.xpose.msra.mxu0 0
      %1421 = vmatprep.subr.bf16.mxu0 0
      %1422 = vmatpush1.bf16.xpose.msra.mxu0 0
      %1423 = vmatprep.subr.bf16.mxu0 0
      %1424 = vmatpush1.bf16.xpose.msra.mxu0 0
      %1425 = vmatprep.subr.bf16.mxu0 0
      %1426 = vmatpush1.bf16.xpose.msra.mxu0 0
      %1427 = vmatprep.subr.bf16.mxu0 0
      %1428 = vmatpush1.bf16.xpose.msra.mxu0 0
      %1429 = vmatprep.subr.bf16.mxu0 0
      %1430 = vmatpush1.bf16.xpose.msra.mxu0 0
      %1431 = vmatprep.subr.bf16.mxu0 0
      %1432 = vmatpush1.bf16.xpose.msra.mxu0 0
      %1433 = vmatprep.subr.bf16.mxu0 0
      %1434 = vmatpush1.bf16.xpose.msra.mxu0 0
      %1435 = vmatprep.subr.bf16.mxu0 0
      %1436 = vmatpush1.bf16.xpose.msra.mxu0 0
      %1437 = vmatprep.subr.bf16.mxu0 0
      %1438 = vmatpush1.bf16.xpose.msra.mxu0 0
      %1439 = vmatprep.subr.bf16.mxu0 0
      %1440 = vmatpush1.bf16.xpose.msra.mxu0 0
      %1441 = vmatprep.mubr.bf16.mxu0 0
      %1442 = vmatmul.mubr.bf16.gmra.mrb[0].mxu0 %v1404
      %v1443 = vpop.f32.mrb[0].mxu0
      %v1444 = vadd.f32 0.0, %v1443
      %v1445 = vpop.f32.mrb[0].mxu0
      %v1446 = vpop.f32.mrb[0].mxu0
      %v1447 = vpop.f32.mrb[0].mxu0
      %1448 = vdwg.mxu0
      %v1449 = vsel %vm970, %v1444, -inf
      %1450 = vmax.xlane.f32.xlu0 %v1449
      %v1451 = vpop.xlane.xlu0 %1450
      %v1452 = vsub.f32 %v1444, %v1451
      %v1453 = vmul.f32 %v1452, 1.442695
      %v1454 = vpow.pop %v1453
      %v1455 = vsel %vm970, %v1454, 0.0
      %1456 = vadd.xlane.f32.xlu0 %v1455
      %v1457 = vpop.xlane.xlu0 %1456
      %v1458 = vrcp.pop %v1457
      %v1459 = vmul.f32 %v1454, %v1458
      %v1460 = vpack.c.bf16 %v1459, %v1459
      %1461 = vrot.lane.b32.xlu0 %v919, 8
      %v1462 = vpop.permute.xlu0 %1461
      %v1464 = vsel %vm985, %v1460, 0
      %v1467 = vand.u32 %v1462, %v992
      %1469 = vmatprep.subr.bf16.mxu0 0
      %1470 = vmatpush1.bf16.msra.mxu0 %v1467
      %1471 = vmatprep.subr.bf16.mxu0 0
      %1472 = vmatpush1.bf16.msra.mxu0 0
      %1473 = vmatprep.subr.bf16.mxu0 0
      %1474 = vmatpush1.bf16.msra.mxu0 0
      %1475 = vmatprep.subr.bf16.mxu0 0
      %1476 = vmatpush1.bf16.msra.mxu0 0
      %1477 = vmatprep.subr.bf16.mxu0 0
      %1478 = vmatpush1.bf16.msra.mxu0 0
      %1479 = vmatprep.subr.bf16.mxu0 0
      %1480 = vmatpush1.bf16.msra.mxu0 0
      %1481 = vmatprep.subr.bf16.mxu0 0
      %1482 = vmatpush1.bf16.msra.mxu0 0
      %1483 = vmatprep.subr.bf16.mxu0 0
      %1484 = vmatpush1.bf16.msra.mxu0 0
      %1485 = vmatprep.subr.bf16.mxu0 0
      %1486 = vmatpush1.bf16.msra.mxu0 0
      %1487 = vmatprep.subr.bf16.mxu0 0
      %1488 = vmatpush1.bf16.msra.mxu0 0
      %1489 = vmatprep.subr.bf16.mxu0 0
      %1490 = vmatpush1.bf16.msra.mxu0 0
      %1491 = vmatprep.subr.bf16.mxu0 0
      %1492 = vmatpush1.bf16.msra.mxu0 0
      %1493 = vmatprep.subr.bf16.mxu0 0
      %1494 = vmatpush1.bf16.msra.mxu0 0
      %1495 = vmatprep.subr.bf16.mxu0 0
      %1496 = vmatpush1.bf16.msra.mxu0 0
      %1497 = vmatprep.subr.bf16.mxu0 0
      %1498 = vmatpush1.bf16.msra.mxu0 0
      %1499 = vmatprep.subr.bf16.mxu0 0
      %1500 = vmatpush1.bf16.msra.mxu0 0
      %1501 = vmatprep.mubr.bf16.mxu0 0
      %1502 = vmatmul.mubr.bf16.gmra.mrb[0].mxu0 %v1464
      %v1503 = vpop.f32.mrb[0].mxu0
      %v1504 = vadd.f32 0.0, %v1503
      %v1505 = vpop.f32.mrb[0].mxu0
      %v1506 = vpop.f32.mrb[0].mxu0
      %v1507 = vpop.f32.mrb[0].mxu0
      %1508 = vdwg.mxu0
      %v1509 = vpack.c.bf16 %v1504, %v1504
      %v1511 = vsel %vm923, %v1509, 0
      %v1514 = vsel %vm1151, %v776, 0
      %1516 = vmatprep.subr.bf16.mxu0 0
      %1517 = vmatpush1.bf16.msra.mxu0 %v1514
      %1518 = vmatprep.subr.bf16.mxu0 0
      %1519 = vmatpush1.bf16.msra.mxu0 0
      %1520 = vmatprep.subr.bf16.mxu0 0
      %1521 = vmatpush1.bf16.msra.mxu0 0
      %1522 = vmatprep.subr.bf16.mxu0 0
      %1523 = vmatpush1.bf16.msra.mxu0 0
      %1524 = vmatprep.subr.bf16.mxu0 0
      %1525 = vmatpush1.bf16.msra.mxu0 0
      %1526 = vmatprep.subr.bf16.mxu0 0
      %1527 = vmatpush1.bf16.msra.mxu0 0
      %1528 = vmatprep.subr.bf16.mxu0 0
      %1529 = vmatpush1.bf16.msra.mxu0 0
      %1530 = vmatprep.subr.bf16.mxu0 0
      %1531 = vmatpush1.bf16.msra.mxu0 0
      %1532 = vmatprep.subr.bf16.mxu0 0
      %1533 = vmatpush1.bf16.msra.mxu0 0
      %1534 = vmatprep.subr.bf16.mxu0 0
      %1535 = vmatpush1.bf16.msra.mxu0 0
      %1536 = vmatprep.subr.bf16.mxu0 0
      %1537 = vmatpush1.bf16.msra.mxu0 0
      %1538 = vmatprep.subr.bf16.mxu0 0
      %1539 = vmatpush1.bf16.msra.mxu0 0
      %1540 = vmatprep.subr.bf16.mxu0 0
      %1541 = vmatpush1.bf16.msra.mxu0 0
      %1542 = vmatprep.subr.bf16.mxu0 0
      %1543 = vmatpush1.bf16.msra.mxu0 0
      %1544 = vmatprep.subr.bf16.mxu0 0
      %1545 = vmatpush1.bf16.msra.mxu0 0
      %1546 = vmatprep.subr.bf16.mxu0 0
      %1547 = vmatpush1.bf16.msra.mxu0 0
      %1548 = vmatprep.mubr.bf16.mxu0 0
      %1549 = vmatmul.mubr.bf16.gmra.mrb[0].mxu0 %v1511
      %v1550 = vpop.f32.mrb[0].mxu0
      %v1551 = vadd.f32 0.0, %v1550
      %v1552 = vpop.f32.mrb[0].mxu0
      %v1553 = vpop.f32.mrb[0].mxu0
      %v1554 = vpop.f32.mrb[0].mxu0
      %1555 = vdwg.mxu0
      %v1556 = vadd.f32 %v1398, %v1551
      %v1557 = vpack.c.bf16 %v915, %v915
      %1558 = vrot.lane.b32.xlu0 %v919, 96
      %v1559 = vpop.permute.xlu0 %1558
      %1560 = vrot.lane.b32.xlu0 %v919, 48
      %v1561 = vpop.permute.xlu0 %1560
      %v1563 = vsel %vm923, %v1559, 0
      %v1566 = vsel %vm923, %v1561, 0
      %1568 = vmatprep.subr.bf16.mxu0 0
      %1569 = vmatpush1.bf16.xpose.msra.mxu0 %v1566
      %1570 = vmatprep.subr.bf16.mxu0 0
      %1571 = vmatpush1.bf16.xpose.msra.mxu0 0
      %1572 = vmatprep.subr.bf16.mxu0 0
      %1573 = vmatpush1.bf16.xpose.msra.mxu0 0
      %1574 = vmatprep.subr.bf16.mxu0 0
      %1575 = vmatpush1.bf16.xpose.msra.mxu0 0
      %1576 = vmatprep.subr.bf16.mxu0 0
      %1577 = vmatpush1.bf16.xpose.msra.mxu0 0
      %1578 = vmatprep.subr.bf16.mxu0 0
      %1579 = vmatpush1.bf16.xpose.msra.mxu0 0
      %1580 = vmatprep.subr.bf16.mxu0 0
      %1581 = vmatpush1.bf16.xpose.msra.mxu0 0
      %1582 = vmatprep.subr.bf16.mxu0 0
      %1583 = vmatpush1.bf16.xpose.msra.mxu0 0
      %1584 = vmatprep.subr.bf16.mxu0 0
      %1585 = vmatpush1.bf16.xpose.msra.mxu0 0
      %1586 = vmatprep.subr.bf16.mxu0 0
      %1587 = vmatpush1.bf16.xpose.msra.mxu0 0
      %1588 = vmatprep.subr.bf16.mxu0 0
      %1589 = vmatpush1.bf16.xpose.msra.mxu0 0
      %1590 = vmatprep.subr.bf16.mxu0 0
      %1591 = vmatpush1.bf16.xpose.msra.mxu0 0
      %1592 = vmatprep.subr.bf16.mxu0 0
      %1593 = vmatpush1.bf16.xpose.msra.mxu0 0
      %1594 = vmatprep.subr.bf16.mxu0 0
      %1595 = vmatpush1.bf16.xpose.msra.mxu0 0
      %1596 = vmatprep.subr.bf16.mxu0 0
      %1597 = vmatpush1.bf16.xpose.msra.mxu0 0
      %1598 = vmatprep.subr.bf16.mxu0 0
      %1599 = vmatpush1.bf16.xpose.msra.mxu0 0
      %1600 = vmatprep.mubr.bf16.mxu0 0
      %1601 = vmatmul.mubr.bf16.gmra.mrb[0].mxu0 %v1563
      %v1602 = vpop.f32.mrb[0].mxu0
      %v1603 = vadd.f32 0.0, %v1602
      %v1604 = vpop.f32.mrb[0].mxu0
      %v1605 = vpop.f32.mrb[0].mxu0
      %v1606 = vpop.f32.mrb[0].mxu0
      %1607 = vdwg.mxu0
      %v1608 = vsel %vm970, %v1603, -inf
      %1609 = vmax.xlane.f32.xlu0 %v1608
      %v1610 = vpop.xlane.xlu0 %1609
      %v1611 = vsub.f32 %v1603, %v1610
      %v1612 = vmul.f32 %v1611, 1.442695
      %v1613 = vpow.pop %v1612
      %v1614 = vsel %vm970, %v1613, 0.0
      %1615 = vadd.xlane.f32.xlu0 %v1614
      %v1616 = vpop.xlane.xlu0 %1615
      %v1617 = vrcp.pop %v1616
      %v1618 = vmul.f32 %v1613, %v1617
      %v1619 = vpack.c.bf16 %v1618, %v1618
      %v1621 = vsel %vm985, %v1619, 0
      %v1624 = vand.u32 %v1557, %v992
      %1626 = vmatprep.subr.bf16.mxu0 0
      %1627 = vmatpush1.bf16.msra.mxu0 %v1624
      %1628 = vmatprep.subr.bf16.mxu0 0
      %1629 = vmatpush1.bf16.msra.mxu0 0
      %1630 = vmatprep.subr.bf16.mxu0 0
      %1631 = vmatpush1.bf16.msra.mxu0 0
      %1632 = vmatprep.subr.bf16.mxu0 0
      %1633 = vmatpush1.bf16.msra.mxu0 0
      %1634 = vmatprep.subr.bf16.mxu0 0
      %1635 = vmatpush1.bf16.msra.mxu0 0
      %1636 = vmatprep.subr.bf16.mxu0 0
      %1637 = vmatpush1.bf16.msra.mxu0 0
      %1638 = vmatprep.subr.bf16.mxu0 0
      %1639 = vmatpush1.bf16.msra.mxu0 0
      %1640 = vmatprep.subr.bf16.mxu0 0
      %1641 = vmatpush1.bf16.msra.mxu0 0
      %1642 = vmatprep.subr.bf16.mxu0 0
      %1643 = vmatpush1.bf16.msra.mxu0 0
      %1644 = vmatprep.subr.bf16.mxu0 0
      %1645 = vmatpush1.bf16.msra.mxu0 0
      %1646 = vmatprep.subr.bf16.mxu0 0
      %1647 = vmatpush1.bf16.msra.mxu0 0
      %1648 = vmatprep.subr.bf16.mxu0 0
      %1649 = vmatpush1.bf16.msra.mxu0 0
      %1650 = vmatprep.subr.bf16.mxu0 0
      %1651 = vmatpush1.bf16.msra.mxu0 0
      %1652 = vmatprep.subr.bf16.mxu0 0
      %1653 = vmatpush1.bf16.msra.mxu0 0
      %1654 = vmatprep.subr.bf16.mxu0 0
      %1655 = vmatpush1.bf16.msra.mxu0 0
      %1656 = vmatprep.subr.bf16.mxu0 0
      %1657 = vmatpush1.bf16.msra.mxu0 0
      %1658 = vmatprep.mubr.bf16.mxu0 0
      %1659 = vmatmul.mubr.bf16.gmra.mrb[0].mxu0 %v1621
      %v1660 = vpop.f32.mrb[0].mxu0
      %v1661 = vadd.f32 0.0, %v1660
      %v1662 = vpop.f32.mrb[0].mxu0
      %v1663 = vpop.f32.mrb[0].mxu0
      %v1664 = vpop.f32.mrb[0].mxu0
      %1665 = vdwg.mxu0
      %v1666 = vpack.c.bf16 %v1661, %v1661
      %v1668 = vsel %vm923, %v1666, 0
      %v1671 = vsel %vm1151, %v777, 0
      %1673 = vmatprep.subr.bf16.mxu0 0
      %1674 = vmatpush1.bf16.msra.mxu0 %v1671
      %1675 = vmatprep.subr.bf16.mxu0 0
      %1676 = vmatpush1.bf16.msra.mxu0 0
      %1677 = vmatprep.subr.bf16.mxu0 0
      %1678 = vmatpush1.bf16.msra.mxu0 0
      %1679 = vmatprep.subr.bf16.mxu0 0
      %1680 = vmatpush1.bf16.msra.mxu0 0
      %1681 = vmatprep.subr.bf16.mxu0 0
      %1682 = vmatpush1.bf16.msra.mxu0 0
      %1683 = vmatprep.subr.bf16.mxu0 0
      %1684 = vmatpush1.bf16.msra.mxu0 0
      %1685 = vmatprep.subr.bf16.mxu0 0
      %1686 = vmatpush1.bf16.msra.mxu0 0
      %1687 = vmatprep.subr.bf16.mxu0 0
      %1688 = vmatpush1.bf16.msra.mxu0 0
      %1689 = vmatprep.subr.bf16.mxu0 0
      %1690 = vmatpush1.bf16.msra.mxu0 0
      %1691 = vmatprep.subr.bf16.mxu0 0
      %1692 = vmatpush1.bf16.msra.mxu0 0
      %1693 = vmatprep.subr.bf16.mxu0 0
      %1694 = vmatpush1.bf16.msra.mxu0 0
      %1695 = vmatprep.subr.bf16.mxu0 0
      %1696 = vmatpush1.bf16.msra.mxu0 0
      %1697 = vmatprep.subr.bf16.mxu0 0
      %1698 = vmatpush1.bf16.msra.mxu0 0
      %1699 = vmatprep.subr.bf16.mxu0 0
      %1700 = vmatpush1.bf16.msra.mxu0 0
      %1701 = vmatprep.subr.bf16.mxu0 0
      %1702 = vmatpush1.bf16.msra.mxu0 0
      %1703 = vmatprep.subr.bf16.mxu0 0
      %1704 = vmatpush1.bf16.msra.mxu0 0
      %1705 = vmatprep.mubr.bf16.mxu0 0
      %1706 = vmatmul.mubr.bf16.gmra.mrb[0].mxu0 %v1668
      %v1707 = vpop.f32.mrb[0].mxu0
      %v1708 = vadd.f32 0.0, %v1707
      %v1709 = vpop.f32.mrb[0].mxu0
      %v1710 = vpop.f32.mrb[0].mxu0
      %v1711 = vpop.f32.mrb[0].mxu0
      %1712 = vdwg.mxu0
      %v1713 = vadd.f32 %v1556, %v1708
      %1714 = vrot.lane.b32.xlu0 %v919, 88
      %v1715 = vpop.permute.xlu0 %1714
      %1716 = vrot.lane.b32.xlu0 %v919, 40
      %v1717 = vpop.permute.xlu0 %1716
      %v1719 = vsel %vm923, %v1715, 0
      %v1722 = vsel %vm923, %v1717, 0
      %1724 = vmatprep.subr.bf16.mxu0 0
      %1725 = vmatpush1.bf16.xpose.msra.mxu0 %v1722
      %1726 = vmatprep.subr.bf16.mxu0 0
      %1727 = vmatpush1.bf16.xpose.msra.mxu0 0
      %1728 = vmatprep.subr.bf16.mxu0 0
      %1729 = vmatpush1.bf16.xpose.msra.mxu0 0
      %1730 = vmatprep.subr.bf16.mxu0 0
      %1731 = vmatpush1.bf16.xpose.msra.mxu0 0
      %1732 = vmatprep.subr.bf16.mxu0 0
      %1733 = vmatpush1.bf16.xpose.msra.mxu0 0
      %1734 = vmatprep.subr.bf16.mxu0 0
      %1735 = vmatpush1.bf16.xpose.msra.mxu0 0
      %1736 = vmatprep.subr.bf16.mxu0 0
      %1737 = vmatpush1.bf16.xpose.msra.mxu0 0
      %1738 = vmatprep.subr.bf16.mxu0 0
      %1739 = vmatpush1.bf16.xpose.msra.mxu0 0
      %1740 = vmatprep.subr.bf16.mxu0 0
      %1741 = vmatpush1.bf16.xpose.msra.mxu0 0
      %1742 = vmatprep.subr.bf16.mxu0 0
      %1743 = vmatpush1.bf16.xpose.msra.mxu0 0
      %1744 = vmatprep.subr.bf16.mxu0 0
      %1745 = vmatpush1.bf16.xpose.msra.mxu0 0
      %1746 = vmatprep.subr.bf16.mxu0 0
      %1747 = vmatpush1.bf16.xpose.msra.mxu0 0
      %1748 = vmatprep.subr.bf16.mxu0 0
      %1749 = vmatpush1.bf16.xpose.msra.mxu0 0
      %1750 = vmatprep.subr.bf16.mxu0 0
      %1751 = vmatpush1.bf16.xpose.msra.mxu0 0
      %1752 = vmatprep.subr.bf16.mxu0 0
      %1753 = vmatpush1.bf16.xpose.msra.mxu0 0
      %1754 = vmatprep.subr.bf16.mxu0 0
      %1755 = vmatpush1.bf16.xpose.msra.mxu0 0
      %1756 = vmatprep.mubr.bf16.mxu0 0
      %1757 = vmatmul.mubr.bf16.gmra.mrb[0].mxu0 %v1719
      %v1758 = vpop.f32.mrb[0].mxu0
      %v1759 = vadd.f32 0.0, %v1758
      %v1760 = vpop.f32.mrb[0].mxu0
      %v1761 = vpop.f32.mrb[0].mxu0
      %v1762 = vpop.f32.mrb[0].mxu0
      %1763 = vdwg.mxu0
      %v1764 = vsel %vm970, %v1759, -inf
      %1765 = vmax.xlane.f32.xlu0 %v1764
      %v1766 = vpop.xlane.xlu0 %1765
      %v1767 = vsub.f32 %v1759, %v1766
      %v1768 = vmul.f32 %v1767, 1.442695
      %v1769 = vpow.pop %v1768
      %v1770 = vsel %vm970, %v1769, 0.0
      %1771 = vadd.xlane.f32.xlu0 %v1770
      %v1772 = vpop.xlane.xlu0 %1771
      %v1773 = vrcp.pop %v1772
      %v1774 = vmul.f32 %v1769, %v1773
      %v1775 = vpack.c.bf16 %v1774, %v1774
      %1777 = vrot.lane.b32.xlu0 %v1557, 120
      %v1778 = vpop.permute.xlu0 %1777
      %v1780 = vsel %vm985, %v1775, 0
      %v1783 = vand.u32 %v1778, %v992
      %1785 = vmatprep.subr.bf16.mxu0 0
      %1786 = vmatpush1.bf16.msra.mxu0 %v1783
      %1787 = vmatprep.subr.bf16.mxu0 0
      %1788 = vmatpush1.bf16.msra.mxu0 0
      %1789 = vmatprep.subr.bf16.mxu0 0
      %1790 = vmatpush1.bf16.msra.mxu0 0
      %1791 = vmatprep.subr.bf16.mxu0 0
      %1792 = vmatpush1.bf16.msra.mxu0 0
      %1793 = vmatprep.subr.bf16.mxu0 0
      %1794 = vmatpush1.bf16.msra.mxu0 0
      %1795 = vmatprep.subr.bf16.mxu0 0
      %1796 = vmatpush1.bf16.msra.mxu0 0
      %1797 = vmatprep.subr.bf16.mxu0 0
      %1798 = vmatpush1.bf16.msra.mxu0 0
      %1799 = vmatprep.subr.bf16.mxu0 0
      %1800 = vmatpush1.bf16.msra.mxu0 0
      %1801 = vmatprep.subr.bf16.mxu0 0
      %1802 = vmatpush1.bf16.msra.mxu0 0
      %1803 = vmatprep.subr.bf16.mxu0 0
      %1804 = vmatpush1.bf16.msra.mxu0 0
      %1805 = vmatprep.subr.bf16.mxu0 0
      %1806 = vmatpush1.bf16.msra.mxu0 0
      %1807 = vmatprep.subr.bf16.mxu0 0
      %1808 = vmatpush1.bf16.msra.mxu0 0
      %1809 = vmatprep.subr.bf16.mxu0 0
      %1810 = vmatpush1.bf16.msra.mxu0 0
      %1811 = vmatprep.subr.bf16.mxu0 0
      %1812 = vmatpush1.bf16.msra.mxu0 0
      %1813 = vmatprep.subr.bf16.mxu0 0
      %1814 = vmatpush1.bf16.msra.mxu0 0
      %1815 = vmatprep.subr.bf16.mxu0 0
      %1816 = vmatpush1.bf16.msra.mxu0 0
      %1817 = vmatprep.mubr.bf16.mxu0 0
      %1818 = vmatmul.mubr.bf16.gmra.mrb[0].mxu0 %v1780
      %v1819 = vpop.f32.mrb[0].mxu0
      %v1820 = vadd.f32 0.0, %v1819
      %v1821 = vpop.f32.mrb[0].mxu0
      %v1822 = vpop.f32.mrb[0].mxu0
      %v1823 = vpop.f32.mrb[0].mxu0
      %1824 = vdwg.mxu0
      %v1825 = vpack.c.bf16 %v1820, %v1820
      %v1827 = vsel %vm923, %v1825, 0
      %v1830 = vsel %vm1151, %v778, 0
      %1832 = vmatprep.subr.bf16.mxu0 0
      %1833 = vmatpush1.bf16.msra.mxu0 %v1830
      %1834 = vmatprep.subr.bf16.mxu0 0
      %1835 = vmatpush1.bf16.msra.mxu0 0
      %1836 = vmatprep.subr.bf16.mxu0 0
      %1837 = vmatpush1.bf16.msra.mxu0 0
      %1838 = vmatprep.subr.bf16.mxu0 0
      %1839 = vmatpush1.bf16.msra.mxu0 0
      %1840 = vmatprep.subr.bf16.mxu0 0
      %1841 = vmatpush1.bf16.msra.mxu0 0
      %1842 = vmatprep.subr.bf16.mxu0 0
      %1843 = vmatpush1.bf16.msra.mxu0 0
      %1844 = vmatprep.subr.bf16.mxu0 0
      %1845 = vmatpush1.bf16.msra.mxu0 0
      %1846 = vmatprep.subr.bf16.mxu0 0
      %1847 = vmatpush1.bf16.msra.mxu0 0
      %1848 = vmatprep.subr.bf16.mxu0 0
      %1849 = vmatpush1.bf16.msra.mxu0 0
      %1850 = vmatprep.subr.bf16.mxu0 0
      %1851 = vmatpush1.bf16.msra.mxu0 0
      %1852 = vmatprep.subr.bf16.mxu0 0
      %1853 = vmatpush1.bf16.msra.mxu0 0
      %1854 = vmatprep.subr.bf16.mxu0 0
      %1855 = vmatpush1.bf16.msra.mxu0 0
      %1856 = vmatprep.subr.bf16.mxu0 0
      %1857 = vmatpush1.bf16.msra.mxu0 0
      %1858 = vmatprep.subr.bf16.mxu0 0
      %1859 = vmatpush1.bf16.msra.mxu0 0
      %1860 = vmatprep.subr.bf16.mxu0 0
      %1861 = vmatpush1.bf16.msra.mxu0 0
      %1862 = vmatprep.subr.bf16.mxu0 0
      %1863 = vmatpush1.bf16.msra.mxu0 0
      %1864 = vmatprep.mubr.bf16.mxu0 0
      %1865 = vmatmul.mubr.bf16.gmra.mrb[0].mxu0 %v1827
      %v1866 = vpop.f32.mrb[0].mxu0
      %v1867 = vadd.f32 0.0, %v1866
      %v1868 = vpop.f32.mrb[0].mxu0
      %v1869 = vpop.f32.mrb[0].mxu0
      %v1870 = vpop.f32.mrb[0].mxu0
      %1871 = vdwg.mxu0
      %v1872 = vadd.f32 %v1713, %v1867
      %v1873 = vadd.f32 %v764, %v1872
      %v1875 = vlaneseq
      %v1876 = vshrl.u32 %v1875, 7
      %v1877 = vsub.s32 0, %v1876
      %v1878 = vrot.slane %v779, %v1877
      %v1880 = vadd.f32 %v1873, %v1878
      %v1881 = vsel %vm814, %v1880, 0.0
      %1882 = vadd.xlane.f32.xlu0 %v1881
      %v1883 = vpop.xlane.xlu0 %1882
      %v1884 = vmul.f32 %v1883, %v818
      %v1885 = vsub.f32 %v1880, %v1884
      %v1886 = vmul.f32 %v1885, %v1885
      %v1887 = vsel %vm814, %v1886, 0.0
      %1888 = vadd.xlane.f32.xlu0 %v1887
      %v1889 = vpop.xlane.xlu0 %1888
      %v1890 = vmul.f32 %v1889, %v818
      %v1891 = vadd.f32 %v1890, 1e-06
      %v1892 = vrsqrt.pop %v1891
      %v1893 = vmul.f32 %v1885, %v1892
      %v1895 = vlaneseq
      %v1896 = vshrl.u32 %v1895, 7
      %v1897 = vsub.s32 0, %v1896
      %v1898 = vrot.slane %v780, %v1897
      %v1900 = vmul.f32 %v1893, %v1898
      %v1902 = vlaneseq
      %v1903 = vshrl.u32 %v1902, 7
      %v1904 = vsub.s32 0, %v1903
      %v1905 = vrot.slane %v781, %v1904
      %v1907 = vadd.f32 %v1900, %v1905
      %v1908 = vpack.c.bf16 %v1907, %v1907
      %v1910 = vlaneseq
      %v1911 = vshrl.u32 %v1910, 7
      %v1912 = vsub.s32 0, %v1911
      %v1913 = vrot.slane %v788, %v1912
      %v1914 = vlaneseq
      %v1915 = vshrl.u32 %v1914, 7
      %v1916 = vsub.s32 1, %v1915
      %v1917 = vrot.slane %v788, %v1916
      %v1926 = vunpack.c.l.b16 %v782
      %v1927 = vunpack.c.h.b16 %v782
      %v1928 = vunpack.c.l.b16 %v783
      %v1929 = vunpack.c.h.b16 %v783
      %v1930 = vunpack.c.l.b16 %v784
      %v1931 = vunpack.c.h.b16 %v784
      %v1932 = vunpack.c.l.b16 %v785
      %v1933 = vunpack.c.h.b16 %v785
      %v1934 = vunpack.c.l.b16 %v786
      %v1935 = vunpack.c.h.b16 %v786
      %v1936 = vunpack.c.l.b16 %v787
      %v1937 = vunpack.c.h.b16 %v787
      %v1938 = vpack.c.b16 %v1928, %v1926
      %v1939 = vpack.c.b16 %v1929, %v1927
      %v1940 = vpack.c.b16 %v1932, %v1930
      %v1941 = vpack.c.b16 %v1933, %v1931
      %v1942 = vpack.c.b16 %v1936, %v1934
      %v1943 = vpack.c.b16 %v1937, %v1935
      %v1951 = vsel %vm874, %v1908, 0
      %1953 = vmatprep.subr.bf16.mxu0 %v1939
      %1954 = vmatpush1.bf16.msra.mxu0 %v1938
      %1955 = vmatprep.subr.bf16.mxu0 %v1941
      %1956 = vmatpush1.bf16.msra.mxu0 %v1940
      %1957 = vmatprep.subr.bf16.mxu0 %v1943
      %1958 = vmatpush1.bf16.msra.mxu0 %v1942
      %1959 = vmatprep.subr.bf16.mxu0 0
      %1960 = vmatpush1.bf16.msra.mxu0 0
      %1961 = vmatprep.subr.bf16.mxu0 0
      %1962 = vmatpush1.bf16.msra.mxu0 0
      %1963 = vmatprep.subr.bf16.mxu0 0
      %1964 = vmatpush1.bf16.msra.mxu0 0
      %1965 = vmatprep.subr.bf16.mxu0 0
      %1966 = vmatpush1.bf16.msra.mxu0 0
      %1967 = vmatprep.subr.bf16.mxu0 0
      %1968 = vmatpush1.bf16.msra.mxu0 0
      %1969 = vmatprep.subr.bf16.mxu0 0
      %1970 = vmatpush1.bf16.msra.mxu0 0
      %1971 = vmatprep.subr.bf16.mxu0 0
      %1972 = vmatpush1.bf16.msra.mxu0 0
      %1973 = vmatprep.subr.bf16.mxu0 0
      %1974 = vmatpush1.bf16.msra.mxu0 0
      %1975 = vmatprep.subr.bf16.mxu0 0
      %1976 = vmatpush1.bf16.msra.mxu0 0
      %1977 = vmatprep.subr.bf16.mxu0 0
      %1978 = vmatpush1.bf16.msra.mxu0 0
      %1979 = vmatprep.subr.bf16.mxu0 0
      %1980 = vmatpush1.bf16.msra.mxu0 0
      %1981 = vmatprep.subr.bf16.mxu0 0
      %1982 = vmatpush1.bf16.msra.mxu0 0
      %1983 = vmatprep.subr.bf16.mxu0 0
      %1984 = vmatpush1.bf16.msra.mxu0 0
      %1985 = vmatprep.mubr.bf16.mxu0 0
      %1986 = vmatmul.mubr.bf16.gmra.mrb[0].mxu0 %v1951
      %v1987 = vpop.f32.mrb[0].mxu0
      %v1988 = vadd.f32 %v1913, %v1987
      %v1989 = vpop.f32.mrb[0].mxu0
      %v1990 = vadd.f32 %v1917, %v1989
      %v1991 = vpop.f32.mrb[0].mxu0
      %v1992 = vpop.f32.mrb[0].mxu0
      %1993 = vdwg.mxu0
      %v1994 = vmul.f32 %v1988, %v1988
      %v1995 = vmul.f32 %v1990, %v1990
      %v1996 = vmul.f32 %v1988, %v1994
      %v1997 = vmul.f32 %v1990, %v1995
      %v1998 = vmul.f32 %v1996, 0.044715
      %v1999 = vmul.f32 %v1997, 0.044715
      %v2000 = vadd.f32 %v1988, %v1998
      %v2001 = vadd.f32 %v1990, %v1999
      %v2002 = vmul.f32 %v2000, 0.7978846
      %v2003 = vmul.f32 %v2001, 0.7978846
      %v2004 = vtanh.pop %v2002
      %v2005 = vtanh.pop %v2003
      %v2006 = vadd.f32 %v2004, 1.0
      %v2007 = vadd.f32 %v2005, 1.0
      %v2008 = vmul.f32 %v2006, 0.5
      %v2009 = vmul.f32 %v2007, 0.5
      %v2010 = vmul.f32 %v1988, %v2008
      %v2011 = vmul.f32 %v1990, %v2009
      %v2012 = vpack.c.bf16 %v2010, %v2010
      %v2013 = vpack.c.bf16 %v2011, %v2011
      %v2015 = vlaneseq
      %v2016 = vshrl.u32 %v2015, 7
      %v2017 = vsub.s32 0, %v2016
      %v2018 = vrot.slane %v813, %v2017
      %v2044 = vunpack.c.l.b16 %v789
      %v2045 = vunpack.c.l.b16 %v790
      %v2046 = vunpack.c.l.b16 %v791
      %v2047 = vunpack.c.l.b16 %v792
      %v2048 = vunpack.c.l.b16 %v793
      %v2049 = vunpack.c.l.b16 %v794
      %v2050 = vunpack.c.l.b16 %v795
      %v2051 = vunpack.c.l.b16 %v796
      %v2052 = vunpack.c.l.b16 %v797
      %v2053 = vunpack.c.l.b16 %v798
      %v2054 = vunpack.c.l.b16 %v799
      %v2055 = vunpack.c.l.b16 %v800
      %v2056 = vunpack.c.l.b16 %v801
      %v2057 = vunpack.c.l.b16 %v802
      %v2058 = vunpack.c.l.b16 %v803
      %v2059 = vunpack.c.l.b16 %v804
      %v2060 = vunpack.c.l.b16 %v805
      %v2061 = vunpack.c.l.b16 %v806
      %v2062 = vunpack.c.l.b16 %v807
      %v2063 = vunpack.c.l.b16 %v808
      %v2064 = vunpack.c.l.b16 %v809
      %v2065 = vunpack.c.l.b16 %v810
      %v2066 = vunpack.c.l.b16 %v811
      %v2067 = vunpack.c.l.b16 %v812
      %v2068 = vpack.c.b16 %v2045, %v2044
      %v2069 = vpack.c.b16 %v2047, %v2046
      %v2070 = vpack.c.b16 %v2049, %v2048
      %v2071 = vpack.c.b16 %v2051, %v2050
      %v2072 = vpack.c.b16 %v2053, %v2052
      %v2073 = vpack.c.b16 %v2055, %v2054
      %v2074 = vpack.c.b16 %v2057, %v2056
      %v2075 = vpack.c.b16 %v2059, %v2058
      %v2076 = vpack.c.b16 %v2061, %v2060
      %v2077 = vpack.c.b16 %v2063, %v2062
      %v2078 = vpack.c.b16 %v2065, %v2064
      %v2079 = vpack.c.b16 %v2067, %v2066
      %vm2092 = vcmask 523264
      %v2094 = vsel %vm2092, %v2013, 0
      %2096 = vmatprep.subr.bf16.mxu0 0
      %2097 = vmatpush1.bf16.msra.mxu0 %v2068
      %2098 = vmatprep.subr.bf16.mxu0 0
      %2099 = vmatpush1.bf16.msra.mxu0 %v2069
      %2100 = vmatprep.subr.bf16.mxu0 0
      %2101 = vmatpush1.bf16.msra.mxu0 %v2070
      %2102 = vmatprep.subr.bf16.mxu0 0
      %2103 = vmatpush1.bf16.msra.mxu0 %v2071
      %2104 = vmatprep.subr.bf16.mxu0 0
      %2105 = vmatpush1.bf16.msra.mxu0 %v2072
      %2106 = vmatprep.subr.bf16.mxu0 0
      %2107 = vmatpush1.bf16.msra.mxu0 %v2073
      %2108 = vmatprep.subr.bf16.mxu0 0
      %2109 = vmatpush1.bf16.msra.mxu0 %v2074
      %2110 = vmatprep.subr.bf16.mxu0 0
      %2111 = vmatpush1.bf16.msra.mxu0 %v2075
      %2112 = vmatprep.subr.bf16.mxu0 0
      %2113 = vmatpush1.bf16.msra.mxu0 %v2076
      %2114 = vmatprep.subr.bf16.mxu0 0
      %2115 = vmatpush1.bf16.msra.mxu0 %v2077
      %2116 = vmatprep.subr.bf16.mxu0 0
      %2117 = vmatpush1.bf16.msra.mxu0 %v2078
      %2118 = vmatprep.subr.bf16.mxu0 0
      %2119 = vmatpush1.bf16.msra.mxu0 %v2079
      %2120 = vmatprep.subr.bf16.mxu0 0
      %2121 = vmatpush1.bf16.msra.mxu0 0
      %2122 = vmatprep.subr.bf16.mxu0 0
      %2123 = vmatpush1.bf16.msra.mxu0 0
      %2124 = vmatprep.subr.bf16.mxu0 0
      %2125 = vmatpush1.bf16.msra.mxu0 0
      %2126 = vmatprep.subr.bf16.mxu0 0
      %2127 = vmatpush1.bf16.msra.mxu0 0
      %2128 = vmatprep.mubr.bf16.mxu0 %v2094
      %2129 = vmatmul.mubr.bf16.gmra.mrb[0].mxu0 %v2012
      %v2130 = vpop.f32.mrb[0].mxu0
      %v2131 = vadd.f32 %v2018, %v2130
      %v2132 = vpop.f32.mrb[0].mxu0
      %v2133 = vpop.f32.mrb[0].mxu0
      %v2134 = vpop.f32.mrb[0].mxu0
      %2135 = vdwg.mxu0
      %v2136 = vadd.f32 %v1880, %v2131
      %2137 = vst.msk [vmem:[#allocation2] sm:$0x7] %vm814, %v2136
      %p2138 = scmp.eq.s32.totalorder %s33, 1
      // Predicated region
      $region93: #{masked_point_vit_forward.4} parent=87 // pred_check
        %p2139 = pneg %p2138
      $region94: #{masked_point_vit_forward.4} parent=87 // pred_check_branch
        %2141 = sbr.rel (%p2139) target = $region96
      $region95: #{masked_point_vit_forward.4} parent=87 // pred_region
        %v2142 = vld [vmem:[%s13] sm:$0x1]
        %v2143 = vld [vmem:[%s14] sm:$0x1]
        %v2144 = vsel %vm814, %v2136, 0.0
        %2145 = vadd.xlane.f32.xlu0 %v2144
        %v2146 = vpop.xlane.xlu0 %2145
        %v2147 = vmul.f32 %v2146, %v818
        %v2148 = vsub.f32 %v2136, %v2147
        %v2149 = vmul.f32 %v2148, %v2148
        %v2150 = vsel %vm814, %v2149, 0.0
        %2151 = vadd.xlane.f32.xlu0 %v2150
        %v2152 = vpop.xlane.xlu0 %2151
        %v2153 = vmul.f32 %v2152, %v818
        %v2154 = vadd.f32 %v2153, 1e-06
        %v2155 = vrsqrt.pop %v2154
        %v2156 = vmul.f32 %v2148, %v2155
        %v2158 = vlaneseq
        %v2159 = vshrl.u32 %v2158, 7
        %v2160 = vsub.s32 0, %v2159
        %v2161 = vrot.slane %v2142, %v2160
        %v2163 = vmul.f32 %v2156, %v2161
        %v2165 = vlaneseq
        %v2166 = vshrl.u32 %v2165, 7
        %v2167 = vsub.s32 0, %v2166
        %v2168 = vrot.slane %v2143, %v2167
        %v2170 = vadd.f32 %v2163, %v2168
        %v2171 = vpack.c.bf16 %v2170, %v2170
        %v2172 = vld [vmem:[%s15] sm:$0xf]
        %v2173 = vld [vmem:[%s15 + $0x4] sm:$0xf]
        %v2174 = vld [vmem:[%s15 + $0x8] sm:$0xf]
        %v2175 = vld [vmem:[%s15 + $0xc] sm:$0xf]
        %v2176 = vld [vmem:[%s15 + $0x10] sm:$0xf]
        %v2177 = vld [vmem:[%s15 + $0x14] sm:$0xf]
        %v2178 = vld [vmem:[%s16] sm:$0x1]
        %v2180 = vlaneseq
        %v2181 = vshrl.u32 %v2180, 7
        %v2182 = vsub.s32 0, %v2181
        %v2183 = vrot.slane %v2178, %v2182
        %v2191 = vunpack.c.l.b16 %v2172
        %v2192 = vunpack.c.l.b16 %v2173
        %v2193 = vunpack.c.l.b16 %v2174
        %v2194 = vunpack.c.l.b16 %v2175
        %v2195 = vunpack.c.l.b16 %v2176
        %v2196 = vunpack.c.l.b16 %v2177
        %v2197 = vpack.c.b16 %v2192, %v2191
        %v2198 = vpack.c.b16 %v2194, %v2193
        %v2199 = vpack.c.b16 %v2196, %v2195
        %v2204 = vsel %vm874, %v2171, 0
        %2206 = vmatprep.subr.bf16.mxu0 0
        %2207 = vmatpush1.bf16.msra.mxu0 %v2197
        %2208 = vmatprep.subr.bf16.mxu0 0
        %2209 = vmatpush1.bf16.msra.mxu0 %v2198
        %2210 = vmatprep.subr.bf16.mxu0 0
        %2211 = vmatpush1.bf16.msra.mxu0 %v2199
        %2212 = vmatprep.subr.bf16.mxu0 0
        %2213 = vmatpush1.bf16.msra.mxu0 0
        %2214 = vmatprep.subr.bf16.mxu0 0
        %2215 = vmatpush1.bf16.msra.mxu0 0
        %2216 = vmatprep.subr.bf16.mxu0 0
        %2217 = vmatpush1.bf16.msra.mxu0 0
        %2218 = vmatprep.subr.bf16.mxu0 0
        %2219 = vmatpush1.bf16.msra.mxu0 0
        %2220 = vmatprep.subr.bf16.mxu0 0
        %2221 = vmatpush1.bf16.msra.mxu0 0
        %2222 = vmatprep.subr.bf16.mxu0 0
        %2223 = vmatpush1.bf16.msra.mxu0 0
        %2224 = vmatprep.subr.bf16.mxu0 0
        %2225 = vmatpush1.bf16.msra.mxu0 0
        %2226 = vmatprep.subr.bf16.mxu0 0
        %2227 = vmatpush1.bf16.msra.mxu0 0
        %2228 = vmatprep.subr.bf16.mxu0 0
        %2229 = vmatpush1.bf16.msra.mxu0 0
        %2230 = vmatprep.subr.bf16.mxu0 0
        %2231 = vmatpush1.bf16.msra.mxu0 0
        %2232 = vmatprep.subr.bf16.mxu0 0
        %2233 = vmatpush1.bf16.msra.mxu0 0
        %2234 = vmatprep.subr.bf16.mxu0 0
        %2235 = vmatpush1.bf16.msra.mxu0 0
        %2236 = vmatprep.subr.bf16.mxu0 0
        %2237 = vmatpush1.bf16.msra.mxu0 0
        %2238 = vmatprep.mubr.bf16.mxu0 0
        %2239 = vmatmul.mubr.bf16.gmra.mrb[0].mxu0 %v2204
        %v2240 = vpop.f32.mrb[0].mxu0
        %v2241 = vadd.f32 %v2183, %v2240
        %v2242 = vpop.f32.mrb[0].mxu0
        %v2243 = vpop.f32.mrb[0].mxu0
        %v2244 = vpop.f32.mrb[0].mxu0
        %2245 = vdwg.mxu0
        %vm2246 = vcmask 256000
        %2247 = vst.msk [vmem:[%s753] sm:$0x7] %vm2246, %v2241
      $region96: #{masked_point_vit_forward.4} parent=87 // pred_fallthru
        _
      %p2248 = scmp.lt.s32.totalorder %s32, 1
      %s2249 = scalar_select %p2248, %s32, 1
      %s2250 = smul.addr %s2249, 4
      %s2251 = scalar_lea.vmem %s17, %s2250
      // Predicated region
      $region97: #{masked_point_vit_forward.4} parent=87 // pred_check
        %p2252 = pneg %p480
      $region98: #{masked_point_vit_forward.4} parent=87 // pred_check_branch
        %2254 = sbr.rel (%p2252) target = $region100
      $region99: #{masked_point_vit_forward.4} parent=87 // pred_region
        _
      $region100: #{masked_point_vit_forward.4} parent=87 // pred_fallthru
        _
    $region88: #{masked_point_vit_forward.4} parent=5 // pred_fallthru
      _
    %p2255 = scmp.le.s32.totalorder 2, %s23
    // Predicated region
    $region101: #{masked_point_vit_forward.4} parent=5 // pred_check
      %p2256 = pneg %p2255
    $region102: #{masked_point_vit_forward.4} parent=5 // pred_check_branch
      %2258 = sbr.rel (%p2256) target = $region104
    $region103: #{masked_point_vit_forward.4} parent=5 // pred_region
      %s2259 = ssub.s32 %s23, 2
      // Predicated region
      $region105: #{masked_point_vit_forward.4} parent=103 // pred_check
        %p2260 = pneg %p486
      $region106: #{masked_point_vit_forward.4} parent=103 // pred_check_branch
        %2262 = sbr.rel (%p2260) target = $region108
      $region107: #{masked_point_vit_forward.4} parent=103 // pred_region
        %p2263 = scmp.lt.s32.totalorder %s34, 1
        %s2264 = scalar_select %p2263, %s34, 1
        %s2265 = smul.addr %s2264, 4
        %s2266 = scalar_lea.vmem %s17, %s2265
      $region108: #{masked_point_vit_forward.4} parent=103 // pred_fallthru
        _
    $region104: #{masked_point_vit_forward.4} parent=5 // pred_fallthru
      _
  $region6: #{masked_point_vit_forward.4} parent=0 // loop_footer
    %s27 = sadd.s32 1, %s23
  $region7: #{masked_point_vit_forward.4} parent=0 // loop_footer_branch
    %22 = sbr.rel target = $region3
  $region8: #{masked_point_vit_forward.4} parent=0 // loop_exit
    _

// kernel: masked_point_vit_forward.5
$region0: #{masked_point_vit_forward.5}
  #allocation0 [shape = 'u32[]', space=smem, size = 0x4, offset = 0x4, fixed_abs, tag = 'smem constant byte address 0x4 - core index']
  #allocation1 [shape = 'u32[144,128]{1,0:T(1,128)}', space=vmem, size = 0x12000, scoped, tag = 'internal scratch']
  #allocation2 [shape = 'f32[9,32]{1,0:T(8,128)}', space=vmem, size = 0x2000, scoped, tag = 'scratch operand']
  %s0 = inlined_call_operand.vmem [shape: f32[2,9,32], index: 0, kind: input, shape index: {}]
  %s1 = inlined_call_operand.vmem [shape: f32[2,9,32], index: 1, kind: input, shape index: {}]
  %s2 = inlined_call_operand.vmem [shape: f32[2,1,32], index: 2, kind: input, shape index: {}]
  %s3 = inlined_call_operand.vmem [shape: f32[2,1,32], index: 3, kind: input, shape index: {}]
  %s4 = inlined_call_operand.vmem [shape: bf16[2,32,96], index: 4, kind: input, shape index: {}]
  %s5 = inlined_call_operand.vmem [shape: bf16[2,32,32], index: 5, kind: input, shape index: {}]
  %s6 = inlined_call_operand.vmem [shape: f32[2,1,32], index: 6, kind: input, shape index: {}]
  %s7 = inlined_call_operand.vmem [shape: f32[2,1,32], index: 7, kind: input, shape index: {}]
  %s8 = inlined_call_operand.vmem [shape: f32[2,1,32], index: 8, kind: input, shape index: {}]
  %s9 = inlined_call_operand.vmem [shape: bf16[2,32,128], index: 9, kind: input, shape index: {}]
  %s10 = inlined_call_operand.vmem [shape: f32[2,1,128], index: 10, kind: input, shape index: {}]
  %s11 = inlined_call_operand.vmem [shape: bf16[2,128,32], index: 11, kind: input, shape index: {}]
  %s12 = inlined_call_operand.vmem [shape: f32[2,1,32], index: 12, kind: input, shape index: {}]
  %s13 = inlined_call_operand.vmem [shape: f32[1,32], index: 13, kind: input, shape index: {}]
  %s14 = inlined_call_operand.vmem [shape: f32[1,32], index: 14, kind: input, shape index: {}]
  %s15 = inlined_call_operand.vmem [shape: bf16[32,24], index: 15, kind: input, shape index: {}]
  %s16 = inlined_call_operand.vmem [shape: f32[1,24], index: 16, kind: input, shape index: {}]
  %s17 = inlined_call_operand.vmem [shape: f32[2,9,24], index: 17, kind: output, shape index: {}]
  %s18 = sld [smem:[#allocation0]]
  $region109: #{masked_point_vit_forward.5} parent=0
    _
  %s20 = ssub.s32 1, %s18
  %s21 = scalar_select 0, %s20, %s18
  loop: start=0, step=1, limit=6
  $region2: #{masked_point_vit_forward.5} parent=0 // loop_pre_header
    _
  $region3: #{masked_point_vit_forward.5} parent=0 // loop_header
    %s23 = sphi 0, %s27
    %p24 = scmp.ge.s32.totalorder %s23, 6
    %s30 = sphi 0, %s42
    %s31 = sphi 0, %s38
    %s32 = sphi 0, %s30
    %s33 = sphi 0, %s31
    %s34 = sphi 0, %s32
    %s35 = sphi 0, %s33
    %s45 = sphi 0, %s47
    %s48 = sphi 0, %s45
    %s49 = sphi 0, %s48
    %s65 = sphi 0, %s49
    %s71 = sphi 0, %s73
    %s74 = sphi 0, %s71
    %s75 = sphi 0, %s74
    %s91 = sphi 0, %s75
    %s97 = sphi 0, %s99
    %s100 = sphi 0, %s97
    %s101 = sphi 0, %s100
    %s117 = sphi 0, %s101
    %s123 = sphi 0, %s125
    %s126 = sphi 0, %s123
    %s127 = sphi 0, %s126
    %s143 = sphi 0, %s127
    %s149 = sphi 0, %s151
    %s152 = sphi 0, %s149
    %s153 = sphi 0, %s152
    %s169 = sphi 0, %s153
    %s175 = sphi 0, %s177
    %s178 = sphi 0, %s175
    %s179 = sphi 0, %s178
    %s195 = sphi 0, %s179
    %s201 = sphi 0, %s203
    %s204 = sphi 0, %s201
    %s205 = sphi 0, %s204
    %s221 = sphi 0, %s205
    %s227 = sphi 0, %s229
    %s230 = sphi 0, %s227
    %s231 = sphi 0, %s230
    %s247 = sphi 0, %s231
    %s253 = sphi 0, %s255
    %s256 = sphi 0, %s253
    %s257 = sphi 0, %s256
    %s273 = sphi 0, %s257
    %s279 = sphi 0, %s281
    %s282 = sphi 0, %s279
    %s283 = sphi 0, %s282
    %s299 = sphi 0, %s283
    %s305 = sphi 0, %s307
    %s308 = sphi 0, %s305
    %s309 = sphi 0, %s308
    %s325 = sphi 0, %s309
    %s331 = sphi 0, %s333
    %s334 = sphi 0, %s331
    %s335 = sphi 0, %s334
    %s351 = sphi 0, %s335
    %s357 = sphi 0, %s359
    %s360 = sphi 0, %s357
    %s361 = sphi 0, %s360
    %s377 = sphi 0, %s361
    %s381 = sphi 0, %s381
    %s383 = sphi 0, %s381
    %s384 = sphi 0, %s383
    %s398 = sphi 0, %s384
    %s402 = sphi 0, %s402
    %s404 = sphi 0, %s402
    %s405 = sphi 0, %s404
    %s419 = sphi 0, %s405
    %s423 = sphi 0, %s423
    %s425 = sphi 0, %s423
    %s426 = sphi 0, %s425
    %s440 = sphi 0, %s426
    %s444 = sphi 0, %s444
    %s446 = sphi 0, %s444
    %s447 = sphi 0, %s446
    %s461 = sphi 0, %s447
    %s467 = sphi 0, %s469
    %s470 = sphi 0, %s467
    %s471 = sphi 0, %s470
    %s487 = sphi 0, %s471
  $region4: #{masked_point_vit_forward.5} parent=0 // loop_header_branch
    %26 = sbr.rel (%p24) target = $region8
  $region5: #{masked_point_vit_forward.5} parent=0 // loop_body
    %s28 = ssub.s32 %s23, 1
    %s29 = ssub.s32 %s23, 2
    %s36 = sadd.s32 1, %s31
    %p37 = scmp.ge.s32.totalorder %s36, 2
    %s38 = scalar_select %p37, 0, %s36
    %s39 = sadd.s32 1, %s30
    %s40 = scalar_select %p37, %s39, %s30
    %p41 = scmp.ge.s32.totalorder %s40, 2
    %s42 = scalar_select %p41, 0, %s40
    %s43 = ssub.s32 %s30, %s42
    %p44 = scmp.eq.s32.totalorder %s43, 0
    %s46 = sadd.s32 %s45, 1
    %s47 = scalar_select %p44, %s45, %s46
    %p50 = pneg %p44
    %p51 = scmp.eq.s32.totalorder %s23, 3
    %p52 = por %p50, %p51
    %p53 = scmp.ne.s32.totalorder %s45, %s48
    %p54 = scmp.eq.s32.totalorder %s23, 0
    %p55 = por %p53, %p54
    %p56 = scmp.ne.s32.totalorder %s45, %s48
    %p57 = scmp.eq.s32.totalorder %s28, 3
    %p58 = por %p56, %p57
    %p59 = scmp.ne.s32.totalorder %s48, %s49
    %p60 = scmp.eq.s32.totalorder %s28, 0
    %p61 = por %p59, %p60
    %p62 = scmp.ne.s32.totalorder %s48, %s49
    %p63 = scmp.eq.s32.totalorder %s29, 3
    %p64 = por %p62, %p63
    %p66 = scmp.ne.s32.totalorder %s49, %s65
    %p67 = scmp.eq.s32.totalorder %s29, 0
    %p68 = por %p66, %p67
    %s69 = ssub.s32 %s30, %s42
    %p70 = scmp.eq.s32.totalorder %s69, 0
    %s72 = sadd.s32 %s71, 1
    %s73 = scalar_select %p70, %s71, %s72
    %p76 = pneg %p70
    %p77 = scmp.eq.s32.totalorder %s23, 3
    %p78 = por %p76, %p77
    %p79 = scmp.ne.s32.totalorder %s71, %s74
    %p80 = scmp.eq.s32.totalorder %s23, 0
    %p81 = por %p79, %p80
    %p82 = scmp.ne.s32.totalorder %s71, %s74
    %p83 = scmp.eq.s32.totalorder %s28, 3
    %p84 = por %p82, %p83
    %p85 = scmp.ne.s32.totalorder %s74, %s75
    %p86 = scmp.eq.s32.totalorder %s28, 0
    %p87 = por %p85, %p86
    %p88 = scmp.ne.s32.totalorder %s74, %s75
    %p89 = scmp.eq.s32.totalorder %s29, 3
    %p90 = por %p88, %p89
    %p92 = scmp.ne.s32.totalorder %s75, %s91
    %p93 = scmp.eq.s32.totalorder %s29, 0
    %p94 = por %p92, %p93
    %s95 = ssub.s32 %s31, %s38
    %p96 = scmp.eq.s32.totalorder %s95, 0
    %s98 = sadd.s32 %s97, 1
    %s99 = scalar_select %p96, %s97, %s98
    %p102 = pneg %p96
    %p103 = scmp.eq.s32.totalorder %s23, 3
    %p104 = por %p102, %p103
    %p105 = scmp.ne.s32.totalorder %s97, %s100
    %p106 = scmp.eq.s32.totalorder %s23, 0
    %p107 = por %p105, %p106
    %p108 = scmp.ne.s32.totalorder %s97, %s100
    %p109 = scmp.eq.s32.totalorder %s28, 3
    %p110 = por %p108, %p109
    %p111 = scmp.ne.s32.totalorder %s100, %s101
    %p112 = scmp.eq.s32.totalorder %s28, 0
    %p113 = por %p111, %p112
    %p114 = scmp.ne.s32.totalorder %s100, %s101
    %p115 = scmp.eq.s32.totalorder %s29, 3
    %p116 = por %p114, %p115
    %p118 = scmp.ne.s32.totalorder %s101, %s117
    %p119 = scmp.eq.s32.totalorder %s29, 0
    %p120 = por %p118, %p119
    %s121 = ssub.s32 %s31, %s38
    %p122 = scmp.eq.s32.totalorder %s121, 0
    %s124 = sadd.s32 %s123, 1
    %s125 = scalar_select %p122, %s123, %s124
    %p128 = pneg %p122
    %p129 = scmp.eq.s32.totalorder %s23, 3
    %p130 = por %p128, %p129
    %p131 = scmp.ne.s32.totalorder %s123, %s126
    %p132 = scmp.eq.s32.totalorder %s23, 0
    %p133 = por %p131, %p132
    %p134 = scmp.ne.s32.totalorder %s123, %s126
    %p135 = scmp.eq.s32.totalorder %s28, 3
    %p136 = por %p134, %p135
    %p137 = scmp.ne.s32.totalorder %s126, %s127
    %p138 = scmp.eq.s32.totalorder %s28, 0
    %p139 = por %p137, %p138
    %p140 = scmp.ne.s32.totalorder %s126, %s127
    %p141 = scmp.eq.s32.totalorder %s29, 3
    %p142 = por %p140, %p141
    %p144 = scmp.ne.s32.totalorder %s127, %s143
    %p145 = scmp.eq.s32.totalorder %s29, 0
    %p146 = por %p144, %p145
    %s147 = ssub.s32 %s31, %s38
    %p148 = scmp.eq.s32.totalorder %s147, 0
    %s150 = sadd.s32 %s149, 1
    %s151 = scalar_select %p148, %s149, %s150
    %p154 = pneg %p148
    %p155 = scmp.eq.s32.totalorder %s23, 3
    %p156 = por %p154, %p155
    %p157 = scmp.ne.s32.totalorder %s149, %s152
    %p158 = scmp.eq.s32.totalorder %s23, 0
    %p159 = por %p157, %p158
    %p160 = scmp.ne.s32.totalorder %s149, %s152
    %p161 = scmp.eq.s32.totalorder %s28, 3
    %p162 = por %p160, %p161
    %p163 = scmp.ne.s32.totalorder %s152, %s153
    %p164 = scmp.eq.s32.totalorder %s28, 0
    %p165 = por %p163, %p164
    %p166 = scmp.ne.s32.totalorder %s152, %s153
    %p167 = scmp.eq.s32.totalorder %s29, 3
    %p168 = por %p166, %p167
    %p170 = scmp.ne.s32.totalorder %s153, %s169
    %p171 = scmp.eq.s32.totalorder %s29, 0
    %p172 = por %p170, %p171
    %s173 = ssub.s32 %s31, %s38
    %p174 = scmp.eq.s32.totalorder %s173, 0
    %s176 = sadd.s32 %s175, 1
    %s177 = scalar_select %p174, %s175, %s176
    %p180 = pneg %p174
    %p181 = scmp.eq.s32.totalorder %s23, 3
    %p182 = por %p180, %p181
    %p183 = scmp.ne.s32.totalorder %s175, %s178
    %p184 = scmp.eq.s32.totalorder %s23, 0
    %p185 = por %p183, %p184
    %p186 = scmp.ne.s32.totalorder %s175, %s178
    %p187 = scmp.eq.s32.totalorder %s28, 3
    %p188 = por %p186, %p187
    %p189 = scmp.ne.s32.totalorder %s178, %s179
    %p190 = scmp.eq.s32.totalorder %s28, 0
    %p191 = por %p189, %p190
    %p192 = scmp.ne.s32.totalorder %s178, %s179
    %p193 = scmp.eq.s32.totalorder %s29, 3
    %p194 = por %p192, %p193
    %p196 = scmp.ne.s32.totalorder %s179, %s195
    %p197 = scmp.eq.s32.totalorder %s29, 0
    %p198 = por %p196, %p197
    %s199 = ssub.s32 %s31, %s38
    %p200 = scmp.eq.s32.totalorder %s199, 0
    %s202 = sadd.s32 %s201, 1
    %s203 = scalar_select %p200, %s201, %s202
    %p206 = pneg %p200
    %p207 = scmp.eq.s32.totalorder %s23, 3
    %p208 = por %p206, %p207
    %p209 = scmp.ne.s32.totalorder %s201, %s204
    %p210 = scmp.eq.s32.totalorder %s23, 0
    %p211 = por %p209, %p210
    %p212 = scmp.ne.s32.totalorder %s201, %s204
    %p213 = scmp.eq.s32.totalorder %s28, 3
    %p214 = por %p212, %p213
    %p215 = scmp.ne.s32.totalorder %s204, %s205
    %p216 = scmp.eq.s32.totalorder %s28, 0
    %p217 = por %p215, %p216
    %p218 = scmp.ne.s32.totalorder %s204, %s205
    %p219 = scmp.eq.s32.totalorder %s29, 3
    %p220 = por %p218, %p219
    %p222 = scmp.ne.s32.totalorder %s205, %s221
    %p223 = scmp.eq.s32.totalorder %s29, 0
    %p224 = por %p222, %p223
    %s225 = ssub.s32 %s31, %s38
    %p226 = scmp.eq.s32.totalorder %s225, 0
    %s228 = sadd.s32 %s227, 1
    %s229 = scalar_select %p226, %s227, %s228
    %p232 = pneg %p226
    %p233 = scmp.eq.s32.totalorder %s23, 3
    %p234 = por %p232, %p233
    %p235 = scmp.ne.s32.totalorder %s227, %s230
    %p236 = scmp.eq.s32.totalorder %s23, 0
    %p237 = por %p235, %p236
    %p238 = scmp.ne.s32.totalorder %s227, %s230
    %p239 = scmp.eq.s32.totalorder %s28, 3
    %p240 = por %p238, %p239
    %p241 = scmp.ne.s32.totalorder %s230, %s231
    %p242 = scmp.eq.s32.totalorder %s28, 0
    %p243 = por %p241, %p242
    %p244 = scmp.ne.s32.totalorder %s230, %s231
    %p245 = scmp.eq.s32.totalorder %s29, 3
    %p246 = por %p244, %p245
    %p248 = scmp.ne.s32.totalorder %s231, %s247
    %p249 = scmp.eq.s32.totalorder %s29, 0
    %p250 = por %p248, %p249
    %s251 = ssub.s32 %s31, %s38
    %p252 = scmp.eq.s32.totalorder %s251, 0
    %s254 = sadd.s32 %s253, 1
    %s255 = scalar_select %p252, %s253, %s254
    %p258 = pneg %p252
    %p259 = scmp.eq.s32.totalorder %s23, 3
    %p260 = por %p258, %p259
    %p261 = scmp.ne.s32.totalorder %s253, %s256
    %p262 = scmp.eq.s32.totalorder %s23, 0
    %p263 = por %p261, %p262
    %p264 = scmp.ne.s32.totalorder %s253, %s256
    %p265 = scmp.eq.s32.totalorder %s28, 3
    %p266 = por %p264, %p265
    %p267 = scmp.ne.s32.totalorder %s256, %s257
    %p268 = scmp.eq.s32.totalorder %s28, 0
    %p269 = por %p267, %p268
    %p270 = scmp.ne.s32.totalorder %s256, %s257
    %p271 = scmp.eq.s32.totalorder %s29, 3
    %p272 = por %p270, %p271
    %p274 = scmp.ne.s32.totalorder %s257, %s273
    %p275 = scmp.eq.s32.totalorder %s29, 0
    %p276 = por %p274, %p275
    %s277 = ssub.s32 %s31, %s38
    %p278 = scmp.eq.s32.totalorder %s277, 0
    %s280 = sadd.s32 %s279, 1
    %s281 = scalar_select %p278, %s279, %s280
    %p284 = pneg %p278
    %p285 = scmp.eq.s32.totalorder %s23, 3
    %p286 = por %p284, %p285
    %p287 = scmp.ne.s32.totalorder %s279, %s282
    %p288 = scmp.eq.s32.totalorder %s23, 0
    %p289 = por %p287, %p288
    %p290 = scmp.ne.s32.totalorder %s279, %s282
    %p291 = scmp.eq.s32.totalorder %s28, 3
    %p292 = por %p290, %p291
    %p293 = scmp.ne.s32.totalorder %s282, %s283
    %p294 = scmp.eq.s32.totalorder %s28, 0
    %p295 = por %p293, %p294
    %p296 = scmp.ne.s32.totalorder %s282, %s283
    %p297 = scmp.eq.s32.totalorder %s29, 3
    %p298 = por %p296, %p297
    %p300 = scmp.ne.s32.totalorder %s283, %s299
    %p301 = scmp.eq.s32.totalorder %s29, 0
    %p302 = por %p300, %p301
    %s303 = ssub.s32 %s31, %s38
    %p304 = scmp.eq.s32.totalorder %s303, 0
    %s306 = sadd.s32 %s305, 1
    %s307 = scalar_select %p304, %s305, %s306
    %p310 = pneg %p304
    %p311 = scmp.eq.s32.totalorder %s23, 3
    %p312 = por %p310, %p311
    %p313 = scmp.ne.s32.totalorder %s305, %s308
    %p314 = scmp.eq.s32.totalorder %s23, 0
    %p315 = por %p313, %p314
    %p316 = scmp.ne.s32.totalorder %s305, %s308
    %p317 = scmp.eq.s32.totalorder %s28, 3
    %p318 = por %p316, %p317
    %p319 = scmp.ne.s32.totalorder %s308, %s309
    %p320 = scmp.eq.s32.totalorder %s28, 0
    %p321 = por %p319, %p320
    %p322 = scmp.ne.s32.totalorder %s308, %s309
    %p323 = scmp.eq.s32.totalorder %s29, 3
    %p324 = por %p322, %p323
    %p326 = scmp.ne.s32.totalorder %s309, %s325
    %p327 = scmp.eq.s32.totalorder %s29, 0
    %p328 = por %p326, %p327
    %s329 = ssub.s32 %s31, %s38
    %p330 = scmp.eq.s32.totalorder %s329, 0
    %s332 = sadd.s32 %s331, 1
    %s333 = scalar_select %p330, %s331, %s332
    %p336 = pneg %p330
    %p337 = scmp.eq.s32.totalorder %s23, 3
    %p338 = por %p336, %p337
    %p339 = scmp.ne.s32.totalorder %s331, %s334
    %p340 = scmp.eq.s32.totalorder %s23, 0
    %p341 = por %p339, %p340
    %p342 = scmp.ne.s32.totalorder %s331, %s334
    %p343 = scmp.eq.s32.totalorder %s28, 3
    %p344 = por %p342, %p343
    %p345 = scmp.ne.s32.totalorder %s334, %s335
    %p346 = scmp.eq.s32.totalorder %s28, 0
    %p347 = por %p345, %p346
    %p348 = scmp.ne.s32.totalorder %s334, %s335
    %p349 = scmp.eq.s32.totalorder %s29, 3
    %p350 = por %p348, %p349
    %p352 = scmp.ne.s32.totalorder %s335, %s351
    %p353 = scmp.eq.s32.totalorder %s29, 0
    %p354 = por %p352, %p353
    %s355 = ssub.s32 %s31, %s38
    %p356 = scmp.eq.s32.totalorder %s355, 0
    %s358 = sadd.s32 %s357, 1
    %s359 = scalar_select %p356, %s357, %s358
    %p362 = pneg %p356
    %p363 = scmp.eq.s32.totalorder %s23, 3
    %p364 = por %p362, %p363
    %p365 = scmp.ne.s32.totalorder %s357, %s360
    %p366 = scmp.eq.s32.totalorder %s23, 0
    %p367 = por %p365, %p366
    %p368 = scmp.ne.s32.totalorder %s357, %s360
    %p369 = scmp.eq.s32.totalorder %s28, 3
    %p370 = por %p368, %p369
    %p371 = scmp.ne.s32.totalorder %s360, %s361
    %p372 = scmp.eq.s32.totalorder %s28, 0
    %p373 = por %p371, %p372
    %p374 = scmp.ne.s32.totalorder %s360, %s361
    %p375 = scmp.eq.s32.totalorder %s29, 3
    %p376 = por %p374, %p375
    %p378 = scmp.ne.s32.totalorder %s361, %s377
    %p379 = scmp.eq.s32.totalorder %s29, 0
    %p380 = por %p378, %p379
    %s382 = sadd.s32 %s381, 1
    %p385 = scmp.eq.s32.totalorder %s23, 3
    %p386 = scmp.ne.s32.totalorder %s381, %s383
    %p387 = scmp.eq.s32.totalorder %s23, 0
    %p388 = por %p386, %p387
    %p389 = scmp.ne.s32.totalorder %s381, %s383
    %p390 = scmp.eq.s32.totalorder %s28, 3
    %p391 = por %p389, %p390
    %p392 = scmp.ne.s32.totalorder %s383, %s384
    %p393 = scmp.eq.s32.totalorder %s28, 0
    %p394 = por %p392, %p393
    %p395 = scmp.ne.s32.totalorder %s383, %s384
    %p396 = scmp.eq.s32.totalorder %s29, 3
    %p397 = por %p395, %p396
    %p399 = scmp.ne.s32.totalorder %s384, %s398
    %p400 = scmp.eq.s32.totalorder %s29, 0
    %p401 = por %p399, %p400
    %s403 = sadd.s32 %s402, 1
    %p406 = scmp.eq.s32.totalorder %s23, 3
    %p407 = scmp.ne.s32.totalorder %s402, %s404
    %p408 = scmp.eq.s32.totalorder %s23, 0
    %p409 = por %p407, %p408
    %p410 = scmp.ne.s32.totalorder %s402, %s404
    %p411 = scmp.eq.s32.totalorder %s28, 3
    %p412 = por %p410, %p411
    %p413 = scmp.ne.s32.totalorder %s404, %s405
    %p414 = scmp.eq.s32.totalorder %s28, 0
    %p415 = por %p413, %p414
    %p416 = scmp.ne.s32.totalorder %s404, %s405
    %p417 = scmp.eq.s32.totalorder %s29, 3
    %p418 = por %p416, %p417
    %p420 = scmp.ne.s32.totalorder %s405, %s419
    %p421 = scmp.eq.s32.totalorder %s29, 0
    %p422 = por %p420, %p421
    %s424 = sadd.s32 %s423, 1
    %p427 = scmp.eq.s32.totalorder %s23, 3
    %p428 = scmp.ne.s32.totalorder %s423, %s425
    %p429 = scmp.eq.s32.totalorder %s23, 0
    %p430 = por %p428, %p429
    %p431 = scmp.ne.s32.totalorder %s423, %s425
    %p432 = scmp.eq.s32.totalorder %s28, 3
    %p433 = por %p431, %p432
    %p434 = scmp.ne.s32.totalorder %s425, %s426
    %p435 = scmp.eq.s32.totalorder %s28, 0
    %p436 = por %p434, %p435
    %p437 = scmp.ne.s32.totalorder %s425, %s426
    %p438 = scmp.eq.s32.totalorder %s29, 3
    %p439 = por %p437, %p438
    %p441 = scmp.ne.s32.totalorder %s426, %s440
    %p442 = scmp.eq.s32.totalorder %s29, 0
    %p443 = por %p441, %p442
    %s445 = sadd.s32 %s444, 1
    %p448 = scmp.eq.s32.totalorder %s23, 3
    %p449 = scmp.ne.s32.totalorder %s444, %s446
    %p450 = scmp.eq.s32.totalorder %s23, 0
    %p451 = por %p449, %p450
    %p452 = scmp.ne.s32.totalorder %s444, %s446
    %p453 = scmp.eq.s32.totalorder %s28, 3
    %p454 = por %p452, %p453
    %p455 = scmp.ne.s32.totalorder %s446, %s447
    %p456 = scmp.eq.s32.totalorder %s28, 0
    %p457 = por %p455, %p456
    %p458 = scmp.ne.s32.totalorder %s446, %s447
    %p459 = scmp.eq.s32.totalorder %s29, 3
    %p460 = por %p458, %p459
    %p462 = scmp.ne.s32.totalorder %s447, %s461
    %p463 = scmp.eq.s32.totalorder %s29, 0
    %p464 = por %p462, %p463
    %s465 = ssub.s32 %s30, %s42
    %p466 = scmp.eq.s32.totalorder %s465, 0
    %s468 = sadd.s32 %s467, 1
    %s469 = scalar_select %p466, %s467, %s468
    %p472 = pneg %p466
    %p473 = scmp.eq.s32.totalorder %s23, 3
    %p474 = por %p472, %p473
    %p475 = scmp.ne.s32.totalorder %s467, %s470
    %p476 = scmp.eq.s32.totalorder %s23, 0
    %p477 = por %p475, %p476
    %p478 = scmp.ne.s32.totalorder %s467, %s470
    %p479 = scmp.eq.s32.totalorder %s28, 3
    %p480 = por %p478, %p479
    %p481 = scmp.ne.s32.totalorder %s470, %s471
    %p482 = scmp.eq.s32.totalorder %s28, 0
    %p483 = por %p481, %p482
    %p484 = scmp.ne.s32.totalorder %s470, %s471
    %p485 = scmp.eq.s32.totalorder %s29, 3
    %p486 = por %p484, %p485
    %p488 = scmp.ne.s32.totalorder %s471, %s487
    %p489 = scmp.eq.s32.totalorder %s29, 0
    %p490 = por %p488, %p489
    %p491 = scmp.le.s32.totalorder 1, %s23
    %p492 = scmp.lt.s32.totalorder %s23, 5
    %p493 = pnand %p491, %p492
    %p494 = pneg %p493
    // Predicated region
    $region9: #{masked_point_vit_forward.5} parent=5 // pred_check
      _
    $region10: #{masked_point_vit_forward.5} parent=5 // pred_check_branch
      %496 = sbr.rel (%p493) target = $region12
    $region11: #{masked_point_vit_forward.5} parent=5 // pred_region
      %s497 = ssub.s32 %s23, 1
      // Predicated region
      $region13: #{masked_point_vit_forward.5} parent=11 // pred_check
        %p498 = pneg %p394
      $region14: #{masked_point_vit_forward.5} parent=11 // pred_check_branch
        %500 = sbr.rel (%p498) target = $region16
      $region15: #{masked_point_vit_forward.5} parent=11 // pred_region
        _
      $region16: #{masked_point_vit_forward.5} parent=11 // pred_fallthru
        _
      // Predicated region
      $region17: #{masked_point_vit_forward.5} parent=11 // pred_check
        %p501 = pneg %p415
      $region18: #{masked_point_vit_forward.5} parent=11 // pred_check_branch
        %503 = sbr.rel (%p501) target = $region20
      $region19: #{masked_point_vit_forward.5} parent=11 // pred_region
        _
      $region20: #{masked_point_vit_forward.5} parent=11 // pred_fallthru
        _
      // Predicated region
      $region21: #{masked_point_vit_forward.5} parent=11 // pred_check
        %p504 = pneg %p436
      $region22: #{masked_point_vit_forward.5} parent=11 // pred_check_branch
        %506 = sbr.rel (%p504) target = $region24
      $region23: #{masked_point_vit_forward.5} parent=11 // pred_region
        _
      $region24: #{masked_point_vit_forward.5} parent=11 // pred_fallthru
        _
      // Predicated region
      $region25: #{masked_point_vit_forward.5} parent=11 // pred_check
        %p507 = pneg %p457
      $region26: #{masked_point_vit_forward.5} parent=11 // pred_check_branch
        %509 = sbr.rel (%p507) target = $region28
      $region27: #{masked_point_vit_forward.5} parent=11 // pred_region
        _
      $region28: #{masked_point_vit_forward.5} parent=11 // pred_fallthru
        _
    $region12: #{masked_point_vit_forward.5} parent=5 // pred_fallthru
      _
    %p510 = scmp.lt.s32.totalorder %s23, 4
    // Predicated region
    $region29: #{masked_point_vit_forward.5} parent=5 // pred_check
      %p511 = pneg %p510
    $region30: #{masked_point_vit_forward.5} parent=5 // pred_check_branch
      %513 = sbr.rel (%p511) target = $region32
    $region31: #{masked_point_vit_forward.5} parent=5 // pred_region
      // Predicated region
      $region33: #{masked_point_vit_forward.5} parent=31 // pred_check
        %p514 = pneg %p55
      $region34: #{masked_point_vit_forward.5} parent=31 // pred_check_branch
        %516 = sbr.rel (%p514) target = $region36
      $region35: #{masked_point_vit_forward.5} parent=31 // pred_region
        %p517 = scmp.lt.s32.totalorder %s30, 1
        %s518 = scalar_select %p517, %s30, 1
        %s519 = smul.addr %s518, 2
        %s520 = smul.addr %s519, 8
        %s521 = scalar_lea.vmem %s0, %s520
      $region36: #{masked_point_vit_forward.5} parent=31 // pred_fallthru
        _
      // Predicated region
      $region37: #{masked_point_vit_forward.5} parent=31 // pred_check
        %p522 = pneg %p81
      $region38: #{masked_point_vit_forward.5} parent=31 // pred_check_branch
        %524 = sbr.rel (%p522) target = $region40
      $region39: #{masked_point_vit_forward.5} parent=31 // pred_region
        %p525 = scmp.lt.s32.totalorder %s30, 1
        %s526 = scalar_select %p525, %s30, 1
        %s527 = smul.addr %s526, 2
        %s528 = smul.addr %s527, 8
        %s529 = scalar_lea.vmem %s1, %s528
      $region40: #{masked_point_vit_forward.5} parent=31 // pred_fallthru
        _
      // Predicated region
      $region41: #{masked_point_vit_forward.5} parent=31 // pred_check
        %p530 = pneg %p107
      $region42: #{masked_point_vit_forward.5} parent=31 // pred_check_branch
        %532 = sbr.rel (%p530) target = $region44
      $region43: #{masked_point_vit_forward.5} parent=31 // pred_region
        %p533 = scmp.lt.s32.totalorder %s31, 1
        %s534 = scalar_select %p533, %s31, 1
        %s535 = scalar_lea.vmem %s2, %s534
      $region44: #{masked_point_vit_forward.5} parent=31 // pred_fallthru
        _
      // Predicated region
      $region45: #{masked_point_vit_forward.5} parent=31 // pred_check
        %p536 = pneg %p133
      $region46: #{masked_point_vit_forward.5} parent=31 // pred_check_branch
        %538 = sbr.rel (%p536) target = $region48
      $region47: #{masked_point_vit_forward.5} parent=31 // pred_region
        %p539 = scmp.lt.s32.totalorder %s31, 1
        %s540 = scalar_select %p539, %s31, 1
        %s541 = scalar_lea.vmem %s3, %s540
      $region48: #{masked_point_vit_forward.5} parent=31 // pred_fallthru
        _
      // Predicated region
      $region49: #{masked_point_vit_forward.5} parent=31 // pred_check
        %p542 = pneg %p159
      $region50: #{masked_point_vit_forward.5} parent=31 // pred_check_branch
        %544 = sbr.rel (%p542) target = $region52
      $region51: #{masked_point_vit_forward.5} parent=31 // pred_region
        %p545 = scmp.lt.s32.totalorder %s31, 1
        %s546 = scalar_select %p545, %s31, 1
        %s547 = smul.addr %s546, 4
        %s548 = smul.addr %s547, 4
        %s549 = scalar_lea.vmem %s4, %s548
      $region52: #{masked_point_vit_forward.5} parent=31 // pred_fallthru
        _
      // Predicated region
      $region53: #{masked_point_vit_forward.5} parent=31 // pred_check
        %p550 = pneg %p185
      $region54: #{masked_point_vit_forward.5} parent=31 // pred_check_branch
        %552 = sbr.rel (%p550) target = $region56
      $region55: #{masked_point_vit_forward.5} parent=31 // pred_region
        %p553 = scmp.lt.s32.totalorder %s31, 1
        %s554 = scalar_select %p553, %s31, 1
        %s555 = smul.addr %s554, 4
        %s556 = smul.addr %s555, 4
        %s557 = scalar_lea.vmem %s5, %s556
      $region56: #{masked_point_vit_forward.5} parent=31 // pred_fallthru
        _
      // Predicated region
      $region57: #{masked_point_vit_forward.5} parent=31 // pred_check
        %p558 = pneg %p211
      $region58: #{masked_point_vit_forward.5} parent=31 // pred_check_branch
        %560 = sbr.rel (%p558) target = $region60
      $region59: #{masked_point_vit_forward.5} parent=31 // pred_region
        %p561 = scmp.lt.s32.totalorder %s31, 1
        %s562 = scalar_select %p561, %s31, 1
        %s563 = scalar_lea.vmem %s6, %s562
      $region60: #{masked_point_vit_forward.5} parent=31 // pred_fallthru
        _
      // Predicated region
      $region61: #{masked_point_vit_forward.5} parent=31 // pred_check
        %p564 = pneg %p237
      $region62: #{masked_point_vit_forward.5} parent=31 // pred_check_branch
        %566 = sbr.rel (%p564) target = $region64
      $region63: #{masked_point_vit_forward.5} parent=31 // pred_region
        %p567 = scmp.lt.s32.totalorder %s31, 1
        %s568 = scalar_select %p567, %s31, 1
        %s569 = scalar_lea.vmem %s7, %s568
      $region64: #{masked_point_vit_forward.5} parent=31 // pred_fallthru
        _
      // Predicated region
      $region65: #{masked_point_vit_forward.5} parent=31 // pred_check
        %p570 = pneg %p263
      $region66: #{masked_point_vit_forward.5} parent=31 // pred_check_branch
        %572 = sbr.rel (%p570) target = $region68
      $region67: #{masked_point_vit_forward.5} parent=31 // pred_region
        %p573 = scmp.lt.s32.totalorder %s31, 1
        %s574 = scalar_select %p573, %s31, 1
        %s575 = scalar_lea.vmem %s8, %s574
      $region68: #{masked_point_vit_forward.5} parent=31 // pred_fallthru
        _
      // Predicated region
      $region69: #{masked_point_vit_forward.5} parent=31 // pred_check
        %p576 = pneg %p289
      $region70: #{masked_point_vit_forward.5} parent=31 // pred_check_branch
        %578 = sbr.rel (%p576) target = $region72
      $region71: #{masked_point_vit_forward.5} parent=31 // pred_region
        %p579 = scmp.lt.s32.totalorder %s31, 1
        %s580 = scalar_select %p579, %s31, 1
        %s581 = smul.addr %s580, 4
        %s582 = smul.addr %s581, 4
        %s583 = scalar_lea.vmem %s9, %s582
      $region72: #{masked_point_vit_forward.5} parent=31 // pred_fallthru
        _
      // Predicated region
      $region73: #{masked_point_vit_forward.5} parent=31 // pred_check
        %p584 = pneg %p315
      $region74: #{masked_point_vit_forward.5} parent=31 // pred_check_branch
        %586 = sbr.rel (%p584) target = $region76
      $region75: #{masked_point_vit_forward.5} parent=31 // pred_region
        %p587 = scmp.lt.s32.totalorder %s31, 1
        %s588 = scalar_select %p587, %s31, 1
        %s589 = scalar_lea.vmem %s10, %s588
      $region76: #{masked_point_vit_forward.5} parent=31 // pred_fallthru
        _
      // Predicated region
      $region77: #{masked_point_vit_forward.5} parent=31 // pred_check
        %p590 = pneg %p341
      $region78: #{masked_point_vit_forward.5} parent=31 // pred_check_branch
        %592 = sbr.rel (%p590) target = $region80
      $region79: #{masked_point_vit_forward.5} parent=31 // pred_region
        %p593 = scmp.lt.s32.totalorder %s31, 1
        %s594 = scalar_select %p593, %s31, 1
        %s595 = smul.addr %s594, 16
        %s596 = smul.addr %s595, 4
        %s597 = scalar_lea.vmem %s11, %s596
      $region80: #{masked_point_vit_forward.5} parent=31 // pred_fallthru
        _
      // Predicated region
      $region81: #{masked_point_vit_forward.5} parent=31 // pred_check
        %p598 = pneg %p367
      $region82: #{masked_point_vit_forward.5} parent=31 // pred_check_branch
        %600 = sbr.rel (%p598) target = $region84
      $region83: #{masked_point_vit_forward.5} parent=31 // pred_region
        %p601 = scmp.lt.s32.totalorder %s31, 1
        %s602 = scalar_select %p601, %s31, 1
        %s603 = scalar_lea.vmem %s12, %s602
      $region84: #{masked_point_vit_forward.5} parent=31 // pred_fallthru
        _
    $region32: #{masked_point_vit_forward.5} parent=5 // pred_fallthru
      _
    %p604 = scmp.le.s32.totalorder 1, %s23
    %p605 = scmp.lt.s32.totalorder %s23, 5
    %p606 = pnand %p604, %p605
    %p607 = pneg %p606
    // Predicated region
    $region85: #{masked_point_vit_forward.5} parent=5 // pred_check
      _
    $region86: #{masked_point_vit_forward.5} parent=5 // pred_check_branch
      %609 = sbr.rel (%p606) target = $region88
    $region87: #{masked_point_vit_forward.5} parent=5 // pred_region
      %s610 = ssub.s32 %s23, 1
      %p611 = scmp.lt.s32.totalorder %s32, 1
      %s612 = scalar_select %p611, %s32, 1
      %s613 = smul.addr %s612, 2
      %s614 = smul.addr %s613, 8
      %s615 = scalar_lea.vmem %s0, %s614
      %p616 = pneg %p61
      %p617 = pneg %p58
      %p618 = scmp.lt.s32.totalorder %s32, 1
      %s619 = scalar_select %p618, %s32, 1
      %s620 = smul.addr %s619, 2
      %s621 = smul.addr %s620, 8
      %s622 = scalar_lea.vmem %s1, %s621
      %p623 = pneg %p87
      %p624 = pneg %p84
      %p625 = scmp.lt.s32.totalorder %s33, 1
      %s626 = scalar_select %p625, %s33, 1
      %s627 = scalar_lea.vmem %s2, %s626
      %p628 = pneg %p113
      %p629 = pneg %p110
      %p630 = scmp.lt.s32.totalorder %s33, 1
      %s631 = scalar_select %p630, %s33, 1
      %s632 = scalar_lea.vmem %s3, %s631
      %p633 = pneg %p139
      %p634 = pneg %p136
      %p635 = scmp.lt.s32.totalorder %s33, 1
      %s636 = scalar_select %p635, %s33, 1
      %s637 = smul.addr %s636, 4
      %s638 = smul.addr %s637, 4
      %s639 = scalar_lea.vmem %s4, %s638
      %p640 = pneg %p165
      %p641 = pneg %p162
      %p642 = scmp.lt.s32.totalorder %s33, 1
      %s643 = scalar_select %p642, %s33, 1
      %s644 = smul.addr %s643, 4
      %s645 = smul.addr %s644, 4
      %s646 = scalar_lea.vmem %s5, %s645
      %p647 = pneg %p191
      %p648 = pneg %p188
      %p649 = scmp.lt.s32.totalorder %s33, 1
      %s650 = scalar_select %p649, %s33, 1
      %s651 = scalar_lea.vmem %s6, %s650
      %p652 = pneg %p217
      %p653 = pneg %p214
      %p654 = scmp.lt.s32.totalorder %s33, 1
      %s655 = scalar_select %p654, %s33, 1
      %s656 = scalar_lea.vmem %s7, %s655
      %p657 = pneg %p243
      %p658 = pneg %p240
      %p659 = scmp.lt.s32.totalorder %s33, 1
      %s660 = scalar_select %p659, %s33, 1
      %s661 = scalar_lea.vmem %s8, %s660
      %p662 = pneg %p269
      %p663 = pneg %p266
      %p664 = scmp.lt.s32.totalorder %s33, 1
      %s665 = scalar_select %p664, %s33, 1
      %s666 = smul.addr %s665, 4
      %s667 = smul.addr %s666, 4
      %s668 = scalar_lea.vmem %s9, %s667
      %p669 = pneg %p295
      %p670 = pneg %p292
      %p671 = scmp.lt.s32.totalorder %s33, 1
      %s672 = scalar_select %p671, %s33, 1
      %s673 = scalar_lea.vmem %s10, %s672
      %p674 = pneg %p321
      %p675 = pneg %p318
      %p676 = scmp.lt.s32.totalorder %s33, 1
      %s677 = scalar_select %p676, %s33, 1
      %s678 = smul.addr %s677, 16
      %s679 = smul.addr %s678, 4
      %s680 = scalar_lea.vmem %s11, %s679
      %p681 = pneg %p347
      %p682 = pneg %p344
      %p683 = scmp.lt.s32.totalorder %s33, 1
      %s684 = scalar_select %p683, %s33, 1
      %s685 = scalar_lea.vmem %s12, %s684
      %p686 = pneg %p373
      %p687 = pneg %p370
      %p688 = pneg %p394
      %p689 = pneg %p391
      %p690 = pneg %p415
      %p691 = pneg %p412
      %p692 = pneg %p436
      %p693 = pneg %p433
      %p694 = pneg %p457
      %p695 = pneg %p454
      %p696 = pneg %p483
      %p697 = pneg %p480
      %p698 = scmp.lt.s32.totalorder %s32, 1
      %s699 = scalar_select %p698, %s32, 1
      %s700 = smul.addr %s699, 2
      %s701 = smul.addr %s700, 8
      %s702 = scalar_lea.vmem %s17, %s701
      %p703 = scmp.lt.s32.totalorder %s32, 1
      %s704 = scalar_select %p703, %s32, 1
      %s705 = smul.addr %s704, 2
      %s706 = smul.addr %s705, 8
      %s707 = scalar_lea.vmem %s0, %s706
      %p708 = scmp.lt.s32.totalorder %s32, 1
      %s709 = scalar_select %p708, %s32, 1
      %s710 = smul.addr %s709, 2
      %s711 = smul.addr %s710, 8
      %s712 = scalar_lea.vmem %s1, %s711
      %p713 = scmp.lt.s32.totalorder %s33, 1
      %s714 = scalar_select %p713, %s33, 1
      %s715 = scalar_lea.vmem %s2, %s714
      %p716 = scmp.lt.s32.totalorder %s33, 1
      %s717 = scalar_select %p716, %s33, 1
      %s718 = scalar_lea.vmem %s3, %s717
      %p719 = scmp.lt.s32.totalorder %s33, 1
      %s720 = scalar_select %p719, %s33, 1
      %s721 = smul.addr %s720, 4
      %s722 = smul.addr %s721, 4
      %s723 = scalar_lea.vmem %s4, %s722
      %p724 = scmp.lt.s32.totalorder %s33, 1
      %s725 = scalar_select %p724, %s33, 1
      %s726 = smul.addr %s725, 4
      %s727 = smul.addr %s726, 4
      %s728 = scalar_lea.vmem %s5, %s727
      %p729 = scmp.lt.s32.totalorder %s33, 1
      %s730 = scalar_select %p729, %s33, 1
      %s731 = scalar_lea.vmem %s6, %s730
      %p732 = scmp.lt.s32.totalorder %s33, 1
      %s733 = scalar_select %p732, %s33, 1
      %s734 = scalar_lea.vmem %s7, %s733
      %p735 = scmp.lt.s32.totalorder %s33, 1
      %s736 = scalar_select %p735, %s33, 1
      %s737 = scalar_lea.vmem %s8, %s736
      %p738 = scmp.lt.s32.totalorder %s33, 1
      %s739 = scalar_select %p738, %s33, 1
      %s740 = smul.addr %s739, 4
      %s741 = smul.addr %s740, 4
      %s742 = scalar_lea.vmem %s9, %s741
      %p743 = scmp.lt.s32.totalorder %s33, 1
      %s744 = scalar_select %p743, %s33, 1
      %s745 = scalar_lea.vmem %s10, %s744
      %p746 = scmp.lt.s32.totalorder %s33, 1
      %s747 = scalar_select %p746, %s33, 1
      %s748 = smul.addr %s747, 16
      %s749 = smul.addr %s748, 4
      %s750 = scalar_lea.vmem %s11, %s749
      %p751 = scmp.lt.s32.totalorder %s33, 1
      %s752 = scalar_select %p751, %s33, 1
      %s753 = scalar_lea.vmem %s12, %s752
      %p754 = scmp.lt.s32.totalorder %s32, 1
      %s755 = scalar_select %p754, %s32, 1
      %s756 = smul.addr %s755, 2
      %s757 = smul.addr %s756, 8
      %s758 = scalar_lea.vmem %s17, %s757
      %p760 = scmp.eq.s32.totalorder %s33, 0
      // Predicated region
      $region89: #{masked_point_vit_forward.5} parent=87 // pred_check
        %p761 = pneg %p760
      $region90: #{masked_point_vit_forward.5} parent=87 // pred_check_branch
        %763 = sbr.rel (%p761) target = $region92
      $region91: #{masked_point_vit_forward.5} parent=87 // pred_region
        %v764 = vld [vmem:[%s707] sm:$0xff]
        %v765 = vld [vmem:[%s707 + $0x8] sm:$0x1]
        %vm766 = vcmask 261120
        %767 = vst.msk [vmem:[#allocation2] sm:$0xff] %vm766, %v764
        %vm768 = vcmask 253952
        %769 = vst.msk [vmem:[#allocation2 + $0x8] sm:$0x1] %vm768, %v765
      $region92: #{masked_point_vit_forward.5} parent=87 // pred_fallthru
        _
      %v770 = vld [vmem:[#allocation2] sm:$0xff]
      %v771 = vld [vmem:[#allocation2 + $0x8] sm:$0x1]
      %v772 = vld [vmem:[%s712] sm:$0xff]
      %v773 = vld [vmem:[%s712 + $0x8] sm:$0x1]
      %v774 = vadd.f32 %v770, %v772
      %v775 = vadd.f32 %v771, %v773
      %v776 = vld [vmem:[%s715] sm:$0x1]
      %v777 = vld [vmem:[%s718] sm:$0x1]
      %v778 = vld [vmem:[%s723] sm:$0xf]
      %v779 = vld [vmem:[%s723 + $0x4] sm:$0xf]
      %v780 = vld [vmem:[%s723 + $0x8] sm:$0xf]
      %v781 = vld [vmem:[%s723 + $0xc] sm:$0xf]
      %v782 = vld [vmem:[%s728] sm:$0xf]
      %v783 = vld [vmem:[%s728 + $0x4] sm:$0xf]
      %v784 = vld [vmem:[%s728 + $0x8] sm:$0xf]
      %v785 = vld [vmem:[%s728 + $0xc] sm:$0xf]
      %v786 = vld [vmem:[%s731] sm:$0x1]
      %v787 = vld [vmem:[%s734] sm:$0x1]
      %v788 = vld [vmem:[%s737] sm:$0x1]
      %v789 = vld [vmem:[%s742] sm:$0xf]
      %v790 = vld [vmem:[%s742 + $0x4] sm:$0xf]
      %v791 = vld [vmem:[%s742 + $0x8] sm:$0xf]
      %v792 = vld [vmem:[%s742 + $0xc] sm:$0xf]
      %v793 = vld [vmem:[%s745] sm:$0x1]
      %v794 = vld [vmem:[%s750] sm:$0xf]
      %v795 = vld [vmem:[%s750 + $0x4] sm:$0xf]
      %v796 = vld [vmem:[%s750 + $0x8] sm:$0xf]
      %v797 = vld [vmem:[%s750 + $0xc] sm:$0xf]
      %v798 = vld [vmem:[%s750 + $0x10] sm:$0xf]
      %v799 = vld [vmem:[%s750 + $0x14] sm:$0xf]
      %v800 = vld [vmem:[%s750 + $0x18] sm:$0xf]
      %v801 = vld [vmem:[%s750 + $0x1c] sm:$0xf]
      %v802 = vld [vmem:[%s750 + $0x20] sm:$0xf]
      %v803 = vld [vmem:[%s750 + $0x24] sm:$0xf]
      %v804 = vld [vmem:[%s750 + $0x28] sm:$0xf]
      %v805 = vld [vmem:[%s750 + $0x2c] sm:$0xf]
      %v806 = vld [vmem:[%s750 + $0x30] sm:$0xf]
      %v807 = vld [vmem:[%s750 + $0x34] sm:$0xf]
      %v808 = vld [vmem:[%s750 + $0x38] sm:$0xf]
      %v809 = vld [vmem:[%s750 + $0x3c] sm:$0xf]
      %v810 = vld [vmem:[%s753] sm:$0x1]
      %vm811 = vcmask 261120
      %v812 = vsel %vm811, %v774, 0.0
      %813 = vadd.xlane.f32.xlu0 %v812
      %v814 = vpop.xlane.xlu0 %813
      %vm815 = vcmask 253952
      %v816 = vsel %vm815, %v775, 0.0
      %817 = vadd.xlane.f32.xlu0 %v816
      %v818 = vpop.xlane.xlu0 %817
      %v819 = vrcp.pop 32.0
      %v820 = vmul.f32 %v814, %v819
      %v821 = vmul.f32 %v818, %v819
      %v822 = vsub.f32 %v774, %v820
      %v823 = vsub.f32 %v775, %v821
      %v824 = vmul.f32 %v822, %v822
      %v825 = vmul.f32 %v823, %v823
      %v826 = vsel %vm811, %v824, 0.0
      %827 = vadd.xlane.f32.xlu0 %v826
      %v828 = vpop.xlane.xlu0 %827
      %v829 = vsel %vm815, %v825, 0.0
      %830 = vadd.xlane.f32.xlu0 %v829
      %v831 = vpop.xlane.xlu0 %830
      %v832 = vmul.f32 %v828, %v819
      %v833 = vmul.f32 %v831, %v819
      %v834 = vadd.f32 %v832, 1e-06
      %v835 = vadd.f32 %v833, 1e-06
      %v836 = vrsqrt.pop %v834
      %v837 = vrsqrt.pop %v835
      %v838 = vmul.f32 %v822, %v836
      %v839 = vmul.f32 %v823, %v837
      %v841 = vlaneseq
      %v842 = vshrl.u32 %v841, 7
      %v843 = vsub.s32 0, %v842
      %v844 = vrot.slane %v776, %v843
      %v846 = vmul.f32 %v838, %v844
      %v847 = vmul.f32 %v839, %v844
      %v849 = vlaneseq
      %v850 = vshrl.u32 %v849, 7
      %v851 = vsub.s32 0, %v850
      %v852 = vrot.slane %v777, %v851
      %v854 = vadd.f32 %v846, %v852
      %v855 = vadd.f32 %v847, %v852
      %v856 = vpack.c.bf16 %v855, %v854
      %v861 = vunpack.c.l.b16 %v778
      %v862 = vunpack.c.l.b16 %v779
      %v863 = vunpack.c.l.b16 %v780
      %v864 = vunpack.c.l.b16 %v781
      %v865 = vpack.c.b16 %v862, %v861
      %v866 = vpack.c.b16 %v864, %v863
      %v870 = vsel %vm811, %v856, 0
      %872 = vmatprep.subr.bf16.mxu0 0
      %873 = vmatpush1.bf16.msra.mxu0 %v865
      %874 = vmatprep.subr.bf16.mxu0 0
      %875 = vmatpush1.bf16.msra.mxu0 %v866
      %876 = vmatprep.subr.bf16.mxu0 0
      %877 = vmatpush1.bf16.msra.mxu0 0
      %878 = vmatprep.subr.bf16.mxu0 0
      %879 = vmatpush1.bf16.msra.mxu0 0
      %880 = vmatprep.subr.bf16.mxu0 0
      %881 = vmatpush1.bf16.msra.mxu0 0
      %882 = vmatprep.subr.bf16.mxu0 0
      %883 = vmatpush1.bf16.msra.mxu0 0
      %884 = vmatprep.subr.bf16.mxu0 0
      %885 = vmatpush1.bf16.msra.mxu0 0
      %886 = vmatprep.subr.bf16.mxu0 0
      %887 = vmatpush1.bf16.msra.mxu0 0
      %888 = vmatprep.subr.bf16.mxu0 0
      %889 = vmatpush1.bf16.msra.mxu0 0
      %890 = vmatprep.subr.bf16.mxu0 0
      %891 = vmatpush1.bf16.msra.mxu0 0
      %892 = vmatprep.subr.bf16.mxu0 0
      %893 = vmatpush1.bf16.msra.mxu0 0
      %894 = vmatprep.subr.bf16.mxu0 0
      %895 = vmatpush1.bf16.msra.mxu0 0
      %896 = vmatprep.subr.bf16.mxu0 0
      %897 = vmatpush1.bf16.msra.mxu0 0
      %898 = vmatprep.subr.bf16.mxu0 0
      %899 = vmatpush1.bf16.msra.mxu0 0
      %900 = vmatprep.subr.bf16.mxu0 0
      %901 = vmatpush1.bf16.msra.mxu0 0
      %902 = vmatprep.subr.bf16.mxu0 0
      %903 = vmatpush1.bf16.msra.mxu0 0
      %904 = vmatprep.mubr.bf16.mxu0 0
      %905 = vmatmul.mubr.bf16.gmra.mrb[0].mxu0 %v870
      %v906 = vpop.f32.mrb[0].mxu0
      %v907 = vadd.f32 0.0, %v906
      %v908 = vpop.f32.mrb[0].mxu0
      %v909 = vpop.f32.mrb[0].mxu0
      %v910 = vadd.f32 0.0, %v909
      %v911 = vpop.f32.mrb[0].mxu0
      %912 = vdwg.mxu0
      %v913 = vpack.c.bf16 %v910, %v907
      %915 = vrot.lane.b32.xlu0 %v913, 96
      %v916 = vpop.permute.xlu0 %915
      %vm917 = vcmask 64512
      %v919 = vsel %vm917, %v913, 0
      %v922 = vsel %vm917, %v916, 0
      %924 = vmatprep.subr.bf16.mxu0 0
      %925 = vmatpush1.bf16.xpose.msra.mxu0 %v922
      %926 = vmatprep.subr.bf16.mxu0 0
      %927 = vmatpush1.bf16.xpose.msra.mxu0 0
      %928 = vmatprep.subr.bf16.mxu0 0
      %929 = vmatpush1.bf16.xpose.msra.mxu0 0
      %930 = vmatprep.subr.bf16.mxu0 0
      %931 = vmatpush1.bf16.xpose.msra.mxu0 0
      %932 = vmatprep.subr.bf16.mxu0 0
      %933 = vmatpush1.bf16.xpose.msra.mxu0 0
      %934 = vmatprep.subr.bf16.mxu0 0
      %935 = vmatpush1.bf16.xpose.msra.mxu0 0
      %936 = vmatprep.subr.bf16.mxu0 0
      %937 = vmatpush1.bf16.xpose.msra.mxu0 0
      %938 = vmatprep.subr.bf16.mxu0 0
      %939 = vmatpush1.bf16.xpose.msra.mxu0 0
      %940 = vmatprep.subr.bf16.mxu0 0
      %941 = vmatpush1.bf16.xpose.msra.mxu0 0
      %942 = vmatprep.subr.bf16.mxu0 0
      %943 = vmatpush1.bf16.xpose.msra.mxu0 0
      %944 = vmatprep.subr.bf16.mxu0 0
      %945 = vmatpush1.bf16.xpose.msra.mxu0 0
      %946 = vmatprep.subr.bf16.mxu0 0
      %947 = vmatpush1.bf16.xpose.msra.mxu0 0
      %948 = vmatprep.subr.bf16.mxu0 0
      %949 = vmatpush1.bf16.xpose.msra.mxu0 0
      %950 = vmatprep.subr.bf16.mxu0 0
      %951 = vmatpush1.bf16.xpose.msra.mxu0 0
      %952 = vmatprep.subr.bf16.mxu0 0
      %953 = vmatpush1.bf16.xpose.msra.mxu0 0
      %954 = vmatprep.subr.bf16.mxu0 0
      %955 = vmatpush1.bf16.xpose.msra.mxu0 0
      %956 = vmatprep.mubr.bf16.mxu0 0
      %957 = vmatmul.mubr.bf16.gmra.mrb[0].mxu0 %v919
      %v958 = vpop.f32.mrb[0].mxu0
      %v959 = vadd.f32 0.0, %v958
      %v960 = vpop.f32.mrb[0].mxu0
      %v961 = vpop.f32.mrb[0].mxu0
      %v962 = vadd.f32 0.0, %v961
      %v963 = vpop.f32.mrb[0].mxu0
      %964 = vdwg.mxu0
      %vm965 = vcmask 72704
      %v966 = vsel %vm965, %v959, -inf
      %967 = vmax.xlane.f32.xlu0 %v966
      %v968 = vpop.xlane.xlu0 %967
      %vm969 = vcmask 65536
      %v970 = vsel %vm969, %v962, -inf
      %971 = vmax.xlane.f32.xlu0 %v970
      %v972 = vpop.xlane.xlu0 %971
      %v973 = vsub.f32 %v959, %v968
      %v974 = vsub.f32 %v962, %v972
      %v975 = vmul.f32 %v973, 1.442695
      %v976 = vpow.pop %v975
      %v977 = vmul.f32 %v974, 1.442695
      %v978 = vpow.pop %v977
      %v979 = vsel %vm965, %v976, 0.0
      %980 = vadd.xlane.f32.xlu0 %v979
      %v981 = vpop.xlane.xlu0 %980
      %v982 = vsel %vm969, %v978, 0.0
      %983 = vadd.xlane.f32.xlu0 %v982
      %v984 = vpop.xlane.xlu0 %983
      %v985 = vrcp.pop %v981
      %v986 = vrcp.pop %v984
      %v987 = vmul.f32 %v976, %v985
      %v988 = vmul.f32 %v978, %v986
      %v989 = vpack.c.bf16 %v988, %v987
      %990 = vrot.lane.b32.xlu0 %v913, 64
      %v991 = vpop.permute.xlu0 %990
      %v993 = vsel %vm965, %v989, 0
      %vm995 = vcmask 1043456
      %vm996 = vcmask 1044480
      %v997 = vsel %vm995, 4294967295, 65535
      %v998 = vsel %vm996, %v997, 0
      %v1000 = vand.u32 %v991, %v998
      %1002 = vmatprep.subr.bf16.mxu0 0
      %1003 = vmatpush1.bf16.msra.mxu0 %v1000
      %1004 = vmatprep.subr.bf16.mxu0 0
      %1005 = vmatpush1.bf16.msra.mxu0 0
      %1006 = vmatprep.subr.bf16.mxu0 0
      %1007 = vmatpush1.bf16.msra.mxu0 0
      %1008 = vmatprep.subr.bf16.mxu0 0
      %1009 = vmatpush1.bf16.msra.mxu0 0
      %1010 = vmatprep.subr.bf16.mxu0 0
      %1011 = vmatpush1.bf16.msra.mxu0 0
      %1012 = vmatprep.subr.bf16.mxu0 0
      %1013 = vmatpush1.bf16.msra.mxu0 0
      %1014 = vmatprep.subr.bf16.mxu0 0
      %1015 = vmatpush1.bf16.msra.mxu0 0
      %1016 = vmatprep.subr.bf16.mxu0 0
      %1017 = vmatpush1.bf16.msra.mxu0 0
      %1018 = vmatprep.subr.bf16.mxu0 0
      %1019 = vmatpush1.bf16.msra.mxu0 0
      %1020 = vmatprep.subr.bf16.mxu0 0
      %1021 = vmatpush1.bf16.msra.mxu0 0
      %1022 = vmatprep.subr.bf16.mxu0 0
      %1023 = vmatpush1.bf16.msra.mxu0 0
      %1024 = vmatprep.subr.bf16.mxu0 0
      %1025 = vmatpush1.bf16.msra.mxu0 0
      %1026 = vmatprep.subr.bf16.mxu0 0
      %1027 = vmatpush1.bf16.msra.mxu0 0
      %1028 = vmatprep.subr.bf16.mxu0 0
      %1029 = vmatpush1.bf16.msra.mxu0 0
      %1030 = vmatprep.subr.bf16.mxu0 0
      %1031 = vmatpush1.bf16.msra.mxu0 0
      %1032 = vmatprep.subr.bf16.mxu0 0
      %1033 = vmatpush1.bf16.msra.mxu0 0
      %1034 = vmatprep.mubr.bf16.mxu0 0
      %1035 = vmatmul.mubr.bf16.gmra.mrb[0].mxu0 %v993
      %v1036 = vpop.f32.mrb[0].mxu0
      %v1037 = vadd.f32 0.0, %v1036
      %v1038 = vpop.f32.mrb[0].mxu0
      %v1039 = vpop.f32.mrb[0].mxu0
      %v1040 = vadd.f32 0.0, %v1039
      %v1041 = vpop.f32.mrb[0].mxu0
      %1042 = vdwg.mxu0
      %v1043 = vpack.c.bf16 %v1040, %v1037
      %1044 = vrot.lane.b32.xlu0 %v913, 120
      %v1045 = vpop.permute.xlu0 %1044
      %1046 = vrot.lane.b32.xlu0 %v913, 88
      %v1047 = vpop.permute.xlu0 %1046
      %v1049 = vsel %vm917, %v1045, 0
      %v1052 = vsel %vm917, %v1047, 0
      %1054 = vmatprep.subr.bf16.mxu0 0
      %1055 = vmatpush1.bf16.xpose.msra.mxu0 %v1052
      %1056 = vmatprep.subr.bf16.mxu0 0
      %1057 = vmatpush1.bf16.xpose.msra.mxu0 0
      %1058 = vmatprep.subr.bf16.mxu0 0
      %1059 = vmatpush1.bf16.xpose.msra.mxu0 0
      %1060 = vmatprep.subr.bf16.mxu0 0
      %1061 = vmatpush1.bf16.xpose.msra.mxu0 0
      %1062 = vmatprep.subr.bf16.mxu0 0
      %1063 = vmatpush1.bf16.xpose.msra.mxu0 0
      %1064 = vmatprep.subr.bf16.mxu0 0
      %1065 = vmatpush1.bf16.xpose.msra.mxu0 0
      %1066 = vmatprep.subr.bf16.mxu0 0
      %1067 = vmatpush1.bf16.xpose.msra.mxu0 0
      %1068 = vmatprep.subr.bf16.mxu0 0
      %1069 = vmatpush1.bf16.xpose.msra.mxu0 0
      %1070 = vmatprep.subr.bf16.mxu0 0
      %1071 = vmatpush1.bf16.xpose.msra.mxu0 0
      %1072 = vmatprep.subr.bf16.mxu0 0
      %1073 = vmatpush1.bf16.xpose.msra.mxu0 0
      %1074 = vmatprep.subr.bf16.mxu0 0
      %1075 = vmatpush1.bf16.xpose.msra.mxu0 0
      %1076 = vmatprep.subr.bf16.mxu0 0
      %1077 = vmatpush1.bf16.xpose.msra.mxu0 0
      %1078 = vmatprep.subr.bf16.mxu0 0
      %1079 = vmatpush1.bf16.xpose.msra.mxu0 0
      %1080 = vmatprep.subr.bf16.mxu0 0
      %1081 = vmatpush1.bf16.xpose.msra.mxu0 0
      %1082 = vmatprep.subr.bf16.mxu0 0
      %1083 = vmatpush1.bf16.xpose.msra.mxu0 0
      %1084 = vmatprep.subr.bf16.mxu0 0
      %1085 = vmatpush1.bf16.xpose.msra.mxu0 0
      %1086 = vmatprep.mubr.bf16.mxu0 0
      %1087 = vmatmul.mubr.bf16.gmra.mrb[0].mxu0 %v1049
      %v1088 = vpop.f32.mrb[0].mxu0
      %v1089 = vadd.f32 0.0, %v1088
      %v1090 = vpop.f32.mrb[0].mxu0
      %v1091 = vpop.f32.mrb[0].mxu0
      %v1092 = vadd.f32 0.0, %v1091
      %v1093 = vpop.f32.mrb[0].mxu0
      %1094 = vdwg.mxu0
      %v1095 = vsel %vm965, %v1089, -inf
      %1096 = vmax.xlane.f32.xlu0 %v1095
      %v1097 = vpop.xlane.xlu0 %1096
      %v1098 = vsel %vm969, %v1092, -inf
      %1099 = vmax.xlane.f32.xlu0 %v1098
      %v1100 = vpop.xlane.xlu0 %1099
      %v1101 = vsub.f32 %v1089, %v1097
      %v1102 = vsub.f32 %v1092, %v1100
      %v1103 = vmul.f32 %v1101, 1.442695
      %v1104 = vpow.pop %v1103
      %v1105 = vmul.f32 %v1102, 1.442695
      %v1106 = vpow.pop %v1105
      %v1107 = vsel %vm965, %v1104, 0.0
      %1108 = vadd.xlane.f32.xlu0 %v1107
      %v1109 = vpop.xlane.xlu0 %1108
      %v1110 = vsel %vm969, %v1106, 0.0
      %1111 = vadd.xlane.f32.xlu0 %v1110
      %v1112 = vpop.xlane.xlu0 %1111
      %v1113 = vrcp.pop %v1109
      %v1114 = vrcp.pop %v1112
      %v1115 = vmul.f32 %v1104, %v1113
      %v1116 = vmul.f32 %v1106, %v1114
      %v1117 = vpack.c.bf16 %v1116, %v1115
      %1118 = vrot.lane.b32.xlu0 %v913, 56
      %v1119 = vpop.permute.xlu0 %1118
      %v1121 = vsel %vm965, %v1117, 0
      %v1124 = vand.u32 %v1119, %v998
      %1126 = vmatprep.subr.bf16.mxu0 0
      %1127 = vmatpush1.bf16.msra.mxu0 %v1124
      %1128 = vmatprep.subr.bf16.mxu0 0
      %1129 = vmatpush1.bf16.msra.mxu0 0
      %1130 = vmatprep.subr.bf16.mxu0 0
      %1131 = vmatpush1.bf16.msra.mxu0 0
      %1132 = vmatprep.subr.bf16.mxu0 0
      %1133 = vmatpush1.bf16.msra.mxu0 0
      %1134 = vmatprep.subr.bf16.mxu0 0
      %1135 = vmatpush1.bf16.msra.mxu0 0
      %1136 = vmatprep.subr.bf16.mxu0 0
      %1137 = vmatpush1.bf16.msra.mxu0 0
      %1138 = vmatprep.subr.bf16.mxu0 0
      %1139 = vmatpush1.bf16.msra.mxu0 0
      %1140 = vmatprep.subr.bf16.mxu0 0
      %1141 = vmatpush1.bf16.msra.mxu0 0
      %1142 = vmatprep.subr.bf16.mxu0 0
      %1143 = vmatpush1.bf16.msra.mxu0 0
      %1144 = vmatprep.subr.bf16.mxu0 0
      %1145 = vmatpush1.bf16.msra.mxu0 0
      %1146 = vmatprep.subr.bf16.mxu0 0
      %1147 = vmatpush1.bf16.msra.mxu0 0
      %1148 = vmatprep.subr.bf16.mxu0 0
      %1149 = vmatpush1.bf16.msra.mxu0 0
      %1150 = vmatprep.subr.bf16.mxu0 0
      %1151 = vmatpush1.bf16.msra.mxu0 0
      %1152 = vmatprep.subr.bf16.mxu0 0
      %1153 = vmatpush1.bf16.msra.mxu0 0
      %1154 = vmatprep.subr.bf16.mxu0 0
      %1155 = vmatpush1.bf16.msra.mxu0 0
      %1156 = vmatprep.subr.bf16.mxu0 0
      %1157 = vmatpush1.bf16.msra.mxu0 0
      %1158 = vmatprep.mubr.bf16.mxu0 0
      %1159 = vmatmul.mubr.bf16.gmra.mrb[0].mxu0 %v1121
      %v1160 = vpop.f32.mrb[0].mxu0
      %v1161 = vadd.f32 0.0, %v1160
      %v1162 = vpop.f32.mrb[0].mxu0
      %v1163 = vpop.f32.mrb[0].mxu0
      %v1164 = vadd.f32 0.0, %v1163
      %v1165 = vpop.f32.mrb[0].mxu0
      %1166 = vdwg.mxu0
      %v1167 = vpack.c.bf16 %v1164, %v1161
      %v1169 = vsel %vm917, %v1167, 0
      %v1172 = vsel %vm995, %v783, 0
      %1174 = vmatprep.subr.bf16.mxu0 0
      %1175 = vmatpush1.bf16.msra.mxu0 %v1172
      %1176 = vmatprep.subr.bf16.mxu0 0
      %1177 = vmatpush1.bf16.msra.mxu0 0
      %1178 = vmatprep.subr.bf16.mxu0 0
      %1179 = vmatpush1.bf16.msra.mxu0 0
      %1180 = vmatprep.subr.bf16.mxu0 0
      %1181 = vmatpush1.bf16.msra.mxu0 0
      %1182 = vmatprep.subr.bf16.mxu0 0
      %1183 = vmatpush1.bf16.msra.mxu0 0
      %1184 = vmatprep.subr.bf16.mxu0 0
      %1185 = vmatpush1.bf16.msra.mxu0 0
      %1186 = vmatprep.subr.bf16.mxu0 0
      %1187 = vmatpush1.bf16.msra.mxu0 0
      %1188 = vmatprep.subr.bf16.mxu0 0
      %1189 = vmatpush1.bf16.msra.mxu0 0
      %1190 = vmatprep.subr.bf16.mxu0 0
      %1191 = vmatpush1.bf16.msra.mxu0 0
      %1192 = vmatprep.subr.bf16.mxu0 0
      %1193 = vmatpush1.bf16.msra.mxu0 0
      %1194 = vmatprep.subr.bf16.mxu0 0
      %1195 = vmatpush1.bf16.msra.mxu0 0
      %1196 = vmatprep.subr.bf16.mxu0 0
      %1197 = vmatpush1.bf16.msra.mxu0 0
      %1198 = vmatprep.subr.bf16.mxu0 0
      %1199 = vmatpush1.bf16.msra.mxu0 0
      %1200 = vmatprep.subr.bf16.mxu0 0
      %1201 = vmatpush1.bf16.msra.mxu0 0
      %1202 = vmatprep.subr.bf16.mxu0 0
      %1203 = vmatpush1.bf16.msra.mxu0 0
      %1204 = vmatprep.subr.bf16.mxu0 0
      %1205 = vmatpush1.bf16.msra.mxu0 0
      %1206 = vmatprep.mubr.bf16.mxu0 0
      %1207 = vmatmul.mubr.bf16.gmra.mrb[0].mxu0 %v1169
      %v1208 = vpop.f32.mrb[0].mxu0
      %v1209 = vadd.f32 0.0, %v1208
      %v1210 = vpop.f32.mrb[0].mxu0
      %v1211 = vpop.f32.mrb[0].mxu0
      %v1212 = vadd.f32 0.0, %v1211
      %v1213 = vpop.f32.mrb[0].mxu0
      %1214 = vdwg.mxu0
      %v1216 = vsel %vm917, %v1043, 0
      %v1219 = vsel %vm995, %v782, 0
      %1221 = vmatprep.subr.bf16.mxu0 0
      %1222 = vmatpush1.bf16.msra.mxu0 %v1219
      %1223 = vmatprep.subr.bf16.mxu0 0
      %1224 = vmatpush1.bf16.msra.mxu0 0
      %1225 = vmatprep.subr.bf16.mxu0 0
      %1226 = vmatpush1.bf16.msra.mxu0 0
      %1227 = vmatprep.subr.bf16.mxu0 0
      %1228 = vmatpush1.bf16.msra.mxu0 0
      %1229 = vmatprep.subr.bf16.mxu0 0
      %1230 = vmatpush1.bf16.msra.mxu0 0
      %1231 = vmatprep.subr.bf16.mxu0 0
      %1232 = vmatpush1.bf16.msra.mxu0 0
      %1233 = vmatprep.subr.bf16.mxu0 0
      %1234 = vmatpush1.bf16.msra.mxu0 0
      %1235 = vmatprep.subr.bf16.mxu0 0
      %1236 = vmatpush1.bf16.msra.mxu0 0
      %1237 = vmatprep.subr.bf16.mxu0 0
      %1238 = vmatpush1.bf16.msra.mxu0 0
      %1239 = vmatprep.subr.bf16.mxu0 0
      %1240 = vmatpush1.bf16.msra.mxu0 0
      %1241 = vmatprep.subr.bf16.mxu0 0
      %1242 = vmatpush1.bf16.msra.mxu0 0
      %1243 = vmatprep.subr.bf16.mxu0 0
      %1244 = vmatpush1.bf16.msra.mxu0 0
      %1245 = vmatprep.subr.bf16.mxu0 0
      %1246 = vmatpush1.bf16.msra.mxu0 0
      %1247 = vmatprep.subr.bf16.mxu0 0
      %1248 = vmatpush1.bf16.msra.mxu0 0
      %1249 = vmatprep.subr.bf16.mxu0 0
      %1250 = vmatpush1.bf16.msra.mxu0 0
      %1251 = vmatprep.subr.bf16.mxu0 0
      %1252 = vmatpush1.bf16.msra.mxu0 0
      %1253 = vmatprep.mubr.bf16.mxu0 0
      %1254 = vmatmul.mubr.bf16.gmra.mrb[0].mxu0 %v1216
      %v1255 = vpop.f32.mrb[0].mxu0
      %v1256 = vadd.f32 %v1209, %v1255
      %v1257 = vpop.f32.mrb[0].mxu0
      %v1258 = vpop.f32.mrb[0].mxu0
      %v1259 = vadd.f32 %v1212, %v1258
      %v1260 = vpop.f32.mrb[0].mxu0
      %1261 = vdwg.mxu0
      %1262 = vrot.lane.b32.xlu0 %v913, 112
      %v1263 = vpop.permute.xlu0 %1262
      %1264 = vrot.lane.b32.xlu0 %v913, 80
      %v1265 = vpop.permute.xlu0 %1264
      %v1267 = vsel %vm917, %v1263, 0
      %v1270 = vsel %vm917, %v1265, 0
      %1272 = vmatprep.subr.bf16.mxu0 0
      %1273 = vmatpush1.bf16.xpose.msra.mxu0 %v1270
      %1274 = vmatprep.subr.bf16.mxu0 0
      %1275 = vmatpush1.bf16.xpose.msra.mxu0 0
      %1276 = vmatprep.subr.bf16.mxu0 0
      %1277 = vmatpush1.bf16.xpose.msra.mxu0 0
      %1278 = vmatprep.subr.bf16.mxu0 0
      %1279 = vmatpush1.bf16.xpose.msra.mxu0 0
      %1280 = vmatprep.subr.bf16.mxu0 0
      %1281 = vmatpush1.bf16.xpose.msra.mxu0 0
      %1282 = vmatprep.subr.bf16.mxu0 0
      %1283 = vmatpush1.bf16.xpose.msra.mxu0 0
      %1284 = vmatprep.subr.bf16.mxu0 0
      %1285 = vmatpush1.bf16.xpose.msra.mxu0 0
      %1286 = vmatprep.subr.bf16.mxu0 0
      %1287 = vmatpush1.bf16.xpose.msra.mxu0 0
      %1288 = vmatprep.subr.bf16.mxu0 0
      %1289 = vmatpush1.bf16.xpose.msra.mxu0 0
      %1290 = vmatprep.subr.bf16.mxu0 0
      %1291 = vmatpush1.bf16.xpose.msra.mxu0 0
      %1292 = vmatprep.subr.bf16.mxu0 0
      %1293 = vmatpush1.bf16.xpose.msra.mxu0 0
      %1294 = vmatprep.subr.bf16.mxu0 0
      %1295 = vmatpush1.bf16.xpose.msra.mxu0 0
      %1296 = vmatprep.subr.bf16.mxu0 0
      %1297 = vmatpush1.bf16.xpose.msra.mxu0 0
      %1298 = vmatprep.subr.bf16.mxu0 0
      %1299 = vmatpush1.bf16.xpose.msra.mxu0 0
      %1300 = vmatprep.subr.bf16.mxu0 0
      %1301 = vmatpush1.bf16.xpose.msra.mxu0 0
      %1302 = vmatprep.subr.bf16.mxu0 0
      %1303 = vmatpush1.bf16.xpose.msra.mxu0 0
      %1304 = vmatprep.mubr.bf16.mxu0 0
      %1305 = vmatmul.mubr.bf16.gmra.mrb[0].mxu0 %v1267
      %v1306 = vpop.f32.mrb[0].mxu0
      %v1307 = vadd.f32 0.0, %v1306
      %v1308 = vpop.f32.mrb[0].mxu0
      %v1309 = vpop.f32.mrb[0].mxu0
      %v1310 = vadd.f32 0.0, %v1309
      %v1311 = vpop.f32.mrb[0].mxu0
      %1312 = vdwg.mxu0
      %v1313 = vsel %vm965, %v1307, -inf
      %1314 = vmax.xlane.f32.xlu0 %v1313
      %v1315 = vpop.xlane.xlu0 %1314
      %v1316 = vsel %vm969, %v1310, -inf
      %1317 = vmax.xlane.f32.xlu0 %v1316
      %v1318 = vpop.xlane.xlu0 %1317
      %v1319 = vsub.f32 %v1307, %v1315
      %v1320 = vsub.f32 %v1310, %v1318
      %v1321 = vmul.f32 %v1319, 1.442695
      %v1322 = vpow.pop %v1321
      %v1323 = vmul.f32 %v1320, 1.442695
      %v1324 = vpow.pop %v1323
      %v1325 = vsel %vm965, %v1322, 0.0
      %1326 = vadd.xlane.f32.xlu0 %v1325
      %v1327 = vpop.xlane.xlu0 %1326
      %v1328 = vsel %vm969, %v1324, 0.0
      %1329 = vadd.xlane.f32.xlu0 %v1328
      %v1330 = vpop.xlane.xlu0 %1329
      %v1331 = vrcp.pop %v1327
      %v1332 = vrcp.pop %v1330
      %v1333 = vmul.f32 %v1322, %v1331
      %v1334 = vmul.f32 %v1324, %v1332
      %v1335 = vpack.c.bf16 %v1334, %v1333
      %1336 = vrot.lane.b32.xlu0 %v913, 48
      %v1337 = vpop.permute.xlu0 %1336
      %v1339 = vsel %vm965, %v1335, 0
      %v1342 = vand.u32 %v1337, %v998
      %1344 = vmatprep.subr.bf16.mxu0 0
      %1345 = vmatpush1.bf16.msra.mxu0 %v1342
      %1346 = vmatprep.subr.bf16.mxu0 0
      %1347 = vmatpush1.bf16.msra.mxu0 0
      %1348 = vmatprep.subr.bf16.mxu0 0
      %1349 = vmatpush1.bf16.msra.mxu0 0
      %1350 = vmatprep.subr.bf16.mxu0 0
      %1351 = vmatpush1.bf16.msra.mxu0 0
      %1352 = vmatprep.subr.bf16.mxu0 0
      %1353 = vmatpush1.bf16.msra.mxu0 0
      %1354 = vmatprep.subr.bf16.mxu0 0
      %1355 = vmatpush1.bf16.msra.mxu0 0
      %1356 = vmatprep.subr.bf16.mxu0 0
      %1357 = vmatpush1.bf16.msra.mxu0 0
      %1358 = vmatprep.subr.bf16.mxu0 0
      %1359 = vmatpush1.bf16.msra.mxu0 0
      %1360 = vmatprep.subr.bf16.mxu0 0
      %1361 = vmatpush1.bf16.msra.mxu0 0
      %1362 = vmatprep.subr.bf16.mxu0 0
      %1363 = vmatpush1.bf16.msra.mxu0 0
      %1364 = vmatprep.subr.bf16.mxu0 0
      %1365 = vmatpush1.bf16.msra.mxu0 0
      %1366 = vmatprep.subr.bf16.mxu0 0
      %1367 = vmatpush1.bf16.msra.mxu0 0
      %1368 = vmatprep.subr.bf16.mxu0 0
      %1369 = vmatpush1.bf16.msra.mxu0 0
      %1370 = vmatprep.subr.bf16.mxu0 0
      %1371 = vmatpush1.bf16.msra.mxu0 0
      %1372 = vmatprep.subr.bf16.mxu0 0
      %1373 = vmatpush1.bf16.msra.mxu0 0
      %1374 = vmatprep.subr.bf16.mxu0 0
      %1375 = vmatpush1.bf16.msra.mxu0 0
      %1376 = vmatprep.mubr.bf16.mxu0 0
      %1377 = vmatmul.mubr.bf16.gmra.mrb[0].mxu0 %v1339
      %v1378 = vpop.f32.mrb[0].mxu0
      %v1379 = vadd.f32 0.0, %v1378
      %v1380 = vpop.f32.mrb[0].mxu0
      %v1381 = vpop.f32.mrb[0].mxu0
      %v1382 = vadd.f32 0.0, %v1381
      %v1383 = vpop.f32.mrb[0].mxu0
      %1384 = vdwg.mxu0
      %v1385 = vpack.c.bf16 %v1382, %v1379
      %v1387 = vsel %vm917, %v1385, 0
      %v1390 = vsel %vm995, %v784, 0
      %1392 = vmatprep.subr.bf16.mxu0 0
      %1393 = vmatpush1.bf16.msra.mxu0 %v1390
      %1394 = vmatprep.subr.bf16.mxu0 0
      %1395 = vmatpush1.bf16.msra.mxu0 0
      %1396 = vmatprep.subr.bf16.mxu0 0
      %1397 = vmatpush1.bf16.msra.mxu0 0
      %1398 = vmatprep.subr.bf16.mxu0 0
      %1399 = vmatpush1.bf16.msra.mxu0 0
      %1400 = vmatprep.subr.bf16.mxu0 0
      %1401 = vmatpush1.bf16.msra.mxu0 0
      %1402 = vmatprep.subr.bf16.mxu0 0
      %1403 = vmatpush1.bf16.msra.mxu0 0
      %1404 = vmatprep.subr.bf16.mxu0 0
      %1405 = vmatpush1.bf16.msra.mxu0 0
      %1406 = vmatprep.subr.bf16.mxu0 0
      %1407 = vmatpush1.bf16.msra.mxu0 0
      %1408 = vmatprep.subr.bf16.mxu0 0
      %1409 = vmatpush1.bf16.msra.mxu0 0
      %1410 = vmatprep.subr.bf16.mxu0 0
      %1411 = vmatpush1.bf16.msra.mxu0 0
      %1412 = vmatprep.subr.bf16.mxu0 0
      %1413 = vmatpush1.bf16.msra.mxu0 0
      %1414 = vmatprep.subr.bf16.mxu0 0
      %1415 = vmatpush1.bf16.msra.mxu0 0
      %1416 = vmatprep.subr.bf16.mxu0 0
      %1417 = vmatpush1.bf16.msra.mxu0 0
      %1418 = vmatprep.subr.bf16.mxu0 0
      %1419 = vmatpush1.bf16.msra.mxu0 0
      %1420 = vmatprep.subr.bf16.mxu0 0
      %1421 = vmatpush1.bf16.msra.mxu0 0
      %1422 = vmatprep.subr.bf16.mxu0 0
      %1423 = vmatpush1.bf16.msra.mxu0 0
      %1424 = vmatprep.mubr.bf16.mxu0 0
      %1425 = vmatmul.mubr.bf16.gmra.mrb[0].mxu0 %v1387
      %v1426 = vpop.f32.mrb[0].mxu0
      %v1427 = vadd.f32 0.0, %v1426
      %v1428 = vpop.f32.mrb[0].mxu0
      %v1429 = vpop.f32.mrb[0].mxu0
      %v1430 = vadd.f32 0.0, %v1429
      %v1431 = vpop.f32.mrb[0].mxu0
      %1432 = vdwg.mxu0
      %v1433 = vadd.f32 %v1256, %v1427
      %v1434 = vadd.f32 %v1259, %v1430
      %1435 = vrot.lane.b32.xlu0 %v913, 104
      %v1436 = vpop.permute.xlu0 %1435
      %1437 = vrot.lane.b32.xlu0 %v913, 72
      %v1438 = vpop.permute.xlu0 %1437
      %v1440 = vsel %vm917, %v1436, 0
      %v1443 = vsel %vm917, %v1438, 0
      %1445 = vmatprep.subr.bf16.mxu0 0
      %1446 = vmatpush1.bf16.xpose.msra.mxu0 %v1443
      %1447 = vmatprep.subr.bf16.mxu0 0
      %1448 = vmatpush1.bf16.xpose.msra.mxu0 0
      %1449 = vmatprep.subr.bf16.mxu0 0
      %1450 = vmatpush1.bf16.xpose.msra.mxu0 0
      %1451 = vmatprep.subr.bf16.mxu0 0
      %1452 = vmatpush1.bf16.xpose.msra.mxu0 0
      %1453 = vmatprep.subr.bf16.mxu0 0
      %1454 = vmatpush1.bf16.xpose.msra.mxu0 0
      %1455 = vmatprep.subr.bf16.mxu0 0
      %1456 = vmatpush1.bf16.xpose.msra.mxu0 0
      %1457 = vmatprep.subr.bf16.mxu0 0
      %1458 = vmatpush1.bf16.xpose.msra.mxu0 0
      %1459 = vmatprep.subr.bf16.mxu0 0
      %1460 = vmatpush1.bf16.xpose.msra.mxu0 0
      %1461 = vmatprep.subr.bf16.mxu0 0
      %1462 = vmatpush1.bf16.xpose.msra.mxu0 0
      %1463 = vmatprep.subr.bf16.mxu0 0
      %1464 = vmatpush1.bf16.xpose.msra.mxu0 0
      %1465 = vmatprep.subr.bf16.mxu0 0
      %1466 = vmatpush1.bf16.xpose.msra.mxu0 0
      %1467 = vmatprep.subr.bf16.mxu0 0
      %1468 = vmatpush1.bf16.xpose.msra.mxu0 0
      %1469 = vmatprep.subr.bf16.mxu0 0
      %1470 = vmatpush1.bf16.xpose.msra.mxu0 0
      %1471 = vmatprep.subr.bf16.mxu0 0
      %1472 = vmatpush1.bf16.xpose.msra.mxu0 0
      %1473 = vmatprep.subr.bf16.mxu0 0
      %1474 = vmatpush1.bf16.xpose.msra.mxu0 0
      %1475 = vmatprep.subr.bf16.mxu0 0
      %1476 = vmatpush1.bf16.xpose.msra.mxu0 0
      %1477 = vmatprep.mubr.bf16.mxu0 0
      %1478 = vmatmul.mubr.bf16.gmra.mrb[0].mxu0 %v1440
      %v1479 = vpop.f32.mrb[0].mxu0
      %v1480 = vadd.f32 0.0, %v1479
      %v1481 = vpop.f32.mrb[0].mxu0
      %v1482 = vpop.f32.mrb[0].mxu0
      %v1483 = vadd.f32 0.0, %v1482
      %v1484 = vpop.f32.mrb[0].mxu0
      %1485 = vdwg.mxu0
      %v1486 = vsel %vm965, %v1480, -inf
      %1487 = vmax.xlane.f32.xlu0 %v1486
      %v1488 = vpop.xlane.xlu0 %1487
      %v1489 = vsel %vm969, %v1483, -inf
      %1490 = vmax.xlane.f32.xlu0 %v1489
      %v1491 = vpop.xlane.xlu0 %1490
      %v1492 = vsub.f32 %v1480, %v1488
      %v1493 = vsub.f32 %v1483, %v1491
      %v1494 = vmul.f32 %v1492, 1.442695
      %v1495 = vpow.pop %v1494
      %v1496 = vmul.f32 %v1493, 1.442695
      %v1497 = vpow.pop %v1496
      %v1498 = vsel %vm965, %v1495, 0.0
      %1499 = vadd.xlane.f32.xlu0 %v1498
      %v1500 = vpop.xlane.xlu0 %1499
      %v1501 = vsel %vm969, %v1497, 0.0
      %1502 = vadd.xlane.f32.xlu0 %v1501
      %v1503 = vpop.xlane.xlu0 %1502
      %v1504 = vrcp.pop %v1500
      %v1505 = vrcp.pop %v1503
      %v1506 = vmul.f32 %v1495, %v1504
      %v1507 = vmul.f32 %v1497, %v1505
      %v1508 = vpack.c.bf16 %v1507, %v1506
      %1509 = vrot.lane.b32.xlu0 %v913, 40
      %v1510 = vpop.permute.xlu0 %1509
      %v1512 = vsel %vm965, %v1508, 0
      %v1515 = vand.u32 %v1510, %v998
      %1517 = vmatprep.subr.bf16.mxu0 0
      %1518 = vmatpush1.bf16.msra.mxu0 %v1515
      %1519 = vmatprep.subr.bf16.mxu0 0
      %1520 = vmatpush1.bf16.msra.mxu0 0
      %1521 = vmatprep.subr.bf16.mxu0 0
      %1522 = vmatpush1.bf16.msra.mxu0 0
      %1523 = vmatprep.subr.bf16.mxu0 0
      %1524 = vmatpush1.bf16.msra.mxu0 0
      %1525 = vmatprep.subr.bf16.mxu0 0
      %1526 = vmatpush1.bf16.msra.mxu0 0
      %1527 = vmatprep.subr.bf16.mxu0 0
      %1528 = vmatpush1.bf16.msra.mxu0 0
      %1529 = vmatprep.subr.bf16.mxu0 0
      %1530 = vmatpush1.bf16.msra.mxu0 0
      %1531 = vmatprep.subr.bf16.mxu0 0
      %1532 = vmatpush1.bf16.msra.mxu0 0
      %1533 = vmatprep.subr.bf16.mxu0 0
      %1534 = vmatpush1.bf16.msra.mxu0 0
      %1535 = vmatprep.subr.bf16.mxu0 0
      %1536 = vmatpush1.bf16.msra.mxu0 0
      %1537 = vmatprep.subr.bf16.mxu0 0
      %1538 = vmatpush1.bf16.msra.mxu0 0
      %1539 = vmatprep.subr.bf16.mxu0 0
      %1540 = vmatpush1.bf16.msra.mxu0 0
      %1541 = vmatprep.subr.bf16.mxu0 0
      %1542 = vmatpush1.bf16.msra.mxu0 0
      %1543 = vmatprep.subr.bf16.mxu0 0
      %1544 = vmatpush1.bf16.msra.mxu0 0
      %1545 = vmatprep.subr.bf16.mxu0 0
      %1546 = vmatpush1.bf16.msra.mxu0 0
      %1547 = vmatprep.subr.bf16.mxu0 0
      %1548 = vmatpush1.bf16.msra.mxu0 0
      %1549 = vmatprep.mubr.bf16.mxu0 0
      %1550 = vmatmul.mubr.bf16.gmra.mrb[0].mxu0 %v1512
      %v1551 = vpop.f32.mrb[0].mxu0
      %v1552 = vadd.f32 0.0, %v1551
      %v1553 = vpop.f32.mrb[0].mxu0
      %v1554 = vpop.f32.mrb[0].mxu0
      %v1555 = vadd.f32 0.0, %v1554
      %v1556 = vpop.f32.mrb[0].mxu0
      %1557 = vdwg.mxu0
      %v1558 = vpack.c.bf16 %v1555, %v1552
      %v1560 = vsel %vm917, %v1558, 0
      %v1563 = vsel %vm995, %v785, 0
      %1565 = vmatprep.subr.bf16.mxu0 0
      %1566 = vmatpush1.bf16.msra.mxu0 %v1563
      %1567 = vmatprep.subr.bf16.mxu0 0
      %1568 = vmatpush1.bf16.msra.mxu0 0
      %1569 = vmatprep.subr.bf16.mxu0 0
      %1570 = vmatpush1.bf16.msra.mxu0 0
      %1571 = vmatprep.subr.bf16.mxu0 0
      %1572 = vmatpush1.bf16.msra.mxu0 0
      %1573 = vmatprep.subr.bf16.mxu0 0
      %1574 = vmatpush1.bf16.msra.mxu0 0
      %1575 = vmatprep.subr.bf16.mxu0 0
      %1576 = vmatpush1.bf16.msra.mxu0 0
      %1577 = vmatprep.subr.bf16.mxu0 0
      %1578 = vmatpush1.bf16.msra.mxu0 0
      %1579 = vmatprep.subr.bf16.mxu0 0
      %1580 = vmatpush1.bf16.msra.mxu0 0
      %1581 = vmatprep.subr.bf16.mxu0 0
      %1582 = vmatpush1.bf16.msra.mxu0 0
      %1583 = vmatprep.subr.bf16.mxu0 0
      %1584 = vmatpush1.bf16.msra.mxu0 0
      %1585 = vmatprep.subr.bf16.mxu0 0
      %1586 = vmatpush1.bf16.msra.mxu0 0
      %1587 = vmatprep.subr.bf16.mxu0 0
      %1588 = vmatpush1.bf16.msra.mxu0 0
      %1589 = vmatprep.subr.bf16.mxu0 0
      %1590 = vmatpush1.bf16.msra.mxu0 0
      %1591 = vmatprep.subr.bf16.mxu0 0
      %1592 = vmatpush1.bf16.msra.mxu0 0
      %1593 = vmatprep.subr.bf16.mxu0 0
      %1594 = vmatpush1.bf16.msra.mxu0 0
      %1595 = vmatprep.subr.bf16.mxu0 0
      %1596 = vmatpush1.bf16.msra.mxu0 0
      %1597 = vmatprep.mubr.bf16.mxu0 0
      %1598 = vmatmul.mubr.bf16.gmra.mrb[0].mxu0 %v1560
      %v1599 = vpop.f32.mrb[0].mxu0
      %v1600 = vadd.f32 0.0, %v1599
      %v1601 = vpop.f32.mrb[0].mxu0
      %v1602 = vpop.f32.mrb[0].mxu0
      %v1603 = vadd.f32 0.0, %v1602
      %v1604 = vpop.f32.mrb[0].mxu0
      %1605 = vdwg.mxu0
      %v1606 = vadd.f32 %v1433, %v1600
      %v1607 = vadd.f32 %v1434, %v1603
      %v1608 = vadd.f32 %v774, %v1606
      %v1609 = vadd.f32 %v775, %v1607
      %v1611 = vlaneseq
      %v1612 = vshrl.u32 %v1611, 7
      %v1613 = vsub.s32 0, %v1612
      %v1614 = vrot.slane %v786, %v1613
      %v1616 = vadd.f32 %v1608, %v1614
      %v1617 = vadd.f32 %v1609, %v1614
      %v1618 = vsel %vm811, %v1616, 0.0
      %1619 = vadd.xlane.f32.xlu0 %v1618
      %v1620 = vpop.xlane.xlu0 %1619
      %v1621 = vsel %vm815, %v1617, 0.0
      %1622 = vadd.xlane.f32.xlu0 %v1621
      %v1623 = vpop.xlane.xlu0 %1622
      %v1624 = vmul.f32 %v1620, %v819
      %v1625 = vmul.f32 %v1623, %v819
      %v1626 = vsub.f32 %v1616, %v1624
      %v1627 = vsub.f32 %v1617, %v1625
      %v1628 = vmul.f32 %v1626, %v1626
      %v1629 = vmul.f32 %v1627, %v1627
      %v1630 = vsel %vm811, %v1628, 0.0
      %1631 = vadd.xlane.f32.xlu0 %v1630
      %v1632 = vpop.xlane.xlu0 %1631
      %v1633 = vsel %vm815, %v1629, 0.0
      %1634 = vadd.xlane.f32.xlu0 %v1633
      %v1635 = vpop.xlane.xlu0 %1634
      %v1636 = vmul.f32 %v1632, %v819
      %v1637 = vmul.f32 %v1635, %v819
      %v1638 = vadd.f32 %v1636, 1e-06
      %v1639 = vadd.f32 %v1637, 1e-06
      %v1640 = vrsqrt.pop %v1638
      %v1641 = vrsqrt.pop %v1639
      %v1642 = vmul.f32 %v1626, %v1640
      %v1643 = vmul.f32 %v1627, %v1641
      %v1645 = vlaneseq
      %v1646 = vshrl.u32 %v1645, 7
      %v1647 = vsub.s32 0, %v1646
      %v1648 = vrot.slane %v787, %v1647
      %v1650 = vmul.f32 %v1642, %v1648
      %v1651 = vmul.f32 %v1643, %v1648
      %v1653 = vlaneseq
      %v1654 = vshrl.u32 %v1653, 7
      %v1655 = vsub.s32 0, %v1654
      %v1656 = vrot.slane %v788, %v1655
      %v1658 = vadd.f32 %v1650, %v1656
      %v1659 = vadd.f32 %v1651, %v1656
      %v1660 = vpack.c.bf16 %v1659, %v1658
      %v1662 = vlaneseq
      %v1663 = vshrl.u32 %v1662, 7
      %v1664 = vsub.s32 0, %v1663
      %v1665 = vrot.slane %v793, %v1664
      %v1671 = vunpack.c.l.b16 %v789
      %v1672 = vunpack.c.l.b16 %v790
      %v1673 = vunpack.c.l.b16 %v791
      %v1674 = vunpack.c.l.b16 %v792
      %v1675 = vpack.c.b16 %v1672, %v1671
      %v1676 = vpack.c.b16 %v1674, %v1673
      %v1680 = vsel %vm811, %v1660, 0
      %1682 = vmatprep.subr.bf16.mxu0 0
      %1683 = vmatpush1.bf16.msra.mxu0 %v1675
      %1684 = vmatprep.subr.bf16.mxu0 0
      %1685 = vmatpush1.bf16.msra.mxu0 %v1676
      %1686 = vmatprep.subr.bf16.mxu0 0
      %1687 = vmatpush1.bf16.msra.mxu0 0
      %1688 = vmatprep.subr.bf16.mxu0 0
      %1689 = vmatpush1.bf16.msra.mxu0 0
      %1690 = vmatprep.subr.bf16.mxu0 0
      %1691 = vmatpush1.bf16.msra.mxu0 0
      %1692 = vmatprep.subr.bf16.mxu0 0
      %1693 = vmatpush1.bf16.msra.mxu0 0
      %1694 = vmatprep.subr.bf16.mxu0 0
      %1695 = vmatpush1.bf16.msra.mxu0 0
      %1696 = vmatprep.subr.bf16.mxu0 0
      %1697 = vmatpush1.bf16.msra.mxu0 0
      %1698 = vmatprep.subr.bf16.mxu0 0
      %1699 = vmatpush1.bf16.msra.mxu0 0
      %1700 = vmatprep.subr.bf16.mxu0 0
      %1701 = vmatpush1.bf16.msra.mxu0 0
      %1702 = vmatprep.subr.bf16.mxu0 0
      %1703 = vmatpush1.bf16.msra.mxu0 0
      %1704 = vmatprep.subr.bf16.mxu0 0
      %1705 = vmatpush1.bf16.msra.mxu0 0
      %1706 = vmatprep.subr.bf16.mxu0 0
      %1707 = vmatpush1.bf16.msra.mxu0 0
      %1708 = vmatprep.subr.bf16.mxu0 0
      %1709 = vmatpush1.bf16.msra.mxu0 0
      %1710 = vmatprep.subr.bf16.mxu0 0
      %1711 = vmatpush1.bf16.msra.mxu0 0
      %1712 = vmatprep.subr.bf16.mxu0 0
      %1713 = vmatpush1.bf16.msra.mxu0 0
      %1714 = vmatprep.mubr.bf16.mxu0 0
      %1715 = vmatmul.mubr.bf16.gmra.mrb[0].mxu0 %v1680
      %v1716 = vpop.f32.mrb[0].mxu0
      %v1717 = vadd.f32 %v1665, %v1716
      %v1718 = vpop.f32.mrb[0].mxu0
      %v1719 = vpop.f32.mrb[0].mxu0
      %v1720 = vadd.f32 %v1665, %v1719
      %v1721 = vpop.f32.mrb[0].mxu0
      %1722 = vdwg.mxu0
      %v1723 = vmul.f32 %v1717, %v1717
      %v1724 = vmul.f32 %v1720, %v1720
      %v1725 = vmul.f32 %v1717, %v1723
      %v1726 = vmul.f32 %v1720, %v1724
      %v1727 = vmul.f32 %v1725, 0.044715
      %v1728 = vmul.f32 %v1726, 0.044715
      %v1729 = vadd.f32 %v1717, %v1727
      %v1730 = vadd.f32 %v1720, %v1728
      %v1731 = vmul.f32 %v1729, 0.7978846
      %v1732 = vmul.f32 %v1730, 0.7978846
      %v1733 = vtanh.pop %v1731
      %v1734 = vtanh.pop %v1732
      %v1735 = vadd.f32 %v1733, 1.0
      %v1736 = vadd.f32 %v1734, 1.0
      %v1737 = vmul.f32 %v1735, 0.5
      %v1738 = vmul.f32 %v1736, 0.5
      %v1739 = vmul.f32 %v1717, %v1737
      %v1740 = vmul.f32 %v1720, %v1738
      %v1741 = vpack.c.bf16 %v1740, %v1739
      %v1743 = vlaneseq
      %v1744 = vshrl.u32 %v1743, 7
      %v1745 = vsub.s32 0, %v1744
      %v1746 = vrot.slane %v810, %v1745
      %v1764 = vunpack.c.l.b16 %v794
      %v1765 = vunpack.c.l.b16 %v795
      %v1766 = vunpack.c.l.b16 %v796
      %v1767 = vunpack.c.l.b16 %v797
      %v1768 = vunpack.c.l.b16 %v798
      %v1769 = vunpack.c.l.b16 %v799
      %v1770 = vunpack.c.l.b16 %v800
      %v1771 = vunpack.c.l.b16 %v801
      %v1772 = vunpack.c.l.b16 %v802
      %v1773 = vunpack.c.l.b16 %v803
      %v1774 = vunpack.c.l.b16 %v804
      %v1775 = vunpack.c.l.b16 %v805
      %v1776 = vunpack.c.l.b16 %v806
      %v1777 = vunpack.c.l.b16 %v807
      %v1778 = vunpack.c.l.b16 %v808
      %v1779 = vunpack.c.l.b16 %v809
      %v1780 = vpack.c.b16 %v1765, %v1764
      %v1781 = vpack.c.b16 %v1767, %v1766
      %v1782 = vpack.c.b16 %v1769, %v1768
      %v1783 = vpack.c.b16 %v1771, %v1770
      %v1784 = vpack.c.b16 %v1773, %v1772
      %v1785 = vpack.c.b16 %v1775, %v1774
      %v1786 = vpack.c.b16 %v1777, %v1776
      %v1787 = vpack.c.b16 %v1779, %v1778
      %1796 = vmatprep.subr.bf16.mxu0 0
      %1797 = vmatpush1.bf16.msra.mxu0 %v1780
      %1798 = vmatprep.subr.bf16.mxu0 0
      %1799 = vmatpush1.bf16.msra.mxu0 %v1781
      %1800 = vmatprep.subr.bf16.mxu0 0
      %1801 = vmatpush1.bf16.msra.mxu0 %v1782
      %1802 = vmatprep.subr.bf16.mxu0 0
      %1803 = vmatpush1.bf16.msra.mxu0 %v1783
      %1804 = vmatprep.subr.bf16.mxu0 0
      %1805 = vmatpush1.bf16.msra.mxu0 %v1784
      %1806 = vmatprep.subr.bf16.mxu0 0
      %1807 = vmatpush1.bf16.msra.mxu0 %v1785
      %1808 = vmatprep.subr.bf16.mxu0 0
      %1809 = vmatpush1.bf16.msra.mxu0 %v1786
      %1810 = vmatprep.subr.bf16.mxu0 0
      %1811 = vmatpush1.bf16.msra.mxu0 %v1787
      %1812 = vmatprep.subr.bf16.mxu0 0
      %1813 = vmatpush1.bf16.msra.mxu0 0
      %1814 = vmatprep.subr.bf16.mxu0 0
      %1815 = vmatpush1.bf16.msra.mxu0 0
      %1816 = vmatprep.subr.bf16.mxu0 0
      %1817 = vmatpush1.bf16.msra.mxu0 0
      %1818 = vmatprep.subr.bf16.mxu0 0
      %1819 = vmatpush1.bf16.msra.mxu0 0
      %1820 = vmatprep.subr.bf16.mxu0 0
      %1821 = vmatpush1.bf16.msra.mxu0 0
      %1822 = vmatprep.subr.bf16.mxu0 0
      %1823 = vmatpush1.bf16.msra.mxu0 0
      %1824 = vmatprep.subr.bf16.mxu0 0
      %1825 = vmatpush1.bf16.msra.mxu0 0
      %1826 = vmatprep.subr.bf16.mxu0 0
      %1827 = vmatpush1.bf16.msra.mxu0 0
      %1828 = vmatprep.mubr.bf16.mxu0 0
      %1829 = vmatmul.mubr.bf16.gmra.mrb[0].mxu0 %v1741
      %v1830 = vpop.f32.mrb[0].mxu0
      %v1831 = vadd.f32 %v1746, %v1830
      %v1832 = vpop.f32.mrb[0].mxu0
      %v1833 = vpop.f32.mrb[0].mxu0
      %v1834 = vadd.f32 %v1746, %v1833
      %v1835 = vpop.f32.mrb[0].mxu0
      %1836 = vdwg.mxu0
      %v1837 = vadd.f32 %v1616, %v1831
      %v1838 = vadd.f32 %v1617, %v1834
      %1839 = vst.msk [vmem:[#allocation2] sm:$0xff] %vm811, %v1837
      %1840 = vst.msk [vmem:[#allocation2 + $0x8] sm:$0x1] %vm815, %v1838
      %p1841 = scmp.eq.s32.totalorder %s33, 1
      // Predicated region
      $region93: #{masked_point_vit_forward.5} parent=87 // pred_check
        %p1842 = pneg %p1841
      $region94: #{masked_point_vit_forward.5} parent=87 // pred_check_branch
        %1844 = sbr.rel (%p1842) target = $region96
      $region95: #{masked_point_vit_forward.5} parent=87 // pred_region
        %v1845 = vld [vmem:[%s13] sm:$0x1]
        %v1846 = vld [vmem:[%s14] sm:$0x1]
        %v1847 = vsel %vm811, %v1837, 0.0
        %1848 = vadd.xlane.f32.xlu0 %v1847
        %v1849 = vpop.xlane.xlu0 %1848
        %v1850 = vsel %vm815, %v1838, 0.0
        %1851 = vadd.xlane.f32.xlu0 %v1850
        %v1852 = vpop.xlane.xlu0 %1851
        %v1853 = vmul.f32 %v1849, %v819
        %v1854 = vmul.f32 %v1852, %v819
        %v1855 = vsub.f32 %v1837, %v1853
        %v1856 = vsub.f32 %v1838, %v1854
        %v1857 = vmul.f32 %v1855, %v1855
        %v1858 = vmul.f32 %v1856, %v1856
        %v1859 = vsel %vm811, %v1857, 0.0
        %1860 = vadd.xlane.f32.xlu0 %v1859
        %v1861 = vpop.xlane.xlu0 %1860
        %v1862 = vsel %vm815, %v1858, 0.0
        %1863 = vadd.xlane.f32.xlu0 %v1862
        %v1864 = vpop.xlane.xlu0 %1863
        %v1865 = vmul.f32 %v1861, %v819
        %v1866 = vmul.f32 %v1864, %v819
        %v1867 = vadd.f32 %v1865, 1e-06
        %v1868 = vadd.f32 %v1866, 1e-06
        %v1869 = vrsqrt.pop %v1867
        %v1870 = vrsqrt.pop %v1868
        %v1871 = vmul.f32 %v1855, %v1869
        %v1872 = vmul.f32 %v1856, %v1870
        %v1874 = vlaneseq
        %v1875 = vshrl.u32 %v1874, 7
        %v1876 = vsub.s32 0, %v1875
        %v1877 = vrot.slane %v1845, %v1876
        %v1879 = vmul.f32 %v1871, %v1877
        %v1880 = vmul.f32 %v1872, %v1877
        %v1882 = vlaneseq
        %v1883 = vshrl.u32 %v1882, 7
        %v1884 = vsub.s32 0, %v1883
        %v1885 = vrot.slane %v1846, %v1884
        %v1887 = vadd.f32 %v1879, %v1885
        %v1888 = vadd.f32 %v1880, %v1885
        %v1889 = vpack.c.bf16 %v1888, %v1887
        %v1890 = vld [vmem:[%s15] sm:$0xf]
        %v1891 = vld [vmem:[%s15 + $0x4] sm:$0xf]
        %v1892 = vld [vmem:[%s15 + $0x8] sm:$0xf]
        %v1893 = vld [vmem:[%s15 + $0xc] sm:$0xf]
        %v1894 = vld [vmem:[%s16] sm:$0x1]
        %v1896 = vlaneseq
        %v1897 = vshrl.u32 %v1896, 7
        %v1898 = vsub.s32 0, %v1897
        %v1899 = vrot.slane %v1894, %v1898
        %v1905 = vunpack.c.l.b16 %v1890
        %v1906 = vunpack.c.l.b16 %v1891
        %v1907 = vunpack.c.l.b16 %v1892
        %v1908 = vunpack.c.l.b16 %v1893
        %v1909 = vpack.c.b16 %v1906, %v1905
        %v1910 = vpack.c.b16 %v1908, %v1907
        %v1914 = vsel %vm811, %v1889, 0
        %1916 = vmatprep.subr.bf16.mxu0 0
        %1917 = vmatpush1.bf16.msra.mxu0 %v1909
        %1918 = vmatprep.subr.bf16.mxu0 0
        %1919 = vmatpush1.bf16.msra.mxu0 %v1910
        %1920 = vmatprep.subr.bf16.mxu0 0
        %1921 = vmatpush1.bf16.msra.mxu0 0
        %1922 = vmatprep.subr.bf16.mxu0 0
        %1923 = vmatpush1.bf16.msra.mxu0 0
        %1924 = vmatprep.subr.bf16.mxu0 0
        %1925 = vmatpush1.bf16.msra.mxu0 0
        %1926 = vmatprep.subr.bf16.mxu0 0
        %1927 = vmatpush1.bf16.msra.mxu0 0
        %1928 = vmatprep.subr.bf16.mxu0 0
        %1929 = vmatpush1.bf16.msra.mxu0 0
        %1930 = vmatprep.subr.bf16.mxu0 0
        %1931 = vmatpush1.bf16.msra.mxu0 0
        %1932 = vmatprep.subr.bf16.mxu0 0
        %1933 = vmatpush1.bf16.msra.mxu0 0
        %1934 = vmatprep.subr.bf16.mxu0 0
        %1935 = vmatpush1.bf16.msra.mxu0 0
        %1936 = vmatprep.subr.bf16.mxu0 0
        %1937 = vmatpush1.bf16.msra.mxu0 0
        %1938 = vmatprep.subr.bf16.mxu0 0
        %1939 = vmatpush1.bf16.msra.mxu0 0
        %1940 = vmatprep.subr.bf16.mxu0 0
        %1941 = vmatpush1.bf16.msra.mxu0 0
        %1942 = vmatprep.subr.bf16.mxu0 0
        %1943 = vmatpush1.bf16.msra.mxu0 0
        %1944 = vmatprep.subr.bf16.mxu0 0
        %1945 = vmatpush1.bf16.msra.mxu0 0
        %1946 = vmatprep.subr.bf16.mxu0 0
        %1947 = vmatpush1.bf16.msra.mxu0 0
        %1948 = vmatprep.mubr.bf16.mxu0 0
        %1949 = vmatmul.mubr.bf16.gmra.mrb[0].mxu0 %v1914
        %v1950 = vpop.f32.mrb[0].mxu0
        %v1951 = vadd.f32 %v1899, %v1950
        %v1952 = vpop.f32.mrb[0].mxu0
        %v1953 = vpop.f32.mrb[0].mxu0
        %v1954 = vadd.f32 %v1899, %v1953
        %v1955 = vpop.f32.mrb[0].mxu0
        %1956 = vdwg.mxu0
        %vm1957 = vcmask 195584
        %1958 = vst.msk [vmem:[%s758] sm:$0xff] %vm1957, %v1951
        %vm1959 = vcmask 188416
        %1960 = vst.msk [vmem:[%s758 + $0x8] sm:$0x1] %vm1959, %v1954
      $region96: #{masked_point_vit_forward.5} parent=87 // pred_fallthru
        _
      %p1961 = scmp.lt.s32.totalorder %s32, 1
      %s1962 = scalar_select %p1961, %s32, 1
      %s1963 = smul.addr %s1962, 2
      %s1964 = smul.addr %s1963, 8
      %s1965 = scalar_lea.vmem %s17, %s1964
      // Predicated region
      $region97: #{masked_point_vit_forward.5} parent=87 // pred_check
        %p1966 = pneg %p480
      $region98: #{masked_point_vit_forward.5} parent=87 // pred_check_branch
        %1968 = sbr.rel (%p1966) target = $region100
      $region99: #{masked_point_vit_forward.5} parent=87 // pred_region
        _
      $region100: #{masked_point_vit_forward.5} parent=87 // pred_fallthru
        _
    $region88: #{masked_point_vit_forward.5} parent=5 // pred_fallthru
      _
    %p1969 = scmp.le.s32.totalorder 2, %s23
    // Predicated region
    $region101: #{masked_point_vit_forward.5} parent=5 // pred_check
      %p1970 = pneg %p1969
    $region102: #{masked_point_vit_forward.5} parent=5 // pred_check_branch
      %1972 = sbr.rel (%p1970) target = $region104
    $region103: #{masked_point_vit_forward.5} parent=5 // pred_region
      %s1973 = ssub.s32 %s23, 2
      // Predicated region
      $region105: #{masked_point_vit_forward.5} parent=103 // pred_check
        %p1974 = pneg %p486
      $region106: #{masked_point_vit_forward.5} parent=103 // pred_check_branch
        %1976 = sbr.rel (%p1974) target = $region108
      $region107: #{masked_point_vit_forward.5} parent=103 // pred_region
        %p1977 = scmp.lt.s32.totalorder %s34, 1
        %s1978 = scalar_select %p1977, %s34, 1
        %s1979 = smul.addr %s1978, 2
        %s1980 = smul.addr %s1979, 8
        %s1981 = scalar_lea.vmem %s17, %s1980
      $region108: #{masked_point_vit_forward.5} parent=103 // pred_fallthru
        _
    $region104: #{masked_point_vit_forward.5} parent=5 // pred_fallthru
      _
  $region6: #{masked_point_vit_forward.5} parent=0 // loop_footer
    %s27 = sadd.s32 1, %s23
  $region7: #{masked_point_vit_forward.5} parent=0 // loop_footer_branch
    %22 = sbr.rel target = $region3
  $region8: #{masked_point_vit_forward.5} parent=0 // loop_exit
    _

</llo_original>
